<compile_context>
chip_gen: v7x
topology: tpu7x:2x2x1
jax: 0.10.0
libtpu: 0.0.40
codegen_flags: <defaults>
</compile_context>

<pallas_src>
import functools

import jax
import jax.numpy as jnp
from jax.experimental import pallas as pl
from jax.experimental.pallas import tpu as pltpu


def _round_up(x, m):
    return (x + m - 1) // m * m


# ----------------------------- tiled matmul kernel -----------------------------

def _matmul_bias_act_kernel(a_ref, b_ref, bias_ref, o_ref, acc_ref, *, act):
    @pl.when(pl.program_id(2) == 0)
    def _init():
        acc_ref[...] = jnp.zeros_like(acc_ref)

    acc_ref[...] += jnp.dot(a_ref[...], b_ref[...], preferred_element_type=jnp.float32)

    @pl.when(pl.program_id(2) == pl.num_programs(2) - 1)
    def _epilogue():
        acc = acc_ref[...] + bias_ref[...]          # bias (1, TN) broadcasts over TM
        if act == "relu":
            acc = jnp.maximum(acc, 0.0)
        elif act == "sigmoid":
            acc = jax.nn.sigmoid(acc)
        o_ref[...] = acc.astype(o_ref.dtype)


def matmul_bias_act(a, b, bias, act="none", out_dtype=jnp.float32):
    """act(A @ B + bias). A:(M,K), B:(K,N), bias:(N,). Tiled, pipelined, bf16 MXU operands,
    f32 accumulation, fused bias+activation epilogue. Pads to tile multiples, slices back."""
    M, K = a.shape
    K2, N = b.shape
    assert K == K2
    Mp = _round_up(M, 8)
    Kp = _round_up(K, 128)
    Np = _round_up(N, 128)
    TM = min(256, Mp)
    TN = min(256, Np)
    TK = min(512, Kp)
    Mp = _round_up(Mp, TM)
    Kp = _round_up(Kp, TK)
    Np = _round_up(Np, TN)

    a_p = jnp.pad(a, ((0, Mp - M), (0, Kp - K))).astype(jnp.bfloat16)
    b_p = jnp.pad(b, ((0, Kp - K), (0, Np - N))).astype(jnp.bfloat16)
    bias_p = jnp.pad(bias.reshape(1, N).astype(jnp.float32), ((0, 0), (0, Np - N)))

    out = pl.pallas_call(
        functools.partial(_matmul_bias_act_kernel, act=act),
        out_shape=jax.ShapeDtypeStruct((Mp, Np), out_dtype),
        grid=(Mp // TM, Np // TN, Kp // TK),
        in_specs=[
            pl.BlockSpec((TM, TK), lambda i, j, k: (i, k)),
            pl.BlockSpec((TK, TN), lambda i, j, k: (k, j)),
            pl.BlockSpec((1, TN), lambda i, j, k: (0, j)),
        ],
        out_specs=pl.BlockSpec((TM, TN), lambda i, j, k: (i, j)),
        scratch_shapes=[pltpu.VMEM((TM, TN), jnp.float32)],
        compiler_params=pltpu.CompilerParams(
            dimension_semantics=("parallel", "parallel", "arbitrary")),
        cost_estimate=pl.CostEstimate(
            flops=2 * Mp * Np * Kp,
            transcendentals=Mp * Np if act == "sigmoid" else 0,
            bytes_accessed=2 * (Mp * Kp + Kp * Np)
            + Mp * Np * jnp.dtype(out_dtype).itemsize),
    )(a_p, b_p, bias_p)
    return out[:M, :N]


# ---------------- fused fc_mu + fc_logvar + reparameterization kernel ----------------

def _latent_kernel(a_ref, w_ref, bias_ref, eps_ref, mu_ref, lv_ref, z_ref, acc_ref, *, lp):
    @pl.when(pl.program_id(0) == 0)
    def _init():
        acc_ref[...] = jnp.zeros_like(acc_ref)

    acc_ref[...] += jnp.dot(a_ref[...], w_ref[...], preferred_element_type=jnp.float32)

    @pl.when(pl.program_id(0) == pl.num_programs(0) - 1)
    def _epilogue():
        acc = acc_ref[...] + bias_ref[...]
        mu = acc[:, :lp]
        logvar = acc[:, lp:]
        z = mu + eps_ref[...] * jnp.exp(0.5 * logvar)
        mu_ref[...] = mu
        lv_ref[...] = logvar
        z_ref[...] = z


def encode_latent(flat, w_mu, b_mu, w_lv, b_lv, eps):
    """Fused fc_mu + fc_logvar + z = mu + eps*exp(0.5*logvar): single pass over `flat`."""
    B, K = flat.shape
    L = w_mu.shape[0]
    Bp = _round_up(B, 8)
    Lp = _round_up(L, 128)
    TK = min(512, _round_up(K, 128))
    Kp = _round_up(K, TK)

    a_p = jnp.pad(flat, ((0, Bp - B), (0, Kp - K))).astype(jnp.bfloat16)
    w_cat = jnp.concatenate(
        [jnp.pad(w_mu.T, ((0, Kp - K), (0, Lp - L))),
         jnp.pad(w_lv.T, ((0, Kp - K), (0, Lp - L)))], axis=1).astype(jnp.bfloat16)
    bias_cat = jnp.concatenate(
        [jnp.pad(b_mu, (0, Lp - L)), jnp.pad(b_lv, (0, Lp - L))]
    ).reshape(1, 2 * Lp).astype(jnp.float32)
    eps_p = jnp.pad(eps, ((0, Bp - B), (0, Lp - L))).astype(jnp.float32)

    outs = pl.pallas_call(
        functools.partial(_latent_kernel, lp=Lp),
        out_shape=(jax.ShapeDtypeStruct((Bp, Lp), jnp.float32),) * 3,
        grid=(Kp // TK,),
        in_specs=[
            pl.BlockSpec((Bp, TK), lambda k: (0, k)),
            pl.BlockSpec((TK, 2 * Lp), lambda k: (k, 0)),
            pl.BlockSpec((1, 2 * Lp), lambda k: (0, 0)),
            pl.BlockSpec((Bp, Lp), lambda k: (0, 0)),
        ],
        out_specs=[pl.BlockSpec((Bp, Lp), lambda k: (0, 0))] * 3,
        scratch_shapes=[pltpu.VMEM((Bp, 2 * Lp), jnp.float32)],
        compiler_params=pltpu.CompilerParams(dimension_semantics=("arbitrary",)),
    )(a_p, w_cat, bias_cat, eps_p)
    mu, logvar, z = (o[:B, :L] for o in outs)
    return mu, logvar, z


# -------------------------------- layer wrappers --------------------------------

def conv2d_nhwc(x, w, b, *, act, out_dtype=jnp.bfloat16):
    """Conv2d k=4, stride=2, pad=1. x: NHWC; w: PyTorch layout (Cout, Cin, kH, kW)."""
    N, H, W, C = x.shape
    Cout, Cin, kH, kW = w.shape
    assert Cin == C and kH == 4 and kW == 4
    stride, pad = 2, 1
    Ho = (H + 2 * pad - kH) // stride + 1
    Wo = (W + 2 * pad - kW) // stride + 1
    xp = jnp.pad(x, ((0, 0), (pad, pad), (pad, pad), (0, 0)))
    # TODO(synk): patch extraction still materializes kH*kW copies in HBM (plain-JAX glue);
    # a fully fused shifted-window DMA pipeline would remove it.
    cols = jnp.concatenate(
        [xp[:, i:i + stride * Ho:stride, j:j + stride * Wo:stride, :]
         for i in range(kH) for j in range(kW)], axis=-1)          # K ordered (kh, kw, cin)
    a = cols.reshape(N * Ho * Wo, kH * kW * C)
    bmat = w.transpose(2, 3, 1, 0).reshape(kH * kW * Cin, Cout)    # same (kh, kw, cin) order
    out = matmul_bias_act(a, bmat, b, act=act, out_dtype=out_dtype)
    return out.reshape(N, Ho, Wo, Cout)


# taps (ordered by increasing input index) contributing to output phase 0 / 1 of a
# ConvTranspose2d with k=4, stride=2, pad=1:  oy = 2*ih - 1 + kh
_TAP_IDX = ([3, 1], [2, 0])


def conv_transpose2d_nhwc(x, w, b, *, act, out_dtype=jnp.bfloat16):
    """ConvTranspose2d k=4, stride=2, pad=1 via sub-pixel decomposition (4 stride-1 convs
    with 2x2 tap subsets, interleaved). x: NHWC; w: PyTorch layout (Cin, Cout, kH, kW)."""
    N, H, W, C = x.shape
    Cin, Cout, kH, kW = w.shape
    assert Cin == C and kH == 4 and kW == 4
    phase_rows = []
    for py in (0, 1):
        row = []
        for px in (0, 1):
            xp = jnp.pad(x, ((0, 0), (1 - py, py), (1 - px, px), (0, 0)))
            cols = jnp.concatenate(
                [xp[:, a:a + H, c:c + W, :] for a in (0, 1) for c in (0, 1)], axis=-1)
            a_mat = cols.reshape(N * H * W, 4 * C)
            w_ph = w[:, :, _TAP_IDX[py], :][:, :, :, _TAP_IDX[px]]   # (Cin, Cout, 2, 2)
            bmat = w_ph.transpose(2, 3, 0, 1).reshape(4 * Cin, Cout)
            ph = matmul_bias_act(a_mat, bmat, b, act=act, out_dtype=out_dtype)
            row.append(ph.reshape(N, H, W, Cout))
        phase_rows.append(row)
    out = jnp.stack([jnp.stack(r, axis=3) for r in phase_rows], axis=2)  # (N,H,2,W,2,Cout)
    return out.reshape(N, 2 * H, 2 * W, Cout)


# ----------------------------------- VAE model -----------------------------------

ENC_CH = [(3, 64), (64, 128), (128, 256), (256, 512)]
DEC_CH = [(512, 256), (256, 128), (128, 64), (64, 3)]


def init_params(key, img_size, latent_dim):
    feat = img_size // 16
    flattened = 512 * feat * feat
    keys = jax.random.split(key, 11)
    ki = 0

    def nrm(shape, scale):
        nonlocal ki
        w = scale * jax.random.normal(keys[ki], shape, jnp.float32)
        ki += 1
        return w

    params = {}
    for idx, (cin, cout) in enumerate(ENC_CH):
        params[f"enc{idx}_w"] = nrm((cout, cin, 4, 4), 0.05)
        params[f"enc{idx}_b"] = jnp.full((cout,), 0.01, jnp.float32)
    params["fc_mu_w"] = nrm((latent_dim, flattened), 0.02)
    params["fc_mu_b"] = jnp.zeros((latent_dim,), jnp.float32)
    params["fc_logvar_w"] = nrm((latent_dim, flattened), 0.02)
    params["fc_logvar_b"] = jnp.zeros((latent_dim,), jnp.float32)
    params["fc_decode_w"] = nrm((flattened, latent_dim), 0.02)
    params["fc_decode_b"] = jnp.zeros((flattened,), jnp.float32)
    for idx, (cin, cout) in enumerate(DEC_CH):
        params[f"dec{idx}_w"] = nrm((cin, cout, 4, 4), 0.05)   # ConvTranspose2d layout
        params[f"dec{idx}_b"] = jnp.full((cout,), 0.01, jnp.float32)
    return params


def vae_forward(params, x_nchw, eps, *, img_size, latent_dim):
    # ---- encode (NHWC internally; single layout conversion at the boundary) ----
    h = x_nchw.transpose(0, 2, 3, 1)
    for idx in range(4):
        h = conv2d_nhwc(h, params[f"enc{idx}_w"], params[f"enc{idx}_b"], act="relu")
    N = h.shape[0]
    feat = img_size // 16
    # match torch's .view(N, -1) on NCHW: flatten in (C, H, W) order (cheap, once per fwd)
    flat = h.transpose(0, 3, 1, 2).reshape(N, -1)

    # ---- fc_mu + fc_logvar + reparameterize (fused) ----
    mu, logvar, z = encode_latent(flat, params["fc_mu_w"], params["fc_mu_b"],
                                  params["fc_logvar_w"], params["fc_logvar_b"], eps)

    # ---- decode ----
    d = matmul_bias_act(z, params["fc_decode_w"].T, params["fc_decode_b"],
                        act="none", out_dtype=jnp.bfloat16)
    h = d.reshape(N, 512, feat, feat).transpose(0, 2, 3, 1)   # torch view order -> NHWC
    acts = ["relu", "relu", "relu", "sigmoid"]
    for idx in range(4):
        out_dtype = jnp.float32 if idx == 3 else jnp.bfloat16
        h = conv_transpose2d_nhwc(h, params[f"dec{idx}_w"], params[f"dec{idx}_b"],
                                  act=acts[idx], out_dtype=out_dtype)
    recon = h.transpose(0, 3, 1, 2)                           # back to NCHW at the boundary
    return recon, mu, logvar


# ------------------------------------- main --------------------------------------

if __name__ == "__main__":
    IMG_SIZE = 32       # small stand-in for 640 (must be divisible by 16)
    LATENT_DIM = 32     # small stand-in for 256
    BATCH = 2

    root = jax.random.PRNGKey(0)
    k_params, k_x, k_eps = jax.random.split(root, 3)

    params = init_params(k_params, IMG_SIZE, LATENT_DIM)
    x = jax.random.normal(k_x, (BATCH, 3, IMG_SIZE, IMG_SIZE), jnp.float32)
    eps = jax.random.normal(k_eps, (BATCH, LATENT_DIM), jnp.float32)

    fwd = jax.jit(functools.partial(vae_forward, img_size=IMG_SIZE, latent_dim=LATENT_DIM))
    recon_x, mu, logvar = fwd(params, x, eps)
    jax.block_until_ready((recon_x, mu, logvar))

    assert recon_x.shape == (BATCH, 3, IMG_SIZE, IMG_SIZE)
    assert mu.shape == (BATCH, LATENT_DIM)
    assert logvar.shape == (BATCH, LATENT_DIM)
    assert bool(jnp.all(jnp.isfinite(recon_x)))
    assert bool(jnp.all((recon_x >= 0.0) & (recon_x <= 1.0)))   # sigmoid output

    print("KERNEL_OK")
</pallas_src>

<mosaic_0001>
module attributes {stable_mosaic.version = 11 : i64} {
  func.func @_matmul_bias_act_kernel(%arg0: i32, %arg1: i32, %arg2: i32, %arg3: memref<256x128xbf16, #tpu.memory_space<vmem>>, %arg4: memref<128x128xbf16, #tpu.memory_space<vmem>>, %arg5: memref<1x128xf32, #tpu.memory_space<vmem>>, %arg6: memref<256x128xbf16, #tpu.memory_space<vmem>>, %arg7: memref<256x128xf32, #tpu.memory_space<vmem>>) attributes {dimension_semantics = [#tpu.dimension_semantics<parallel>, #tpu.dimension_semantics<parallel>, #tpu.dimension_semantics<arbitrary>], iteration_bounds = array<i64: 2, 1, 1>, scalar_prefetch = 0 : i64, scratch_operands = 1 : i64, tpu.core_type = #tpu.core_type<tc>, window_params = [{transform_indices = @transform_0, window_bounds = array<i64: 256, 128>}, {transform_indices = @transform_1, window_bounds = array<i64: 128, 128>}, {transform_indices = @transform_2, window_bounds = array<i64: 1, 128>}, {transform_indices = @transform_3, window_bounds = array<i64: 256, 128>}]} {
    %c0_i32 = arith.constant 0 : i32
    %0 = arith.cmpi eq, %arg2, %c0_i32 : i32
    %1 = arith.extui %0 : i1 to i32
    %c0_i32_0 = arith.constant 0 : i32
    %2 = arith.cmpi ne, %1, %c0_i32_0 : i32
    scf.if %2 {
      %cst_10 = arith.constant 0.000000e+00 : f32
      %12 = vector.broadcast %cst_10 : f32 to vector<256x128xf32>
      %c0_11 = arith.constant 0 : index
      %c0_12 = arith.constant 0 : index
      %13 = vector.load %arg7[%c0_11, %c0_12] : memref<256x128xf32, #tpu.memory_space<vmem>>, vector<256x128xf32>
      tpu.vector_store %arg7[%c0_11, %c0_12], %12 {strides = array<i32>} : memref<256x128xf32, #tpu.memory_space<vmem>>, vector<256x128xf32>,
    } else {
    }
    %c0 = arith.constant 0 : index
    %c0_1 = arith.constant 0 : index
    %3 = vector.load %arg7[%c0, %c0_1] : memref<256x128xf32, #tpu.memory_space<vmem>>, vector<256x128xf32>
    %c0_2 = arith.constant 0 : index
    %c0_3 = arith.constant 0 : index
    %4 = vector.load %arg3[%c0_2, %c0_3] : memref<256x128xbf16, #tpu.memory_space<vmem>>, vector<256x128xbf16>
    %c0_4 = arith.constant 0 : index
    %c0_5 = arith.constant 0 : index
    %5 = vector.load %arg4[%c0_4, %c0_5] : memref<128x128xbf16, #tpu.memory_space<vmem>>, vector<128x128xbf16>
    %cst = arith.constant dense<0.000000e+00> : vector<256x128xf32>
    %6 = tpu.matmul %4, %5, %cst {dimension_numbers = #tpu.dot_dimension_numbers<[1], [0], [0], [1], [0, 0, 1, 1], [], []>} : vector<256x128xbf16>, vector<128x128xbf16>, vector<256x128xf32> -> vector<256x128xf32>
    %7 = arith.addf %3, %6 : vector<256x128xf32>
    %c0_6 = arith.constant 0 : index
    %c0_7 = arith.constant 0 : index
    %8 = vector.load %arg7[%c0_6, %c0_7] : memref<256x128xf32, #tpu.memory_space<vmem>>, vector<256x128xf32>
    tpu.vector_store %arg7[%c0_6, %c0_7], %7 {strides = array<i32>} : memref<256x128xf32, #tpu.memory_space<vmem>>, vector<256x128xf32>,
    %c0_i32_8 = arith.constant 0 : i32
    %9 = arith.cmpi eq, %arg2, %c0_i32_8 : i32
    %10 = arith.extui %9 : i1 to i32
    %c0_i32_9 = arith.constant 0 : i32
    %11 = arith.cmpi ne, %10, %c0_i32_9 : i32
    scf.if %11 {
      %c0_10 = arith.constant 0 : index
      %c0_11 = arith.constant 0 : index
      %12 = vector.load %arg7[%c0_10, %c0_11] : memref<256x128xf32, #tpu.memory_space<vmem>>, vector<256x128xf32>
      %c0_12 = arith.constant 0 : index
      %c0_13 = arith.constant 0 : index
      %13 = vector.load %arg5[%c0_12, %c0_13] : memref<1x128xf32, #tpu.memory_space<vmem>>, vector<1x128xf32>
      %14 = vector.broadcast %13 : vector<1x128xf32> to vector<256x128xf32>
      %15 = arith.addf %12, %14 : vector<256x128xf32>
      %cst_14 = arith.constant 0.000000e+00 : f32
      %16 = vector.broadcast %cst_14 : f32 to vector<256x128xf32>
      %17 = arith.maximumf %15, %16 : vector<256x128xf32>
      %18 = arith.truncf %17 : vector<256x128xf32> to vector<256x128xbf16>
      %c0_15 = arith.constant 0 : index
      %c0_16 = arith.constant 0 : index
      %19 = vector.load %arg6[%c0_15, %c0_16] : memref<256x128xbf16, #tpu.memory_space<vmem>>, vector<256x128xbf16>
      tpu.vector_store %arg6[%c0_15, %c0_16], %18 {strides = array<i32>} : memref<256x128xbf16, #tpu.memory_space<vmem>>, vector<256x128xbf16>,
    } else {
    }
    return
  }
  func.func @transform_0(%arg0: i32, %arg1: i32, %arg2: i32) -> (i32, i32) {
    %c0_i32 = arith.constant 0 : i32
    return %arg0, %arg2 : i32, i32
  }
  func.func @transform_1(%arg0: i32, %arg1: i32, %arg2: i32) -> (i32, i32) {
    %c0_i32 = arith.constant 0 : i32
    return %arg2, %arg1 : i32, i32
  }
  func.func @transform_2(%arg0: i32, %arg1: i32, %arg2: i32) -> (i32, i32) {
    %c0_i32 = arith.constant 0 : i32
    %c0_i32_0 = arith.constant 0 : i32
    return %c0_i32, %arg1 : i32, i32
  }
  func.func @transform_3(%arg0: i32, %arg1: i32, %arg2: i32) -> (i32, i32) {
    %c0_i32 = arith.constant 0 : i32
    return %arg0, %arg1 : i32, i32
  }
}

module attributes {stable_mosaic.version = 11 : i64} {
  func.func @_matmul_bias_act_kernel(%arg0: i32, %arg1: i32, %arg2: i32, %arg3: memref<128x512xbf16, #tpu.memory_space<vmem>>, %arg4: memref<512x128xbf16, #tpu.memory_space<vmem>>, %arg5: memref<1x128xf32, #tpu.memory_space<vmem>>, %arg6: memref<128x128xbf16, #tpu.memory_space<vmem>>, %arg7: memref<128x128xf32, #tpu.memory_space<vmem>>) attributes {dimension_semantics = [#tpu.dimension_semantics<parallel>, #tpu.dimension_semantics<parallel>, #tpu.dimension_semantics<arbitrary>], iteration_bounds = array<i64: 1, 1, 2>, scalar_prefetch = 0 : i64, scratch_operands = 1 : i64, tpu.core_type = #tpu.core_type<tc>, window_params = [{transform_indices = @transform_0, window_bounds = array<i64: 128, 512>}, {transform_indices = @transform_1, window_bounds = array<i64: 512, 128>}, {transform_indices = @transform_2, window_bounds = array<i64: 1, 128>}, {transform_indices = @transform_3, window_bounds = array<i64: 128, 128>}]} {
    %c0_i32 = arith.constant 0 : i32
    %0 = arith.cmpi eq, %arg2, %c0_i32 : i32
    %1 = arith.extui %0 : i1 to i32
    %c0_i32_0 = arith.constant 0 : i32
    %2 = arith.cmpi ne, %1, %c0_i32_0 : i32
    scf.if %2 {
      %cst_9 = arith.constant 0.000000e+00 : f32
      %12 = vector.broadcast %cst_9 : f32 to vector<128x128xf32>
      %c0_10 = arith.constant 0 : index
      %c0_11 = arith.constant 0 : index
      %13 = vector.load %arg7[%c0_10, %c0_11] : memref<128x128xf32, #tpu.memory_space<vmem>>, vector<128x128xf32>
      tpu.vector_store %arg7[%c0_10, %c0_11], %12 {strides = array<i32>} : memref<128x128xf32, #tpu.memory_space<vmem>>, vector<128x128xf32>,
    } else {
    }
    %c0 = arith.constant 0 : index
    %c0_1 = arith.constant 0 : index
    %3 = vector.load %arg7[%c0, %c0_1] : memref<128x128xf32, #tpu.memory_space<vmem>>, vector<128x128xf32>
    %c0_2 = arith.constant 0 : index
    %c0_3 = arith.constant 0 : index
    %4 = vector.load %arg3[%c0_2, %c0_3] : memref<128x512xbf16, #tpu.memory_space<vmem>>, vector<128x512xbf16>
    %c0_4 = arith.constant 0 : index
    %c0_5 = arith.constant 0 : index
    %5 = vector.load %arg4[%c0_4, %c0_5] : memref<512x128xbf16, #tpu.memory_space<vmem>>, vector<512x128xbf16>
    %cst = arith.constant dense<0.000000e+00> : vector<128x128xf32>
    %6 = tpu.matmul %4, %5, %cst {dimension_numbers = #tpu.dot_dimension_numbers<[1], [0], [0], [1], [0, 0, 1, 1], [], []>} : vector<128x512xbf16>, vector<512x128xbf16>, vector<128x128xf32> -> vector<128x128xf32>
    %7 = arith.addf %3, %6 : vector<128x128xf32>
    %c0_6 = arith.constant 0 : index
    %c0_7 = arith.constant 0 : index
    %8 = vector.load %arg7[%c0_6, %c0_7] : memref<128x128xf32, #tpu.memory_space<vmem>>, vector<128x128xf32>
    tpu.vector_store %arg7[%c0_6, %c0_7], %7 {strides = array<i32>} : memref<128x128xf32, #tpu.memory_space<vmem>>, vector<128x128xf32>,
    %c1_i32 = arith.constant 1 : i32
    %9 = arith.cmpi eq, %arg2, %c1_i32 : i32
    %10 = arith.extui %9 : i1 to i32
    %c0_i32_8 = arith.constant 0 : i32
    %11 = arith.cmpi ne, %10, %c0_i32_8 : i32
    scf.if %11 {
      %c0_9 = arith.constant 0 : index
      %c0_10 = arith.constant 0 : index
      %12 = vector.load %arg7[%c0_9, %c0_10] : memref<128x128xf32, #tpu.memory_space<vmem>>, vector<128x128xf32>
      %c0_11 = arith.constant 0 : index
      %c0_12 = arith.constant 0 : index
      %13 = vector.load %arg5[%c0_11, %c0_12] : memref<1x128xf32, #tpu.memory_space<vmem>>, vector<1x128xf32>
      %14 = vector.broadcast %13 : vector<1x128xf32> to vector<128x128xf32>
      %15 = arith.addf %12, %14 : vector<128x128xf32>
      %cst_13 = arith.constant 0.000000e+00 : f32
      %16 = vector.broadcast %cst_13 : f32 to vector<128x128xf32>
      %17 = arith.maximumf %15, %16 : vector<128x128xf32>
      %18 = arith.truncf %17 : vector<128x128xf32> to vector<128x128xbf16>
      %c0_14 = arith.constant 0 : index
      %c0_15 = arith.constant 0 : index
      %19 = vector.load %arg6[%c0_14, %c0_15] : memref<128x128xbf16, #tpu.memory_space<vmem>>, vector<128x128xbf16>
      tpu.vector_store %arg6[%c0_14, %c0_15], %18 {strides = array<i32>} : memref<128x128xbf16, #tpu.memory_space<vmem>>, vector<128x128xbf16>,
    } else {
    }
    return
  }
  func.func @transform_0(%arg0: i32, %arg1: i32, %arg2: i32) -> (i32, i32) {
    %c0_i32 = arith.constant 0 : i32
    return %arg0, %arg2 : i32, i32
  }
  func.func @transform_1(%arg0: i32, %arg1: i32, %arg2: i32) -> (i32, i32) {
    %c0_i32 = arith.constant 0 : i32
    return %arg2, %arg1 : i32, i32
  }
  func.func @transform_2(%arg0: i32, %arg1: i32, %arg2: i32) -> (i32, i32) {
    %c0_i32 = arith.constant 0 : i32
    %c0_i32_0 = arith.constant 0 : i32
    return %c0_i32, %arg1 : i32, i32
  }
  func.func @transform_3(%arg0: i32, %arg1: i32, %arg2: i32) -> (i32, i32) {
    %c0_i32 = arith.constant 0 : i32
    return %arg0, %arg1 : i32, i32
  }
}

module attributes {stable_mosaic.version = 11 : i64} {
  func.func @_matmul_bias_act_kernel(%arg0: i32, %arg1: i32, %arg2: i32, %arg3: memref<32x512xbf16, #tpu.memory_space<vmem>>, %arg4: memref<512x256xbf16, #tpu.memory_space<vmem>>, %arg5: memref<1x256xf32, #tpu.memory_space<vmem>>, %arg6: memref<32x256xbf16, #tpu.memory_space<vmem>>, %arg7: memref<32x256xf32, #tpu.memory_space<vmem>>) attributes {dimension_semantics = [#tpu.dimension_semantics<parallel>, #tpu.dimension_semantics<parallel>, #tpu.dimension_semantics<arbitrary>], iteration_bounds = array<i64: 1, 1, 4>, scalar_prefetch = 0 : i64, scratch_operands = 1 : i64, tpu.core_type = #tpu.core_type<tc>, window_params = [{transform_indices = @transform_0, window_bounds = array<i64: 32, 512>}, {transform_indices = @transform_1, window_bounds = array<i64: 512, 256>}, {transform_indices = @transform_2, window_bounds = array<i64: 1, 256>}, {transform_indices = @transform_3, window_bounds = array<i64: 32, 256>}]} {
    %c0_i32 = arith.constant 0 : i32
    %0 = arith.cmpi eq, %arg2, %c0_i32 : i32
    %1 = arith.extui %0 : i1 to i32
    %c0_i32_0 = arith.constant 0 : i32
    %2 = arith.cmpi ne, %1, %c0_i32_0 : i32
    scf.if %2 {
      %cst_9 = arith.constant 0.000000e+00 : f32
      %12 = vector.broadcast %cst_9 : f32 to vector<32x256xf32>
      %c0_10 = arith.constant 0 : index
      %c0_11 = arith.constant 0 : index
      %13 = vector.load %arg7[%c0_10, %c0_11] : memref<32x256xf32, #tpu.memory_space<vmem>>, vector<32x256xf32>
      tpu.vector_store %arg7[%c0_10, %c0_11], %12 {strides = array<i32>} : memref<32x256xf32, #tpu.memory_space<vmem>>, vector<32x256xf32>,
    } else {
    }
    %c0 = arith.constant 0 : index
    %c0_1 = arith.constant 0 : index
    %3 = vector.load %arg7[%c0, %c0_1] : memref<32x256xf32, #tpu.memory_space<vmem>>, vector<32x256xf32>
    %c0_2 = arith.constant 0 : index
    %c0_3 = arith.constant 0 : index
    %4 = vector.load %arg3[%c0_2, %c0_3] : memref<32x512xbf16, #tpu.memory_space<vmem>>, vector<32x512xbf16>
    %c0_4 = arith.constant 0 : index
    %c0_5 = arith.constant 0 : index
    %5 = vector.load %arg4[%c0_4, %c0_5] : memref<512x256xbf16, #tpu.memory_space<vmem>>, vector<512x256xbf16>
    %cst = arith.constant dense<0.000000e+00> : vector<32x256xf32>
    %6 = tpu.matmul %4, %5, %cst {dimension_numbers = #tpu.dot_dimension_numbers<[1], [0], [0], [1], [0, 0, 1, 1], [], []>} : vector<32x512xbf16>, vector<512x256xbf16>, vector<32x256xf32> -> vector<32x256xf32>
    %7 = arith.addf %3, %6 : vector<32x256xf32>
    %c0_6 = arith.constant 0 : index
    %c0_7 = arith.constant 0 : index
    %8 = vector.load %arg7[%c0_6, %c0_7] : memref<32x256xf32, #tpu.memory_space<vmem>>, vector<32x256xf32>
    tpu.vector_store %arg7[%c0_6, %c0_7], %7 {strides = array<i32>} : memref<32x256xf32, #tpu.memory_space<vmem>>, vector<32x256xf32>,
    %c3_i32 = arith.constant 3 : i32
    %9 = arith.cmpi eq, %arg2, %c3_i32 : i32
    %10 = arith.extui %9 : i1 to i32
    %c0_i32_8 = arith.constant 0 : i32
    %11 = arith.cmpi ne, %10, %c0_i32_8 : i32
    scf.if %11 {
      %c0_9 = arith.constant 0 : index
      %c0_10 = arith.constant 0 : index
      %12 = vector.load %arg7[%c0_9, %c0_10] : memref<32x256xf32, #tpu.memory_space<vmem>>, vector<32x256xf32>
      %c0_11 = arith.constant 0 : index
      %c0_12 = arith.constant 0 : index
      %13 = vector.load %arg5[%c0_11, %c0_12] : memref<1x256xf32, #tpu.memory_space<vmem>>, vector<1x256xf32>
      %14 = vector.broadcast %13 : vector<1x256xf32> to vector<32x256xf32>
      %15 = arith.addf %12, %14 : vector<32x256xf32>
      %cst_13 = arith.constant 0.000000e+00 : f32
      %16 = vector.broadcast %cst_13 : f32 to vector<32x256xf32>
      %17 = arith.maximumf %15, %16 : vector<32x256xf32>
      %18 = arith.truncf %17 : vector<32x256xf32> to vector<32x256xbf16>
      %c0_14 = arith.constant 0 : index
      %c0_15 = arith.constant 0 : index
      %19 = vector.load %arg6[%c0_14, %c0_15] : memref<32x256xbf16, #tpu.memory_space<vmem>>, vector<32x256xbf16>
      tpu.vector_store %arg6[%c0_14, %c0_15], %18 {strides = array<i32>} : memref<32x256xbf16, #tpu.memory_space<vmem>>, vector<32x256xbf16>,
    } else {
    }
    return
  }
  func.func @transform_0(%arg0: i32, %arg1: i32, %arg2: i32) -> (i32, i32) {
    %c0_i32 = arith.constant 0 : i32
    return %arg0, %arg2 : i32, i32
  }
  func.func @transform_1(%arg0: i32, %arg1: i32, %arg2: i32) -> (i32, i32) {
    %c0_i32 = arith.constant 0 : i32
    return %arg2, %arg1 : i32, i32
  }
  func.func @transform_2(%arg0: i32, %arg1: i32, %arg2: i32) -> (i32, i32) {
    %c0_i32 = arith.constant 0 : i32
    %c0_i32_0 = arith.constant 0 : i32
    return %c0_i32, %arg1 : i32, i32
  }
  func.func @transform_3(%arg0: i32, %arg1: i32, %arg2: i32) -> (i32, i32) {
    %c0_i32 = arith.constant 0 : i32
    return %arg0, %arg1 : i32, i32
  }
}

module attributes {stable_mosaic.version = 11 : i64} {
  func.func @_matmul_bias_act_kernel(%arg0: i32, %arg1: i32, %arg2: i32, %arg3: memref<8x512xbf16, #tpu.memory_space<vmem>>, %arg4: memref<512x256xbf16, #tpu.memory_space<vmem>>, %arg5: memref<1x256xf32, #tpu.memory_space<vmem>>, %arg6: memref<8x256xbf16, #tpu.memory_space<vmem>>, %arg7: memref<8x256xf32, #tpu.memory_space<vmem>>) attributes {dimension_semantics = [#tpu.dimension_semantics<parallel>, #tpu.dimension_semantics<parallel>, #tpu.dimension_semantics<arbitrary>], iteration_bounds = array<i64: 1, 2, 8>, scalar_prefetch = 0 : i64, scratch_operands = 1 : i64, tpu.core_type = #tpu.core_type<tc>, window_params = [{transform_indices = @transform_0, window_bounds = array<i64: 8, 512>}, {transform_indices = @transform_1, window_bounds = array<i64: 512, 256>}, {transform_indices = @transform_2, window_bounds = array<i64: 1, 256>}, {transform_indices = @transform_3, window_bounds = array<i64: 8, 256>}]} {
    %c0_i32 = arith.constant 0 : i32
    %0 = arith.cmpi eq, %arg2, %c0_i32 : i32
    %1 = arith.extui %0 : i1 to i32
    %c0_i32_0 = arith.constant 0 : i32
    %2 = arith.cmpi ne, %1, %c0_i32_0 : i32
    scf.if %2 {
      %cst_9 = arith.constant 0.000000e+00 : f32
      %12 = vector.broadcast %cst_9 : f32 to vector<8x256xf32>
      %c0_10 = arith.constant 0 : index
      %c0_11 = arith.constant 0 : index
      %13 = vector.load %arg7[%c0_10, %c0_11] : memref<8x256xf32, #tpu.memory_space<vmem>>, vector<8x256xf32>
      tpu.vector_store %arg7[%c0_10, %c0_11], %12 {strides = array<i32>} : memref<8x256xf32, #tpu.memory_space<vmem>>, vector<8x256xf32>,
    } else {
    }
    %c0 = arith.constant 0 : index
    %c0_1 = arith.constant 0 : index
    %3 = vector.load %arg7[%c0, %c0_1] : memref<8x256xf32, #tpu.memory_space<vmem>>, vector<8x256xf32>
    %c0_2 = arith.constant 0 : index
    %c0_3 = arith.constant 0 : index
    %4 = vector.load %arg3[%c0_2, %c0_3] : memref<8x512xbf16, #tpu.memory_space<vmem>>, vector<8x512xbf16>
    %c0_4 = arith.constant 0 : index
    %c0_5 = arith.constant 0 : index
    %5 = vector.load %arg4[%c0_4, %c0_5] : memref<512x256xbf16, #tpu.memory_space<vmem>>, vector<512x256xbf16>
    %cst = arith.constant dense<0.000000e+00> : vector<8x256xf32>
    %6 = tpu.matmul %4, %5, %cst {dimension_numbers = #tpu.dot_dimension_numbers<[1], [0], [0], [1], [0, 0, 1, 1], [], []>} : vector<8x512xbf16>, vector<512x256xbf16>, vector<8x256xf32> -> vector<8x256xf32>
    %7 = arith.addf %3, %6 : vector<8x256xf32>
    %c0_6 = arith.constant 0 : index
    %c0_7 = arith.constant 0 : index
    %8 = vector.load %arg7[%c0_6, %c0_7] : memref<8x256xf32, #tpu.memory_space<vmem>>, vector<8x256xf32>
    tpu.vector_store %arg7[%c0_6, %c0_7], %7 {strides = array<i32>} : memref<8x256xf32, #tpu.memory_space<vmem>>, vector<8x256xf32>,
    %c7_i32 = arith.constant 7 : i32
    %9 = arith.cmpi eq, %arg2, %c7_i32 : i32
    %10 = arith.extui %9 : i1 to i32
    %c0_i32_8 = arith.constant 0 : i32
    %11 = arith.cmpi ne, %10, %c0_i32_8 : i32
    scf.if %11 {
      %c0_9 = arith.constant 0 : index
      %c0_10 = arith.constant 0 : index
      %12 = vector.load %arg7[%c0_9, %c0_10] : memref<8x256xf32, #tpu.memory_space<vmem>>, vector<8x256xf32>
      %c0_11 = arith.constant 0 : index
      %c0_12 = arith.constant 0 : index
      %13 = vector.load %arg5[%c0_11, %c0_12] : memref<1x256xf32, #tpu.memory_space<vmem>>, vector<1x256xf32>
      %14 = vector.broadcast %13 : vector<1x256xf32> to vector<8x256xf32>
      %15 = arith.addf %12, %14 : vector<8x256xf32>
      %cst_13 = arith.constant 0.000000e+00 : f32
      %16 = vector.broadcast %cst_13 : f32 to vector<8x256xf32>
      %17 = arith.maximumf %15, %16 : vector<8x256xf32>
      %18 = arith.truncf %17 : vector<8x256xf32> to vector<8x256xbf16>
      %c0_14 = arith.constant 0 : index
      %c0_15 = arith.constant 0 : index
      %19 = vector.load %arg6[%c0_14, %c0_15] : memref<8x256xbf16, #tpu.memory_space<vmem>>, vector<8x256xbf16>
      tpu.vector_store %arg6[%c0_14, %c0_15], %18 {strides = array<i32>} : memref<8x256xbf16, #tpu.memory_space<vmem>>, vector<8x256xbf16>,
    } else {
    }
    return
  }
  func.func @transform_0(%arg0: i32, %arg1: i32, %arg2: i32) -> (i32, i32) {
    %c0_i32 = arith.constant 0 : i32
    return %arg0, %arg2 : i32, i32
  }
  func.func @transform_1(%arg0: i32, %arg1: i32, %arg2: i32) -> (i32, i32) {
    %c0_i32 = arith.constant 0 : i32
    return %arg2, %arg1 : i32, i32
  }
  func.func @transform_2(%arg0: i32, %arg1: i32, %arg2: i32) -> (i32, i32) {
    %c0_i32 = arith.constant 0 : i32
    %c0_i32_0 = arith.constant 0 : i32
    return %c0_i32, %arg1 : i32, i32
  }
  func.func @transform_3(%arg0: i32, %arg1: i32, %arg2: i32) -> (i32, i32) {
    %c0_i32 = arith.constant 0 : i32
    return %arg0, %arg1 : i32, i32
  }
}

module attributes {stable_mosaic.version = 11 : i64} {
  func.func @_latent_kernel(%arg0: i32, %arg1: memref<8x512xbf16, #tpu.memory_space<vmem>>, %arg2: memref<512x256xbf16, #tpu.memory_space<vmem>>, %arg3: memref<1x256xf32, #tpu.memory_space<vmem>>, %arg4: memref<8x128xf32, #tpu.memory_space<vmem>>, %arg5: memref<8x128xf32, #tpu.memory_space<vmem>>, %arg6: memref<8x128xf32, #tpu.memory_space<vmem>>, %arg7: memref<8x128xf32, #tpu.memory_space<vmem>>, %arg8: memref<8x256xf32, #tpu.memory_space<vmem>>) attributes {dimension_semantics = [#tpu.dimension_semantics<arbitrary>], iteration_bounds = array<i64: 4>, scalar_prefetch = 0 : i64, scratch_operands = 1 : i64, tpu.core_type = #tpu.core_type<tc>, window_params = [{transform_indices = @transform_0, window_bounds = array<i64: 8, 512>}, {transform_indices = @transform_1, window_bounds = array<i64: 512, 256>}, {pipeline_mode = #tpu.pipeline_mode<synchronous>, transform_indices = @transform_2, window_bounds = array<i64: 1, 256>}, {pipeline_mode = #tpu.pipeline_mode<synchronous>, transform_indices = @transform_3, window_bounds = array<i64: 8, 128>}, {pipeline_mode = #tpu.pipeline_mode<synchronous>, transform_indices = @transform_4, window_bounds = array<i64: 8, 128>}, {pipeline_mode = #tpu.pipeline_mode<synchronous>, transform_indices = @transform_5, window_bounds = array<i64: 8, 128>}, {pipeline_mode = #tpu.pipeline_mode<synchronous>, transform_indices = @transform_6, window_bounds = array<i64: 8, 128>}]} {
    %c0_i32 = arith.constant 0 : i32
    %0 = arith.cmpi eq, %arg0, %c0_i32 : i32
    %1 = arith.extui %0 : i1 to i32
    %c0_i32_0 = arith.constant 0 : i32
    %2 = arith.cmpi ne, %1, %c0_i32_0 : i32
    scf.if %2 {
      %cst_9 = arith.constant 0.000000e+00 : f32
      %12 = vector.broadcast %cst_9 : f32 to vector<8x256xf32>
      %c0_10 = arith.constant 0 : index
      %c0_11 = arith.constant 0 : index
      %13 = vector.load %arg8[%c0_10, %c0_11] : memref<8x256xf32, #tpu.memory_space<vmem>>, vector<8x256xf32>
      tpu.vector_store %arg8[%c0_10, %c0_11], %12 {strides = array<i32>} : memref<8x256xf32, #tpu.memory_space<vmem>>, vector<8x256xf32>,
    } else {
    }
    %c0 = arith.constant 0 : index
    %c0_1 = arith.constant 0 : index
    %3 = vector.load %arg8[%c0, %c0_1] : memref<8x256xf32, #tpu.memory_space<vmem>>, vector<8x256xf32>
    %c0_2 = arith.constant 0 : index
    %c0_3 = arith.constant 0 : index
    %4 = vector.load %arg1[%c0_2, %c0_3] : memref<8x512xbf16, #tpu.memory_space<vmem>>, vector<8x512xbf16>
    %c0_4 = arith.constant 0 : index
    %c0_5 = arith.constant 0 : index
    %5 = vector.load %arg2[%c0_4, %c0_5] : memref<512x256xbf16, #tpu.memory_space<vmem>>, vector<512x256xbf16>
    %cst = arith.constant dense<0.000000e+00> : vector<8x256xf32>
    %6 = tpu.matmul %4, %5, %cst {dimension_numbers = #tpu.dot_dimension_numbers<[1], [0], [0], [1], [0, 0, 1, 1], [], []>} : vector<8x512xbf16>, vector<512x256xbf16>, vector<8x256xf32> -> vector<8x256xf32>
    %7 = arith.addf %3, %6 : vector<8x256xf32>
    %c0_6 = arith.constant 0 : index
    %c0_7 = arith.constant 0 : index
    %8 = vector.load %arg8[%c0_6, %c0_7] : memref<8x256xf32, #tpu.memory_space<vmem>>, vector<8x256xf32>
    tpu.vector_store %arg8[%c0_6, %c0_7], %7 {strides = array<i32>} : memref<8x256xf32, #tpu.memory_space<vmem>>, vector<8x256xf32>,
    %c3_i32 = arith.constant 3 : i32
    %9 = arith.cmpi eq, %arg0, %c3_i32 : i32
    %10 = arith.extui %9 : i1 to i32
    %c0_i32_8 = arith.constant 0 : i32
    %11 = arith.cmpi ne, %10, %c0_i32_8 : i32
    scf.if %11 {
      %c0_9 = arith.constant 0 : index
      %c0_10 = arith.constant 0 : index
      %12 = vector.load %arg8[%c0_9, %c0_10] : memref<8x256xf32, #tpu.memory_space<vmem>>, vector<8x256xf32>
      %c0_11 = arith.constant 0 : index
      %c0_12 = arith.constant 0 : index
      %13 = vector.load %arg3[%c0_11, %c0_12] : memref<1x256xf32, #tpu.memory_space<vmem>>, vector<1x256xf32>
      %14 = vector.broadcast %13 : vector<1x256xf32> to vector<8x256xf32>
      %15 = arith.addf %12, %14 : vector<8x256xf32>
      %16 = vector.extract_strided_slice %15 {offsets = [0, 0], sizes = [8, 128], strides = [1, 1]} : vector<8x256xf32> to vector<8x128xf32>
      %17 = vector.extract_strided_slice %15 {offsets = [0, 128], sizes = [8, 128], strides = [1, 1]} : vector<8x256xf32> to vector<8x128xf32>
      %c0_13 = arith.constant 0 : index
      %c0_14 = arith.constant 0 : index
      %18 = vector.load %arg4[%c0_13, %c0_14] : memref<8x128xf32, #tpu.memory_space<vmem>>, vector<8x128xf32>
      %cst_15 = arith.constant 5.000000e-01 : f32
      %19 = vector.broadcast %cst_15 : f32 to vector<8x128xf32>
      %20 = arith.mulf %19, %17 : vector<8x128xf32>
      %21 = math.exp %20 : vector<8x128xf32>
      %22 = arith.mulf %18, %21 : vector<8x128xf32>
      %23 = arith.addf %16, %22 : vector<8x128xf32>
      %c0_16 = arith.constant 0 : index
      %c0_17 = arith.constant 0 : index
      %24 = vector.load %arg5[%c0_16, %c0_17] : memref<8x128xf32, #tpu.memory_space<vmem>>, vector<8x128xf32>
      tpu.vector_store %arg5[%c0_16, %c0_17], %16 {strides = array<i32>} : memref<8x128xf32, #tpu.memory_space<vmem>>, vector<8x128xf32>,
      %c0_18 = arith.constant 0 : index
      %c0_19 = arith.constant 0 : index
      %25 = vector.load %arg6[%c0_18, %c0_19] : memref<8x128xf32, #tpu.memory_space<vmem>>, vector<8x128xf32>
      tpu.vector_store %arg6[%c0_18, %c0_19], %17 {strides = array<i32>} : memref<8x128xf32, #tpu.memory_space<vmem>>, vector<8x128xf32>,
      %c0_20 = arith.constant 0 : index
      %c0_21 = arith.constant 0 : index
      %26 = vector.load %arg7[%c0_20, %c0_21] : memref<8x128xf32, #tpu.memory_space<vmem>>, vector<8x128xf32>
      tpu.vector_store %arg7[%c0_20, %c0_21], %23 {strides = array<i32>} : memref<8x128xf32, #tpu.memory_space<vmem>>, vector<8x128xf32>,
    } else {
    }
    return
  }
  func.func @transform_0(%arg0: i32) -> (i32, i32) {
    %c0_i32 = arith.constant 0 : i32
    %c0_i32_0 = arith.constant 0 : i32
    return %c0_i32, %arg0 : i32, i32
  }
  func.func @transform_1(%arg0: i32) -> (i32, i32) {
    %c0_i32 = arith.constant 0 : i32
    %c0_i32_0 = arith.constant 0 : i32
    return %arg0, %c0_i32 : i32, i32
  }
  func.func @transform_2(%arg0: i32) -> (i32, i32) {
    %c0_i32 = arith.constant 0 : i32
    %c0_i32_0 = arith.constant 0 : i32
    %c0_i32_1 = arith.constant 0 : i32
    return %c0_i32, %c0_i32_0 : i32, i32
  }
  func.func @transform_3(%arg0: i32) -> (i32, i32) {
    %c0_i32 = arith.constant 0 : i32
    %c0_i32_0 = arith.constant 0 : i32
    %c0_i32_1 = arith.constant 0 : i32
    return %c0_i32, %c0_i32_0 : i32, i32
  }
  func.func @transform_4(%arg0: i32) -> (i32, i32) {
    %c0_i32 = arith.constant 0 : i32
    %c0_i32_0 = arith.constant 0 : i32
    %c0_i32_1 = arith.constant 0 : i32
    return %c0_i32, %c0_i32_0 : i32, i32
  }
  func.func @transform_5(%arg0: i32) -> (i32, i32) {
    %c0_i32 = arith.constant 0 : i32
    %c0_i32_0 = arith.constant 0 : i32
    %c0_i32_1 = arith.constant 0 : i32
    return %c0_i32, %c0_i32_0 : i32, i32
  }
  func.func @transform_6(%arg0: i32) -> (i32, i32) {
    %c0_i32 = arith.constant 0 : i32
    %c0_i32_0 = arith.constant 0 : i32
    %c0_i32_1 = arith.constant 0 : i32
    return %c0_i32, %c0_i32_0 : i32, i32
  }
}

module attributes {stable_mosaic.version = 11 : i64} {
  func.func @_matmul_bias_act_kernel(%arg0: i32, %arg1: i32, %arg2: i32, %arg3: memref<8x128xbf16, #tpu.memory_space<vmem>>, %arg4: memref<128x256xbf16, #tpu.memory_space<vmem>>, %arg5: memref<1x256xf32, #tpu.memory_space<vmem>>, %arg6: memref<8x256xbf16, #tpu.memory_space<vmem>>, %arg7: memref<8x256xf32, #tpu.memory_space<vmem>>) attributes {dimension_semantics = [#tpu.dimension_semantics<parallel>, #tpu.dimension_semantics<parallel>, #tpu.dimension_semantics<arbitrary>], iteration_bounds = array<i64: 1, 8, 1>, scalar_prefetch = 0 : i64, scratch_operands = 1 : i64, tpu.core_type = #tpu.core_type<tc>, window_params = [{transform_indices = @transform_0, window_bounds = array<i64: 8, 128>}, {transform_indices = @transform_1, window_bounds = array<i64: 128, 256>}, {transform_indices = @transform_2, window_bounds = array<i64: 1, 256>}, {transform_indices = @transform_3, window_bounds = array<i64: 8, 256>}]} {
    %c0_i32 = arith.constant 0 : i32
    %0 = arith.cmpi eq, %arg2, %c0_i32 : i32
    %1 = arith.extui %0 : i1 to i32
    %c0_i32_0 = arith.constant 0 : i32
    %2 = arith.cmpi ne, %1, %c0_i32_0 : i32
    scf.if %2 {
      %cst_10 = arith.constant 0.000000e+00 : f32
      %12 = vector.broadcast %cst_10 : f32 to vector<8x256xf32>
      %c0_11 = arith.constant 0 : index
      %c0_12 = arith.constant 0 : index
      %13 = vector.load %arg7[%c0_11, %c0_12] : memref<8x256xf32, #tpu.memory_space<vmem>>, vector<8x256xf32>
      tpu.vector_store %arg7[%c0_11, %c0_12], %12 {strides = array<i32>} : memref<8x256xf32, #tpu.memory_space<vmem>>, vector<8x256xf32>,
    } else {
    }
    %c0 = arith.constant 0 : index
    %c0_1 = arith.constant 0 : index
    %3 = vector.load %arg7[%c0, %c0_1] : memref<8x256xf32, #tpu.memory_space<vmem>>, vector<8x256xf32>
    %c0_2 = arith.constant 0 : index
    %c0_3 = arith.constant 0 : index
    %4 = vector.load %arg3[%c0_2, %c0_3] : memref<8x128xbf16, #tpu.memory_space<vmem>>, vector<8x128xbf16>
    %c0_4 = arith.constant 0 : index
    %c0_5 = arith.constant 0 : index
    %5 = vector.load %arg4[%c0_4, %c0_5] : memref<128x256xbf16, #tpu.memory_space<vmem>>, vector<128x256xbf16>
    %cst = arith.constant dense<0.000000e+00> : vector<8x256xf32>
    %6 = tpu.matmul %4, %5, %cst {dimension_numbers = #tpu.dot_dimension_numbers<[1], [0], [0], [1], [0, 0, 1, 1], [], []>} : vector<8x128xbf16>, vector<128x256xbf16>, vector<8x256xf32> -> vector<8x256xf32>
    %7 = arith.addf %3, %6 : vector<8x256xf32>
    %c0_6 = arith.constant 0 : index
    %c0_7 = arith.constant 0 : index
    %8 = vector.load %arg7[%c0_6, %c0_7] : memref<8x256xf32, #tpu.memory_space<vmem>>, vector<8x256xf32>
    tpu.vector_store %arg7[%c0_6, %c0_7], %7 {strides = array<i32>} : memref<8x256xf32, #tpu.memory_space<vmem>>, vector<8x256xf32>,
    %c0_i32_8 = arith.constant 0 : i32
    %9 = arith.cmpi eq, %arg2, %c0_i32_8 : i32
    %10 = arith.extui %9 : i1 to i32
    %c0_i32_9 = arith.constant 0 : i32
    %11 = arith.cmpi ne, %10, %c0_i32_9 : i32
    scf.if %11 {
      %c0_10 = arith.constant 0 : index
      %c0_11 = arith.constant 0 : index
      %12 = vector.load %arg7[%c0_10, %c0_11] : memref<8x256xf32, #tpu.memory_space<vmem>>, vector<8x256xf32>
      %c0_12 = arith.constant 0 : index
      %c0_13 = arith.constant 0 : index
      %13 = vector.load %arg5[%c0_12, %c0_13] : memref<1x256xf32, #tpu.memory_space<vmem>>, vector<1x256xf32>
      %14 = vector.broadcast %13 : vector<1x256xf32> to vector<8x256xf32>
      %15 = arith.addf %12, %14 : vector<8x256xf32>
      %16 = arith.truncf %15 : vector<8x256xf32> to vector<8x256xbf16>
      %c0_14 = arith.constant 0 : index
      %c0_15 = arith.constant 0 : index
      %17 = vector.load %arg6[%c0_14, %c0_15] : memref<8x256xbf16, #tpu.memory_space<vmem>>, vector<8x256xbf16>
      tpu.vector_store %arg6[%c0_14, %c0_15], %16 {strides = array<i32>} : memref<8x256xbf16, #tpu.memory_space<vmem>>, vector<8x256xbf16>,
    } else {
    }
    return
  }
  func.func @transform_0(%arg0: i32, %arg1: i32, %arg2: i32) -> (i32, i32) {
    %c0_i32 = arith.constant 0 : i32
    return %arg0, %arg2 : i32, i32
  }
  func.func @transform_1(%arg0: i32, %arg1: i32, %arg2: i32) -> (i32, i32) {
    %c0_i32 = arith.constant 0 : i32
    return %arg2, %arg1 : i32, i32
  }
  func.func @transform_2(%arg0: i32, %arg1: i32, %arg2: i32) -> (i32, i32) {
    %c0_i32 = arith.constant 0 : i32
    %c0_i32_0 = arith.constant 0 : i32
    return %c0_i32, %arg1 : i32, i32
  }
  func.func @transform_3(%arg0: i32, %arg1: i32, %arg2: i32) -> (i32, i32) {
    %c0_i32 = arith.constant 0 : i32
    return %arg0, %arg1 : i32, i32
  }
}

module attributes {stable_mosaic.version = 11 : i64} {
  func.func @_matmul_bias_act_kernel(%arg0: i32, %arg1: i32, %arg2: i32, %arg3: memref<8x512xbf16, #tpu.memory_space<vmem>>, %arg4: memref<512x256xbf16, #tpu.memory_space<vmem>>, %arg5: memref<1x256xf32, #tpu.memory_space<vmem>>, %arg6: memref<8x256xbf16, #tpu.memory_space<vmem>>, %arg7: memref<8x256xf32, #tpu.memory_space<vmem>>) attributes {dimension_semantics = [#tpu.dimension_semantics<parallel>, #tpu.dimension_semantics<parallel>, #tpu.dimension_semantics<arbitrary>], iteration_bounds = array<i64: 1, 1, 4>, scalar_prefetch = 0 : i64, scratch_operands = 1 : i64, tpu.core_type = #tpu.core_type<tc>, window_params = [{transform_indices = @transform_0, window_bounds = array<i64: 8, 512>}, {transform_indices = @transform_1, window_bounds = array<i64: 512, 256>}, {transform_indices = @transform_2, window_bounds = array<i64: 1, 256>}, {transform_indices = @transform_3, window_bounds = array<i64: 8, 256>}]} {
    %c0_i32 = arith.constant 0 : i32
    %0 = arith.cmpi eq, %arg2, %c0_i32 : i32
    %1 = arith.extui %0 : i1 to i32
    %c0_i32_0 = arith.constant 0 : i32
    %2 = arith.cmpi ne, %1, %c0_i32_0 : i32
    scf.if %2 {
      %cst_9 = arith.constant 0.000000e+00 : f32
      %12 = vector.broadcast %cst_9 : f32 to vector<8x256xf32>
      %c0_10 = arith.constant 0 : index
      %c0_11 = arith.constant 0 : index
      %13 = vector.load %arg7[%c0_10, %c0_11] : memref<8x256xf32, #tpu.memory_space<vmem>>, vector<8x256xf32>
      tpu.vector_store %arg7[%c0_10, %c0_11], %12 {strides = array<i32>} : memref<8x256xf32, #tpu.memory_space<vmem>>, vector<8x256xf32>,
    } else {
    }
    %c0 = arith.constant 0 : index
    %c0_1 = arith.constant 0 : index
    %3 = vector.load %arg7[%c0, %c0_1] : memref<8x256xf32, #tpu.memory_space<vmem>>, vector<8x256xf32>
    %c0_2 = arith.constant 0 : index
    %c0_3 = arith.constant 0 : index
    %4 = vector.load %arg3[%c0_2, %c0_3] : memref<8x512xbf16, #tpu.memory_space<vmem>>, vector<8x512xbf16>
    %c0_4 = arith.constant 0 : index
    %c0_5 = arith.constant 0 : index
    %5 = vector.load %arg4[%c0_4, %c0_5] : memref<512x256xbf16, #tpu.memory_space<vmem>>, vector<512x256xbf16>
    %cst = arith.constant dense<0.000000e+00> : vector<8x256xf32>
    %6 = tpu.matmul %4, %5, %cst {dimension_numbers = #tpu.dot_dimension_numbers<[1], [0], [0], [1], [0, 0, 1, 1], [], []>} : vector<8x512xbf16>, vector<512x256xbf16>, vector<8x256xf32> -> vector<8x256xf32>
    %7 = arith.addf %3, %6 : vector<8x256xf32>
    %c0_6 = arith.constant 0 : index
    %c0_7 = arith.constant 0 : index
    %8 = vector.load %arg7[%c0_6, %c0_7] : memref<8x256xf32, #tpu.memory_space<vmem>>, vector<8x256xf32>
    tpu.vector_store %arg7[%c0_6, %c0_7], %7 {strides = array<i32>} : memref<8x256xf32, #tpu.memory_space<vmem>>, vector<8x256xf32>,
    %c3_i32 = arith.constant 3 : i32
    %9 = arith.cmpi eq, %arg2, %c3_i32 : i32
    %10 = arith.extui %9 : i1 to i32
    %c0_i32_8 = arith.constant 0 : i32
    %11 = arith.cmpi ne, %10, %c0_i32_8 : i32
    scf.if %11 {
      %c0_9 = arith.constant 0 : index
      %c0_10 = arith.constant 0 : index
      %12 = vector.load %arg7[%c0_9, %c0_10] : memref<8x256xf32, #tpu.memory_space<vmem>>, vector<8x256xf32>
      %c0_11 = arith.constant 0 : index
      %c0_12 = arith.constant 0 : index
      %13 = vector.load %arg5[%c0_11, %c0_12] : memref<1x256xf32, #tpu.memory_space<vmem>>, vector<1x256xf32>
      %14 = vector.broadcast %13 : vector<1x256xf32> to vector<8x256xf32>
      %15 = arith.addf %12, %14 : vector<8x256xf32>
      %cst_13 = arith.constant 0.000000e+00 : f32
      %16 = vector.broadcast %cst_13 : f32 to vector<8x256xf32>
      %17 = arith.maximumf %15, %16 : vector<8x256xf32>
      %18 = arith.truncf %17 : vector<8x256xf32> to vector<8x256xbf16>
      %c0_14 = arith.constant 0 : index
      %c0_15 = arith.constant 0 : index
      %19 = vector.load %arg6[%c0_14, %c0_15] : memref<8x256xbf16, #tpu.memory_space<vmem>>, vector<8x256xbf16>
      tpu.vector_store %arg6[%c0_14, %c0_15], %18 {strides = array<i32>} : memref<8x256xbf16, #tpu.memory_space<vmem>>, vector<8x256xbf16>,
    } else {
    }
    return
  }
  func.func @transform_0(%arg0: i32, %arg1: i32, %arg2: i32) -> (i32, i32) {
    %c0_i32 = arith.constant 0 : i32
    return %arg0, %arg2 : i32, i32
  }
  func.func @transform_1(%arg0: i32, %arg1: i32, %arg2: i32) -> (i32, i32) {
    %c0_i32 = arith.constant 0 : i32
    return %arg2, %arg1 : i32, i32
  }
  func.func @transform_2(%arg0: i32, %arg1: i32, %arg2: i32) -> (i32, i32) {
    %c0_i32 = arith.constant 0 : i32
    %c0_i32_0 = arith.constant 0 : i32
    return %c0_i32, %arg1 : i32, i32
  }
  func.func @transform_3(%arg0: i32, %arg1: i32, %arg2: i32) -> (i32, i32) {
    %c0_i32 = arith.constant 0 : i32
    return %arg0, %arg1 : i32, i32
  }
}

module attributes {stable_mosaic.version = 11 : i64} {
  func.func @_matmul_bias_act_kernel(%arg0: i32, %arg1: i32, %arg2: i32, %arg3: memref<32x512xbf16, #tpu.memory_space<vmem>>, %arg4: memref<512x128xbf16, #tpu.memory_space<vmem>>, %arg5: memref<1x128xf32, #tpu.memory_space<vmem>>, %arg6: memref<32x128xbf16, #tpu.memory_space<vmem>>, %arg7: memref<32x128xf32, #tpu.memory_space<vmem>>) attributes {dimension_semantics = [#tpu.dimension_semantics<parallel>, #tpu.dimension_semantics<parallel>, #tpu.dimension_semantics<arbitrary>], iteration_bounds = array<i64: 1, 1, 2>, scalar_prefetch = 0 : i64, scratch_operands = 1 : i64, tpu.core_type = #tpu.core_type<tc>, window_params = [{transform_indices = @transform_0, window_bounds = array<i64: 32, 512>}, {transform_indices = @transform_1, window_bounds = array<i64: 512, 128>}, {transform_indices = @transform_2, window_bounds = array<i64: 1, 128>}, {transform_indices = @transform_3, window_bounds = array<i64: 32, 128>}]} {
    %c0_i32 = arith.constant 0 : i32
    %0 = arith.cmpi eq, %arg2, %c0_i32 : i32
    %1 = arith.extui %0 : i1 to i32
    %c0_i32_0 = arith.constant 0 : i32
    %2 = arith.cmpi ne, %1, %c0_i32_0 : i32
    scf.if %2 {
      %cst_9 = arith.constant 0.000000e+00 : f32
      %12 = vector.broadcast %cst_9 : f32 to vector<32x128xf32>
      %c0_10 = arith.constant 0 : index
      %c0_11 = arith.constant 0 : index
      %13 = vector.load %arg7[%c0_10, %c0_11] : memref<32x128xf32, #tpu.memory_space<vmem>>, vector<32x128xf32>
      tpu.vector_store %arg7[%c0_10, %c0_11], %12 {strides = array<i32>} : memref<32x128xf32, #tpu.memory_space<vmem>>, vector<32x128xf32>,
    } else {
    }
    %c0 = arith.constant 0 : index
    %c0_1 = arith.constant 0 : index
    %3 = vector.load %arg7[%c0, %c0_1] : memref<32x128xf32, #tpu.memory_space<vmem>>, vector<32x128xf32>
    %c0_2 = arith.constant 0 : index
    %c0_3 = arith.constant 0 : index
    %4 = vector.load %arg3[%c0_2, %c0_3] : memref<32x512xbf16, #tpu.memory_space<vmem>>, vector<32x512xbf16>
    %c0_4 = arith.constant 0 : index
    %c0_5 = arith.constant 0 : index
    %5 = vector.load %arg4[%c0_4, %c0_5] : memref<512x128xbf16, #tpu.memory_space<vmem>>, vector<512x128xbf16>
    %cst = arith.constant dense<0.000000e+00> : vector<32x128xf32>
    %6 = tpu.matmul %4, %5, %cst {dimension_numbers = #tpu.dot_dimension_numbers<[1], [0], [0], [1], [0, 0, 1, 1], [], []>} : vector<32x512xbf16>, vector<512x128xbf16>, vector<32x128xf32> -> vector<32x128xf32>
    %7 = arith.addf %3, %6 : vector<32x128xf32>
    %c0_6 = arith.constant 0 : index
    %c0_7 = arith.constant 0 : index
    %8 = vector.load %arg7[%c0_6, %c0_7] : memref<32x128xf32, #tpu.memory_space<vmem>>, vector<32x128xf32>
    tpu.vector_store %arg7[%c0_6, %c0_7], %7 {strides = array<i32>} : memref<32x128xf32, #tpu.memory_space<vmem>>, vector<32x128xf32>,
    %c1_i32 = arith.constant 1 : i32
    %9 = arith.cmpi eq, %arg2, %c1_i32 : i32
    %10 = arith.extui %9 : i1 to i32
    %c0_i32_8 = arith.constant 0 : i32
    %11 = arith.cmpi ne, %10, %c0_i32_8 : i32
    scf.if %11 {
      %c0_9 = arith.constant 0 : index
      %c0_10 = arith.constant 0 : index
      %12 = vector.load %arg7[%c0_9, %c0_10] : memref<32x128xf32, #tpu.memory_space<vmem>>, vector<32x128xf32>
      %c0_11 = arith.constant 0 : index
      %c0_12 = arith.constant 0 : index
      %13 = vector.load %arg5[%c0_11, %c0_12] : memref<1x128xf32, #tpu.memory_space<vmem>>, vector<1x128xf32>
      %14 = vector.broadcast %13 : vector<1x128xf32> to vector<32x128xf32>
      %15 = arith.addf %12, %14 : vector<32x128xf32>
      %cst_13 = arith.constant 0.000000e+00 : f32
      %16 = vector.broadcast %cst_13 : f32 to vector<32x128xf32>
      %17 = arith.maximumf %15, %16 : vector<32x128xf32>
      %18 = arith.truncf %17 : vector<32x128xf32> to vector<32x128xbf16>
      %c0_14 = arith.constant 0 : index
      %c0_15 = arith.constant 0 : index
      %19 = vector.load %arg6[%c0_14, %c0_15] : memref<32x128xbf16, #tpu.memory_space<vmem>>, vector<32x128xbf16>
      tpu.vector_store %arg6[%c0_14, %c0_15], %18 {strides = array<i32>} : memref<32x128xbf16, #tpu.memory_space<vmem>>, vector<32x128xbf16>,
    } else {
    }
    return
  }
  func.func @transform_0(%arg0: i32, %arg1: i32, %arg2: i32) -> (i32, i32) {
    %c0_i32 = arith.constant 0 : i32
    return %arg0, %arg2 : i32, i32
  }
  func.func @transform_1(%arg0: i32, %arg1: i32, %arg2: i32) -> (i32, i32) {
    %c0_i32 = arith.constant 0 : i32
    return %arg2, %arg1 : i32, i32
  }
  func.func @transform_2(%arg0: i32, %arg1: i32, %arg2: i32) -> (i32, i32) {
    %c0_i32 = arith.constant 0 : i32
    %c0_i32_0 = arith.constant 0 : i32
    return %c0_i32, %arg1 : i32, i32
  }
  func.func @transform_3(%arg0: i32, %arg1: i32, %arg2: i32) -> (i32, i32) {
    %c0_i32 = arith.constant 0 : i32
    return %arg0, %arg1 : i32, i32
  }
}

module attributes {stable_mosaic.version = 11 : i64} {
  func.func @_matmul_bias_act_kernel(%arg0: i32, %arg1: i32, %arg2: i32, %arg3: memref<128x512xbf16, #tpu.memory_space<vmem>>, %arg4: memref<512x128xbf16, #tpu.memory_space<vmem>>, %arg5: memref<1x128xf32, #tpu.memory_space<vmem>>, %arg6: memref<128x128xbf16, #tpu.memory_space<vmem>>, %arg7: memref<128x128xf32, #tpu.memory_space<vmem>>) attributes {dimension_semantics = [#tpu.dimension_semantics<parallel>, #tpu.dimension_semantics<parallel>, #tpu.dimension_semantics<arbitrary>], iteration_bounds = array<i64: 1, 1, 1>, scalar_prefetch = 0 : i64, scratch_operands = 1 : i64, tpu.core_type = #tpu.core_type<tc>, window_params = [{transform_indices = @transform_0, window_bounds = array<i64: 128, 512>}, {transform_indices = @transform_1, window_bounds = array<i64: 512, 128>}, {transform_indices = @transform_2, window_bounds = array<i64: 1, 128>}, {transform_indices = @transform_3, window_bounds = array<i64: 128, 128>}]} {
    %c0_i32 = arith.constant 0 : i32
    %0 = arith.cmpi eq, %arg2, %c0_i32 : i32
    %1 = arith.extui %0 : i1 to i32
    %c0_i32_0 = arith.constant 0 : i32
    %2 = arith.cmpi ne, %1, %c0_i32_0 : i32
    scf.if %2 {
      %cst_10 = arith.constant 0.000000e+00 : f32
      %12 = vector.broadcast %cst_10 : f32 to vector<128x128xf32>
      %c0_11 = arith.constant 0 : index
      %c0_12 = arith.constant 0 : index
      %13 = vector.load %arg7[%c0_11, %c0_12] : memref<128x128xf32, #tpu.memory_space<vmem>>, vector<128x128xf32>
      tpu.vector_store %arg7[%c0_11, %c0_12], %12 {strides = array<i32>} : memref<128x128xf32, #tpu.memory_space<vmem>>, vector<128x128xf32>,
    } else {
    }
    %c0 = arith.constant 0 : index
    %c0_1 = arith.constant 0 : index
    %3 = vector.load %arg7[%c0, %c0_1] : memref<128x128xf32, #tpu.memory_space<vmem>>, vector<128x128xf32>
    %c0_2 = arith.constant 0 : index
    %c0_3 = arith.constant 0 : index
    %4 = vector.load %arg3[%c0_2, %c0_3] : memref<128x512xbf16, #tpu.memory_space<vmem>>, vector<128x512xbf16>
    %c0_4 = arith.constant 0 : index
    %c0_5 = arith.constant 0 : index
    %5 = vector.load %arg4[%c0_4, %c0_5] : memref<512x128xbf16, #tpu.memory_space<vmem>>, vector<512x128xbf16>
    %cst = arith.constant dense<0.000000e+00> : vector<128x128xf32>
    %6 = tpu.matmul %4, %5, %cst {dimension_numbers = #tpu.dot_dimension_numbers<[1], [0], [0], [1], [0, 0, 1, 1], [], []>} : vector<128x512xbf16>, vector<512x128xbf16>, vector<128x128xf32> -> vector<128x128xf32>
    %7 = arith.addf %3, %6 : vector<128x128xf32>
    %c0_6 = arith.constant 0 : index
    %c0_7 = arith.constant 0 : index
    %8 = vector.load %arg7[%c0_6, %c0_7] : memref<128x128xf32, #tpu.memory_space<vmem>>, vector<128x128xf32>
    tpu.vector_store %arg7[%c0_6, %c0_7], %7 {strides = array<i32>} : memref<128x128xf32, #tpu.memory_space<vmem>>, vector<128x128xf32>,
    %c0_i32_8 = arith.constant 0 : i32
    %9 = arith.cmpi eq, %arg2, %c0_i32_8 : i32
    %10 = arith.extui %9 : i1 to i32
    %c0_i32_9 = arith.constant 0 : i32
    %11 = arith.cmpi ne, %10, %c0_i32_9 : i32
    scf.if %11 {
      %c0_10 = arith.constant 0 : index
      %c0_11 = arith.constant 0 : index
      %12 = vector.load %arg7[%c0_10, %c0_11] : memref<128x128xf32, #tpu.memory_space<vmem>>, vector<128x128xf32>
      %c0_12 = arith.constant 0 : index
      %c0_13 = arith.constant 0 : index
      %13 = vector.load %arg5[%c0_12, %c0_13] : memref<1x128xf32, #tpu.memory_space<vmem>>, vector<1x128xf32>
      %14 = vector.broadcast %13 : vector<1x128xf32> to vector<128x128xf32>
      %15 = arith.addf %12, %14 : vector<128x128xf32>
      %cst_14 = arith.constant 0.000000e+00 : f32
      %16 = vector.broadcast %cst_14 : f32 to vector<128x128xf32>
      %17 = arith.maximumf %15, %16 : vector<128x128xf32>
      %18 = arith.truncf %17 : vector<128x128xf32> to vector<128x128xbf16>
      %c0_15 = arith.constant 0 : index
      %c0_16 = arith.constant 0 : index
      %19 = vector.load %arg6[%c0_15, %c0_16] : memref<128x128xbf16, #tpu.memory_space<vmem>>, vector<128x128xbf16>
      tpu.vector_store %arg6[%c0_15, %c0_16], %18 {strides = array<i32>} : memref<128x128xbf16, #tpu.memory_space<vmem>>, vector<128x128xbf16>,
    } else {
    }
    return
  }
  func.func @transform_0(%arg0: i32, %arg1: i32, %arg2: i32) -> (i32, i32) {
    %c0_i32 = arith.constant 0 : i32
    return %arg0, %arg2 : i32, i32
  }
  func.func @transform_1(%arg0: i32, %arg1: i32, %arg2: i32) -> (i32, i32) {
    %c0_i32 = arith.constant 0 : i32
    return %arg2, %arg1 : i32, i32
  }
  func.func @transform_2(%arg0: i32, %arg1: i32, %arg2: i32) -> (i32, i32) {
    %c0_i32 = arith.constant 0 : i32
    %c0_i32_0 = arith.constant 0 : i32
    return %c0_i32, %arg1 : i32, i32
  }
  func.func @transform_3(%arg0: i32, %arg1: i32, %arg2: i32) -> (i32, i32) {
    %c0_i32 = arith.constant 0 : i32
    return %arg0, %arg1 : i32, i32
  }
}

module attributes {stable_mosaic.version = 11 : i64} {
  func.func @_matmul_bias_act_kernel(%arg0: i32, %arg1: i32, %arg2: i32, %arg3: memref<256x256xbf16, #tpu.memory_space<vmem>>, %arg4: memref<256x128xbf16, #tpu.memory_space<vmem>>, %arg5: memref<1x128xf32, #tpu.memory_space<vmem>>, %arg6: memref<256x128xf32, #tpu.memory_space<vmem>>, %arg7: memref<256x128xf32, #tpu.memory_space<vmem>>) attributes {dimension_semantics = [#tpu.dimension_semantics<parallel>, #tpu.dimension_semantics<parallel>, #tpu.dimension_semantics<arbitrary>], iteration_bounds = array<i64: 2, 1, 1>, scalar_prefetch = 0 : i64, scratch_operands = 1 : i64, tpu.core_type = #tpu.core_type<tc>, window_params = [{transform_indices = @transform_0, window_bounds = array<i64: 256, 256>}, {transform_indices = @transform_1, window_bounds = array<i64: 256, 128>}, {transform_indices = @transform_2, window_bounds = array<i64: 1, 128>}, {transform_indices = @transform_3, window_bounds = array<i64: 256, 128>}]} {
    %c0_i32 = arith.constant 0 : i32
    %0 = arith.cmpi eq, %arg2, %c0_i32 : i32
    %1 = arith.extui %0 : i1 to i32
    %c0_i32_0 = arith.constant 0 : i32
    %2 = arith.cmpi ne, %1, %c0_i32_0 : i32
    scf.if %2 {
      %cst_10 = arith.constant 0.000000e+00 : f32
      %12 = vector.broadcast %cst_10 : f32 to vector<256x128xf32>
      %c0_11 = arith.constant 0 : index
      %c0_12 = arith.constant 0 : index
      %13 = vector.load %arg7[%c0_11, %c0_12] : memref<256x128xf32, #tpu.memory_space<vmem>>, vector<256x128xf32>
      tpu.vector_store %arg7[%c0_11, %c0_12], %12 {strides = array<i32>} : memref<256x128xf32, #tpu.memory_space<vmem>>, vector<256x128xf32>,
    } else {
    }
    %c0 = arith.constant 0 : index
    %c0_1 = arith.constant 0 : index
    %3 = vector.load %arg7[%c0, %c0_1] : memref<256x128xf32, #tpu.memory_space<vmem>>, vector<256x128xf32>
    %c0_2 = arith.constant 0 : index
    %c0_3 = arith.constant 0 : index
    %4 = vector.load %arg3[%c0_2, %c0_3] : memref<256x256xbf16, #tpu.memory_space<vmem>>, vector<256x256xbf16>
    %c0_4 = arith.constant 0 : index
    %c0_5 = arith.constant 0 : index
    %5 = vector.load %arg4[%c0_4, %c0_5] : memref<256x128xbf16, #tpu.memory_space<vmem>>, vector<256x128xbf16>
    %cst = arith.constant dense<0.000000e+00> : vector<256x128xf32>
    %6 = tpu.matmul %4, %5, %cst {dimension_numbers = #tpu.dot_dimension_numbers<[1], [0], [0], [1], [0, 0, 1, 1], [], []>} : vector<256x256xbf16>, vector<256x128xbf16>, vector<256x128xf32> -> vector<256x128xf32>
    %7 = arith.addf %3, %6 : vector<256x128xf32>
    %c0_6 = arith.constant 0 : index
    %c0_7 = arith.constant 0 : index
    %8 = vector.load %arg7[%c0_6, %c0_7] : memref<256x128xf32, #tpu.memory_space<vmem>>, vector<256x128xf32>
    tpu.vector_store %arg7[%c0_6, %c0_7], %7 {strides = array<i32>} : memref<256x128xf32, #tpu.memory_space<vmem>>, vector<256x128xf32>,
    %c0_i32_8 = arith.constant 0 : i32
    %9 = arith.cmpi eq, %arg2, %c0_i32_8 : i32
    %10 = arith.extui %9 : i1 to i32
    %c0_i32_9 = arith.constant 0 : i32
    %11 = arith.cmpi ne, %10, %c0_i32_9 : i32
    scf.if %11 {
      %c0_10 = arith.constant 0 : index
      %c0_11 = arith.constant 0 : index
      %12 = vector.load %arg7[%c0_10, %c0_11] : memref<256x128xf32, #tpu.memory_space<vmem>>, vector<256x128xf32>
      %c0_12 = arith.constant 0 : index
      %c0_13 = arith.constant 0 : index
      %13 = vector.load %arg5[%c0_12, %c0_13] : memref<1x128xf32, #tpu.memory_space<vmem>>, vector<1x128xf32>
      %14 = vector.broadcast %13 : vector<1x128xf32> to vector<256x128xf32>
      %15 = arith.addf %12, %14 : vector<256x128xf32>
      %16 = arith.negf %15 : vector<256x128xf32>
      %17 = math.exp %16 : vector<256x128xf32>
      %cst_14 = arith.constant 1.000000e+00 : f32
      %18 = vector.broadcast %cst_14 : f32 to vector<256x128xf32>
      %19 = arith.addf %18, %17 : vector<256x128xf32>
      %20 = arith.divf %18, %19 : vector<256x128xf32>
      %c0_15 = arith.constant 0 : index
      %c0_16 = arith.constant 0 : index
      %21 = vector.load %arg6[%c0_15, %c0_16] : memref<256x128xf32, #tpu.memory_space<vmem>>, vector<256x128xf32>
      tpu.vector_store %arg6[%c0_15, %c0_16], %20 {strides = array<i32>} : memref<256x128xf32, #tpu.memory_space<vmem>>, vector<256x128xf32>,
    } else {
    }
    return
  }
  func.func @transform_0(%arg0: i32, %arg1: i32, %arg2: i32) -> (i32, i32) {
    %c0_i32 = arith.constant 0 : i32
    return %arg0, %arg2 : i32, i32
  }
  func.func @transform_1(%arg0: i32, %arg1: i32, %arg2: i32) -> (i32, i32) {
    %c0_i32 = arith.constant 0 : i32
    return %arg2, %arg1 : i32, i32
  }
  func.func @transform_2(%arg0: i32, %arg1: i32, %arg2: i32) -> (i32, i32) {
    %c0_i32 = arith.constant 0 : i32
    %c0_i32_0 = arith.constant 0 : i32
    return %c0_i32, %arg1 : i32, i32
  }
  func.func @transform_3(%arg0: i32, %arg1: i32, %arg2: i32) -> (i32, i32) {
    %c0_i32 = arith.constant 0 : i32
    return %arg0, %arg1 : i32, i32
  }
}

</mosaic_0001>

<llo_original>
// kernel: vae_forward.22
$region0: #{vae_forward.22}
  #allocation0 [shape = 'u32[]', space=smem, size = 0x4, offset = 0x4, fixed_abs, tag = 'smem constant byte address 0x4 - core index']
  #allocation1 [shape = 'u32[144,128]{1,0:T(1,128)}', space=vmem, size = 0x12000, scoped, tag = 'internal scratch']
  #allocation2 [shape = 'f32[256,128]{1,0:T(8,128)}', space=vmem, size = 0x20000, scoped, tag = 'scratch operand']
  %s0 = inlined_call_operand.vmem [shape: bf16[512,128], index: 0, kind: input, shape index: {}]
  %s1 = inlined_call_operand.vmem [shape: bf16[128,128], index: 1, kind: input, shape index: {}]
  %s2 = inlined_call_operand.vmem [shape: f32[1,128], index: 2, kind: input, shape index: {}]
  %s3 = inlined_call_operand.vmem [shape: bf16[512,128], index: 3, kind: output, shape index: {}]
  %s4 = sld [smem:[#allocation0]]
  $region53: #{vae_forward.22} parent=0
    _
  %s6 = ssub.s32 1, %s4
  %s7 = scalar_select 0, %s6, %s4
  loop: start=0, step=1, limit=4
  $region2: #{vae_forward.22} parent=0 // loop_pre_header
    _
  $region3: #{vae_forward.22} parent=0 // loop_header
    %s9 = sphi 0, %s13
    %p10 = scmp.ge.s32.totalorder %s9, 4
    %s16 = sphi 0, %s35
    %s17 = sphi 0, %s31
    %s18 = sphi 0, %s27
    %s19 = sphi 0, %s16
    %s20 = sphi 0, %s17
    %s21 = sphi 0, %s18
    %s22 = sphi 0, %s19
    %s23 = sphi 0, %s20
    %s24 = sphi 0, %s21
    %s40 = sphi 0, %s42
    %s43 = sphi 0, %s40
    %s44 = sphi 0, %s43
    %s60 = sphi 0, %s44
    %s68 = sphi 0, %s70
    %s71 = sphi 0, %s68
    %s72 = sphi 0, %s71
    %s88 = sphi 0, %s72
    %s94 = sphi 0, %s96
    %s97 = sphi 0, %s94
    %s98 = sphi 0, %s97
    %s114 = sphi 0, %s98
    %s122 = sphi 0, %s124
    %s125 = sphi 0, %s122
    %s126 = sphi 0, %s125
    %s142 = sphi 0, %s126
  $region4: #{vae_forward.22} parent=0 // loop_header_branch
    %12 = sbr.rel (%p10) target = $region8
  $region5: #{vae_forward.22} parent=0 // loop_body
    %s14 = ssub.s32 %s9, 1
    %s15 = ssub.s32 %s9, 2
    %s25 = sadd.s32 1, %s18
    %p26 = scmp.ge.s32.totalorder %s25, 1
    %s27 = scalar_select %p26, 0, %s25
    %s28 = sadd.s32 1, %s17
    %s29 = scalar_select %p26, %s28, %s17
    %p30 = scmp.ge.s32.totalorder %s29, 1
    %s31 = scalar_select %p30, 0, %s29
    %s32 = sadd.s32 1, %s16
    %s33 = scalar_select %p30, %s32, %s16
    %p34 = scmp.ge.s32.totalorder %s33, 2
    %s35 = scalar_select %p34, 0, %s33
    %s36 = ssub.s32 %s16, %s35
    %s37 = ssub.s32 %s18, %s27
    %s38 = sor.u32 %s36, %s37
    %p39 = scmp.eq.s32.totalorder %s38, 0
    %s41 = sadd.s32 %s40, 1
    %s42 = scalar_select %p39, %s40, %s41
    %p45 = pneg %p39
    %p46 = scmp.eq.s32.totalorder %s9, 1
    %p47 = por %p45, %p46
    %p48 = scmp.ne.s32.totalorder %s40, %s43
    %p49 = scmp.eq.s32.totalorder %s9, 0
    %p50 = por %p48, %p49
    %p51 = scmp.ne.s32.totalorder %s40, %s43
    %p52 = scmp.eq.s32.totalorder %s14, 1
    %p53 = por %p51, %p52
    %p54 = scmp.ne.s32.totalorder %s43, %s44
    %p55 = scmp.eq.s32.totalorder %s14, 0
    %p56 = por %p54, %p55
    %p57 = scmp.ne.s32.totalorder %s43, %s44
    %p58 = scmp.eq.s32.totalorder %s15, 1
    %p59 = por %p57, %p58
    %p61 = scmp.ne.s32.totalorder %s44, %s60
    %p62 = scmp.eq.s32.totalorder %s15, 0
    %p63 = por %p61, %p62
    %s64 = ssub.s32 %s18, %s27
    %s65 = ssub.s32 %s17, %s31
    %s66 = sor.u32 %s64, %s65
    %p67 = scmp.eq.s32.totalorder %s66, 0
    %s69 = sadd.s32 %s68, 1
    %s70 = scalar_select %p67, %s68, %s69
    %p73 = pneg %p67
    %p74 = scmp.eq.s32.totalorder %s9, 1
    %p75 = por %p73, %p74
    %p76 = scmp.ne.s32.totalorder %s68, %s71
    %p77 = scmp.eq.s32.totalorder %s9, 0
    %p78 = por %p76, %p77
    %p79 = scmp.ne.s32.totalorder %s68, %s71
    %p80 = scmp.eq.s32.totalorder %s14, 1
    %p81 = por %p79, %p80
    %p82 = scmp.ne.s32.totalorder %s71, %s72
    %p83 = scmp.eq.s32.totalorder %s14, 0
    %p84 = por %p82, %p83
    %p85 = scmp.ne.s32.totalorder %s71, %s72
    %p86 = scmp.eq.s32.totalorder %s15, 1
    %p87 = por %p85, %p86
    %p89 = scmp.ne.s32.totalorder %s72, %s88
    %p90 = scmp.eq.s32.totalorder %s15, 0
    %p91 = por %p89, %p90
    %s92 = ssub.s32 %s17, %s31
    %p93 = scmp.eq.s32.totalorder %s92, 0
    %s95 = sadd.s32 %s94, 1
    %s96 = scalar_select %p93, %s94, %s95
    %p99 = pneg %p93
    %p100 = scmp.eq.s32.totalorder %s9, 1
    %p101 = por %p99, %p100
    %p102 = scmp.ne.s32.totalorder %s94, %s97
    %p103 = scmp.eq.s32.totalorder %s9, 0
    %p104 = por %p102, %p103
    %p105 = scmp.ne.s32.totalorder %s94, %s97
    %p106 = scmp.eq.s32.totalorder %s14, 1
    %p107 = por %p105, %p106
    %p108 = scmp.ne.s32.totalorder %s97, %s98
    %p109 = scmp.eq.s32.totalorder %s14, 0
    %p110 = por %p108, %p109
    %p111 = scmp.ne.s32.totalorder %s97, %s98
    %p112 = scmp.eq.s32.totalorder %s15, 1
    %p113 = por %p111, %p112
    %p115 = scmp.ne.s32.totalorder %s98, %s114
    %p116 = scmp.eq.s32.totalorder %s15, 0
    %p117 = por %p115, %p116
    %s118 = ssub.s32 %s16, %s35
    %s119 = ssub.s32 %s17, %s31
    %s120 = sor.u32 %s118, %s119
    %p121 = scmp.eq.s32.totalorder %s120, 0
    %s123 = sadd.s32 %s122, 1
    %s124 = scalar_select %p121, %s122, %s123
    %p127 = pneg %p121
    %p128 = scmp.eq.s32.totalorder %s9, 1
    %p129 = por %p127, %p128
    %p130 = scmp.ne.s32.totalorder %s122, %s125
    %p131 = scmp.eq.s32.totalorder %s9, 0
    %p132 = por %p130, %p131
    %p133 = scmp.ne.s32.totalorder %s122, %s125
    %p134 = scmp.eq.s32.totalorder %s14, 1
    %p135 = por %p133, %p134
    %p136 = scmp.ne.s32.totalorder %s125, %s126
    %p137 = scmp.eq.s32.totalorder %s14, 0
    %p138 = por %p136, %p137
    %p139 = scmp.ne.s32.totalorder %s125, %s126
    %p140 = scmp.eq.s32.totalorder %s15, 1
    %p141 = por %p139, %p140
    %p143 = scmp.ne.s32.totalorder %s126, %s142
    %p144 = scmp.eq.s32.totalorder %s15, 0
    %p145 = por %p143, %p144
    %p146 = scmp.le.s32.totalorder 1, %s9
    %p147 = scmp.lt.s32.totalorder %s9, 3
    %p148 = pnand %p146, %p147
    %p149 = pneg %p148
    // Predicated region
    $region9: #{vae_forward.22} parent=5 // pred_check
      _
    $region10: #{vae_forward.22} parent=5 // pred_check_branch
      %151 = sbr.rel (%p148) target = $region12
    $region11: #{vae_forward.22} parent=5 // pred_region
      %s152 = ssub.s32 %s9, 1
      // Predicated region
      $region13: #{vae_forward.22} parent=11 // pred_check
        %p153 = pneg %p84
      $region14: #{vae_forward.22} parent=11 // pred_check_branch
        %155 = sbr.rel (%p153) target = $region16
      $region15: #{vae_forward.22} parent=11 // pred_region
        %s156 = smul.u32 16, %s21
        %p157 = scmp.lt.s32.totalorder %s156, 15
        %s158 = scalar_select %p157, %s156, 15
        %p159 = scmp.lt.s32.totalorder %s20, 0
        %s160 = scalar_select %p159, %s20, 0
        %s161 = sadd.s32 %s160, %s158
        %s162 = smul.addr %s161, 4
        %s163 = scalar_lea.vmem %s1, %s162
        %s164 = smul.u32 16, %s21
      $region16: #{vae_forward.22} parent=11 // pred_fallthru
        _
      // Predicated region
      $region17: #{vae_forward.22} parent=11 // pred_check
        %p165 = pneg %p110
      $region18: #{vae_forward.22} parent=11 // pred_check_branch
        %167 = sbr.rel (%p165) target = $region20
      $region19: #{vae_forward.22} parent=11 // pred_region
        %p168 = scmp.lt.s32.totalorder %s20, 0
        %s169 = scalar_select %p168, %s20, 0
        %s170 = scalar_lea.vmem %s2, %s169
      $region20: #{vae_forward.22} parent=11 // pred_fallthru
        _
    $region12: #{vae_forward.22} parent=5 // pred_fallthru
      _
    %p171 = scmp.lt.s32.totalorder %s9, 2
    // Predicated region
    $region21: #{vae_forward.22} parent=5 // pred_check
      %p172 = pneg %p171
    $region22: #{vae_forward.22} parent=5 // pred_check_branch
      %174 = sbr.rel (%p172) target = $region24
    $region23: #{vae_forward.22} parent=5 // pred_region
      // Predicated region
      $region25: #{vae_forward.22} parent=23 // pred_check
        %p175 = pneg %p50
      $region26: #{vae_forward.22} parent=23 // pred_check_branch
        %177 = sbr.rel (%p175) target = $region28
      $region27: #{vae_forward.22} parent=23 // pred_region
        %s178 = smul.u32 32, %s16
        %p179 = scmp.lt.s32.totalorder %s178, 63
        %s180 = scalar_select %p179, %s178, 63
        %p181 = scmp.lt.s32.totalorder %s18, 0
        %s182 = scalar_select %p181, %s18, 0
        %s183 = sadd.s32 %s182, %s180
        %s184 = smul.addr %s183, 4
        %s185 = scalar_lea.vmem %s0, %s184
        %s186 = smul.u32 32, %s16
      $region28: #{vae_forward.22} parent=23 // pred_fallthru
        _
    $region24: #{vae_forward.22} parent=5 // pred_fallthru
      _
    %p187 = scmp.le.s32.totalorder 1, %s9
    %p188 = scmp.lt.s32.totalorder %s9, 3
    %p189 = pnand %p187, %p188
    %p190 = pneg %p189
    // Predicated region
    $region29: #{vae_forward.22} parent=5 // pred_check
      _
    $region30: #{vae_forward.22} parent=5 // pred_check_branch
      %192 = sbr.rel (%p189) target = $region32
    $region31: #{vae_forward.22} parent=5 // pred_region
      %s193 = ssub.s32 %s9, 1
      %s194 = smul.u32 32, %s19
      %p195 = scmp.lt.s32.totalorder %s194, 63
      %s196 = scalar_select %p195, %s194, 63
      %p197 = scmp.lt.s32.totalorder %s21, 0
      %s198 = scalar_select %p197, %s21, 0
      %s199 = sadd.s32 %s198, %s196
      %s200 = smul.addr %s199, 4
      %s201 = scalar_lea.vmem %s0, %s200
      %p202 = pneg %p56
      %p203 = pneg %p53
      %s204 = smul.u32 16, %s21
      %p205 = scmp.lt.s32.totalorder %s204, 15
      %s206 = scalar_select %p205, %s204, 15
      %p207 = scmp.lt.s32.totalorder %s20, 0
      %s208 = scalar_select %p207, %s20, 0
      %s209 = sadd.s32 %s208, %s206
      %s210 = smul.addr %s209, 4
      %s211 = scalar_lea.vmem %s1, %s210
      %p212 = pneg %p84
      %p213 = pneg %p81
      %p214 = scmp.lt.s32.totalorder %s20, 0
      %s215 = scalar_select %p214, %s20, 0
      %s216 = scalar_lea.vmem %s2, %s215
      %p217 = pneg %p110
      %p218 = pneg %p107
      %p219 = pneg %p138
      %p220 = pneg %p135
      %s221 = smul.u32 32, %s19
      %p222 = scmp.lt.s32.totalorder %s221, 63
      %s223 = scalar_select %p222, %s221, 63
      %p224 = scmp.lt.s32.totalorder %s20, 0
      %s225 = scalar_select %p224, %s20, 0
      %s226 = sadd.s32 %s225, %s223
      %s227 = smul.addr %s226, 4
      %s228 = scalar_lea.vmem %s3, %s227
      %s229 = smul.u32 32, %s19
      %p230 = scmp.lt.s32.totalorder %s229, 63
      %s231 = scalar_select %p230, %s229, 63
      %p232 = scmp.lt.s32.totalorder %s21, 0
      %s233 = scalar_select %p232, %s21, 0
      %s234 = sadd.s32 %s233, %s231
      %s235 = smul.addr %s234, 4
      %s236 = scalar_lea.vmem %s0, %s235
      %s237 = smul.u32 32, %s19
      %s238 = smul.u32 16, %s21
      %p239 = scmp.lt.s32.totalorder %s238, 15
      %s240 = scalar_select %p239, %s238, 15
      %p241 = scmp.lt.s32.totalorder %s20, 0
      %s242 = scalar_select %p241, %s20, 0
      %s243 = sadd.s32 %s242, %s240
      %s244 = smul.addr %s243, 4
      %s245 = scalar_lea.vmem %s1, %s244
      %s246 = smul.u32 16, %s21
      %p247 = scmp.lt.s32.totalorder %s20, 0
      %s248 = scalar_select %p247, %s20, 0
      %s249 = scalar_lea.vmem %s2, %s248
      %s250 = smul.u32 32, %s19
      %p251 = scmp.lt.s32.totalorder %s250, 63
      %s252 = scalar_select %p251, %s250, 63
      %p253 = scmp.lt.s32.totalorder %s20, 0
      %s254 = scalar_select %p253, %s20, 0
      %s255 = sadd.s32 %s254, %s252
      %s256 = smul.addr %s255, 4
      %s257 = scalar_lea.vmem %s3, %s256
      %s258 = smul.u32 32, %s19
      %p260 = scmp.eq.s32.totalorder %s21, 0
      // Predicated region
      $region33: #{vae_forward.22} parent=31 // pred_check
        %p261 = pneg %p260
      $region34: #{vae_forward.22} parent=31 // pred_check_branch
        %263 = sbr.rel (%p261) target = $region36
      $region35: #{vae_forward.22} parent=31 // pred_region
        %264 = vst [vmem:[#allocation2] sm:$0xff] 0.0
        %265 = vst [vmem:[#allocation2 + $0x8] sm:$0xff] 0.0
        %266 = vst [vmem:[#allocation2 + $0x10] sm:$0xff] 0.0
        %267 = vst [vmem:[#allocation2 + $0x18] sm:$0xff] 0.0
        %268 = vst [vmem:[#allocation2 + $0x20] sm:$0xff] 0.0
        %269 = vst [vmem:[#allocation2 + $0x28] sm:$0xff] 0.0
        %270 = vst [vmem:[#allocation2 + $0x30] sm:$0xff] 0.0
        %271 = vst [vmem:[#allocation2 + $0x38] sm:$0xff] 0.0
        %272 = vst [vmem:[#allocation2 + $0x40] sm:$0xff] 0.0
        %273 = vst [vmem:[#allocation2 + $0x48] sm:$0xff] 0.0
        %274 = vst [vmem:[#allocation2 + $0x50] sm:$0xff] 0.0
        %275 = vst [vmem:[#allocation2 + $0x58] sm:$0xff] 0.0
        %276 = vst [vmem:[#allocation2 + $0x60] sm:$0xff] 0.0
        %277 = vst [vmem:[#allocation2 + $0x68] sm:$0xff] 0.0
        %278 = vst [vmem:[#allocation2 + $0x70] sm:$0xff] 0.0
        %279 = vst [vmem:[#allocation2 + $0x78] sm:$0xff] 0.0
        %280 = vst [vmem:[#allocation2 + $0x80] sm:$0xff] 0.0
        %281 = vst [vmem:[#allocation2 + $0x88] sm:$0xff] 0.0
        %282 = vst [vmem:[#allocation2 + $0x90] sm:$0xff] 0.0
        %283 = vst [vmem:[#allocation2 + $0x98] sm:$0xff] 0.0
        %284 = vst [vmem:[#allocation2 + $0xa0] sm:$0xff] 0.0
        %285 = vst [vmem:[#allocation2 + $0xa8] sm:$0xff] 0.0
        %286 = vst [vmem:[#allocation2 + $0xb0] sm:$0xff] 0.0
        %287 = vst [vmem:[#allocation2 + $0xb8] sm:$0xff] 0.0
        %288 = vst [vmem:[#allocation2 + $0xc0] sm:$0xff] 0.0
        %289 = vst [vmem:[#allocation2 + $0xc8] sm:$0xff] 0.0
        %290 = vst [vmem:[#allocation2 + $0xd0] sm:$0xff] 0.0
        %291 = vst [vmem:[#allocation2 + $0xd8] sm:$0xff] 0.0
        %292 = vst [vmem:[#allocation2 + $0xe0] sm:$0xff] 0.0
        %293 = vst [vmem:[#allocation2 + $0xe8] sm:$0xff] 0.0
        %294 = vst [vmem:[#allocation2 + $0xf0] sm:$0xff] 0.0
        %295 = vst [vmem:[#allocation2 + $0xf8] sm:$0xff] 0.0
      $region36: #{vae_forward.22} parent=31 // pred_fallthru
        _
      %v296 = vld [vmem:[#allocation2] sm:$0xff]
      %v297 = vld [vmem:[#allocation2 + $0x8] sm:$0xff]
      %v298 = vld [vmem:[#allocation2 + $0x10] sm:$0xff]
      %v299 = vld [vmem:[#allocation2 + $0x18] sm:$0xff]
      %v300 = vld [vmem:[#allocation2 + $0x20] sm:$0xff]
      %v301 = vld [vmem:[#allocation2 + $0x28] sm:$0xff]
      %v302 = vld [vmem:[#allocation2 + $0x30] sm:$0xff]
      %v303 = vld [vmem:[#allocation2 + $0x38] sm:$0xff]
      %v304 = vld [vmem:[#allocation2 + $0x40] sm:$0xff]
      %v305 = vld [vmem:[#allocation2 + $0x48] sm:$0xff]
      %v306 = vld [vmem:[#allocation2 + $0x50] sm:$0xff]
      %v307 = vld [vmem:[#allocation2 + $0x58] sm:$0xff]
      %v308 = vld [vmem:[#allocation2 + $0x60] sm:$0xff]
      %v309 = vld [vmem:[#allocation2 + $0x68] sm:$0xff]
      %v310 = vld [vmem:[#allocation2 + $0x70] sm:$0xff]
      %v311 = vld [vmem:[#allocation2 + $0x78] sm:$0xff]
      %v312 = vld [vmem:[#allocation2 + $0x80] sm:$0xff]
      %v313 = vld [vmem:[#allocation2 + $0x88] sm:$0xff]
      %v314 = vld [vmem:[#allocation2 + $0x90] sm:$0xff]
      %v315 = vld [vmem:[#allocation2 + $0x98] sm:$0xff]
      %v316 = vld [vmem:[#allocation2 + $0xa0] sm:$0xff]
      %v317 = vld [vmem:[#allocation2 + $0xa8] sm:$0xff]
      %v318 = vld [vmem:[#allocation2 + $0xb0] sm:$0xff]
      %v319 = vld [vmem:[#allocation2 + $0xb8] sm:$0xff]
      %v320 = vld [vmem:[#allocation2 + $0xc0] sm:$0xff]
      %v321 = vld [vmem:[#allocation2 + $0xc8] sm:$0xff]
      %v322 = vld [vmem:[#allocation2 + $0xd0] sm:$0xff]
      %v323 = vld [vmem:[#allocation2 + $0xd8] sm:$0xff]
      %v324 = vld [vmem:[#allocation2 + $0xe0] sm:$0xff]
      %v325 = vld [vmem:[#allocation2 + $0xe8] sm:$0xff]
      %v326 = vld [vmem:[#allocation2 + $0xf0] sm:$0xff]
      %v327 = vld [vmem:[#allocation2 + $0xf8] sm:$0xff]
      %v328 = vld [vmem:[%s236] sm:$0xf]
      %v329 = vld [vmem:[%s236 + $0x4] sm:$0xf]
      %v330 = vld [vmem:[%s236 + $0x8] sm:$0xf]
      %v331 = vld [vmem:[%s236 + $0xc] sm:$0xf]
      %v332 = vld [vmem:[%s236 + $0x10] sm:$0xf]
      %v333 = vld [vmem:[%s236 + $0x14] sm:$0xf]
      %v334 = vld [vmem:[%s236 + $0x18] sm:$0xf]
      %v335 = vld [vmem:[%s236 + $0x1c] sm:$0xf]
      %v336 = vld [vmem:[%s236 + $0x20] sm:$0xf]
      %v337 = vld [vmem:[%s236 + $0x24] sm:$0xf]
      %v338 = vld [vmem:[%s236 + $0x28] sm:$0xf]
      %v339 = vld [vmem:[%s236 + $0x2c] sm:$0xf]
      %v340 = vld [vmem:[%s236 + $0x30] sm:$0xf]
      %v341 = vld [vmem:[%s236 + $0x34] sm:$0xf]
      %v342 = vld [vmem:[%s236 + $0x38] sm:$0xf]
      %v343 = vld [vmem:[%s236 + $0x3c] sm:$0xf]
      %v344 = vld [vmem:[%s236 + $0x40] sm:$0xf]
      %v345 = vld [vmem:[%s236 + $0x44] sm:$0xf]
      %v346 = vld [vmem:[%s236 + $0x48] sm:$0xf]
      %v347 = vld [vmem:[%s236 + $0x4c] sm:$0xf]
      %v348 = vld [vmem:[%s236 + $0x50] sm:$0xf]
      %v349 = vld [vmem:[%s236 + $0x54] sm:$0xf]
      %v350 = vld [vmem:[%s236 + $0x58] sm:$0xf]
      %v351 = vld [vmem:[%s236 + $0x5c] sm:$0xf]
      %v352 = vld [vmem:[%s236 + $0x60] sm:$0xf]
      %v353 = vld [vmem:[%s236 + $0x64] sm:$0xf]
      %v354 = vld [vmem:[%s236 + $0x68] sm:$0xf]
      %v355 = vld [vmem:[%s236 + $0x6c] sm:$0xf]
      %v356 = vld [vmem:[%s236 + $0x70] sm:$0xf]
      %v357 = vld [vmem:[%s236 + $0x74] sm:$0xf]
      %v358 = vld [vmem:[%s236 + $0x78] sm:$0xf]
      %v359 = vld [vmem:[%s236 + $0x7c] sm:$0xf]
      %v360 = vld [vmem:[%s245] sm:$0xf]
      %v361 = vld [vmem:[%s245 + $0x4] sm:$0xf]
      %v362 = vld [vmem:[%s245 + $0x8] sm:$0xf]
      %v363 = vld [vmem:[%s245 + $0xc] sm:$0xf]
      %v364 = vld [vmem:[%s245 + $0x10] sm:$0xf]
      %v365 = vld [vmem:[%s245 + $0x14] sm:$0xf]
      %v366 = vld [vmem:[%s245 + $0x18] sm:$0xf]
      %v367 = vld [vmem:[%s245 + $0x1c] sm:$0xf]
      %v368 = vld [vmem:[%s245 + $0x20] sm:$0xf]
      %v369 = vld [vmem:[%s245 + $0x24] sm:$0xf]
      %v370 = vld [vmem:[%s245 + $0x28] sm:$0xf]
      %v371 = vld [vmem:[%s245 + $0x2c] sm:$0xf]
      %v372 = vld [vmem:[%s245 + $0x30] sm:$0xf]
      %v373 = vld [vmem:[%s245 + $0x34] sm:$0xf]
      %v374 = vld [vmem:[%s245 + $0x38] sm:$0xf]
      %v375 = vld [vmem:[%s245 + $0x3c] sm:$0xf]
      %v408 = vunpack.c.l.b16 %v328
      %v409 = vunpack.c.l.b16 %v329
      %v410 = vunpack.c.l.b16 %v330
      %v411 = vunpack.c.l.b16 %v331
      %v412 = vunpack.c.l.b16 %v332
      %v413 = vunpack.c.l.b16 %v333
      %v414 = vunpack.c.l.b16 %v334
      %v415 = vunpack.c.l.b16 %v335
      %v416 = vunpack.c.l.b16 %v336
      %v417 = vunpack.c.l.b16 %v337
      %v418 = vunpack.c.l.b16 %v338
      %v419 = vunpack.c.l.b16 %v339
      %v420 = vunpack.c.l.b16 %v340
      %v421 = vunpack.c.l.b16 %v341
      %v422 = vunpack.c.l.b16 %v342
      %v423 = vunpack.c.l.b16 %v343
      %v424 = vunpack.c.l.b16 %v344
      %v425 = vunpack.c.l.b16 %v345
      %v426 = vunpack.c.l.b16 %v346
      %v427 = vunpack.c.l.b16 %v347
      %v428 = vunpack.c.l.b16 %v348
      %v429 = vunpack.c.l.b16 %v349
      %v430 = vunpack.c.l.b16 %v350
      %v431 = vunpack.c.l.b16 %v351
      %v432 = vunpack.c.l.b16 %v352
      %v433 = vunpack.c.l.b16 %v353
      %v434 = vunpack.c.l.b16 %v354
      %v435 = vunpack.c.l.b16 %v355
      %v436 = vunpack.c.l.b16 %v356
      %v437 = vunpack.c.l.b16 %v357
      %v438 = vunpack.c.l.b16 %v358
      %v439 = vunpack.c.l.b16 %v359
      %v440 = vpack.c.b16 %v409, %v408
      %v441 = vpack.c.b16 %v411, %v410
      %v442 = vpack.c.b16 %v413, %v412
      %v443 = vpack.c.b16 %v415, %v414
      %v444 = vpack.c.b16 %v417, %v416
      %v445 = vpack.c.b16 %v419, %v418
      %v446 = vpack.c.b16 %v421, %v420
      %v447 = vpack.c.b16 %v423, %v422
      %v448 = vpack.c.b16 %v425, %v424
      %v449 = vpack.c.b16 %v427, %v426
      %v450 = vpack.c.b16 %v429, %v428
      %v451 = vpack.c.b16 %v431, %v430
      %v452 = vpack.c.b16 %v433, %v432
      %v453 = vpack.c.b16 %v435, %v434
      %v454 = vpack.c.b16 %v437, %v436
      %v455 = vpack.c.b16 %v439, %v438
      %v488 = vunpack.c.l.b16 %v360
      %v489 = vunpack.c.l.b16 %v361
      %v490 = vunpack.c.l.b16 %v362
      %v491 = vunpack.c.l.b16 %v363
      %v492 = vunpack.c.l.b16 %v364
      %v493 = vunpack.c.l.b16 %v365
      %v494 = vunpack.c.l.b16 %v366
      %v495 = vunpack.c.l.b16 %v367
      %v496 = vunpack.c.l.b16 %v368
      %v497 = vunpack.c.l.b16 %v369
      %v498 = vunpack.c.l.b16 %v370
      %v499 = vunpack.c.l.b16 %v371
      %v500 = vunpack.c.l.b16 %v372
      %v501 = vunpack.c.l.b16 %v373
      %v502 = vunpack.c.l.b16 %v374
      %v503 = vunpack.c.l.b16 %v375
      %v504 = vpack.c.b16 %v489, %v488
      %v505 = vpack.c.b16 %v491, %v490
      %v506 = vpack.c.b16 %v493, %v492
      %v507 = vpack.c.b16 %v495, %v494
      %v508 = vpack.c.b16 %v497, %v496
      %v509 = vpack.c.b16 %v499, %v498
      %v510 = vpack.c.b16 %v501, %v500
      %v511 = vpack.c.b16 %v503, %v502
      %520 = vmatprep.subr.bf16.mxu0 0
      %521 = vmatpush1.bf16.msra.mxu0 %v504
      %522 = vmatprep.subr.bf16.mxu0 0
      %523 = vmatpush1.bf16.msra.mxu0 %v505
      %524 = vmatprep.subr.bf16.mxu0 0
      %525 = vmatpush1.bf16.msra.mxu0 %v506
      %526 = vmatprep.subr.bf16.mxu0 0
      %527 = vmatpush1.bf16.msra.mxu0 %v507
      %528 = vmatprep.subr.bf16.mxu0 0
      %529 = vmatpush1.bf16.msra.mxu0 %v508
      %530 = vmatprep.subr.bf16.mxu0 0
      %531 = vmatpush1.bf16.msra.mxu0 %v509
      %532 = vmatprep.subr.bf16.mxu0 0
      %533 = vmatpush1.bf16.msra.mxu0 %v510
      %534 = vmatprep.subr.bf16.mxu0 0
      %535 = vmatpush1.bf16.msra.mxu0 %v511
      %536 = vmatprep.subr.bf16.mxu0 0
      %537 = vmatpush1.bf16.msra.mxu0 0
      %538 = vmatprep.subr.bf16.mxu0 0
      %539 = vmatpush1.bf16.msra.mxu0 0
      %540 = vmatprep.subr.bf16.mxu0 0
      %541 = vmatpush1.bf16.msra.mxu0 0
      %542 = vmatprep.subr.bf16.mxu0 0
      %543 = vmatpush1.bf16.msra.mxu0 0
      %544 = vmatprep.subr.bf16.mxu0 0
      %545 = vmatpush1.bf16.msra.mxu0 0
      %546 = vmatprep.subr.bf16.mxu0 0
      %547 = vmatpush1.bf16.msra.mxu0 0
      %548 = vmatprep.subr.bf16.mxu0 0
      %549 = vmatpush1.bf16.msra.mxu0 0
      %550 = vmatprep.subr.bf16.mxu0 0
      %551 = vmatpush1.bf16.msra.mxu0 0
      %552 = vmatprep.mubr.bf16.mxu0 0
      %553 = vmatmul.mubr.bf16.gmra.mrb[0].mxu0 %v440
      %v554 = vpop.f32.mrb[0].mxu0
      %v555 = vadd.f32 0.0, %v554
      %v556 = vpop.f32.mrb[0].mxu0
      %v557 = vpop.f32.mrb[0].mxu0
      %v558 = vadd.f32 0.0, %v557
      %v559 = vpop.f32.mrb[0].mxu0
      %560 = vmatprep.mubr.bf16.mxu0 0
      %561 = vmatmul.mubr.bf16.gmra.mrb[0].mxu0 %v441
      %v562 = vpop.f32.mrb[0].mxu0
      %v563 = vadd.f32 0.0, %v562
      %v564 = vpop.f32.mrb[0].mxu0
      %v565 = vpop.f32.mrb[0].mxu0
      %v566 = vadd.f32 0.0, %v565
      %v567 = vpop.f32.mrb[0].mxu0
      %568 = vmatprep.mubr.bf16.mxu0 0
      %569 = vmatmul.mubr.bf16.gmra.mrb[0].mxu0 %v442
      %v570 = vpop.f32.mrb[0].mxu0
      %v571 = vadd.f32 0.0, %v570
      %v572 = vpop.f32.mrb[0].mxu0
      %v573 = vpop.f32.mrb[0].mxu0
      %v574 = vadd.f32 0.0, %v573
      %v575 = vpop.f32.mrb[0].mxu0
      %576 = vmatprep.mubr.bf16.mxu0 0
      %577 = vmatmul.mubr.bf16.gmra.mrb[0].mxu0 %v443
      %v578 = vpop.f32.mrb[0].mxu0
      %v579 = vadd.f32 0.0, %v578
      %v580 = vpop.f32.mrb[0].mxu0
      %v581 = vpop.f32.mrb[0].mxu0
      %v582 = vadd.f32 0.0, %v581
      %v583 = vpop.f32.mrb[0].mxu0
      %584 = vmatprep.mubr.bf16.mxu0 0
      %585 = vmatmul.mubr.bf16.gmra.mrb[0].mxu0 %v444
      %v586 = vpop.f32.mrb[0].mxu0
      %v587 = vadd.f32 0.0, %v586
      %v588 = vpop.f32.mrb[0].mxu0
      %v589 = vpop.f32.mrb[0].mxu0
      %v590 = vadd.f32 0.0, %v589
      %v591 = vpop.f32.mrb[0].mxu0
      %592 = vmatprep.mubr.bf16.mxu0 0
      %593 = vmatmul.mubr.bf16.gmra.mrb[0].mxu0 %v445
      %v594 = vpop.f32.mrb[0].mxu0
      %v595 = vadd.f32 0.0, %v594
      %v596 = vpop.f32.mrb[0].mxu0
      %v597 = vpop.f32.mrb[0].mxu0
      %v598 = vadd.f32 0.0, %v597
      %v599 = vpop.f32.mrb[0].mxu0
      %600 = vmatprep.mubr.bf16.mxu0 0
      %601 = vmatmul.mubr.bf16.gmra.mrb[0].mxu0 %v446
      %v602 = vpop.f32.mrb[0].mxu0
      %v603 = vadd.f32 0.0, %v602
      %v604 = vpop.f32.mrb[0].mxu0
      %v605 = vpop.f32.mrb[0].mxu0
      %v606 = vadd.f32 0.0, %v605
      %v607 = vpop.f32.mrb[0].mxu0
      %608 = vmatprep.mubr.bf16.mxu0 0
      %609 = vmatmul.mubr.bf16.gmra.mrb[0].mxu0 %v447
      %v610 = vpop.f32.mrb[0].mxu0
      %v611 = vadd.f32 0.0, %v610
      %v612 = vpop.f32.mrb[0].mxu0
      %v613 = vpop.f32.mrb[0].mxu0
      %v614 = vadd.f32 0.0, %v613
      %v615 = vpop.f32.mrb[0].mxu0
      %616 = vmatprep.mubr.bf16.mxu0 0
      %617 = vmatmul.mubr.bf16.gmra.mrb[0].mxu0 %v448
      %v618 = vpop.f32.mrb[0].mxu0
      %v619 = vadd.f32 0.0, %v618
      %v620 = vpop.f32.mrb[0].mxu0
      %v621 = vpop.f32.mrb[0].mxu0
      %v622 = vadd.f32 0.0, %v621
      %v623 = vpop.f32.mrb[0].mxu0
      %624 = vmatprep.mubr.bf16.mxu0 0
      %625 = vmatmul.mubr.bf16.gmra.mrb[0].mxu0 %v449
      %v626 = vpop.f32.mrb[0].mxu0
      %v627 = vadd.f32 0.0, %v626
      %v628 = vpop.f32.mrb[0].mxu0
      %v629 = vpop.f32.mrb[0].mxu0
      %v630 = vadd.f32 0.0, %v629
      %v631 = vpop.f32.mrb[0].mxu0
      %632 = vmatprep.mubr.bf16.mxu0 0
      %633 = vmatmul.mubr.bf16.gmra.mrb[0].mxu0 %v450
      %v634 = vpop.f32.mrb[0].mxu0
      %v635 = vadd.f32 0.0, %v634
      %v636 = vpop.f32.mrb[0].mxu0
      %v637 = vpop.f32.mrb[0].mxu0
      %v638 = vadd.f32 0.0, %v637
      %v639 = vpop.f32.mrb[0].mxu0
      %640 = vmatprep.mubr.bf16.mxu0 0
      %641 = vmatmul.mubr.bf16.gmra.mrb[0].mxu0 %v451
      %v642 = vpop.f32.mrb[0].mxu0
      %v643 = vadd.f32 0.0, %v642
      %v644 = vpop.f32.mrb[0].mxu0
      %v645 = vpop.f32.mrb[0].mxu0
      %v646 = vadd.f32 0.0, %v645
      %v647 = vpop.f32.mrb[0].mxu0
      %648 = vmatprep.mubr.bf16.mxu0 0
      %649 = vmatmul.mubr.bf16.gmra.mrb[0].mxu0 %v452
      %v650 = vpop.f32.mrb[0].mxu0
      %v651 = vadd.f32 0.0, %v650
      %v652 = vpop.f32.mrb[0].mxu0
      %v653 = vpop.f32.mrb[0].mxu0
      %v654 = vadd.f32 0.0, %v653
      %v655 = vpop.f32.mrb[0].mxu0
      %656 = vmatprep.mubr.bf16.mxu0 0
      %657 = vmatmul.mubr.bf16.gmra.mrb[0].mxu0 %v453
      %v658 = vpop.f32.mrb[0].mxu0
      %v659 = vadd.f32 0.0, %v658
      %v660 = vpop.f32.mrb[0].mxu0
      %v661 = vpop.f32.mrb[0].mxu0
      %v662 = vadd.f32 0.0, %v661
      %v663 = vpop.f32.mrb[0].mxu0
      %664 = vmatprep.mubr.bf16.mxu0 0
      %665 = vmatmul.mubr.bf16.gmra.mrb[0].mxu0 %v454
      %v666 = vpop.f32.mrb[0].mxu0
      %v667 = vadd.f32 0.0, %v666
      %v668 = vpop.f32.mrb[0].mxu0
      %v669 = vpop.f32.mrb[0].mxu0
      %v670 = vadd.f32 0.0, %v669
      %v671 = vpop.f32.mrb[0].mxu0
      %672 = vmatprep.mubr.bf16.mxu0 0
      %673 = vmatmul.mubr.bf16.gmra.mrb[0].mxu0 %v455
      %v674 = vpop.f32.mrb[0].mxu0
      %v675 = vadd.f32 0.0, %v674
      %v676 = vpop.f32.mrb[0].mxu0
      %v677 = vpop.f32.mrb[0].mxu0
      %v678 = vadd.f32 0.0, %v677
      %v679 = vpop.f32.mrb[0].mxu0
      %680 = vdwg.mxu0
      %v681 = vadd.f32 %v296, %v555
      %v682 = vadd.f32 %v297, %v558
      %v683 = vadd.f32 %v298, %v563
      %v684 = vadd.f32 %v299, %v566
      %v685 = vadd.f32 %v300, %v571
      %v686 = vadd.f32 %v301, %v574
      %v687 = vadd.f32 %v302, %v579
      %v688 = vadd.f32 %v303, %v582
      %v689 = vadd.f32 %v304, %v587
      %v690 = vadd.f32 %v305, %v590
      %v691 = vadd.f32 %v306, %v595
      %v692 = vadd.f32 %v307, %v598
      %v693 = vadd.f32 %v308, %v603
      %v694 = vadd.f32 %v309, %v606
      %v695 = vadd.f32 %v310, %v611
      %v696 = vadd.f32 %v311, %v614
      %v697 = vadd.f32 %v312, %v619
      %v698 = vadd.f32 %v313, %v622
      %v699 = vadd.f32 %v314, %v627
      %v700 = vadd.f32 %v315, %v630
      %v701 = vadd.f32 %v316, %v635
      %v702 = vadd.f32 %v317, %v638
      %v703 = vadd.f32 %v318, %v643
      %v704 = vadd.f32 %v319, %v646
      %v705 = vadd.f32 %v320, %v651
      %v706 = vadd.f32 %v321, %v654
      %v707 = vadd.f32 %v322, %v659
      %v708 = vadd.f32 %v323, %v662
      %v709 = vadd.f32 %v324, %v667
      %v710 = vadd.f32 %v325, %v670
      %v711 = vadd.f32 %v326, %v675
      %v712 = vadd.f32 %v327, %v678
      %713 = vst [vmem:[#allocation2] sm:$0xff] %v681
      %714 = vst [vmem:[#allocation2 + $0x8] sm:$0xff] %v682
      %715 = vst [vmem:[#allocation2 + $0x10] sm:$0xff] %v683
      %716 = vst [vmem:[#allocation2 + $0x18] sm:$0xff] %v684
      %717 = vst [vmem:[#allocation2 + $0x20] sm:$0xff] %v685
      %718 = vst [vmem:[#allocation2 + $0x28] sm:$0xff] %v686
      %719 = vst [vmem:[#allocation2 + $0x30] sm:$0xff] %v687
      %720 = vst [vmem:[#allocation2 + $0x38] sm:$0xff] %v688
      %721 = vst [vmem:[#allocation2 + $0x40] sm:$0xff] %v689
      %722 = vst [vmem:[#allocation2 + $0x48] sm:$0xff] %v690
      %723 = vst [vmem:[#allocation2 + $0x50] sm:$0xff] %v691
      %724 = vst [vmem:[#allocation2 + $0x58] sm:$0xff] %v692
      %725 = vst [vmem:[#allocation2 + $0x60] sm:$0xff] %v693
      %726 = vst [vmem:[#allocation2 + $0x68] sm:$0xff] %v694
      %727 = vst [vmem:[#allocation2 + $0x70] sm:$0xff] %v695
      %728 = vst [vmem:[#allocation2 + $0x78] sm:$0xff] %v696
      %729 = vst [vmem:[#allocation2 + $0x80] sm:$0xff] %v697
      %730 = vst [vmem:[#allocation2 + $0x88] sm:$0xff] %v698
      %731 = vst [vmem:[#allocation2 + $0x90] sm:$0xff] %v699
      %732 = vst [vmem:[#allocation2 + $0x98] sm:$0xff] %v700
      %733 = vst [vmem:[#allocation2 + $0xa0] sm:$0xff] %v701
      %734 = vst [vmem:[#allocation2 + $0xa8] sm:$0xff] %v702
      %735 = vst [vmem:[#allocation2 + $0xb0] sm:$0xff] %v703
      %736 = vst [vmem:[#allocation2 + $0xb8] sm:$0xff] %v704
      %737 = vst [vmem:[#allocation2 + $0xc0] sm:$0xff] %v705
      %738 = vst [vmem:[#allocation2 + $0xc8] sm:$0xff] %v706
      %739 = vst [vmem:[#allocation2 + $0xd0] sm:$0xff] %v707
      %740 = vst [vmem:[#allocation2 + $0xd8] sm:$0xff] %v708
      %741 = vst [vmem:[#allocation2 + $0xe0] sm:$0xff] %v709
      %742 = vst [vmem:[#allocation2 + $0xe8] sm:$0xff] %v710
      %743 = vst [vmem:[#allocation2 + $0xf0] sm:$0xff] %v711
      %744 = vst [vmem:[#allocation2 + $0xf8] sm:$0xff] %v712
      // Predicated region
      $region37: #{vae_forward.22} parent=31 // pred_check
        %p745 = pneg %p260
      $region38: #{vae_forward.22} parent=31 // pred_check_branch
        %747 = sbr.rel (%p745) target = $region40
      $region39: #{vae_forward.22} parent=31 // pred_region
        %v748 = vld [vmem:[#allocation2] sm:$0xff]
        %v749 = vld [vmem:[#allocation2 + $0x8] sm:$0xff]
        %v750 = vld [vmem:[#allocation2 + $0x10] sm:$0xff]
        %v751 = vld [vmem:[#allocation2 + $0x18] sm:$0xff]
        %v752 = vld [vmem:[#allocation2 + $0x20] sm:$0xff]
        %v753 = vld [vmem:[#allocation2 + $0x28] sm:$0xff]
        %v754 = vld [vmem:[#allocation2 + $0x30] sm:$0xff]
        %v755 = vld [vmem:[#allocation2 + $0x38] sm:$0xff]
        %v756 = vld [vmem:[#allocation2 + $0x40] sm:$0xff]
        %v757 = vld [vmem:[#allocation2 + $0x48] sm:$0xff]
        %v758 = vld [vmem:[#allocation2 + $0x50] sm:$0xff]
        %v759 = vld [vmem:[#allocation2 + $0x58] sm:$0xff]
        %v760 = vld [vmem:[#allocation2 + $0x60] sm:$0xff]
        %v761 = vld [vmem:[#allocation2 + $0x68] sm:$0xff]
        %v762 = vld [vmem:[#allocation2 + $0x70] sm:$0xff]
        %v763 = vld [vmem:[#allocation2 + $0x78] sm:$0xff]
        %v764 = vld [vmem:[#allocation2 + $0x80] sm:$0xff]
        %v765 = vld [vmem:[#allocation2 + $0x88] sm:$0xff]
        %v766 = vld [vmem:[#allocation2 + $0x90] sm:$0xff]
        %v767 = vld [vmem:[#allocation2 + $0x98] sm:$0xff]
        %v768 = vld [vmem:[#allocation2 + $0xa0] sm:$0xff]
        %v769 = vld [vmem:[#allocation2 + $0xa8] sm:$0xff]
        %v770 = vld [vmem:[#allocation2 + $0xb0] sm:$0xff]
        %v771 = vld [vmem:[#allocation2 + $0xb8] sm:$0xff]
        %v772 = vld [vmem:[#allocation2 + $0xc0] sm:$0xff]
        %v773 = vld [vmem:[#allocation2 + $0xc8] sm:$0xff]
        %v774 = vld [vmem:[#allocation2 + $0xd0] sm:$0xff]
        %v775 = vld [vmem:[#allocation2 + $0xd8] sm:$0xff]
        %v776 = vld [vmem:[#allocation2 + $0xe0] sm:$0xff]
        %v777 = vld [vmem:[#allocation2 + $0xe8] sm:$0xff]
        %v778 = vld [vmem:[#allocation2 + $0xf0] sm:$0xff]
        %v779 = vld [vmem:[#allocation2 + $0xf8] sm:$0xff]
        %v780 = vld [vmem:[%s249] sm:$0x1]
        %v782 = vlaneseq
        %v783 = vshrl.u32 %v782, 7
        %v784 = vsub.s32 0, %v783
        %v785 = vrot.slane %v780, %v784
        %v787 = vadd.f32 %v748, %v785
        %v788 = vadd.f32 %v749, %v785
        %v789 = vadd.f32 %v750, %v785
        %v790 = vadd.f32 %v751, %v785
        %v791 = vadd.f32 %v752, %v785
        %v792 = vadd.f32 %v753, %v785
        %v793 = vadd.f32 %v754, %v785
        %v794 = vadd.f32 %v755, %v785
        %v795 = vadd.f32 %v756, %v785
        %v796 = vadd.f32 %v757, %v785
        %v797 = vadd.f32 %v758, %v785
        %v798 = vadd.f32 %v759, %v785
        %v799 = vadd.f32 %v760, %v785
        %v800 = vadd.f32 %v761, %v785
        %v801 = vadd.f32 %v762, %v785
        %v802 = vadd.f32 %v763, %v785
        %v803 = vadd.f32 %v764, %v785
        %v804 = vadd.f32 %v765, %v785
        %v805 = vadd.f32 %v766, %v785
        %v806 = vadd.f32 %v767, %v785
        %v807 = vadd.f32 %v768, %v785
        %v808 = vadd.f32 %v769, %v785
        %v809 = vadd.f32 %v770, %v785
        %v810 = vadd.f32 %v771, %v785
        %v811 = vadd.f32 %v772, %v785
        %v812 = vadd.f32 %v773, %v785
        %v813 = vadd.f32 %v774, %v785
        %v814 = vadd.f32 %v775, %v785
        %v815 = vadd.f32 %v776, %v785
        %v816 = vadd.f32 %v777, %v785
        %v817 = vadd.f32 %v778, %v785
        %v818 = vadd.f32 %v779, %v785
        %v819 = vmax.f32 %v787, 0.0
        %v820 = vmax.f32 %v788, 0.0
        %v821 = vmax.f32 %v789, 0.0
        %v822 = vmax.f32 %v790, 0.0
        %v823 = vmax.f32 %v791, 0.0
        %v824 = vmax.f32 %v792, 0.0
        %v825 = vmax.f32 %v793, 0.0
        %v826 = vmax.f32 %v794, 0.0
        %v827 = vmax.f32 %v795, 0.0
        %v828 = vmax.f32 %v796, 0.0
        %v829 = vmax.f32 %v797, 0.0
        %v830 = vmax.f32 %v798, 0.0
        %v831 = vmax.f32 %v799, 0.0
        %v832 = vmax.f32 %v800, 0.0
        %v833 = vmax.f32 %v801, 0.0
        %v834 = vmax.f32 %v802, 0.0
        %v835 = vmax.f32 %v803, 0.0
        %v836 = vmax.f32 %v804, 0.0
        %v837 = vmax.f32 %v805, 0.0
        %v838 = vmax.f32 %v806, 0.0
        %v839 = vmax.f32 %v807, 0.0
        %v840 = vmax.f32 %v808, 0.0
        %v841 = vmax.f32 %v809, 0.0
        %v842 = vmax.f32 %v810, 0.0
        %v843 = vmax.f32 %v811, 0.0
        %v844 = vmax.f32 %v812, 0.0
        %v845 = vmax.f32 %v813, 0.0
        %v846 = vmax.f32 %v814, 0.0
        %v847 = vmax.f32 %v815, 0.0
        %v848 = vmax.f32 %v816, 0.0
        %v849 = vmax.f32 %v817, 0.0
        %v850 = vmax.f32 %v818, 0.0
        %v851 = vpack.c.bf16 %v820, %v819
        %v852 = vpack.c.bf16 %v822, %v821
        %v853 = vpack.c.bf16 %v824, %v823
        %v854 = vpack.c.bf16 %v826, %v825
        %v855 = vpack.c.bf16 %v828, %v827
        %v856 = vpack.c.bf16 %v830, %v829
        %v857 = vpack.c.bf16 %v832, %v831
        %v858 = vpack.c.bf16 %v834, %v833
        %v859 = vpack.c.bf16 %v836, %v835
        %v860 = vpack.c.bf16 %v838, %v837
        %v861 = vpack.c.bf16 %v840, %v839
        %v862 = vpack.c.bf16 %v842, %v841
        %v863 = vpack.c.bf16 %v844, %v843
        %v864 = vpack.c.bf16 %v846, %v845
        %v865 = vpack.c.bf16 %v848, %v847
        %v866 = vpack.c.bf16 %v850, %v849
        %v883 = vunpack.c.l.b16 %v851
        %v884 = vunpack.c.h.b16 %v851
        %v885 = vunpack.c.l.b16 %v852
        %v886 = vunpack.c.h.b16 %v852
        %v887 = vunpack.c.l.b16 %v853
        %v888 = vunpack.c.h.b16 %v853
        %v889 = vunpack.c.l.b16 %v854
        %v890 = vunpack.c.h.b16 %v854
        %v891 = vunpack.c.l.b16 %v855
        %v892 = vunpack.c.h.b16 %v855
        %v893 = vunpack.c.l.b16 %v856
        %v894 = vunpack.c.h.b16 %v856
        %v895 = vunpack.c.l.b16 %v857
        %v896 = vunpack.c.h.b16 %v857
        %v897 = vunpack.c.l.b16 %v858
        %v898 = vunpack.c.h.b16 %v858
        %v899 = vunpack.c.l.b16 %v859
        %v900 = vunpack.c.h.b16 %v859
        %v901 = vunpack.c.l.b16 %v860
        %v902 = vunpack.c.h.b16 %v860
        %v903 = vunpack.c.l.b16 %v861
        %v904 = vunpack.c.h.b16 %v861
        %v905 = vunpack.c.l.b16 %v862
        %v906 = vunpack.c.h.b16 %v862
        %v907 = vunpack.c.l.b16 %v863
        %v908 = vunpack.c.h.b16 %v863
        %v909 = vunpack.c.l.b16 %v864
        %v910 = vunpack.c.h.b16 %v864
        %v911 = vunpack.c.l.b16 %v865
        %v912 = vunpack.c.h.b16 %v865
        %v913 = vunpack.c.l.b16 %v866
        %v914 = vunpack.c.h.b16 %v866
        %v915 = vpack.c.b16 %v883, %v883
        %v916 = vpack.c.b16 %v884, %v884
        %v917 = vpack.c.b16 %v885, %v885
        %v918 = vpack.c.b16 %v886, %v886
        %v919 = vpack.c.b16 %v887, %v887
        %v920 = vpack.c.b16 %v888, %v888
        %v921 = vpack.c.b16 %v889, %v889
        %v922 = vpack.c.b16 %v890, %v890
        %v923 = vpack.c.b16 %v891, %v891
        %v924 = vpack.c.b16 %v892, %v892
        %v925 = vpack.c.b16 %v893, %v893
        %v926 = vpack.c.b16 %v894, %v894
        %v927 = vpack.c.b16 %v895, %v895
        %v928 = vpack.c.b16 %v896, %v896
        %v929 = vpack.c.b16 %v897, %v897
        %v930 = vpack.c.b16 %v898, %v898
        %v931 = vpack.c.b16 %v899, %v899
        %v932 = vpack.c.b16 %v900, %v900
        %v933 = vpack.c.b16 %v901, %v901
        %v934 = vpack.c.b16 %v902, %v902
        %v935 = vpack.c.b16 %v903, %v903
        %v936 = vpack.c.b16 %v904, %v904
        %v937 = vpack.c.b16 %v905, %v905
        %v938 = vpack.c.b16 %v906, %v906
        %v939 = vpack.c.b16 %v907, %v907
        %v940 = vpack.c.b16 %v908, %v908
        %v941 = vpack.c.b16 %v909, %v909
        %v942 = vpack.c.b16 %v910, %v910
        %v943 = vpack.c.b16 %v911, %v911
        %v944 = vpack.c.b16 %v912, %v912
        %v945 = vpack.c.b16 %v913, %v913
        %v946 = vpack.c.b16 %v914, %v914
        %979 = vst [vmem:[%s257] sm:$0xf] %v915
        %980 = vst [vmem:[%s257 + $0x4] sm:$0xf] %v916
        %981 = vst [vmem:[%s257 + $0x8] sm:$0xf] %v917
        %982 = vst [vmem:[%s257 + $0xc] sm:$0xf] %v918
        %983 = vst [vmem:[%s257 + $0x10] sm:$0xf] %v919
        %984 = vst [vmem:[%s257 + $0x14] sm:$0xf] %v920
        %985 = vst [vmem:[%s257 + $0x18] sm:$0xf] %v921
        %986 = vst [vmem:[%s257 + $0x1c] sm:$0xf] %v922
        %987 = vst [vmem:[%s257 + $0x20] sm:$0xf] %v923
        %988 = vst [vmem:[%s257 + $0x24] sm:$0xf] %v924
        %989 = vst [vmem:[%s257 + $0x28] sm:$0xf] %v925
        %990 = vst [vmem:[%s257 + $0x2c] sm:$0xf] %v926
        %991 = vst [vmem:[%s257 + $0x30] sm:$0xf] %v927
        %992 = vst [vmem:[%s257 + $0x34] sm:$0xf] %v928
        %993 = vst [vmem:[%s257 + $0x38] sm:$0xf] %v929
        %994 = vst [vmem:[%s257 + $0x3c] sm:$0xf] %v930
        %995 = vst [vmem:[%s257 + $0x40] sm:$0xf] %v931
        %996 = vst [vmem:[%s257 + $0x44] sm:$0xf] %v932
        %997 = vst [vmem:[%s257 + $0x48] sm:$0xf] %v933
        %998 = vst [vmem:[%s257 + $0x4c] sm:$0xf] %v934
        %999 = vst [vmem:[%s257 + $0x50] sm:$0xf] %v935
        %1000 = vst [vmem:[%s257 + $0x54] sm:$0xf] %v936
        %1001 = vst [vmem:[%s257 + $0x58] sm:$0xf] %v937
        %1002 = vst [vmem:[%s257 + $0x5c] sm:$0xf] %v938
        %1003 = vst [vmem:[%s257 + $0x60] sm:$0xf] %v939
        %1004 = vst [vmem:[%s257 + $0x64] sm:$0xf] %v940
        %1005 = vst [vmem:[%s257 + $0x68] sm:$0xf] %v941
        %1006 = vst [vmem:[%s257 + $0x6c] sm:$0xf] %v942
        %1007 = vst [vmem:[%s257 + $0x70] sm:$0xf] %v943
        %1008 = vst [vmem:[%s257 + $0x74] sm:$0xf] %v944
        %1009 = vst [vmem:[%s257 + $0x78] sm:$0xf] %v945
        %1010 = vst [vmem:[%s257 + $0x7c] sm:$0xf] %v946
      $region40: #{vae_forward.22} parent=31 // pred_fallthru
        _
      %s1011 = smul.u32 32, %s19
      %p1012 = scmp.lt.s32.totalorder %s1011, 63
      %s1013 = scalar_select %p1012, %s1011, 63
      %p1014 = scmp.lt.s32.totalorder %s20, 0
      %s1015 = scalar_select %p1014, %s20, 0
      %s1016 = sadd.s32 %s1015, %s1013
      %s1017 = smul.addr %s1016, 4
      %s1018 = scalar_lea.vmem %s3, %s1017
      // Predicated region
      $region41: #{vae_forward.22} parent=31 // pred_check
        %p1019 = pneg %p135
      $region42: #{vae_forward.22} parent=31 // pred_check_branch
        %1021 = sbr.rel (%p1019) target = $region44
      $region43: #{vae_forward.22} parent=31 // pred_region
        %s1022 = smul.u32 32, %s19
      $region44: #{vae_forward.22} parent=31 // pred_fallthru
        _
    $region32: #{vae_forward.22} parent=5 // pred_fallthru
      _
    %p1023 = scmp.le.s32.totalorder 2, %s9
    // Predicated region
    $region45: #{vae_forward.22} parent=5 // pred_check
      %p1024 = pneg %p1023
    $region46: #{vae_forward.22} parent=5 // pred_check_branch
      %1026 = sbr.rel (%p1024) target = $region48
    $region47: #{vae_forward.22} parent=5 // pred_region
      %s1027 = ssub.s32 %s9, 2
      // Predicated region
      $region49: #{vae_forward.22} parent=47 // pred_check
        %p1028 = pneg %p141
      $region50: #{vae_forward.22} parent=47 // pred_check_branch
        %1030 = sbr.rel (%p1028) target = $region52
      $region51: #{vae_forward.22} parent=47 // pred_region
        %s1031 = smul.u32 32, %s22
        %p1032 = scmp.lt.s32.totalorder %s1031, 63
        %s1033 = scalar_select %p1032, %s1031, 63
        %p1034 = scmp.lt.s32.totalorder %s23, 0
        %s1035 = scalar_select %p1034, %s23, 0
        %s1036 = sadd.s32 %s1035, %s1033
        %s1037 = smul.addr %s1036, 4
        %s1038 = scalar_lea.vmem %s3, %s1037
      $region52: #{vae_forward.22} parent=47 // pred_fallthru
        _
    $region48: #{vae_forward.22} parent=5 // pred_fallthru
      _
  $region6: #{vae_forward.22} parent=0 // loop_footer
    %s13 = sadd.s32 1, %s9
  $region7: #{vae_forward.22} parent=0 // loop_footer_branch
    %8 = sbr.rel target = $region3
  $region8: #{vae_forward.22} parent=0 // loop_exit
    _

// kernel: vae_forward.23
$region0: #{vae_forward.23}
  #allocation0 [shape = 'u32[]', space=smem, size = 0x4, offset = 0x4, fixed_abs, tag = 'smem constant byte address 0x4 - core index']
  #allocation1 [shape = 'u32[144,128]{1,0:T(1,128)}', space=vmem, size = 0x12000, scoped, tag = 'internal scratch']
  #allocation2 [shape = 'f32[128,128]{1,0:T(8,128)}', space=vmem, size = 0x10000, scoped, tag = 'scratch operand']
  %s0 = inlined_call_operand.vmem [shape: bf16[128,1024], index: 0, kind: input, shape index: {}]
  %s1 = inlined_call_operand.vmem [shape: bf16[1024,128], index: 1, kind: input, shape index: {}]
  %s2 = inlined_call_operand.vmem [shape: f32[1,128], index: 2, kind: input, shape index: {}]
  %s3 = inlined_call_operand.vmem [shape: bf16[128,128], index: 3, kind: output, shape index: {}]
  %s4 = sld [smem:[#allocation0]]
  $region76: #{vae_forward.23} parent=0
    _
  %s6 = ssub.s32 1, %s4
  %s7 = scalar_select 0, %s6, %s4
  $region1: #{vae_forward.23} parent=0
    #allocation3 [shape = 'u8[262144]{0}', space=vmem, size = 0x40000, scoped, tag = 'input window, operand 0']
    loop: start=0, step=1, limit=4
    $region2: #{vae_forward.23} parent=1 // loop_pre_header
      _
    $region3: #{vae_forward.23} parent=1 // loop_header
      %s9 = sphi 0, %s13
      %p10 = scmp.ge.s32.totalorder %s9, 4
      %s16 = sphi 0, %s35
      %s17 = sphi 0, %s31
      %s18 = sphi 0, %s27
      %s19 = sphi 0, %s16
      %s20 = sphi 0, %s17
      %s21 = sphi 0, %s18
      %s22 = sphi 0, %s19
      %s23 = sphi 0, %s20
      %s24 = sphi 0, %s21
      %s40 = sphi 0, %s42
      %s43 = sphi 0, %s40
      %s44 = sphi 0, %s43
      %s60 = sphi 0, %s44
      %s68 = sphi 0, %s70
      %s71 = sphi 0, %s68
      %s72 = sphi 0, %s71
      %s88 = sphi 0, %s72
      %s94 = sphi 0, %s96
      %s97 = sphi 0, %s94
      %s98 = sphi 0, %s97
      %s114 = sphi 0, %s98
      %s122 = sphi 0, %s124
      %s125 = sphi 0, %s122
      %s126 = sphi 0, %s125
      %s142 = sphi 0, %s126
    $region4: #{vae_forward.23} parent=1 // loop_header_branch
      %12 = sbr.rel (%p10) target = $region8
    $region5: #{vae_forward.23} parent=1 // loop_body
      %s14 = ssub.s32 %s9, 1
      %s15 = ssub.s32 %s9, 2
      %s25 = sadd.s32 1, %s18
      %p26 = scmp.ge.s32.totalorder %s25, 2
      %s27 = scalar_select %p26, 0, %s25
      %s28 = sadd.s32 1, %s17
      %s29 = scalar_select %p26, %s28, %s17
      %p30 = scmp.ge.s32.totalorder %s29, 1
      %s31 = scalar_select %p30, 0, %s29
      %s32 = sadd.s32 1, %s16
      %s33 = scalar_select %p30, %s32, %s16
      %p34 = scmp.ge.s32.totalorder %s33, 1
      %s35 = scalar_select %p34, 0, %s33
      %s36 = ssub.s32 %s16, %s35
      %s37 = ssub.s32 %s18, %s27
      %s38 = sor.u32 %s36, %s37
      %p39 = scmp.eq.s32.totalorder %s38, 0
      %s41 = sadd.s32 %s40, 1
      %s42 = scalar_select %p39, %s40, %s41
      %p45 = pneg %p39
      %p46 = scmp.eq.s32.totalorder %s9, 1
      %p47 = por %p45, %p46
      %p48 = scmp.ne.s32.totalorder %s40, %s43
      %p49 = scmp.eq.s32.totalorder %s9, 0
      %p50 = por %p48, %p49
      %p51 = scmp.ne.s32.totalorder %s40, %s43
      %p52 = scmp.eq.s32.totalorder %s14, 1
      %p53 = por %p51, %p52
      %p54 = scmp.ne.s32.totalorder %s43, %s44
      %p55 = scmp.eq.s32.totalorder %s14, 0
      %p56 = por %p54, %p55
      %p57 = scmp.ne.s32.totalorder %s43, %s44
      %p58 = scmp.eq.s32.totalorder %s15, 1
      %p59 = por %p57, %p58
      %p61 = scmp.ne.s32.totalorder %s44, %s60
      %p62 = scmp.eq.s32.totalorder %s15, 0
      %p63 = por %p61, %p62
      %s64 = ssub.s32 %s18, %s27
      %s65 = ssub.s32 %s17, %s31
      %s66 = sor.u32 %s64, %s65
      %p67 = scmp.eq.s32.totalorder %s66, 0
      %s69 = sadd.s32 %s68, 1
      %s70 = scalar_select %p67, %s68, %s69
      %p73 = pneg %p67
      %p74 = scmp.eq.s32.totalorder %s9, 1
      %p75 = por %p73, %p74
      %p76 = scmp.ne.s32.totalorder %s68, %s71
      %p77 = scmp.eq.s32.totalorder %s9, 0
      %p78 = por %p76, %p77
      %p79 = scmp.ne.s32.totalorder %s68, %s71
      %p80 = scmp.eq.s32.totalorder %s14, 1
      %p81 = por %p79, %p80
      %p82 = scmp.ne.s32.totalorder %s71, %s72
      %p83 = scmp.eq.s32.totalorder %s14, 0
      %p84 = por %p82, %p83
      %p85 = scmp.ne.s32.totalorder %s71, %s72
      %p86 = scmp.eq.s32.totalorder %s15, 1
      %p87 = por %p85, %p86
      %p89 = scmp.ne.s32.totalorder %s72, %s88
      %p90 = scmp.eq.s32.totalorder %s15, 0
      %p91 = por %p89, %p90
      %s92 = ssub.s32 %s17, %s31
      %p93 = scmp.eq.s32.totalorder %s92, 0
      %s95 = sadd.s32 %s94, 1
      %s96 = scalar_select %p93, %s94, %s95
      %p99 = pneg %p93
      %p100 = scmp.eq.s32.totalorder %s9, 1
      %p101 = por %p99, %p100
      %p102 = scmp.ne.s32.totalorder %s94, %s97
      %p103 = scmp.eq.s32.totalorder %s9, 0
      %p104 = por %p102, %p103
      %p105 = scmp.ne.s32.totalorder %s94, %s97
      %p106 = scmp.eq.s32.totalorder %s14, 1
      %p107 = por %p105, %p106
      %p108 = scmp.ne.s32.totalorder %s97, %s98
      %p109 = scmp.eq.s32.totalorder %s14, 0
      %p110 = por %p108, %p109
      %p111 = scmp.ne.s32.totalorder %s97, %s98
      %p112 = scmp.eq.s32.totalorder %s15, 1
      %p113 = por %p111, %p112
      %p115 = scmp.ne.s32.totalorder %s98, %s114
      %p116 = scmp.eq.s32.totalorder %s15, 0
      %p117 = por %p115, %p116
      %s118 = ssub.s32 %s16, %s35
      %s119 = ssub.s32 %s17, %s31
      %s120 = sor.u32 %s118, %s119
      %p121 = scmp.eq.s32.totalorder %s120, 0
      %s123 = sadd.s32 %s122, 1
      %s124 = scalar_select %p121, %s122, %s123
      %p127 = pneg %p121
      %p128 = scmp.eq.s32.totalorder %s9, 1
      %p129 = por %p127, %p128
      %p130 = scmp.ne.s32.totalorder %s122, %s125
      %p131 = scmp.eq.s32.totalorder %s9, 0
      %p132 = por %p130, %p131
      %p133 = scmp.ne.s32.totalorder %s122, %s125
      %p134 = scmp.eq.s32.totalorder %s14, 1
      %p135 = por %p133, %p134
      %p136 = scmp.ne.s32.totalorder %s125, %s126
      %p137 = scmp.eq.s32.totalorder %s14, 0
      %p138 = por %p136, %p137
      %p139 = scmp.ne.s32.totalorder %s125, %s126
      %p140 = scmp.eq.s32.totalorder %s15, 1
      %p141 = por %p139, %p140
      %p143 = scmp.ne.s32.totalorder %s126, %s142
      %p144 = scmp.eq.s32.totalorder %s15, 0
      %p145 = por %p143, %p144
      %p146 = scmp.le.s32.totalorder 1, %s9
      %p147 = scmp.lt.s32.totalorder %s9, 3
      %p148 = pnand %p146, %p147
      %p149 = pneg %p148
      // Predicated region
      $region9: #{vae_forward.23} parent=5 // pred_check
        _
      $region10: #{vae_forward.23} parent=5 // pred_check_branch
        %151 = sbr.rel (%p148) target = $region12
      $region11: #{vae_forward.23} parent=5 // pred_region
        %s152 = ssub.s32 %s9, 1
        // Predicated region
        $region13: #{vae_forward.23} parent=11 // pred_check
          %p153 = pneg %p110
        $region14: #{vae_forward.23} parent=11 // pred_check_branch
          %155 = sbr.rel (%p153) target = $region16
        $region15: #{vae_forward.23} parent=11 // pred_region
          %p156 = scmp.lt.s32.totalorder %s20, 0
          %s157 = scalar_select %p156, %s20, 0
          %s158 = scalar_lea.vmem %s2, %s157
        $region16: #{vae_forward.23} parent=11 // pred_fallthru
          _
      $region12: #{vae_forward.23} parent=5 // pred_fallthru
        _
      %p159 = scmp.lt.s32.totalorder %s9, 2
      // Predicated region
      $region17: #{vae_forward.23} parent=5 // pred_check
        %p160 = pneg %p159
      $region18: #{vae_forward.23} parent=5 // pred_check_branch
        %162 = sbr.rel (%p160) target = $region20
      $region19: #{vae_forward.23} parent=5 // pred_region
        // Predicated region
        $region21: #{vae_forward.23} parent=19 // pred_check
          %p163 = pneg %p50
        $region22: #{vae_forward.23} parent=19 // pred_check_branch
          %165 = sbr.rel (%p163) target = $region24
        $region23: #{vae_forward.23} parent=19 // pred_region
          %s166 = sand.u32 %s40, 1
          %s167 = sand.u32 %s40, 1
          %s168 = smul.addr %s167, 256
          %s169 = scalar_lea.vmem [#allocation3], %s168
          %s170 = smul.u32 16, %s16
          %s171 = smul.u32 4, %s18
          %s172 = smul.addr %s170, 8
          %s173 = sadd.s32 %s171, %s172
          %s174 = smul.addr %s173, 4
          %s175 = scalar_lea.vmem %s0, %s174
          // Predicated region
          $region25: #{vae_forward.23} parent=23 // pred_check
            _
          $region26: #{vae_forward.23} parent=23 // pred_check_branch
            %177 = sbr.rel (0) target = $region28
          $region27: #{vae_forward.23} parent=23 // pred_region
            // Predicated region
            $region29: #{vae_forward.23} parent=27 // pred_check
              _
            $region30: #{vae_forward.23} parent=27 // pred_check_branch
              %179 = sbr.rel (0) target = $region32
            $region31: #{vae_forward.23} parent=27 // pred_region
              loop: start=0, step=1, limit=1
              $region33: #{vae_forward.23} parent=31 // loop_pre_header
                _
              $region34: #{vae_forward.23} parent=31 // loop_header
                %s181 = sphi 0, %s185
                %p182 = scmp.ge.s32.totalorder %s181, 1
                %s186 = sphi %s175, %s175
                %s187 = sphi %s169, %s169
              $region35: #{vae_forward.23} parent=31 // loop_header_branch
                %184 = sbr.rel (%p182) target = $region39
              $region36: #{vae_forward.23} parent=31 // loop_body
                %v188 = vld [vmem:[%s186] sm:$0xff]
                %189 = vst [vmem:[%s187] sm:$0xff] %v188
                %v190 = vld [vmem:[%s186 + $0x8] sm:$0xff]
                %191 = vst [vmem:[%s187 + $0x8] sm:$0xff] %v190
                %v192 = vld [vmem:[%s186 + $0x20] sm:$0xff]
                %193 = vst [vmem:[%s187 + $0x10] sm:$0xff] %v192
                %v194 = vld [vmem:[%s186 + $0x28] sm:$0xff]
                %195 = vst [vmem:[%s187 + $0x18] sm:$0xff] %v194
                %v196 = vld [vmem:[%s186 + $0x40] sm:$0xff]
                %197 = vst [vmem:[%s187 + $0x20] sm:$0xff] %v196
                %v198 = vld [vmem:[%s186 + $0x48] sm:$0xff]
                %199 = vst [vmem:[%s187 + $0x28] sm:$0xff] %v198
                %v200 = vld [vmem:[%s186 + $0x60] sm:$0xff]
                %201 = vst [vmem:[%s187 + $0x30] sm:$0xff] %v200
                %v202 = vld [vmem:[%s186 + $0x68] sm:$0xff]
                %203 = vst [vmem:[%s187 + $0x38] sm:$0xff] %v202
                %v204 = vld [vmem:[%s186 + $0x80] sm:$0xff]
                %205 = vst [vmem:[%s187 + $0x40] sm:$0xff] %v204
                %v206 = vld [vmem:[%s186 + $0x88] sm:$0xff]
                %207 = vst [vmem:[%s187 + $0x48] sm:$0xff] %v206
                %v208 = vld [vmem:[%s186 + $0xa0] sm:$0xff]
                %209 = vst [vmem:[%s187 + $0x50] sm:$0xff] %v208
                %v210 = vld [vmem:[%s186 + $0xa8] sm:$0xff]
                %211 = vst [vmem:[%s187 + $0x58] sm:$0xff] %v210
                %v212 = vld [vmem:[%s186 + $0xc0] sm:$0xff]
                %213 = vst [vmem:[%s187 + $0x60] sm:$0xff] %v212
                %v214 = vld [vmem:[%s186 + $0xc8] sm:$0xff]
                %215 = vst [vmem:[%s187 + $0x68] sm:$0xff] %v214
                %v216 = vld [vmem:[%s186 + $0xe0] sm:$0xff]
                %217 = vst [vmem:[%s187 + $0x70] sm:$0xff] %v216
                %v218 = vld [vmem:[%s186 + $0xe8] sm:$0xff]
                %219 = vst [vmem:[%s187 + $0x78] sm:$0xff] %v218
                %v220 = vld [vmem:[%s186 + $0x100] sm:$0xff]
                %221 = vst [vmem:[%s187 + $0x80] sm:$0xff] %v220
                %v222 = vld [vmem:[%s186 + $0x108] sm:$0xff]
                %223 = vst [vmem:[%s187 + $0x88] sm:$0xff] %v222
                %v224 = vld [vmem:[%s186 + $0x120] sm:$0xff]
                %225 = vst [vmem:[%s187 + $0x90] sm:$0xff] %v224
                %v226 = vld [vmem:[%s186 + $0x128] sm:$0xff]
                %227 = vst [vmem:[%s187 + $0x98] sm:$0xff] %v226
                %v228 = vld [vmem:[%s186 + $0x140] sm:$0xff]
                %229 = vst [vmem:[%s187 + $0xa0] sm:$0xff] %v228
                %v230 = vld [vmem:[%s186 + $0x148] sm:$0xff]
                %231 = vst [vmem:[%s187 + $0xa8] sm:$0xff] %v230
                %v232 = vld [vmem:[%s186 + $0x160] sm:$0xff]
                %233 = vst [vmem:[%s187 + $0xb0] sm:$0xff] %v232
                %v234 = vld [vmem:[%s186 + $0x168] sm:$0xff]
                %235 = vst [vmem:[%s187 + $0xb8] sm:$0xff] %v234
                %v236 = vld [vmem:[%s186 + $0x180] sm:$0xff]
                %237 = vst [vmem:[%s187 + $0xc0] sm:$0xff] %v236
                %v238 = vld [vmem:[%s186 + $0x188] sm:$0xff]
                %239 = vst [vmem:[%s187 + $0xc8] sm:$0xff] %v238
                %v240 = vld [vmem:[%s186 + $0x1a0] sm:$0xff]
                %241 = vst [vmem:[%s187 + $0xd0] sm:$0xff] %v240
                %v242 = vld [vmem:[%s186 + $0x1a8] sm:$0xff]
                %243 = vst [vmem:[%s187 + $0xd8] sm:$0xff] %v242
                %v244 = vld [vmem:[%s186 + $0x1c0] sm:$0xff]
                %245 = vst [vmem:[%s187 + $0xe0] sm:$0xff] %v244
                %v246 = vld [vmem:[%s186 + $0x1c8] sm:$0xff]
                %247 = vst [vmem:[%s187 + $0xe8] sm:$0xff] %v246
                %v248 = vld [vmem:[%s186 + $0x1e0] sm:$0xff]
                %249 = vst [vmem:[%s187 + $0xf0] sm:$0xff] %v248
                %v250 = vld [vmem:[%s186 + $0x1e8] sm:$0xff]
                %251 = vst [vmem:[%s187 + $0xf8] sm:$0xff] %v250
              $region37: #{vae_forward.23} parent=31 // loop_footer
                %s185 = sadd.s32 1, %s181
              $region38: #{vae_forward.23} parent=31 // loop_footer_branch
                %180 = sbr.rel target = $region34
              $region39: #{vae_forward.23} parent=31 // loop_exit
                _
            $region32: #{vae_forward.23} parent=27 // pred_fallthru
              _
            // Predicated region
            $region40: #{vae_forward.23} parent=27 // pred_check
              _
            $region41: #{vae_forward.23} parent=27 // pred_check_branch
              %253 = sbr.rel target = $region43
            $region42: #{vae_forward.23} parent=27 // pred_region
              _
            $region43: #{vae_forward.23} parent=27 // pred_fallthru
              _
          $region28: #{vae_forward.23} parent=23 // pred_fallthru
            _
          %254 = vnop
        $region24: #{vae_forward.23} parent=19 // pred_fallthru
          _
        // Predicated region
        $region44: #{vae_forward.23} parent=19 // pred_check
          %p255 = pneg %p78
        $region45: #{vae_forward.23} parent=19 // pred_check_branch
          %257 = sbr.rel (%p255) target = $region47
        $region46: #{vae_forward.23} parent=19 // pred_region
          %s258 = smul.u32 64, %s18
          %p259 = scmp.lt.s32.totalorder %s258, 127
          %s260 = scalar_select %p259, %s258, 127
          %p261 = scmp.lt.s32.totalorder %s17, 0
          %s262 = scalar_select %p261, %s17, 0
          %s263 = sadd.s32 %s262, %s260
          %s264 = smul.addr %s263, 4
          %s265 = scalar_lea.vmem %s1, %s264
          %s266 = smul.u32 64, %s18
        $region47: #{vae_forward.23} parent=19 // pred_fallthru
          _
      $region20: #{vae_forward.23} parent=5 // pred_fallthru
        _
      %p267 = scmp.le.s32.totalorder 1, %s9
      %p268 = scmp.lt.s32.totalorder %s9, 3
      %p269 = pnand %p267, %p268
      %p270 = pneg %p269
      // Predicated region
      $region48: #{vae_forward.23} parent=5 // pred_check
        _
      $region49: #{vae_forward.23} parent=5 // pred_check_branch
        %272 = sbr.rel (%p269) target = $region51
      $region50: #{vae_forward.23} parent=5 // pred_region
        %s273 = ssub.s32 %s9, 1
        %s274 = sand.u32 %s43, 1
        %s275 = sand.u32 %s43, 1
        %s276 = smul.addr %s275, 256
        %s277 = scalar_lea.vmem [#allocation3], %s276
        // Predicated region
        $region52: #{vae_forward.23} parent=50 // pred_check
          %p278 = pneg %p56
        $region53: #{vae_forward.23} parent=50 // pred_check_branch
          %280 = sbr.rel (%p278) target = $region55
        $region54: #{vae_forward.23} parent=50 // pred_region
          _
        $region55: #{vae_forward.23} parent=50 // pred_fallthru
          _
        %s281 = sand.u32 %s43, 1
        %s282 = sand.u32 %s43, 1
        %s283 = smul.addr %s282, 256
        %s284 = scalar_lea.vmem [#allocation3], %s283
        %p285 = pneg %p56
        %p286 = pneg %p53
        %s287 = smul.u32 64, %s21
        %p288 = scmp.lt.s32.totalorder %s287, 127
        %s289 = scalar_select %p288, %s287, 127
        %p290 = scmp.lt.s32.totalorder %s20, 0
        %s291 = scalar_select %p290, %s20, 0
        %s292 = sadd.s32 %s291, %s289
        %s293 = smul.addr %s292, 4
        %s294 = scalar_lea.vmem %s1, %s293
        %p295 = pneg %p84
        %p296 = pneg %p81
        %p297 = scmp.lt.s32.totalorder %s20, 0
        %s298 = scalar_select %p297, %s20, 0
        %s299 = scalar_lea.vmem %s2, %s298
        %p300 = pneg %p110
        %p301 = pneg %p107
        %p302 = pneg %p138
        %p303 = pneg %p135
        %s304 = smul.u32 16, %s19
        %p305 = scmp.lt.s32.totalorder %s304, 15
        %s306 = scalar_select %p305, %s304, 15
        %p307 = scmp.lt.s32.totalorder %s20, 0
        %s308 = scalar_select %p307, %s20, 0
        %s309 = sadd.s32 %s308, %s306
        %s310 = smul.addr %s309, 4
        %s311 = scalar_lea.vmem %s3, %s310
        %s312 = smul.u32 16, %s19
        %s313 = smul.u32 4, %s21
        %s314 = smul.u32 64, %s21
        %p315 = scmp.lt.s32.totalorder %s314, 127
        %s316 = scalar_select %p315, %s314, 127
        %p317 = scmp.lt.s32.totalorder %s20, 0
        %s318 = scalar_select %p317, %s20, 0
        %s319 = sadd.s32 %s318, %s316
        %s320 = smul.addr %s319, 4
        %s321 = scalar_lea.vmem %s1, %s320
        %s322 = smul.u32 64, %s21
        %p323 = scmp.lt.s32.totalorder %s20, 0
        %s324 = scalar_select %p323, %s20, 0
        %s325 = scalar_lea.vmem %s2, %s324
        %s326 = smul.u32 16, %s19
        %p327 = scmp.lt.s32.totalorder %s326, 15
        %s328 = scalar_select %p327, %s326, 15
        %p329 = scmp.lt.s32.totalorder %s20, 0
        %s330 = scalar_select %p329, %s20, 0
        %s331 = sadd.s32 %s330, %s328
        %s332 = smul.addr %s331, 4
        %s333 = scalar_lea.vmem %s3, %s332
        %s334 = smul.u32 16, %s19
        %p336 = scmp.eq.s32.totalorder %s21, 0
        // Predicated region
        $region56: #{vae_forward.23} parent=50 // pred_check
          %p337 = pneg %p336
        $region57: #{vae_forward.23} parent=50 // pred_check_branch
          %339 = sbr.rel (%p337) target = $region59
        $region58: #{vae_forward.23} parent=50 // pred_region
          %340 = vst [vmem:[#allocation2] sm:$0xff] 0.0
          %341 = vst [vmem:[#allocation2 + $0x8] sm:$0xff] 0.0
          %342 = vst [vmem:[#allocation2 + $0x10] sm:$0xff] 0.0
          %343 = vst [vmem:[#allocation2 + $0x18] sm:$0xff] 0.0
          %344 = vst [vmem:[#allocation2 + $0x20] sm:$0xff] 0.0
          %345 = vst [vmem:[#allocation2 + $0x28] sm:$0xff] 0.0
          %346 = vst [vmem:[#allocation2 + $0x30] sm:$0xff] 0.0
          %347 = vst [vmem:[#allocation2 + $0x38] sm:$0xff] 0.0
          %348 = vst [vmem:[#allocation2 + $0x40] sm:$0xff] 0.0
          %349 = vst [vmem:[#allocation2 + $0x48] sm:$0xff] 0.0
          %350 = vst [vmem:[#allocation2 + $0x50] sm:$0xff] 0.0
          %351 = vst [vmem:[#allocation2 + $0x58] sm:$0xff] 0.0
          %352 = vst [vmem:[#allocation2 + $0x60] sm:$0xff] 0.0
          %353 = vst [vmem:[#allocation2 + $0x68] sm:$0xff] 0.0
          %354 = vst [vmem:[#allocation2 + $0x70] sm:$0xff] 0.0
          %355 = vst [vmem:[#allocation2 + $0x78] sm:$0xff] 0.0
        $region59: #{vae_forward.23} parent=50 // pred_fallthru
          _
        %v356 = vld [vmem:[#allocation2] sm:$0xff]
        %v357 = vld [vmem:[#allocation2 + $0x8] sm:$0xff]
        %v358 = vld [vmem:[#allocation2 + $0x10] sm:$0xff]
        %v359 = vld [vmem:[#allocation2 + $0x18] sm:$0xff]
        %v360 = vld [vmem:[#allocation2 + $0x20] sm:$0xff]
        %v361 = vld [vmem:[#allocation2 + $0x28] sm:$0xff]
        %v362 = vld [vmem:[#allocation2 + $0x30] sm:$0xff]
        %v363 = vld [vmem:[#allocation2 + $0x38] sm:$0xff]
        %v364 = vld [vmem:[#allocation2 + $0x40] sm:$0xff]
        %v365 = vld [vmem:[#allocation2 + $0x48] sm:$0xff]
        %v366 = vld [vmem:[#allocation2 + $0x50] sm:$0xff]
        %v367 = vld [vmem:[#allocation2 + $0x58] sm:$0xff]
        %v368 = vld [vmem:[#allocation2 + $0x60] sm:$0xff]
        %v369 = vld [vmem:[#allocation2 + $0x68] sm:$0xff]
        %v370 = vld [vmem:[#allocation2 + $0x70] sm:$0xff]
        %v371 = vld [vmem:[#allocation2 + $0x78] sm:$0xff]
        %v372 = vld [vmem:[%s277] sm:$0xff]
        %v373 = vld [vmem:[%s277 + $0x8] sm:$0xff]
        %v374 = vld [vmem:[%s277 + $0x10] sm:$0xff]
        %v375 = vld [vmem:[%s277 + $0x18] sm:$0xff]
        %v376 = vld [vmem:[%s277 + $0x20] sm:$0xff]
        %v377 = vld [vmem:[%s277 + $0x28] sm:$0xff]
        %v378 = vld [vmem:[%s277 + $0x30] sm:$0xff]
        %v379 = vld [vmem:[%s277 + $0x38] sm:$0xff]
        %v380 = vld [vmem:[%s277 + $0x40] sm:$0xff]
        %v381 = vld [vmem:[%s277 + $0x48] sm:$0xff]
        %v382 = vld [vmem:[%s277 + $0x50] sm:$0xff]
        %v383 = vld [vmem:[%s277 + $0x58] sm:$0xff]
        %v384 = vld [vmem:[%s277 + $0x60] sm:$0xff]
        %v385 = vld [vmem:[%s277 + $0x68] sm:$0xff]
        %v386 = vld [vmem:[%s277 + $0x70] sm:$0xff]
        %v387 = vld [vmem:[%s277 + $0x78] sm:$0xff]
        %v388 = vld [vmem:[%s277 + $0x80] sm:$0xff]
        %v389 = vld [vmem:[%s277 + $0x88] sm:$0xff]
        %v390 = vld [vmem:[%s277 + $0x90] sm:$0xff]
        %v391 = vld [vmem:[%s277 + $0x98] sm:$0xff]
        %v392 = vld [vmem:[%s277 + $0xa0] sm:$0xff]
        %v393 = vld [vmem:[%s277 + $0xa8] sm:$0xff]
        %v394 = vld [vmem:[%s277 + $0xb0] sm:$0xff]
        %v395 = vld [vmem:[%s277 + $0xb8] sm:$0xff]
        %v396 = vld [vmem:[%s277 + $0xc0] sm:$0xff]
        %v397 = vld [vmem:[%s277 + $0xc8] sm:$0xff]
        %v398 = vld [vmem:[%s277 + $0xd0] sm:$0xff]
        %v399 = vld [vmem:[%s277 + $0xd8] sm:$0xff]
        %v400 = vld [vmem:[%s277 + $0xe0] sm:$0xff]
        %v401 = vld [vmem:[%s277 + $0xe8] sm:$0xff]
        %v402 = vld [vmem:[%s277 + $0xf0] sm:$0xff]
        %v403 = vld [vmem:[%s277 + $0xf8] sm:$0xff]
        %v404 = vld [vmem:[%s321] sm:$0xf]
        %v405 = vld [vmem:[%s321 + $0x4] sm:$0xf]
        %v406 = vld [vmem:[%s321 + $0x8] sm:$0xf]
        %v407 = vld [vmem:[%s321 + $0xc] sm:$0xf]
        %v408 = vld [vmem:[%s321 + $0x10] sm:$0xf]
        %v409 = vld [vmem:[%s321 + $0x14] sm:$0xf]
        %v410 = vld [vmem:[%s321 + $0x18] sm:$0xf]
        %v411 = vld [vmem:[%s321 + $0x1c] sm:$0xf]
        %v412 = vld [vmem:[%s321 + $0x20] sm:$0xf]
        %v413 = vld [vmem:[%s321 + $0x24] sm:$0xf]
        %v414 = vld [vmem:[%s321 + $0x28] sm:$0xf]
        %v415 = vld [vmem:[%s321 + $0x2c] sm:$0xf]
        %v416 = vld [vmem:[%s321 + $0x30] sm:$0xf]
        %v417 = vld [vmem:[%s321 + $0x34] sm:$0xf]
        %v418 = vld [vmem:[%s321 + $0x38] sm:$0xf]
        %v419 = vld [vmem:[%s321 + $0x3c] sm:$0xf]
        %v420 = vld [vmem:[%s321 + $0x40] sm:$0xf]
        %v421 = vld [vmem:[%s321 + $0x44] sm:$0xf]
        %v422 = vld [vmem:[%s321 + $0x48] sm:$0xf]
        %v423 = vld [vmem:[%s321 + $0x4c] sm:$0xf]
        %v424 = vld [vmem:[%s321 + $0x50] sm:$0xf]
        %v425 = vld [vmem:[%s321 + $0x54] sm:$0xf]
        %v426 = vld [vmem:[%s321 + $0x58] sm:$0xf]
        %v427 = vld [vmem:[%s321 + $0x5c] sm:$0xf]
        %v428 = vld [vmem:[%s321 + $0x60] sm:$0xf]
        %v429 = vld [vmem:[%s321 + $0x64] sm:$0xf]
        %v430 = vld [vmem:[%s321 + $0x68] sm:$0xf]
        %v431 = vld [vmem:[%s321 + $0x6c] sm:$0xf]
        %v432 = vld [vmem:[%s321 + $0x70] sm:$0xf]
        %v433 = vld [vmem:[%s321 + $0x74] sm:$0xf]
        %v434 = vld [vmem:[%s321 + $0x78] sm:$0xf]
        %v435 = vld [vmem:[%s321 + $0x7c] sm:$0xf]
        %v436 = vld [vmem:[%s321 + $0x80] sm:$0xf]
        %v437 = vld [vmem:[%s321 + $0x84] sm:$0xf]
        %v438 = vld [vmem:[%s321 + $0x88] sm:$0xf]
        %v439 = vld [vmem:[%s321 + $0x8c] sm:$0xf]
        %v440 = vld [vmem:[%s321 + $0x90] sm:$0xf]
        %v441 = vld [vmem:[%s321 + $0x94] sm:$0xf]
        %v442 = vld [vmem:[%s321 + $0x98] sm:$0xf]
        %v443 = vld [vmem:[%s321 + $0x9c] sm:$0xf]
        %v444 = vld [vmem:[%s321 + $0xa0] sm:$0xf]
        %v445 = vld [vmem:[%s321 + $0xa4] sm:$0xf]
        %v446 = vld [vmem:[%s321 + $0xa8] sm:$0xf]
        %v447 = vld [vmem:[%s321 + $0xac] sm:$0xf]
        %v448 = vld [vmem:[%s321 + $0xb0] sm:$0xf]
        %v449 = vld [vmem:[%s321 + $0xb4] sm:$0xf]
        %v450 = vld [vmem:[%s321 + $0xb8] sm:$0xf]
        %v451 = vld [vmem:[%s321 + $0xbc] sm:$0xf]
        %v452 = vld [vmem:[%s321 + $0xc0] sm:$0xf]
        %v453 = vld [vmem:[%s321 + $0xc4] sm:$0xf]
        %v454 = vld [vmem:[%s321 + $0xc8] sm:$0xf]
        %v455 = vld [vmem:[%s321 + $0xcc] sm:$0xf]
        %v456 = vld [vmem:[%s321 + $0xd0] sm:$0xf]
        %v457 = vld [vmem:[%s321 + $0xd4] sm:$0xf]
        %v458 = vld [vmem:[%s321 + $0xd8] sm:$0xf]
        %v459 = vld [vmem:[%s321 + $0xdc] sm:$0xf]
        %v460 = vld [vmem:[%s321 + $0xe0] sm:$0xf]
        %v461 = vld [vmem:[%s321 + $0xe4] sm:$0xf]
        %v462 = vld [vmem:[%s321 + $0xe8] sm:$0xf]
        %v463 = vld [vmem:[%s321 + $0xec] sm:$0xf]
        %v464 = vld [vmem:[%s321 + $0xf0] sm:$0xf]
        %v465 = vld [vmem:[%s321 + $0xf4] sm:$0xf]
        %v466 = vld [vmem:[%s321 + $0xf8] sm:$0xf]
        %v467 = vld [vmem:[%s321 + $0xfc] sm:$0xf]
        %v500 = vunpack.c.l.b16 %v372
        %v501 = vunpack.c.h.b16 %v372
        %v502 = vunpack.c.l.b16 %v373
        %v503 = vunpack.c.h.b16 %v373
        %v504 = vunpack.c.l.b16 %v374
        %v505 = vunpack.c.h.b16 %v374
        %v506 = vunpack.c.l.b16 %v375
        %v507 = vunpack.c.h.b16 %v375
        %v508 = vunpack.c.l.b16 %v376
        %v509 = vunpack.c.h.b16 %v376
        %v510 = vunpack.c.l.b16 %v377
        %v511 = vunpack.c.h.b16 %v377
        %v512 = vunpack.c.l.b16 %v378
        %v513 = vunpack.c.h.b16 %v378
        %v514 = vunpack.c.l.b16 %v379
        %v515 = vunpack.c.h.b16 %v379
        %v516 = vunpack.c.l.b16 %v380
        %v517 = vunpack.c.h.b16 %v380
        %v518 = vunpack.c.l.b16 %v381
        %v519 = vunpack.c.h.b16 %v381
        %v520 = vunpack.c.l.b16 %v382
        %v521 = vunpack.c.h.b16 %v382
        %v522 = vunpack.c.l.b16 %v383
        %v523 = vunpack.c.h.b16 %v383
        %v524 = vunpack.c.l.b16 %v384
        %v525 = vunpack.c.h.b16 %v384
        %v526 = vunpack.c.l.b16 %v385
        %v527 = vunpack.c.h.b16 %v385
        %v528 = vunpack.c.l.b16 %v386
        %v529 = vunpack.c.h.b16 %v386
        %v530 = vunpack.c.l.b16 %v387
        %v531 = vunpack.c.h.b16 %v387
        %v532 = vunpack.c.l.b16 %v388
        %v533 = vunpack.c.h.b16 %v388
        %v534 = vunpack.c.l.b16 %v389
        %v535 = vunpack.c.h.b16 %v389
        %v536 = vunpack.c.l.b16 %v390
        %v537 = vunpack.c.h.b16 %v390
        %v538 = vunpack.c.l.b16 %v391
        %v539 = vunpack.c.h.b16 %v391
        %v540 = vunpack.c.l.b16 %v392
        %v541 = vunpack.c.h.b16 %v392
        %v542 = vunpack.c.l.b16 %v393
        %v543 = vunpack.c.h.b16 %v393
        %v544 = vunpack.c.l.b16 %v394
        %v545 = vunpack.c.h.b16 %v394
        %v546 = vunpack.c.l.b16 %v395
        %v547 = vunpack.c.h.b16 %v395
        %v548 = vunpack.c.l.b16 %v396
        %v549 = vunpack.c.h.b16 %v396
        %v550 = vunpack.c.l.b16 %v397
        %v551 = vunpack.c.h.b16 %v397
        %v552 = vunpack.c.l.b16 %v398
        %v553 = vunpack.c.h.b16 %v398
        %v554 = vunpack.c.l.b16 %v399
        %v555 = vunpack.c.h.b16 %v399
        %v556 = vunpack.c.l.b16 %v400
        %v557 = vunpack.c.h.b16 %v400
        %v558 = vunpack.c.l.b16 %v401
        %v559 = vunpack.c.h.b16 %v401
        %v560 = vunpack.c.l.b16 %v402
        %v561 = vunpack.c.h.b16 %v402
        %v562 = vunpack.c.l.b16 %v403
        %v563 = vunpack.c.h.b16 %v403
        %v564 = vpack.c.b16 %v504, %v500
        %v565 = vpack.c.b16 %v505, %v501
        %v566 = vpack.c.b16 %v506, %v502
        %v567 = vpack.c.b16 %v507, %v503
        %v568 = vpack.c.b16 %v512, %v508
        %v569 = vpack.c.b16 %v513, %v509
        %v570 = vpack.c.b16 %v514, %v510
        %v571 = vpack.c.b16 %v515, %v511
        %v572 = vpack.c.b16 %v520, %v516
        %v573 = vpack.c.b16 %v521, %v517
        %v574 = vpack.c.b16 %v522, %v518
        %v575 = vpack.c.b16 %v523, %v519
        %v576 = vpack.c.b16 %v528, %v524
        %v577 = vpack.c.b16 %v529, %v525
        %v578 = vpack.c.b16 %v530, %v526
        %v579 = vpack.c.b16 %v531, %v527
        %v580 = vpack.c.b16 %v536, %v532
        %v581 = vpack.c.b16 %v537, %v533
        %v582 = vpack.c.b16 %v538, %v534
        %v583 = vpack.c.b16 %v539, %v535
        %v584 = vpack.c.b16 %v544, %v540
        %v585 = vpack.c.b16 %v545, %v541
        %v586 = vpack.c.b16 %v546, %v542
        %v587 = vpack.c.b16 %v547, %v543
        %v588 = vpack.c.b16 %v552, %v548
        %v589 = vpack.c.b16 %v553, %v549
        %v590 = vpack.c.b16 %v554, %v550
        %v591 = vpack.c.b16 %v555, %v551
        %v592 = vpack.c.b16 %v560, %v556
        %v593 = vpack.c.b16 %v561, %v557
        %v594 = vpack.c.b16 %v562, %v558
        %v595 = vpack.c.b16 %v563, %v559
        %v692 = vunpack.c.l.b16 %v404
        %v693 = vunpack.c.l.b16 %v405
        %v694 = vunpack.c.l.b16 %v406
        %v695 = vunpack.c.l.b16 %v407
        %v696 = vunpack.c.l.b16 %v408
        %v697 = vunpack.c.l.b16 %v409
        %v698 = vunpack.c.l.b16 %v410
        %v699 = vunpack.c.l.b16 %v411
        %v700 = vunpack.c.l.b16 %v412
        %v701 = vunpack.c.l.b16 %v413
        %v702 = vunpack.c.l.b16 %v414
        %v703 = vunpack.c.l.b16 %v415
        %v704 = vunpack.c.l.b16 %v416
        %v705 = vunpack.c.l.b16 %v417
        %v706 = vunpack.c.l.b16 %v418
        %v707 = vunpack.c.l.b16 %v419
        %v708 = vunpack.c.l.b16 %v420
        %v709 = vunpack.c.l.b16 %v421
        %v710 = vunpack.c.l.b16 %v422
        %v711 = vunpack.c.l.b16 %v423
        %v712 = vunpack.c.l.b16 %v424
        %v713 = vunpack.c.l.b16 %v425
        %v714 = vunpack.c.l.b16 %v426
        %v715 = vunpack.c.l.b16 %v427
        %v716 = vunpack.c.l.b16 %v428
        %v717 = vunpack.c.l.b16 %v429
        %v718 = vunpack.c.l.b16 %v430
        %v719 = vunpack.c.l.b16 %v431
        %v720 = vunpack.c.l.b16 %v432
        %v721 = vunpack.c.l.b16 %v433
        %v722 = vunpack.c.l.b16 %v434
        %v723 = vunpack.c.l.b16 %v435
        %v724 = vunpack.c.l.b16 %v436
        %v725 = vunpack.c.l.b16 %v437
        %v726 = vunpack.c.l.b16 %v438
        %v727 = vunpack.c.l.b16 %v439
        %v728 = vunpack.c.l.b16 %v440
        %v729 = vunpack.c.l.b16 %v441
        %v730 = vunpack.c.l.b16 %v442
        %v731 = vunpack.c.l.b16 %v443
        %v732 = vunpack.c.l.b16 %v444
        %v733 = vunpack.c.l.b16 %v445
        %v734 = vunpack.c.l.b16 %v446
        %v735 = vunpack.c.l.b16 %v447
        %v736 = vunpack.c.l.b16 %v448
        %v737 = vunpack.c.l.b16 %v449
        %v738 = vunpack.c.l.b16 %v450
        %v739 = vunpack.c.l.b16 %v451
        %v740 = vunpack.c.l.b16 %v452
        %v741 = vunpack.c.l.b16 %v453
        %v742 = vunpack.c.l.b16 %v454
        %v743 = vunpack.c.l.b16 %v455
        %v744 = vunpack.c.l.b16 %v456
        %v745 = vunpack.c.l.b16 %v457
        %v746 = vunpack.c.l.b16 %v458
        %v747 = vunpack.c.l.b16 %v459
        %v748 = vunpack.c.l.b16 %v460
        %v749 = vunpack.c.l.b16 %v461
        %v750 = vunpack.c.l.b16 %v462
        %v751 = vunpack.c.l.b16 %v463
        %v752 = vunpack.c.l.b16 %v464
        %v753 = vunpack.c.l.b16 %v465
        %v754 = vunpack.c.l.b16 %v466
        %v755 = vunpack.c.l.b16 %v467
        %v756 = vpack.c.b16 %v693, %v692
        %v757 = vpack.c.b16 %v695, %v694
        %v758 = vpack.c.b16 %v697, %v696
        %v759 = vpack.c.b16 %v699, %v698
        %v760 = vpack.c.b16 %v701, %v700
        %v761 = vpack.c.b16 %v703, %v702
        %v762 = vpack.c.b16 %v705, %v704
        %v763 = vpack.c.b16 %v707, %v706
        %v764 = vpack.c.b16 %v709, %v708
        %v765 = vpack.c.b16 %v711, %v710
        %v766 = vpack.c.b16 %v713, %v712
        %v767 = vpack.c.b16 %v715, %v714
        %v768 = vpack.c.b16 %v717, %v716
        %v769 = vpack.c.b16 %v719, %v718
        %v770 = vpack.c.b16 %v721, %v720
        %v771 = vpack.c.b16 %v723, %v722
        %v772 = vpack.c.b16 %v725, %v724
        %v773 = vpack.c.b16 %v727, %v726
        %v774 = vpack.c.b16 %v729, %v728
        %v775 = vpack.c.b16 %v731, %v730
        %v776 = vpack.c.b16 %v733, %v732
        %v777 = vpack.c.b16 %v735, %v734
        %v778 = vpack.c.b16 %v737, %v736
        %v779 = vpack.c.b16 %v739, %v738
        %v780 = vpack.c.b16 %v741, %v740
        %v781 = vpack.c.b16 %v743, %v742
        %v782 = vpack.c.b16 %v745, %v744
        %v783 = vpack.c.b16 %v747, %v746
        %v784 = vpack.c.b16 %v749, %v748
        %v785 = vpack.c.b16 %v751, %v750
        %v786 = vpack.c.b16 %v753, %v752
        %v787 = vpack.c.b16 %v755, %v754
        %820 = vmatprep.subr.bf16.mxu0 0
        %821 = vmatpush1.bf16.msra.mxu0 %v756
        %822 = vmatprep.subr.bf16.mxu0 0
        %823 = vmatpush1.bf16.msra.mxu0 %v757
        %824 = vmatprep.subr.bf16.mxu0 0
        %825 = vmatpush1.bf16.msra.mxu0 %v758
        %826 = vmatprep.subr.bf16.mxu0 0
        %827 = vmatpush1.bf16.msra.mxu0 %v759
        %828 = vmatprep.subr.bf16.mxu0 0
        %829 = vmatpush1.bf16.msra.mxu0 %v760
        %830 = vmatprep.subr.bf16.mxu0 0
        %831 = vmatpush1.bf16.msra.mxu0 %v761
        %832 = vmatprep.subr.bf16.mxu0 0
        %833 = vmatpush1.bf16.msra.mxu0 %v762
        %834 = vmatprep.subr.bf16.mxu0 0
        %835 = vmatpush1.bf16.msra.mxu0 %v763
        %836 = vmatprep.subr.bf16.mxu0 0
        %837 = vmatpush1.bf16.msra.mxu0 %v764
        %838 = vmatprep.subr.bf16.mxu0 0
        %839 = vmatpush1.bf16.msra.mxu0 %v765
        %840 = vmatprep.subr.bf16.mxu0 0
        %841 = vmatpush1.bf16.msra.mxu0 %v766
        %842 = vmatprep.subr.bf16.mxu0 0
        %843 = vmatpush1.bf16.msra.mxu0 %v767
        %844 = vmatprep.subr.bf16.mxu0 0
        %845 = vmatpush1.bf16.msra.mxu0 %v768
        %846 = vmatprep.subr.bf16.mxu0 0
        %847 = vmatpush1.bf16.msra.mxu0 %v769
        %848 = vmatprep.subr.bf16.mxu0 0
        %849 = vmatpush1.bf16.msra.mxu0 %v770
        %850 = vmatprep.subr.bf16.mxu0 0
        %851 = vmatpush1.bf16.msra.mxu0 %v771
        %852 = vmatprep.mubr.bf16.mxu0 %v565
        %853 = vmatmul.mubr.bf16.gmra.mrb[0].mxu0 %v564
        %v854 = vpop.f32.mrb[0].mxu0
        %v855 = vadd.f32 0.0, %v854
        %v856 = vpop.f32.mrb[0].mxu0
        %v857 = vpop.f32.mrb[0].mxu0
        %v858 = vadd.f32 0.0, %v857
        %v859 = vpop.f32.mrb[0].mxu0
        %860 = vmatprep.mubr.bf16.mxu0 %v569
        %861 = vmatmul.mubr.bf16.gmra.mrb[0].mxu0 %v568
        %v862 = vpop.f32.mrb[0].mxu0
        %v863 = vadd.f32 0.0, %v862
        %v864 = vpop.f32.mrb[0].mxu0
        %v865 = vpop.f32.mrb[0].mxu0
        %v866 = vadd.f32 0.0, %v865
        %v867 = vpop.f32.mrb[0].mxu0
        %868 = vmatprep.mubr.bf16.mxu0 %v573
        %869 = vmatmul.mubr.bf16.gmra.mrb[0].mxu0 %v572
        %v870 = vpop.f32.mrb[0].mxu0
        %v871 = vadd.f32 0.0, %v870
        %v872 = vpop.f32.mrb[0].mxu0
        %v873 = vpop.f32.mrb[0].mxu0
        %v874 = vadd.f32 0.0, %v873
        %v875 = vpop.f32.mrb[0].mxu0
        %876 = vmatprep.mubr.bf16.mxu0 %v577
        %877 = vmatmul.mubr.bf16.gmra.mrb[0].mxu0 %v576
        %v878 = vpop.f32.mrb[0].mxu0
        %v879 = vadd.f32 0.0, %v878
        %v880 = vpop.f32.mrb[0].mxu0
        %v881 = vpop.f32.mrb[0].mxu0
        %v882 = vadd.f32 0.0, %v881
        %v883 = vpop.f32.mrb[0].mxu0
        %884 = vmatprep.mubr.bf16.mxu0 %v581
        %885 = vmatmul.mubr.bf16.gmra.mrb[0].mxu0 %v580
        %v886 = vpop.f32.mrb[0].mxu0
        %v887 = vadd.f32 0.0, %v886
        %v888 = vpop.f32.mrb[0].mxu0
        %v889 = vpop.f32.mrb[0].mxu0
        %v890 = vadd.f32 0.0, %v889
        %v891 = vpop.f32.mrb[0].mxu0
        %892 = vmatprep.mubr.bf16.mxu0 %v585
        %893 = vmatmul.mubr.bf16.gmra.mrb[0].mxu0 %v584
        %v894 = vpop.f32.mrb[0].mxu0
        %v895 = vadd.f32 0.0, %v894
        %v896 = vpop.f32.mrb[0].mxu0
        %v897 = vpop.f32.mrb[0].mxu0
        %v898 = vadd.f32 0.0, %v897
        %v899 = vpop.f32.mrb[0].mxu0
        %900 = vmatprep.mubr.bf16.mxu0 %v589
        %901 = vmatmul.mubr.bf16.gmra.mrb[0].mxu0 %v588
        %v902 = vpop.f32.mrb[0].mxu0
        %v903 = vadd.f32 0.0, %v902
        %v904 = vpop.f32.mrb[0].mxu0
        %v905 = vpop.f32.mrb[0].mxu0
        %v906 = vadd.f32 0.0, %v905
        %v907 = vpop.f32.mrb[0].mxu0
        %908 = vmatprep.mubr.bf16.mxu0 %v593
        %909 = vmatmul.mubr.bf16.gmra.mrb[0].mxu0 %v592
        %v910 = vpop.f32.mrb[0].mxu0
        %v911 = vadd.f32 0.0, %v910
        %v912 = vpop.f32.mrb[0].mxu0
        %v913 = vpop.f32.mrb[0].mxu0
        %v914 = vadd.f32 0.0, %v913
        %v915 = vpop.f32.mrb[0].mxu0
        %916 = vdwg.mxu0
        %917 = vmatprep.subr.bf16.mxu0 0
        %918 = vmatpush1.bf16.msra.mxu0 %v772
        %919 = vmatprep.subr.bf16.mxu0 0
        %920 = vmatpush1.bf16.msra.mxu0 %v773
        %921 = vmatprep.subr.bf16.mxu0 0
        %922 = vmatpush1.bf16.msra.mxu0 %v774
        %923 = vmatprep.subr.bf16.mxu0 0
        %924 = vmatpush1.bf16.msra.mxu0 %v775
        %925 = vmatprep.subr.bf16.mxu0 0
        %926 = vmatpush1.bf16.msra.mxu0 %v776
        %927 = vmatprep.subr.bf16.mxu0 0
        %928 = vmatpush1.bf16.msra.mxu0 %v777
        %929 = vmatprep.subr.bf16.mxu0 0
        %930 = vmatpush1.bf16.msra.mxu0 %v778
        %931 = vmatprep.subr.bf16.mxu0 0
        %932 = vmatpush1.bf16.msra.mxu0 %v779
        %933 = vmatprep.subr.bf16.mxu0 0
        %934 = vmatpush1.bf16.msra.mxu0 %v780
        %935 = vmatprep.subr.bf16.mxu0 0
        %936 = vmatpush1.bf16.msra.mxu0 %v781
        %937 = vmatprep.subr.bf16.mxu0 0
        %938 = vmatpush1.bf16.msra.mxu0 %v782
        %939 = vmatprep.subr.bf16.mxu0 0
        %940 = vmatpush1.bf16.msra.mxu0 %v783
        %941 = vmatprep.subr.bf16.mxu0 0
        %942 = vmatpush1.bf16.msra.mxu0 %v784
        %943 = vmatprep.subr.bf16.mxu0 0
        %944 = vmatpush1.bf16.msra.mxu0 %v785
        %945 = vmatprep.subr.bf16.mxu0 0
        %946 = vmatpush1.bf16.msra.mxu0 %v786
        %947 = vmatprep.subr.bf16.mxu0 0
        %948 = vmatpush1.bf16.msra.mxu0 %v787
        %949 = vmatprep.mubr.bf16.mxu0 %v567
        %950 = vmatmul.mubr.bf16.gmra.mrb[0].mxu0 %v566
        %v951 = vpop.f32.mrb[0].mxu0
        %v952 = vadd.f32 %v855, %v951
        %v953 = vpop.f32.mrb[0].mxu0
        %v954 = vpop.f32.mrb[0].mxu0
        %v955 = vadd.f32 %v858, %v954
        %v956 = vpop.f32.mrb[0].mxu0
        %957 = vmatprep.mubr.bf16.mxu0 %v571
        %958 = vmatmul.mubr.bf16.gmra.mrb[0].mxu0 %v570
        %v959 = vpop.f32.mrb[0].mxu0
        %v960 = vadd.f32 %v863, %v959
        %v961 = vpop.f32.mrb[0].mxu0
        %v962 = vpop.f32.mrb[0].mxu0
        %v963 = vadd.f32 %v866, %v962
        %v964 = vpop.f32.mrb[0].mxu0
        %965 = vmatprep.mubr.bf16.mxu0 %v575
        %966 = vmatmul.mubr.bf16.gmra.mrb[0].mxu0 %v574
        %v967 = vpop.f32.mrb[0].mxu0
        %v968 = vadd.f32 %v871, %v967
        %v969 = vpop.f32.mrb[0].mxu0
        %v970 = vpop.f32.mrb[0].mxu0
        %v971 = vadd.f32 %v874, %v970
        %v972 = vpop.f32.mrb[0].mxu0
        %973 = vmatprep.mubr.bf16.mxu0 %v579
        %974 = vmatmul.mubr.bf16.gmra.mrb[0].mxu0 %v578
        %v975 = vpop.f32.mrb[0].mxu0
        %v976 = vadd.f32 %v879, %v975
        %v977 = vpop.f32.mrb[0].mxu0
        %v978 = vpop.f32.mrb[0].mxu0
        %v979 = vadd.f32 %v882, %v978
        %v980 = vpop.f32.mrb[0].mxu0
        %981 = vmatprep.mubr.bf16.mxu0 %v583
        %982 = vmatmul.mubr.bf16.gmra.mrb[0].mxu0 %v582
        %v983 = vpop.f32.mrb[0].mxu0
        %v984 = vadd.f32 %v887, %v983
        %v985 = vpop.f32.mrb[0].mxu0
        %v986 = vpop.f32.mrb[0].mxu0
        %v987 = vadd.f32 %v890, %v986
        %v988 = vpop.f32.mrb[0].mxu0
        %989 = vmatprep.mubr.bf16.mxu0 %v587
        %990 = vmatmul.mubr.bf16.gmra.mrb[0].mxu0 %v586
        %v991 = vpop.f32.mrb[0].mxu0
        %v992 = vadd.f32 %v895, %v991
        %v993 = vpop.f32.mrb[0].mxu0
        %v994 = vpop.f32.mrb[0].mxu0
        %v995 = vadd.f32 %v898, %v994
        %v996 = vpop.f32.mrb[0].mxu0
        %997 = vmatprep.mubr.bf16.mxu0 %v591
        %998 = vmatmul.mubr.bf16.gmra.mrb[0].mxu0 %v590
        %v999 = vpop.f32.mrb[0].mxu0
        %v1000 = vadd.f32 %v903, %v999
        %v1001 = vpop.f32.mrb[0].mxu0
        %v1002 = vpop.f32.mrb[0].mxu0
        %v1003 = vadd.f32 %v906, %v1002
        %v1004 = vpop.f32.mrb[0].mxu0
        %1005 = vmatprep.mubr.bf16.mxu0 %v595
        %1006 = vmatmul.mubr.bf16.gmra.mrb[0].mxu0 %v594
        %v1007 = vpop.f32.mrb[0].mxu0
        %v1008 = vadd.f32 %v911, %v1007
        %v1009 = vpop.f32.mrb[0].mxu0
        %v1010 = vpop.f32.mrb[0].mxu0
        %v1011 = vadd.f32 %v914, %v1010
        %v1012 = vpop.f32.mrb[0].mxu0
        %1013 = vdwg.mxu0
        %v1014 = vadd.f32 %v356, %v952
        %v1015 = vadd.f32 %v357, %v955
        %v1016 = vadd.f32 %v358, %v960
        %v1017 = vadd.f32 %v359, %v963
        %v1018 = vadd.f32 %v360, %v968
        %v1019 = vadd.f32 %v361, %v971
        %v1020 = vadd.f32 %v362, %v976
        %v1021 = vadd.f32 %v363, %v979
        %v1022 = vadd.f32 %v364, %v984
        %v1023 = vadd.f32 %v365, %v987
        %v1024 = vadd.f32 %v366, %v992
        %v1025 = vadd.f32 %v367, %v995
        %v1026 = vadd.f32 %v368, %v1000
        %v1027 = vadd.f32 %v369, %v1003
        %v1028 = vadd.f32 %v370, %v1008
        %v1029 = vadd.f32 %v371, %v1011
        %1030 = vst [vmem:[#allocation2] sm:$0xff] %v1014
        %1031 = vst [vmem:[#allocation2 + $0x8] sm:$0xff] %v1015
        %1032 = vst [vmem:[#allocation2 + $0x10] sm:$0xff] %v1016
        %1033 = vst [vmem:[#allocation2 + $0x18] sm:$0xff] %v1017
        %1034 = vst [vmem:[#allocation2 + $0x20] sm:$0xff] %v1018
        %1035 = vst [vmem:[#allocation2 + $0x28] sm:$0xff] %v1019
        %1036 = vst [vmem:[#allocation2 + $0x30] sm:$0xff] %v1020
        %1037 = vst [vmem:[#allocation2 + $0x38] sm:$0xff] %v1021
        %1038 = vst [vmem:[#allocation2 + $0x40] sm:$0xff] %v1022
        %1039 = vst [vmem:[#allocation2 + $0x48] sm:$0xff] %v1023
        %1040 = vst [vmem:[#allocation2 + $0x50] sm:$0xff] %v1024
        %1041 = vst [vmem:[#allocation2 + $0x58] sm:$0xff] %v1025
        %1042 = vst [vmem:[#allocation2 + $0x60] sm:$0xff] %v1026
        %1043 = vst [vmem:[#allocation2 + $0x68] sm:$0xff] %v1027
        %1044 = vst [vmem:[#allocation2 + $0x70] sm:$0xff] %v1028
        %1045 = vst [vmem:[#allocation2 + $0x78] sm:$0xff] %v1029
        %p1046 = scmp.eq.s32.totalorder %s21, 1
        // Predicated region
        $region60: #{vae_forward.23} parent=50 // pred_check
          %p1047 = pneg %p1046
        $region61: #{vae_forward.23} parent=50 // pred_check_branch
          %1049 = sbr.rel (%p1047) target = $region63
        $region62: #{vae_forward.23} parent=50 // pred_region
          %v1050 = vld [vmem:[#allocation2] sm:$0xff]
          %v1051 = vld [vmem:[#allocation2 + $0x8] sm:$0xff]
          %v1052 = vld [vmem:[#allocation2 + $0x10] sm:$0xff]
          %v1053 = vld [vmem:[#allocation2 + $0x18] sm:$0xff]
          %v1054 = vld [vmem:[#allocation2 + $0x20] sm:$0xff]
          %v1055 = vld [vmem:[#allocation2 + $0x28] sm:$0xff]
          %v1056 = vld [vmem:[#allocation2 + $0x30] sm:$0xff]
          %v1057 = vld [vmem:[#allocation2 + $0x38] sm:$0xff]
          %v1058 = vld [vmem:[#allocation2 + $0x40] sm:$0xff]
          %v1059 = vld [vmem:[#allocation2 + $0x48] sm:$0xff]
          %v1060 = vld [vmem:[#allocation2 + $0x50] sm:$0xff]
          %v1061 = vld [vmem:[#allocation2 + $0x58] sm:$0xff]
          %v1062 = vld [vmem:[#allocation2 + $0x60] sm:$0xff]
          %v1063 = vld [vmem:[#allocation2 + $0x68] sm:$0xff]
          %v1064 = vld [vmem:[#allocation2 + $0x70] sm:$0xff]
          %v1065 = vld [vmem:[#allocation2 + $0x78] sm:$0xff]
          %v1066 = vld [vmem:[%s325] sm:$0x1]
          %v1068 = vlaneseq
          %v1069 = vshrl.u32 %v1068, 7
          %v1070 = vsub.s32 0, %v1069
          %v1071 = vrot.slane %v1066, %v1070
          %v1073 = vadd.f32 %v1050, %v1071
          %v1074 = vadd.f32 %v1051, %v1071
          %v1075 = vadd.f32 %v1052, %v1071
          %v1076 = vadd.f32 %v1053, %v1071
          %v1077 = vadd.f32 %v1054, %v1071
          %v1078 = vadd.f32 %v1055, %v1071
          %v1079 = vadd.f32 %v1056, %v1071
          %v1080 = vadd.f32 %v1057, %v1071
          %v1081 = vadd.f32 %v1058, %v1071
          %v1082 = vadd.f32 %v1059, %v1071
          %v1083 = vadd.f32 %v1060, %v1071
          %v1084 = vadd.f32 %v1061, %v1071
          %v1085 = vadd.f32 %v1062, %v1071
          %v1086 = vadd.f32 %v1063, %v1071
          %v1087 = vadd.f32 %v1064, %v1071
          %v1088 = vadd.f32 %v1065, %v1071
          %v1089 = vmax.f32 %v1073, 0.0
          %v1090 = vmax.f32 %v1074, 0.0
          %v1091 = vmax.f32 %v1075, 0.0
          %v1092 = vmax.f32 %v1076, 0.0
          %v1093 = vmax.f32 %v1077, 0.0
          %v1094 = vmax.f32 %v1078, 0.0
          %v1095 = vmax.f32 %v1079, 0.0
          %v1096 = vmax.f32 %v1080, 0.0
          %v1097 = vmax.f32 %v1081, 0.0
          %v1098 = vmax.f32 %v1082, 0.0
          %v1099 = vmax.f32 %v1083, 0.0
          %v1100 = vmax.f32 %v1084, 0.0
          %v1101 = vmax.f32 %v1085, 0.0
          %v1102 = vmax.f32 %v1086, 0.0
          %v1103 = vmax.f32 %v1087, 0.0
          %v1104 = vmax.f32 %v1088, 0.0
          %v1105 = vpack.c.bf16 %v1090, %v1089
          %v1106 = vpack.c.bf16 %v1092, %v1091
          %v1107 = vpack.c.bf16 %v1094, %v1093
          %v1108 = vpack.c.bf16 %v1096, %v1095
          %v1109 = vpack.c.bf16 %v1098, %v1097
          %v1110 = vpack.c.bf16 %v1100, %v1099
          %v1111 = vpack.c.bf16 %v1102, %v1101
          %v1112 = vpack.c.bf16 %v1104, %v1103
          %v1121 = vunpack.c.l.b16 %v1105
          %v1122 = vunpack.c.h.b16 %v1105
          %v1123 = vunpack.c.l.b16 %v1106
          %v1124 = vunpack.c.h.b16 %v1106
          %v1125 = vunpack.c.l.b16 %v1107
          %v1126 = vunpack.c.h.b16 %v1107
          %v1127 = vunpack.c.l.b16 %v1108
          %v1128 = vunpack.c.h.b16 %v1108
          %v1129 = vunpack.c.l.b16 %v1109
          %v1130 = vunpack.c.h.b16 %v1109
          %v1131 = vunpack.c.l.b16 %v1110
          %v1132 = vunpack.c.h.b16 %v1110
          %v1133 = vunpack.c.l.b16 %v1111
          %v1134 = vunpack.c.h.b16 %v1111
          %v1135 = vunpack.c.l.b16 %v1112
          %v1136 = vunpack.c.h.b16 %v1112
          %v1137 = vpack.c.b16 %v1121, %v1121
          %v1138 = vpack.c.b16 %v1122, %v1122
          %v1139 = vpack.c.b16 %v1123, %v1123
          %v1140 = vpack.c.b16 %v1124, %v1124
          %v1141 = vpack.c.b16 %v1125, %v1125
          %v1142 = vpack.c.b16 %v1126, %v1126
          %v1143 = vpack.c.b16 %v1127, %v1127
          %v1144 = vpack.c.b16 %v1128, %v1128
          %v1145 = vpack.c.b16 %v1129, %v1129
          %v1146 = vpack.c.b16 %v1130, %v1130
          %v1147 = vpack.c.b16 %v1131, %v1131
          %v1148 = vpack.c.b16 %v1132, %v1132
          %v1149 = vpack.c.b16 %v1133, %v1133
          %v1150 = vpack.c.b16 %v1134, %v1134
          %v1151 = vpack.c.b16 %v1135, %v1135
          %v1152 = vpack.c.b16 %v1136, %v1136
          %1169 = vst [vmem:[%s333] sm:$0xf] %v1137
          %1170 = vst [vmem:[%s333 + $0x4] sm:$0xf] %v1138
          %1171 = vst [vmem:[%s333 + $0x8] sm:$0xf] %v1139
          %1172 = vst [vmem:[%s333 + $0xc] sm:$0xf] %v1140
          %1173 = vst [vmem:[%s333 + $0x10] sm:$0xf] %v1141
          %1174 = vst [vmem:[%s333 + $0x14] sm:$0xf] %v1142
          %1175 = vst [vmem:[%s333 + $0x18] sm:$0xf] %v1143
          %1176 = vst [vmem:[%s333 + $0x1c] sm:$0xf] %v1144
          %1177 = vst [vmem:[%s333 + $0x20] sm:$0xf] %v1145
          %1178 = vst [vmem:[%s333 + $0x24] sm:$0xf] %v1146
          %1179 = vst [vmem:[%s333 + $0x28] sm:$0xf] %v1147
          %1180 = vst [vmem:[%s333 + $0x2c] sm:$0xf] %v1148
          %1181 = vst [vmem:[%s333 + $0x30] sm:$0xf] %v1149
          %1182 = vst [vmem:[%s333 + $0x34] sm:$0xf] %v1150
          %1183 = vst [vmem:[%s333 + $0x38] sm:$0xf] %v1151
          %1184 = vst [vmem:[%s333 + $0x3c] sm:$0xf] %v1152
        $region63: #{vae_forward.23} parent=50 // pred_fallthru
          _
        %s1185 = smul.u32 16, %s19
        %p1186 = scmp.lt.s32.totalorder %s1185, 15
        %s1187 = scalar_select %p1186, %s1185, 15
        %p1188 = scmp.lt.s32.totalorder %s20, 0
        %s1189 = scalar_select %p1188, %s20, 0
        %s1190 = sadd.s32 %s1189, %s1187
        %s1191 = smul.addr %s1190, 4
        %s1192 = scalar_lea.vmem %s3, %s1191
        // Predicated region
        $region64: #{vae_forward.23} parent=50 // pred_check
          %p1193 = pneg %p135
        $region65: #{vae_forward.23} parent=50 // pred_check_branch
          %1195 = sbr.rel (%p1193) target = $region67
        $region66: #{vae_forward.23} parent=50 // pred_region
          %s1196 = smul.u32 16, %s19
        $region67: #{vae_forward.23} parent=50 // pred_fallthru
          _
        // Predicated region
        $region68: #{vae_forward.23} parent=50 // pred_check
          %p1197 = pneg %p135
        $region69: #{vae_forward.23} parent=50 // pred_check_branch
          %1199 = sbr.rel (%p1197) target = $region71
        $region70: #{vae_forward.23} parent=50 // pred_region
          %s1200 = smul.u32 16, %s19
          %p1201 = scmp.lt.s32.totalorder %s1200, 15
          %s1202 = scalar_select %p1201, %s1200, 15
          %p1203 = scmp.lt.s32.totalorder %s20, 0
          %s1204 = scalar_select %p1203, %s20, 0
          %s1205 = sadd.s32 %s1204, %s1202
          %s1206 = smul.addr %s1205, 4
          %s1207 = scalar_lea.vmem %s3, %s1206
        $region71: #{vae_forward.23} parent=50 // pred_fallthru
          _
      $region51: #{vae_forward.23} parent=5 // pred_fallthru
        _
      %p1208 = scmp.le.s32.totalorder 2, %s9
      // Predicated region
      $region72: #{vae_forward.23} parent=5 // pred_check
        %p1209 = pneg %p1208
      $region73: #{vae_forward.23} parent=5 // pred_check_branch
        %1211 = sbr.rel (%p1209) target = $region75
      $region74: #{vae_forward.23} parent=5 // pred_region
        %s1212 = ssub.s32 %s9, 2
      $region75: #{vae_forward.23} parent=5 // pred_fallthru
        _
    $region6: #{vae_forward.23} parent=1 // loop_footer
      %s13 = sadd.s32 1, %s9
    $region7: #{vae_forward.23} parent=1 // loop_footer_branch
      %8 = sbr.rel target = $region3
    $region8: #{vae_forward.23} parent=1 // loop_exit
      _

// kernel: vae_forward.24
$region0: #{vae_forward.24}
  #allocation0 [shape = 'u32[]', space=smem, size = 0x4, offset = 0x4, fixed_abs, tag = 'smem constant byte address 0x4 - core index']
  #allocation1 [shape = 'u32[144,128]{1,0:T(1,128)}', space=vmem, size = 0x12000, scoped, tag = 'internal scratch']
  #allocation2 [shape = 'f32[32,256]{1,0:T(8,128)}', space=vmem, size = 0x8000, scoped, tag = 'scratch operand']
  %s0 = inlined_call_operand.vmem [shape: bf16[32,2048], index: 0, kind: input, shape index: {}]
  %s1 = inlined_call_operand.vmem [shape: bf16[2048,256], index: 1, kind: input, shape index: {}]
  %s2 = inlined_call_operand.vmem [shape: f32[1,256], index: 2, kind: input, shape index: {}]
  %s3 = inlined_call_operand.vmem [shape: bf16[32,256], index: 3, kind: output, shape index: {}]
  %s4 = sld [smem:[#allocation0]]
  $region76: #{vae_forward.24} parent=0
    _
  %s6 = ssub.s32 1, %s4
  %s7 = scalar_select 0, %s6, %s4
  $region1: #{vae_forward.24} parent=0
    #allocation3 [shape = 'u8[65536]{0}', space=vmem, size = 0x10000, scoped, tag = 'input window, operand 0']
    loop: start=0, step=1, limit=6
    $region2: #{vae_forward.24} parent=1 // loop_pre_header
      _
    $region3: #{vae_forward.24} parent=1 // loop_header
      %s9 = sphi 0, %s13
      %p10 = scmp.ge.s32.totalorder %s9, 6
      %s16 = sphi 0, %s35
      %s17 = sphi 0, %s31
      %s18 = sphi 0, %s27
      %s19 = sphi 0, %s16
      %s20 = sphi 0, %s17
      %s21 = sphi 0, %s18
      %s22 = sphi 0, %s19
      %s23 = sphi 0, %s20
      %s24 = sphi 0, %s21
      %s40 = sphi 0, %s42
      %s43 = sphi 0, %s40
      %s44 = sphi 0, %s43
      %s60 = sphi 0, %s44
      %s68 = sphi 0, %s70
      %s71 = sphi 0, %s68
      %s72 = sphi 0, %s71
      %s88 = sphi 0, %s72
      %s94 = sphi 0, %s96
      %s97 = sphi 0, %s94
      %s98 = sphi 0, %s97
      %s114 = sphi 0, %s98
      %s122 = sphi 0, %s124
      %s125 = sphi 0, %s122
      %s126 = sphi 0, %s125
      %s142 = sphi 0, %s126
    $region4: #{vae_forward.24} parent=1 // loop_header_branch
      %12 = sbr.rel (%p10) target = $region8
    $region5: #{vae_forward.24} parent=1 // loop_body
      %s14 = ssub.s32 %s9, 1
      %s15 = ssub.s32 %s9, 2
      %s25 = sadd.s32 1, %s18
      %p26 = scmp.ge.s32.totalorder %s25, 4
      %s27 = scalar_select %p26, 0, %s25
      %s28 = sadd.s32 1, %s17
      %s29 = scalar_select %p26, %s28, %s17
      %p30 = scmp.ge.s32.totalorder %s29, 1
      %s31 = scalar_select %p30, 0, %s29
      %s32 = sadd.s32 1, %s16
      %s33 = scalar_select %p30, %s32, %s16
      %p34 = scmp.ge.s32.totalorder %s33, 1
      %s35 = scalar_select %p34, 0, %s33
      %s36 = ssub.s32 %s16, %s35
      %s37 = ssub.s32 %s18, %s27
      %s38 = sor.u32 %s36, %s37
      %p39 = scmp.eq.s32.totalorder %s38, 0
      %s41 = sadd.s32 %s40, 1
      %s42 = scalar_select %p39, %s40, %s41
      %p45 = pneg %p39
      %p46 = scmp.eq.s32.totalorder %s9, 3
      %p47 = por %p45, %p46
      %p48 = scmp.ne.s32.totalorder %s40, %s43
      %p49 = scmp.eq.s32.totalorder %s9, 0
      %p50 = por %p48, %p49
      %p51 = scmp.ne.s32.totalorder %s40, %s43
      %p52 = scmp.eq.s32.totalorder %s14, 3
      %p53 = por %p51, %p52
      %p54 = scmp.ne.s32.totalorder %s43, %s44
      %p55 = scmp.eq.s32.totalorder %s14, 0
      %p56 = por %p54, %p55
      %p57 = scmp.ne.s32.totalorder %s43, %s44
      %p58 = scmp.eq.s32.totalorder %s15, 3
      %p59 = por %p57, %p58
      %p61 = scmp.ne.s32.totalorder %s44, %s60
      %p62 = scmp.eq.s32.totalorder %s15, 0
      %p63 = por %p61, %p62
      %s64 = ssub.s32 %s18, %s27
      %s65 = ssub.s32 %s17, %s31
      %s66 = sor.u32 %s64, %s65
      %p67 = scmp.eq.s32.totalorder %s66, 0
      %s69 = sadd.s32 %s68, 1
      %s70 = scalar_select %p67, %s68, %s69
      %p73 = pneg %p67
      %p74 = scmp.eq.s32.totalorder %s9, 3
      %p75 = por %p73, %p74
      %p76 = scmp.ne.s32.totalorder %s68, %s71
      %p77 = scmp.eq.s32.totalorder %s9, 0
      %p78 = por %p76, %p77
      %p79 = scmp.ne.s32.totalorder %s68, %s71
      %p80 = scmp.eq.s32.totalorder %s14, 3
      %p81 = por %p79, %p80
      %p82 = scmp.ne.s32.totalorder %s71, %s72
      %p83 = scmp.eq.s32.totalorder %s14, 0
      %p84 = por %p82, %p83
      %p85 = scmp.ne.s32.totalorder %s71, %s72
      %p86 = scmp.eq.s32.totalorder %s15, 3
      %p87 = por %p85, %p86
      %p89 = scmp.ne.s32.totalorder %s72, %s88
      %p90 = scmp.eq.s32.totalorder %s15, 0
      %p91 = por %p89, %p90
      %s92 = ssub.s32 %s17, %s31
      %p93 = scmp.eq.s32.totalorder %s92, 0
      %s95 = sadd.s32 %s94, 1
      %s96 = scalar_select %p93, %s94, %s95
      %p99 = pneg %p93
      %p100 = scmp.eq.s32.totalorder %s9, 3
      %p101 = por %p99, %p100
      %p102 = scmp.ne.s32.totalorder %s94, %s97
      %p103 = scmp.eq.s32.totalorder %s9, 0
      %p104 = por %p102, %p103
      %p105 = scmp.ne.s32.totalorder %s94, %s97
      %p106 = scmp.eq.s32.totalorder %s14, 3
      %p107 = por %p105, %p106
      %p108 = scmp.ne.s32.totalorder %s97, %s98
      %p109 = scmp.eq.s32.totalorder %s14, 0
      %p110 = por %p108, %p109
      %p111 = scmp.ne.s32.totalorder %s97, %s98
      %p112 = scmp.eq.s32.totalorder %s15, 3
      %p113 = por %p111, %p112
      %p115 = scmp.ne.s32.totalorder %s98, %s114
      %p116 = scmp.eq.s32.totalorder %s15, 0
      %p117 = por %p115, %p116
      %s118 = ssub.s32 %s16, %s35
      %s119 = ssub.s32 %s17, %s31
      %s120 = sor.u32 %s118, %s119
      %p121 = scmp.eq.s32.totalorder %s120, 0
      %s123 = sadd.s32 %s122, 1
      %s124 = scalar_select %p121, %s122, %s123
      %p127 = pneg %p121
      %p128 = scmp.eq.s32.totalorder %s9, 3
      %p129 = por %p127, %p128
      %p130 = scmp.ne.s32.totalorder %s122, %s125
      %p131 = scmp.eq.s32.totalorder %s9, 0
      %p132 = por %p130, %p131
      %p133 = scmp.ne.s32.totalorder %s122, %s125
      %p134 = scmp.eq.s32.totalorder %s14, 3
      %p135 = por %p133, %p134
      %p136 = scmp.ne.s32.totalorder %s125, %s126
      %p137 = scmp.eq.s32.totalorder %s14, 0
      %p138 = por %p136, %p137
      %p139 = scmp.ne.s32.totalorder %s125, %s126
      %p140 = scmp.eq.s32.totalorder %s15, 3
      %p141 = por %p139, %p140
      %p143 = scmp.ne.s32.totalorder %s126, %s142
      %p144 = scmp.eq.s32.totalorder %s15, 0
      %p145 = por %p143, %p144
      %p146 = scmp.le.s32.totalorder 1, %s9
      %p147 = scmp.lt.s32.totalorder %s9, 5
      %p148 = pnand %p146, %p147
      %p149 = pneg %p148
      // Predicated region
      $region9: #{vae_forward.24} parent=5 // pred_check
        _
      $region10: #{vae_forward.24} parent=5 // pred_check_branch
        %151 = sbr.rel (%p148) target = $region12
      $region11: #{vae_forward.24} parent=5 // pred_region
        %s152 = ssub.s32 %s9, 1
        // Predicated region
        $region13: #{vae_forward.24} parent=11 // pred_check
          %p153 = pneg %p110
        $region14: #{vae_forward.24} parent=11 // pred_check_branch
          %155 = sbr.rel (%p153) target = $region16
        $region15: #{vae_forward.24} parent=11 // pred_region
          %s156 = smul.u32 2, %s20
          %p157 = scmp.lt.s32.totalorder %s156, 1
          %s158 = scalar_select %p157, %s156, 1
          %s159 = scalar_lea.vmem %s2, %s158
          %s160 = smul.u32 2, %s20
        $region16: #{vae_forward.24} parent=11 // pred_fallthru
          _
      $region12: #{vae_forward.24} parent=5 // pred_fallthru
        _
      %p161 = scmp.lt.s32.totalorder %s9, 4
      // Predicated region
      $region17: #{vae_forward.24} parent=5 // pred_check
        %p162 = pneg %p161
      $region18: #{vae_forward.24} parent=5 // pred_check_branch
        %164 = sbr.rel (%p162) target = $region20
      $region19: #{vae_forward.24} parent=5 // pred_region
        // Predicated region
        $region21: #{vae_forward.24} parent=19 // pred_check
          %p165 = pneg %p50
        $region22: #{vae_forward.24} parent=19 // pred_check_branch
          %167 = sbr.rel (%p165) target = $region24
        $region23: #{vae_forward.24} parent=19 // pred_region
          %s168 = sand.u32 %s40, 1
          %s169 = sand.u32 %s40, 1
          %s170 = smul.addr %s169, 64
          %s171 = scalar_lea.vmem [#allocation3], %s170
          %s172 = smul.u32 4, %s16
          %s173 = smul.u32 4, %s18
          %s174 = smul.addr %s172, 16
          %s175 = sadd.s32 %s173, %s174
          %s176 = smul.addr %s175, 4
          %s177 = scalar_lea.vmem %s0, %s176
          // Predicated region
          $region25: #{vae_forward.24} parent=23 // pred_check
            _
          $region26: #{vae_forward.24} parent=23 // pred_check_branch
            %179 = sbr.rel (0) target = $region28
          $region27: #{vae_forward.24} parent=23 // pred_region
            // Predicated region
            $region29: #{vae_forward.24} parent=27 // pred_check
              _
            $region30: #{vae_forward.24} parent=27 // pred_check_branch
              %181 = sbr.rel (0) target = $region32
            $region31: #{vae_forward.24} parent=27 // pred_region
              loop: start=0, step=1, limit=1
              $region33: #{vae_forward.24} parent=31 // loop_pre_header
                _
              $region34: #{vae_forward.24} parent=31 // loop_header
                %s183 = sphi 0, %s187
                %p184 = scmp.ge.s32.totalorder %s183, 1
                %s188 = sphi %s177, %s177
                %s189 = sphi %s171, %s171
              $region35: #{vae_forward.24} parent=31 // loop_header_branch
                %186 = sbr.rel (%p184) target = $region39
              $region36: #{vae_forward.24} parent=31 // loop_body
                %v190 = vld [vmem:[%s188] sm:$0xff]
                %191 = vst [vmem:[%s189] sm:$0xff] %v190
                %v192 = vld [vmem:[%s188 + $0x8] sm:$0xff]
                %193 = vst [vmem:[%s189 + $0x8] sm:$0xff] %v192
                %v194 = vld [vmem:[%s188 + $0x40] sm:$0xff]
                %195 = vst [vmem:[%s189 + $0x10] sm:$0xff] %v194
                %v196 = vld [vmem:[%s188 + $0x48] sm:$0xff]
                %197 = vst [vmem:[%s189 + $0x18] sm:$0xff] %v196
                %v198 = vld [vmem:[%s188 + $0x80] sm:$0xff]
                %199 = vst [vmem:[%s189 + $0x20] sm:$0xff] %v198
                %v200 = vld [vmem:[%s188 + $0x88] sm:$0xff]
                %201 = vst [vmem:[%s189 + $0x28] sm:$0xff] %v200
                %v202 = vld [vmem:[%s188 + $0xc0] sm:$0xff]
                %203 = vst [vmem:[%s189 + $0x30] sm:$0xff] %v202
                %v204 = vld [vmem:[%s188 + $0xc8] sm:$0xff]
                %205 = vst [vmem:[%s189 + $0x38] sm:$0xff] %v204
              $region37: #{vae_forward.24} parent=31 // loop_footer
                %s187 = sadd.s32 1, %s183
              $region38: #{vae_forward.24} parent=31 // loop_footer_branch
                %182 = sbr.rel target = $region34
              $region39: #{vae_forward.24} parent=31 // loop_exit
                _
            $region32: #{vae_forward.24} parent=27 // pred_fallthru
              _
            // Predicated region
            $region40: #{vae_forward.24} parent=27 // pred_check
              _
            $region41: #{vae_forward.24} parent=27 // pred_check_branch
              %207 = sbr.rel target = $region43
            $region42: #{vae_forward.24} parent=27 // pred_region
              _
            $region43: #{vae_forward.24} parent=27 // pred_fallthru
              _
          $region28: #{vae_forward.24} parent=23 // pred_fallthru
            _
          %208 = vnop
        $region24: #{vae_forward.24} parent=19 // pred_fallthru
          _
        // Predicated region
        $region44: #{vae_forward.24} parent=19 // pred_check
          %p209 = pneg %p78
        $region45: #{vae_forward.24} parent=19 // pred_check_branch
          %211 = sbr.rel (%p209) target = $region47
        $region46: #{vae_forward.24} parent=19 // pred_region
          %s212 = smul.u32 64, %s18
          %s213 = smul.u32 2, %s17
          %p214 = scmp.lt.s32.totalorder %s212, 255
          %s215 = scalar_select %p214, %s212, 255
          %p216 = scmp.lt.s32.totalorder %s213, 1
          %s217 = scalar_select %p216, %s213, 1
          %s218 = smul.addr %s215, 2
          %s219 = sadd.s32 %s217, %s218
          %s220 = smul.addr %s219, 4
          %s221 = scalar_lea.vmem %s1, %s220
          %s222 = smul.u32 64, %s18
          %s223 = smul.u32 2, %s17
        $region47: #{vae_forward.24} parent=19 // pred_fallthru
          _
      $region20: #{vae_forward.24} parent=5 // pred_fallthru
        _
      %p224 = scmp.le.s32.totalorder 1, %s9
      %p225 = scmp.lt.s32.totalorder %s9, 5
      %p226 = pnand %p224, %p225
      %p227 = pneg %p226
      // Predicated region
      $region48: #{vae_forward.24} parent=5 // pred_check
        _
      $region49: #{vae_forward.24} parent=5 // pred_check_branch
        %229 = sbr.rel (%p226) target = $region51
      $region50: #{vae_forward.24} parent=5 // pred_region
        %s230 = ssub.s32 %s9, 1
        %s231 = sand.u32 %s43, 1
        %s232 = sand.u32 %s43, 1
        %s233 = smul.addr %s232, 64
        %s234 = scalar_lea.vmem [#allocation3], %s233
        // Predicated region
        $region52: #{vae_forward.24} parent=50 // pred_check
          %p235 = pneg %p56
        $region53: #{vae_forward.24} parent=50 // pred_check_branch
          %237 = sbr.rel (%p235) target = $region55
        $region54: #{vae_forward.24} parent=50 // pred_region
          _
        $region55: #{vae_forward.24} parent=50 // pred_fallthru
          _
        %s238 = sand.u32 %s43, 1
        %s239 = sand.u32 %s43, 1
        %s240 = smul.addr %s239, 64
        %s241 = scalar_lea.vmem [#allocation3], %s240
        %p242 = pneg %p56
        %p243 = pneg %p53
        %s244 = smul.u32 64, %s21
        %s245 = smul.u32 2, %s20
        %p246 = scmp.lt.s32.totalorder %s244, 255
        %s247 = scalar_select %p246, %s244, 255
        %p248 = scmp.lt.s32.totalorder %s245, 1
        %s249 = scalar_select %p248, %s245, 1
        %s250 = smul.addr %s247, 2
        %s251 = sadd.s32 %s249, %s250
        %s252 = smul.addr %s251, 4
        %s253 = scalar_lea.vmem %s1, %s252
        %p254 = pneg %p84
        %p255 = pneg %p81
        %s256 = smul.u32 2, %s20
        %p257 = scmp.lt.s32.totalorder %s256, 1
        %s258 = scalar_select %p257, %s256, 1
        %s259 = scalar_lea.vmem %s2, %s258
        %p260 = pneg %p110
        %p261 = pneg %p107
        %p262 = pneg %p138
        %p263 = pneg %p135
        %s264 = smul.u32 4, %s19
        %s265 = smul.u32 2, %s20
        %p266 = scmp.lt.s32.totalorder %s264, 3
        %s267 = scalar_select %p266, %s264, 3
        %p268 = scmp.lt.s32.totalorder %s265, 1
        %s269 = scalar_select %p268, %s265, 1
        %s270 = smul.addr %s267, 2
        %s271 = sadd.s32 %s269, %s270
        %s272 = smul.addr %s271, 4
        %s273 = scalar_lea.vmem %s3, %s272
        %s274 = smul.u32 4, %s19
        %s275 = smul.u32 4, %s21
        %s276 = smul.u32 64, %s21
        %s277 = smul.u32 2, %s20
        %p278 = scmp.lt.s32.totalorder %s276, 255
        %s279 = scalar_select %p278, %s276, 255
        %p280 = scmp.lt.s32.totalorder %s277, 1
        %s281 = scalar_select %p280, %s277, 1
        %s282 = smul.addr %s279, 2
        %s283 = sadd.s32 %s281, %s282
        %s284 = smul.addr %s283, 4
        %s285 = scalar_lea.vmem %s1, %s284
        %s286 = smul.u32 64, %s21
        %s287 = smul.u32 2, %s20
        %s288 = smul.u32 2, %s20
        %p289 = scmp.lt.s32.totalorder %s288, 1
        %s290 = scalar_select %p289, %s288, 1
        %s291 = scalar_lea.vmem %s2, %s290
        %s292 = smul.u32 2, %s20
        %s293 = smul.u32 4, %s19
        %s294 = smul.u32 2, %s20
        %p295 = scmp.lt.s32.totalorder %s293, 3
        %s296 = scalar_select %p295, %s293, 3
        %p297 = scmp.lt.s32.totalorder %s294, 1
        %s298 = scalar_select %p297, %s294, 1
        %s299 = smul.addr %s296, 2
        %s300 = sadd.s32 %s298, %s299
        %s301 = smul.addr %s300, 4
        %s302 = scalar_lea.vmem %s3, %s301
        %s303 = smul.u32 4, %s19
        %s304 = smul.u32 2, %s20
        %p305 = scmp.eq.s32.totalorder %s21, 0
        // Predicated region
        $region56: #{vae_forward.24} parent=50 // pred_check
          %p306 = pneg %p305
        $region57: #{vae_forward.24} parent=50 // pred_check_branch
          %308 = sbr.rel (%p306) target = $region59
        $region58: #{vae_forward.24} parent=50 // pred_region
          %309 = vst [vmem:[#allocation2] sm:$0xff] 0.0
          %310 = vst [vmem:[#allocation2 + $0x8] sm:$0xff] 0.0
          %311 = vst [vmem:[#allocation2 + $0x10] sm:$0xff] 0.0
          %312 = vst [vmem:[#allocation2 + $0x18] sm:$0xff] 0.0
          %313 = vst [vmem:[#allocation2 + $0x20] sm:$0xff] 0.0
          %314 = vst [vmem:[#allocation2 + $0x28] sm:$0xff] 0.0
          %315 = vst [vmem:[#allocation2 + $0x30] sm:$0xff] 0.0
          %316 = vst [vmem:[#allocation2 + $0x38] sm:$0xff] 0.0
        $region59: #{vae_forward.24} parent=50 // pred_fallthru
          _
        %v317 = vld [vmem:[#allocation2] sm:$0xff]
        %v318 = vld [vmem:[#allocation2 + $0x8] sm:$0xff]
        %v319 = vld [vmem:[#allocation2 + $0x10] sm:$0xff]
        %v320 = vld [vmem:[#allocation2 + $0x18] sm:$0xff]
        %v321 = vld [vmem:[#allocation2 + $0x20] sm:$0xff]
        %v322 = vld [vmem:[#allocation2 + $0x28] sm:$0xff]
        %v323 = vld [vmem:[#allocation2 + $0x30] sm:$0xff]
        %v324 = vld [vmem:[#allocation2 + $0x38] sm:$0xff]
        %v325 = vld [vmem:[%s234] sm:$0xff]
        %v326 = vld [vmem:[%s234 + $0x8] sm:$0xff]
        %v327 = vld [vmem:[%s234 + $0x10] sm:$0xff]
        %v328 = vld [vmem:[%s234 + $0x18] sm:$0xff]
        %v329 = vld [vmem:[%s234 + $0x20] sm:$0xff]
        %v330 = vld [vmem:[%s234 + $0x28] sm:$0xff]
        %v331 = vld [vmem:[%s234 + $0x30] sm:$0xff]
        %v332 = vld [vmem:[%s234 + $0x38] sm:$0xff]
        %v333 = vld [vmem:[%s285] sm:$0xff]
        %v334 = vld [vmem:[%s285 + $0x8] sm:$0xff]
        %v335 = vld [vmem:[%s285 + $0x10] sm:$0xff]
        %v336 = vld [vmem:[%s285 + $0x18] sm:$0xff]
        %v337 = vld [vmem:[%s285 + $0x20] sm:$0xff]
        %v338 = vld [vmem:[%s285 + $0x28] sm:$0xff]
        %v339 = vld [vmem:[%s285 + $0x30] sm:$0xff]
        %v340 = vld [vmem:[%s285 + $0x38] sm:$0xff]
        %v341 = vld [vmem:[%s285 + $0x40] sm:$0xff]
        %v342 = vld [vmem:[%s285 + $0x48] sm:$0xff]
        %v343 = vld [vmem:[%s285 + $0x50] sm:$0xff]
        %v344 = vld [vmem:[%s285 + $0x58] sm:$0xff]
        %v345 = vld [vmem:[%s285 + $0x60] sm:$0xff]
        %v346 = vld [vmem:[%s285 + $0x68] sm:$0xff]
        %v347 = vld [vmem:[%s285 + $0x70] sm:$0xff]
        %v348 = vld [vmem:[%s285 + $0x78] sm:$0xff]
        %v349 = vld [vmem:[%s285 + $0x80] sm:$0xff]
        %v350 = vld [vmem:[%s285 + $0x88] sm:$0xff]
        %v351 = vld [vmem:[%s285 + $0x90] sm:$0xff]
        %v352 = vld [vmem:[%s285 + $0x98] sm:$0xff]
        %v353 = vld [vmem:[%s285 + $0xa0] sm:$0xff]
        %v354 = vld [vmem:[%s285 + $0xa8] sm:$0xff]
        %v355 = vld [vmem:[%s285 + $0xb0] sm:$0xff]
        %v356 = vld [vmem:[%s285 + $0xb8] sm:$0xff]
        %v357 = vld [vmem:[%s285 + $0xc0] sm:$0xff]
        %v358 = vld [vmem:[%s285 + $0xc8] sm:$0xff]
        %v359 = vld [vmem:[%s285 + $0xd0] sm:$0xff]
        %v360 = vld [vmem:[%s285 + $0xd8] sm:$0xff]
        %v361 = vld [vmem:[%s285 + $0xe0] sm:$0xff]
        %v362 = vld [vmem:[%s285 + $0xe8] sm:$0xff]
        %v363 = vld [vmem:[%s285 + $0xf0] sm:$0xff]
        %v364 = vld [vmem:[%s285 + $0xf8] sm:$0xff]
        %v365 = vld [vmem:[%s285 + $0x100] sm:$0xff]
        %v366 = vld [vmem:[%s285 + $0x108] sm:$0xff]
        %v367 = vld [vmem:[%s285 + $0x110] sm:$0xff]
        %v368 = vld [vmem:[%s285 + $0x118] sm:$0xff]
        %v369 = vld [vmem:[%s285 + $0x120] sm:$0xff]
        %v370 = vld [vmem:[%s285 + $0x128] sm:$0xff]
        %v371 = vld [vmem:[%s285 + $0x130] sm:$0xff]
        %v372 = vld [vmem:[%s285 + $0x138] sm:$0xff]
        %v373 = vld [vmem:[%s285 + $0x140] sm:$0xff]
        %v374 = vld [vmem:[%s285 + $0x148] sm:$0xff]
        %v375 = vld [vmem:[%s285 + $0x150] sm:$0xff]
        %v376 = vld [vmem:[%s285 + $0x158] sm:$0xff]
        %v377 = vld [vmem:[%s285 + $0x160] sm:$0xff]
        %v378 = vld [vmem:[%s285 + $0x168] sm:$0xff]
        %v379 = vld [vmem:[%s285 + $0x170] sm:$0xff]
        %v380 = vld [vmem:[%s285 + $0x178] sm:$0xff]
        %v381 = vld [vmem:[%s285 + $0x180] sm:$0xff]
        %v382 = vld [vmem:[%s285 + $0x188] sm:$0xff]
        %v383 = vld [vmem:[%s285 + $0x190] sm:$0xff]
        %v384 = vld [vmem:[%s285 + $0x198] sm:$0xff]
        %v385 = vld [vmem:[%s285 + $0x1a0] sm:$0xff]
        %v386 = vld [vmem:[%s285 + $0x1a8] sm:$0xff]
        %v387 = vld [vmem:[%s285 + $0x1b0] sm:$0xff]
        %v388 = vld [vmem:[%s285 + $0x1b8] sm:$0xff]
        %v389 = vld [vmem:[%s285 + $0x1c0] sm:$0xff]
        %v390 = vld [vmem:[%s285 + $0x1c8] sm:$0xff]
        %v391 = vld [vmem:[%s285 + $0x1d0] sm:$0xff]
        %v392 = vld [vmem:[%s285 + $0x1d8] sm:$0xff]
        %v393 = vld [vmem:[%s285 + $0x1e0] sm:$0xff]
        %v394 = vld [vmem:[%s285 + $0x1e8] sm:$0xff]
        %v395 = vld [vmem:[%s285 + $0x1f0] sm:$0xff]
        %v396 = vld [vmem:[%s285 + $0x1f8] sm:$0xff]
        %v405 = vunpack.c.l.b16 %v325
        %v406 = vunpack.c.h.b16 %v325
        %v407 = vunpack.c.l.b16 %v326
        %v408 = vunpack.c.h.b16 %v326
        %v409 = vunpack.c.l.b16 %v327
        %v410 = vunpack.c.h.b16 %v327
        %v411 = vunpack.c.l.b16 %v328
        %v412 = vunpack.c.h.b16 %v328
        %v413 = vunpack.c.l.b16 %v329
        %v414 = vunpack.c.h.b16 %v329
        %v415 = vunpack.c.l.b16 %v330
        %v416 = vunpack.c.h.b16 %v330
        %v417 = vunpack.c.l.b16 %v331
        %v418 = vunpack.c.h.b16 %v331
        %v419 = vunpack.c.l.b16 %v332
        %v420 = vunpack.c.h.b16 %v332
        %v421 = vpack.c.b16 %v409, %v405
        %v422 = vpack.c.b16 %v410, %v406
        %v423 = vpack.c.b16 %v411, %v407
        %v424 = vpack.c.b16 %v412, %v408
        %v425 = vpack.c.b16 %v417, %v413
        %v426 = vpack.c.b16 %v418, %v414
        %v427 = vpack.c.b16 %v419, %v415
        %v428 = vpack.c.b16 %v420, %v416
        %v501 = vunpack.c.l.b16 %v333
        %v502 = vunpack.c.h.b16 %v333
        %v503 = vunpack.c.l.b16 %v334
        %v504 = vunpack.c.h.b16 %v334
        %v505 = vunpack.c.l.b16 %v335
        %v506 = vunpack.c.h.b16 %v335
        %v507 = vunpack.c.l.b16 %v336
        %v508 = vunpack.c.h.b16 %v336
        %v509 = vunpack.c.l.b16 %v337
        %v510 = vunpack.c.h.b16 %v337
        %v511 = vunpack.c.l.b16 %v338
        %v512 = vunpack.c.h.b16 %v338
        %v513 = vunpack.c.l.b16 %v339
        %v514 = vunpack.c.h.b16 %v339
        %v515 = vunpack.c.l.b16 %v340
        %v516 = vunpack.c.h.b16 %v340
        %v517 = vunpack.c.l.b16 %v341
        %v518 = vunpack.c.h.b16 %v341
        %v519 = vunpack.c.l.b16 %v342
        %v520 = vunpack.c.h.b16 %v342
        %v521 = vunpack.c.l.b16 %v343
        %v522 = vunpack.c.h.b16 %v343
        %v523 = vunpack.c.l.b16 %v344
        %v524 = vunpack.c.h.b16 %v344
        %v525 = vunpack.c.l.b16 %v345
        %v526 = vunpack.c.h.b16 %v345
        %v527 = vunpack.c.l.b16 %v346
        %v528 = vunpack.c.h.b16 %v346
        %v529 = vunpack.c.l.b16 %v347
        %v530 = vunpack.c.h.b16 %v347
        %v531 = vunpack.c.l.b16 %v348
        %v532 = vunpack.c.h.b16 %v348
        %v533 = vunpack.c.l.b16 %v349
        %v534 = vunpack.c.h.b16 %v349
        %v535 = vunpack.c.l.b16 %v350
        %v536 = vunpack.c.h.b16 %v350
        %v537 = vunpack.c.l.b16 %v351
        %v538 = vunpack.c.h.b16 %v351
        %v539 = vunpack.c.l.b16 %v352
        %v540 = vunpack.c.h.b16 %v352
        %v541 = vunpack.c.l.b16 %v353
        %v542 = vunpack.c.h.b16 %v353
        %v543 = vunpack.c.l.b16 %v354
        %v544 = vunpack.c.h.b16 %v354
        %v545 = vunpack.c.l.b16 %v355
        %v546 = vunpack.c.h.b16 %v355
        %v547 = vunpack.c.l.b16 %v356
        %v548 = vunpack.c.h.b16 %v356
        %v549 = vunpack.c.l.b16 %v357
        %v550 = vunpack.c.h.b16 %v357
        %v551 = vunpack.c.l.b16 %v358
        %v552 = vunpack.c.h.b16 %v358
        %v553 = vunpack.c.l.b16 %v359
        %v554 = vunpack.c.h.b16 %v359
        %v555 = vunpack.c.l.b16 %v360
        %v556 = vunpack.c.h.b16 %v360
        %v557 = vunpack.c.l.b16 %v361
        %v558 = vunpack.c.h.b16 %v361
        %v559 = vunpack.c.l.b16 %v362
        %v560 = vunpack.c.h.b16 %v362
        %v561 = vunpack.c.l.b16 %v363
        %v562 = vunpack.c.h.b16 %v363
        %v563 = vunpack.c.l.b16 %v364
        %v564 = vunpack.c.h.b16 %v364
        %v565 = vunpack.c.l.b16 %v365
        %v566 = vunpack.c.h.b16 %v365
        %v567 = vunpack.c.l.b16 %v366
        %v568 = vunpack.c.h.b16 %v366
        %v569 = vunpack.c.l.b16 %v367
        %v570 = vunpack.c.h.b16 %v367
        %v571 = vunpack.c.l.b16 %v368
        %v572 = vunpack.c.h.b16 %v368
        %v573 = vunpack.c.l.b16 %v369
        %v574 = vunpack.c.h.b16 %v369
        %v575 = vunpack.c.l.b16 %v370
        %v576 = vunpack.c.h.b16 %v370
        %v577 = vunpack.c.l.b16 %v371
        %v578 = vunpack.c.h.b16 %v371
        %v579 = vunpack.c.l.b16 %v372
        %v580 = vunpack.c.h.b16 %v372
        %v581 = vunpack.c.l.b16 %v373
        %v582 = vunpack.c.h.b16 %v373
        %v583 = vunpack.c.l.b16 %v374
        %v584 = vunpack.c.h.b16 %v374
        %v585 = vunpack.c.l.b16 %v375
        %v586 = vunpack.c.h.b16 %v375
        %v587 = vunpack.c.l.b16 %v376
        %v588 = vunpack.c.h.b16 %v376
        %v589 = vunpack.c.l.b16 %v377
        %v590 = vunpack.c.h.b16 %v377
        %v591 = vunpack.c.l.b16 %v378
        %v592 = vunpack.c.h.b16 %v378
        %v593 = vunpack.c.l.b16 %v379
        %v594 = vunpack.c.h.b16 %v379
        %v595 = vunpack.c.l.b16 %v380
        %v596 = vunpack.c.h.b16 %v380
        %v597 = vunpack.c.l.b16 %v381
        %v598 = vunpack.c.h.b16 %v381
        %v599 = vunpack.c.l.b16 %v382
        %v600 = vunpack.c.h.b16 %v382
        %v601 = vunpack.c.l.b16 %v383
        %v602 = vunpack.c.h.b16 %v383
        %v603 = vunpack.c.l.b16 %v384
        %v604 = vunpack.c.h.b16 %v384
        %v605 = vunpack.c.l.b16 %v385
        %v606 = vunpack.c.h.b16 %v385
        %v607 = vunpack.c.l.b16 %v386
        %v608 = vunpack.c.h.b16 %v386
        %v609 = vunpack.c.l.b16 %v387
        %v610 = vunpack.c.h.b16 %v387
        %v611 = vunpack.c.l.b16 %v388
        %v612 = vunpack.c.h.b16 %v388
        %v613 = vunpack.c.l.b16 %v389
        %v614 = vunpack.c.h.b16 %v389
        %v615 = vunpack.c.l.b16 %v390
        %v616 = vunpack.c.h.b16 %v390
        %v617 = vunpack.c.l.b16 %v391
        %v618 = vunpack.c.h.b16 %v391
        %v619 = vunpack.c.l.b16 %v392
        %v620 = vunpack.c.h.b16 %v392
        %v621 = vunpack.c.l.b16 %v393
        %v622 = vunpack.c.h.b16 %v393
        %v623 = vunpack.c.l.b16 %v394
        %v624 = vunpack.c.h.b16 %v394
        %v625 = vunpack.c.l.b16 %v395
        %v626 = vunpack.c.h.b16 %v395
        %v627 = vunpack.c.l.b16 %v396
        %v628 = vunpack.c.h.b16 %v396
        %v629 = vpack.c.b16 %v503, %v501
        %v630 = vpack.c.b16 %v504, %v502
        %v631 = vpack.c.b16 %v507, %v505
        %v632 = vpack.c.b16 %v508, %v506
        %v633 = vpack.c.b16 %v511, %v509
        %v634 = vpack.c.b16 %v512, %v510
        %v635 = vpack.c.b16 %v515, %v513
        %v636 = vpack.c.b16 %v516, %v514
        %v637 = vpack.c.b16 %v519, %v517
        %v638 = vpack.c.b16 %v520, %v518
        %v639 = vpack.c.b16 %v523, %v521
        %v640 = vpack.c.b16 %v524, %v522
        %v641 = vpack.c.b16 %v527, %v525
        %v642 = vpack.c.b16 %v528, %v526
        %v643 = vpack.c.b16 %v531, %v529
        %v644 = vpack.c.b16 %v532, %v530
        %v645 = vpack.c.b16 %v535, %v533
        %v646 = vpack.c.b16 %v536, %v534
        %v647 = vpack.c.b16 %v539, %v537
        %v648 = vpack.c.b16 %v540, %v538
        %v649 = vpack.c.b16 %v543, %v541
        %v650 = vpack.c.b16 %v544, %v542
        %v651 = vpack.c.b16 %v547, %v545
        %v652 = vpack.c.b16 %v548, %v546
        %v653 = vpack.c.b16 %v551, %v549
        %v654 = vpack.c.b16 %v552, %v550
        %v655 = vpack.c.b16 %v555, %v553
        %v656 = vpack.c.b16 %v556, %v554
        %v657 = vpack.c.b16 %v559, %v557
        %v658 = vpack.c.b16 %v560, %v558
        %v659 = vpack.c.b16 %v563, %v561
        %v660 = vpack.c.b16 %v564, %v562
        %v661 = vpack.c.b16 %v567, %v565
        %v662 = vpack.c.b16 %v568, %v566
        %v663 = vpack.c.b16 %v571, %v569
        %v664 = vpack.c.b16 %v572, %v570
        %v665 = vpack.c.b16 %v575, %v573
        %v666 = vpack.c.b16 %v576, %v574
        %v667 = vpack.c.b16 %v579, %v577
        %v668 = vpack.c.b16 %v580, %v578
        %v669 = vpack.c.b16 %v583, %v581
        %v670 = vpack.c.b16 %v584, %v582
        %v671 = vpack.c.b16 %v587, %v585
        %v672 = vpack.c.b16 %v588, %v586
        %v673 = vpack.c.b16 %v591, %v589
        %v674 = vpack.c.b16 %v592, %v590
        %v675 = vpack.c.b16 %v595, %v593
        %v676 = vpack.c.b16 %v596, %v594
        %v677 = vpack.c.b16 %v599, %v597
        %v678 = vpack.c.b16 %v600, %v598
        %v679 = vpack.c.b16 %v603, %v601
        %v680 = vpack.c.b16 %v604, %v602
        %v681 = vpack.c.b16 %v607, %v605
        %v682 = vpack.c.b16 %v608, %v606
        %v683 = vpack.c.b16 %v611, %v609
        %v684 = vpack.c.b16 %v612, %v610
        %v685 = vpack.c.b16 %v615, %v613
        %v686 = vpack.c.b16 %v616, %v614
        %v687 = vpack.c.b16 %v619, %v617
        %v688 = vpack.c.b16 %v620, %v618
        %v689 = vpack.c.b16 %v623, %v621
        %v690 = vpack.c.b16 %v624, %v622
        %v691 = vpack.c.b16 %v627, %v625
        %v692 = vpack.c.b16 %v628, %v626
        %757 = vmatprep.subr.bf16.mxu0 %v630
        %758 = vmatpush1.bf16.msra.mxu0 %v629
        %759 = vmatprep.subr.bf16.mxu0 %v632
        %760 = vmatpush1.bf16.msra.mxu0 %v631
        %761 = vmatprep.subr.bf16.mxu0 %v634
        %762 = vmatpush1.bf16.msra.mxu0 %v633
        %763 = vmatprep.subr.bf16.mxu0 %v636
        %764 = vmatpush1.bf16.msra.mxu0 %v635
        %765 = vmatprep.subr.bf16.mxu0 %v638
        %766 = vmatpush1.bf16.msra.mxu0 %v637
        %767 = vmatprep.subr.bf16.mxu0 %v640
        %768 = vmatpush1.bf16.msra.mxu0 %v639
        %769 = vmatprep.subr.bf16.mxu0 %v642
        %770 = vmatpush1.bf16.msra.mxu0 %v641
        %771 = vmatprep.subr.bf16.mxu0 %v644
        %772 = vmatpush1.bf16.msra.mxu0 %v643
        %773 = vmatprep.subr.bf16.mxu0 %v646
        %774 = vmatpush1.bf16.msra.mxu0 %v645
        %775 = vmatprep.subr.bf16.mxu0 %v648
        %776 = vmatpush1.bf16.msra.mxu0 %v647
        %777 = vmatprep.subr.bf16.mxu0 %v650
        %778 = vmatpush1.bf16.msra.mxu0 %v649
        %779 = vmatprep.subr.bf16.mxu0 %v652
        %780 = vmatpush1.bf16.msra.mxu0 %v651
        %781 = vmatprep.subr.bf16.mxu0 %v654
        %782 = vmatpush1.bf16.msra.mxu0 %v653
        %783 = vmatprep.subr.bf16.mxu0 %v656
        %784 = vmatpush1.bf16.msra.mxu0 %v655
        %785 = vmatprep.subr.bf16.mxu0 %v658
        %786 = vmatpush1.bf16.msra.mxu0 %v657
        %787 = vmatprep.subr.bf16.mxu0 %v660
        %788 = vmatpush1.bf16.msra.mxu0 %v659
        %789 = vmatprep.mubr.bf16.mxu0 %v422
        %790 = vmatmul.mubr.bf16.gmra.mrb[0].mxu0 %v421
        %v791 = vpop.f32.mrb[0].mxu0
        %v792 = vadd.f32 0.0, %v791
        %v793 = vpop.f32.mrb[0].mxu0
        %v794 = vadd.f32 0.0, %v793
        %v795 = vpop.f32.mrb[0].mxu0
        %v796 = vadd.f32 0.0, %v795
        %v797 = vpop.f32.mrb[0].mxu0
        %v798 = vadd.f32 0.0, %v797
        %799 = vmatprep.mubr.bf16.mxu0 %v426
        %800 = vmatmul.mubr.bf16.gmra.mrb[0].mxu0 %v425
        %v801 = vpop.f32.mrb[0].mxu0
        %v802 = vadd.f32 0.0, %v801
        %v803 = vpop.f32.mrb[0].mxu0
        %v804 = vadd.f32 0.0, %v803
        %v805 = vpop.f32.mrb[0].mxu0
        %v806 = vadd.f32 0.0, %v805
        %v807 = vpop.f32.mrb[0].mxu0
        %v808 = vadd.f32 0.0, %v807
        %809 = vdwg.mxu0
        %810 = vmatprep.subr.bf16.mxu0 %v662
        %811 = vmatpush1.bf16.msra.mxu0 %v661
        %812 = vmatprep.subr.bf16.mxu0 %v664
        %813 = vmatpush1.bf16.msra.mxu0 %v663
        %814 = vmatprep.subr.bf16.mxu0 %v666
        %815 = vmatpush1.bf16.msra.mxu0 %v665
        %816 = vmatprep.subr.bf16.mxu0 %v668
        %817 = vmatpush1.bf16.msra.mxu0 %v667
        %818 = vmatprep.subr.bf16.mxu0 %v670
        %819 = vmatpush1.bf16.msra.mxu0 %v669
        %820 = vmatprep.subr.bf16.mxu0 %v672
        %821 = vmatpush1.bf16.msra.mxu0 %v671
        %822 = vmatprep.subr.bf16.mxu0 %v674
        %823 = vmatpush1.bf16.msra.mxu0 %v673
        %824 = vmatprep.subr.bf16.mxu0 %v676
        %825 = vmatpush1.bf16.msra.mxu0 %v675
        %826 = vmatprep.subr.bf16.mxu0 %v678
        %827 = vmatpush1.bf16.msra.mxu0 %v677
        %828 = vmatprep.subr.bf16.mxu0 %v680
        %829 = vmatpush1.bf16.msra.mxu0 %v679
        %830 = vmatprep.subr.bf16.mxu0 %v682
        %831 = vmatpush1.bf16.msra.mxu0 %v681
        %832 = vmatprep.subr.bf16.mxu0 %v684
        %833 = vmatpush1.bf16.msra.mxu0 %v683
        %834 = vmatprep.subr.bf16.mxu0 %v686
        %835 = vmatpush1.bf16.msra.mxu0 %v685
        %836 = vmatprep.subr.bf16.mxu0 %v688
        %837 = vmatpush1.bf16.msra.mxu0 %v687
        %838 = vmatprep.subr.bf16.mxu0 %v690
        %839 = vmatpush1.bf16.msra.mxu0 %v689
        %840 = vmatprep.subr.bf16.mxu0 %v692
        %841 = vmatpush1.bf16.msra.mxu0 %v691
        %842 = vmatprep.mubr.bf16.mxu0 %v424
        %843 = vmatmul.mubr.bf16.gmra.mrb[0].mxu0 %v423
        %v844 = vpop.f32.mrb[0].mxu0
        %v845 = vadd.f32 %v792, %v844
        %v846 = vpop.f32.mrb[0].mxu0
        %v847 = vadd.f32 %v794, %v846
        %v848 = vpop.f32.mrb[0].mxu0
        %v849 = vadd.f32 %v796, %v848
        %v850 = vpop.f32.mrb[0].mxu0
        %v851 = vadd.f32 %v798, %v850
        %852 = vmatprep.mubr.bf16.mxu0 %v428
        %853 = vmatmul.mubr.bf16.gmra.mrb[0].mxu0 %v427
        %v854 = vpop.f32.mrb[0].mxu0
        %v855 = vadd.f32 %v802, %v854
        %v856 = vpop.f32.mrb[0].mxu0
        %v857 = vadd.f32 %v804, %v856
        %v858 = vpop.f32.mrb[0].mxu0
        %v859 = vadd.f32 %v806, %v858
        %v860 = vpop.f32.mrb[0].mxu0
        %v861 = vadd.f32 %v808, %v860
        %862 = vdwg.mxu0
        %v863 = vadd.f32 %v317, %v845
        %v864 = vadd.f32 %v318, %v847
        %v865 = vadd.f32 %v319, %v849
        %v866 = vadd.f32 %v320, %v851
        %v867 = vadd.f32 %v321, %v855
        %v868 = vadd.f32 %v322, %v857
        %v869 = vadd.f32 %v323, %v859
        %v870 = vadd.f32 %v324, %v861
        %871 = vst [vmem:[#allocation2] sm:$0xff] %v863
        %872 = vst [vmem:[#allocation2 + $0x8] sm:$0xff] %v864
        %873 = vst [vmem:[#allocation2 + $0x10] sm:$0xff] %v865
        %874 = vst [vmem:[#allocation2 + $0x18] sm:$0xff] %v866
        %875 = vst [vmem:[#allocation2 + $0x20] sm:$0xff] %v867
        %876 = vst [vmem:[#allocation2 + $0x28] sm:$0xff] %v868
        %877 = vst [vmem:[#allocation2 + $0x30] sm:$0xff] %v869
        %878 = vst [vmem:[#allocation2 + $0x38] sm:$0xff] %v870
        %p879 = scmp.eq.s32.totalorder %s21, 3
        // Predicated region
        $region60: #{vae_forward.24} parent=50 // pred_check
          %p880 = pneg %p879
        $region61: #{vae_forward.24} parent=50 // pred_check_branch
          %882 = sbr.rel (%p880) target = $region63
        $region62: #{vae_forward.24} parent=50 // pred_region
          %v883 = vld [vmem:[#allocation2] sm:$0xff]
          %v884 = vld [vmem:[#allocation2 + $0x8] sm:$0xff]
          %v885 = vld [vmem:[#allocation2 + $0x10] sm:$0xff]
          %v886 = vld [vmem:[#allocation2 + $0x18] sm:$0xff]
          %v887 = vld [vmem:[#allocation2 + $0x20] sm:$0xff]
          %v888 = vld [vmem:[#allocation2 + $0x28] sm:$0xff]
          %v889 = vld [vmem:[#allocation2 + $0x30] sm:$0xff]
          %v890 = vld [vmem:[#allocation2 + $0x38] sm:$0xff]
          %v891 = vld [vmem:[%s291] sm:$0x3]
          %v893 = vlaneseq
          %v894 = vshrl.u32 %v893, 7
          %v895 = vsub.s32 0, %v894
          %v896 = vrot.slane %v891, %v895
          %v897 = vlaneseq
          %v898 = vshrl.u32 %v897, 7
          %v899 = vsub.s32 1, %v898
          %v900 = vrot.slane %v891, %v899
          %v903 = vadd.f32 %v883, %v896
          %v904 = vadd.f32 %v884, %v900
          %v905 = vadd.f32 %v885, %v896
          %v906 = vadd.f32 %v886, %v900
          %v907 = vadd.f32 %v887, %v896
          %v908 = vadd.f32 %v888, %v900
          %v909 = vadd.f32 %v889, %v896
          %v910 = vadd.f32 %v890, %v900
          %v911 = vmax.f32 %v903, 0.0
          %v912 = vmax.f32 %v904, 0.0
          %v913 = vmax.f32 %v905, 0.0
          %v914 = vmax.f32 %v906, 0.0
          %v915 = vmax.f32 %v907, 0.0
          %v916 = vmax.f32 %v908, 0.0
          %v917 = vmax.f32 %v909, 0.0
          %v918 = vmax.f32 %v910, 0.0
          %v919 = vpack.c.bf16 %v913, %v911
          %v920 = vpack.c.bf16 %v914, %v912
          %v921 = vpack.c.bf16 %v917, %v915
          %v922 = vpack.c.bf16 %v918, %v916
          %v927 = vunpack.c.l.b16 %v919
          %v928 = vunpack.c.l.b16 %v920
          %v929 = vunpack.c.h.b16 %v919
          %v930 = vunpack.c.h.b16 %v920
          %v931 = vunpack.c.l.b16 %v921
          %v932 = vunpack.c.l.b16 %v922
          %v933 = vunpack.c.h.b16 %v921
          %v934 = vunpack.c.h.b16 %v922
          %v935 = vpack.c.b16 %v928, %v927
          %v936 = vpack.c.b16 %v930, %v929
          %v937 = vpack.c.b16 %v932, %v931
          %v938 = vpack.c.b16 %v934, %v933
          %943 = vst [vmem:[%s302] sm:$0xff] %v935
          %944 = vst [vmem:[%s302 + $0x8] sm:$0xff] %v936
          %945 = vst [vmem:[%s302 + $0x10] sm:$0xff] %v937
          %946 = vst [vmem:[%s302 + $0x18] sm:$0xff] %v938
        $region63: #{vae_forward.24} parent=50 // pred_fallthru
          _
        %s947 = smul.u32 4, %s19
        %s948 = smul.u32 2, %s20
        %p949 = scmp.lt.s32.totalorder %s947, 3
        %s950 = scalar_select %p949, %s947, 3
        %p951 = scmp.lt.s32.totalorder %s948, 1
        %s952 = scalar_select %p951, %s948, 1
        %s953 = smul.addr %s950, 2
        %s954 = sadd.s32 %s952, %s953
        %s955 = smul.addr %s954, 4
        %s956 = scalar_lea.vmem %s3, %s955
        // Predicated region
        $region64: #{vae_forward.24} parent=50 // pred_check
          %p957 = pneg %p135
        $region65: #{vae_forward.24} parent=50 // pred_check_branch
          %959 = sbr.rel (%p957) target = $region67
        $region66: #{vae_forward.24} parent=50 // pred_region
          %s960 = smul.u32 4, %s19
          %s961 = smul.u32 2, %s20
        $region67: #{vae_forward.24} parent=50 // pred_fallthru
          _
        // Predicated region
        $region68: #{vae_forward.24} parent=50 // pred_check
          %p962 = pneg %p135
        $region69: #{vae_forward.24} parent=50 // pred_check_branch
          %964 = sbr.rel (%p962) target = $region71
        $region70: #{vae_forward.24} parent=50 // pred_region
          %s965 = smul.u32 4, %s19
          %s966 = smul.u32 2, %s20
          %p967 = scmp.lt.s32.totalorder %s965, 3
          %s968 = scalar_select %p967, %s965, 3
          %p969 = scmp.lt.s32.totalorder %s966, 1
          %s970 = scalar_select %p969, %s966, 1
          %s971 = smul.addr %s968, 2
          %s972 = sadd.s32 %s970, %s971
          %s973 = smul.addr %s972, 4
          %s974 = scalar_lea.vmem %s3, %s973
        $region71: #{vae_forward.24} parent=50 // pred_fallthru
          _
      $region51: #{vae_forward.24} parent=5 // pred_fallthru
        _
      %p975 = scmp.le.s32.totalorder 2, %s9
      // Predicated region
      $region72: #{vae_forward.24} parent=5 // pred_check
        %p976 = pneg %p975
      $region73: #{vae_forward.24} parent=5 // pred_check_branch
        %978 = sbr.rel (%p976) target = $region75
      $region74: #{vae_forward.24} parent=5 // pred_region
        %s979 = ssub.s32 %s9, 2
      $region75: #{vae_forward.24} parent=5 // pred_fallthru
        _
    $region6: #{vae_forward.24} parent=1 // loop_footer
      %s13 = sadd.s32 1, %s9
    $region7: #{vae_forward.24} parent=1 // loop_footer_branch
      %8 = sbr.rel target = $region3
    $region8: #{vae_forward.24} parent=1 // loop_exit
      _

// kernel: vae_forward.25
$region0: #{vae_forward.25}
  #allocation0 [shape = 'u32[]', space=smem, size = 0x4, offset = 0x4, fixed_abs, tag = 'smem constant byte address 0x4 - core index']
  #allocation1 [shape = 'u32[144,128]{1,0:T(1,128)}', space=vmem, size = 0x12000, scoped, tag = 'internal scratch']
  #allocation2 [shape = 'f32[8,256]{1,0:T(8,128)}', space=vmem, size = 0x2000, scoped, tag = 'scratch operand']
  %s0 = inlined_call_operand.vmem [shape: bf16[8,4096], index: 0, kind: input, shape index: {}]
  %s1 = inlined_call_operand.vmem [shape: bf16[4096,512], index: 1, kind: input, shape index: {}]
  %s2 = inlined_call_operand.vmem [shape: f32[1,512], index: 2, kind: input, shape index: {}]
  %s3 = inlined_call_operand.vmem [shape: bf16[8,512], index: 3, kind: output, shape index: {}]
  %s4 = sld [smem:[#allocation0]]
  $region91: #{vae_forward.25} parent=0
    _
  %s6 = ssub.s32 1, %s4
  %s7 = scalar_select 0, %s6, %s4
  $region1: #{vae_forward.25} parent=0
    #allocation3 [shape = 'u8[524288]{0}', space=vmem, size = 0x80000, scoped, tag = 'input window, operand 1']
    loop: start=0, step=1, limit=18
    $region2: #{vae_forward.25} parent=1 // loop_pre_header
      _
    $region3: #{vae_forward.25} parent=1 // loop_header
      %s9 = sphi 0, %s13
      %p10 = scmp.ge.s32.totalorder %s9, 18
      %s16 = sphi 0, %s35
      %s17 = sphi 0, %s31
      %s18 = sphi 0, %s27
      %s19 = sphi 0, %s16
      %s20 = sphi 0, %s17
      %s21 = sphi 0, %s18
      %s22 = sphi 0, %s19
      %s23 = sphi 0, %s20
      %s24 = sphi 0, %s21
      %s40 = sphi 0, %s42
      %s43 = sphi 0, %s40
      %s44 = sphi 0, %s43
      %s60 = sphi 0, %s44
      %s68 = sphi 0, %s70
      %s71 = sphi 0, %s68
      %s72 = sphi 0, %s71
      %s88 = sphi 0, %s72
      %s94 = sphi 0, %s96
      %s97 = sphi 0, %s94
      %s98 = sphi 0, %s97
      %s114 = sphi 0, %s98
      %s122 = sphi 0, %s124
      %s125 = sphi 0, %s122
      %s126 = sphi 0, %s125
      %s142 = sphi 0, %s126
    $region4: #{vae_forward.25} parent=1 // loop_header_branch
      %12 = sbr.rel (%p10) target = $region8
    $region5: #{vae_forward.25} parent=1 // loop_body
      %s14 = ssub.s32 %s9, 1
      %s15 = ssub.s32 %s9, 2
      %s25 = sadd.s32 1, %s18
      %p26 = scmp.ge.s32.totalorder %s25, 8
      %s27 = scalar_select %p26, 0, %s25
      %s28 = sadd.s32 1, %s17
      %s29 = scalar_select %p26, %s28, %s17
      %p30 = scmp.ge.s32.totalorder %s29, 2
      %s31 = scalar_select %p30, 0, %s29
      %s32 = sadd.s32 1, %s16
      %s33 = scalar_select %p30, %s32, %s16
      %p34 = scmp.ge.s32.totalorder %s33, 1
      %s35 = scalar_select %p34, 0, %s33
      %s36 = ssub.s32 %s16, %s35
      %s37 = ssub.s32 %s18, %s27
      %s38 = sor.u32 %s36, %s37
      %p39 = scmp.eq.s32.totalorder %s38, 0
      %s41 = sadd.s32 %s40, 1
      %s42 = scalar_select %p39, %s40, %s41
      %p45 = pneg %p39
      %p46 = scmp.eq.s32.totalorder %s9, 15
      %p47 = por %p45, %p46
      %p48 = scmp.ne.s32.totalorder %s40, %s43
      %p49 = scmp.eq.s32.totalorder %s9, 0
      %p50 = por %p48, %p49
      %p51 = scmp.ne.s32.totalorder %s40, %s43
      %p52 = scmp.eq.s32.totalorder %s14, 15
      %p53 = por %p51, %p52
      %p54 = scmp.ne.s32.totalorder %s43, %s44
      %p55 = scmp.eq.s32.totalorder %s14, 0
      %p56 = por %p54, %p55
      %p57 = scmp.ne.s32.totalorder %s43, %s44
      %p58 = scmp.eq.s32.totalorder %s15, 15
      %p59 = por %p57, %p58
      %p61 = scmp.ne.s32.totalorder %s44, %s60
      %p62 = scmp.eq.s32.totalorder %s15, 0
      %p63 = por %p61, %p62
      %s64 = ssub.s32 %s18, %s27
      %s65 = ssub.s32 %s17, %s31
      %s66 = sor.u32 %s64, %s65
      %p67 = scmp.eq.s32.totalorder %s66, 0
      %s69 = sadd.s32 %s68, 1
      %s70 = scalar_select %p67, %s68, %s69
      %p73 = pneg %p67
      %p74 = scmp.eq.s32.totalorder %s9, 15
      %p75 = por %p73, %p74
      %p76 = scmp.ne.s32.totalorder %s68, %s71
      %p77 = scmp.eq.s32.totalorder %s9, 0
      %p78 = por %p76, %p77
      %p79 = scmp.ne.s32.totalorder %s68, %s71
      %p80 = scmp.eq.s32.totalorder %s14, 15
      %p81 = por %p79, %p80
      %p82 = scmp.ne.s32.totalorder %s71, %s72
      %p83 = scmp.eq.s32.totalorder %s14, 0
      %p84 = por %p82, %p83
      %p85 = scmp.ne.s32.totalorder %s71, %s72
      %p86 = scmp.eq.s32.totalorder %s15, 15
      %p87 = por %p85, %p86
      %p89 = scmp.ne.s32.totalorder %s72, %s88
      %p90 = scmp.eq.s32.totalorder %s15, 0
      %p91 = por %p89, %p90
      %s92 = ssub.s32 %s17, %s31
      %p93 = scmp.eq.s32.totalorder %s92, 0
      %s95 = sadd.s32 %s94, 1
      %s96 = scalar_select %p93, %s94, %s95
      %p99 = pneg %p93
      %p100 = scmp.eq.s32.totalorder %s9, 15
      %p101 = por %p99, %p100
      %p102 = scmp.ne.s32.totalorder %s94, %s97
      %p103 = scmp.eq.s32.totalorder %s9, 0
      %p104 = por %p102, %p103
      %p105 = scmp.ne.s32.totalorder %s94, %s97
      %p106 = scmp.eq.s32.totalorder %s14, 15
      %p107 = por %p105, %p106
      %p108 = scmp.ne.s32.totalorder %s97, %s98
      %p109 = scmp.eq.s32.totalorder %s14, 0
      %p110 = por %p108, %p109
      %p111 = scmp.ne.s32.totalorder %s97, %s98
      %p112 = scmp.eq.s32.totalorder %s15, 15
      %p113 = por %p111, %p112
      %p115 = scmp.ne.s32.totalorder %s98, %s114
      %p116 = scmp.eq.s32.totalorder %s15, 0
      %p117 = por %p115, %p116
      %s118 = ssub.s32 %s16, %s35
      %s119 = ssub.s32 %s17, %s31
      %s120 = sor.u32 %s118, %s119
      %p121 = scmp.eq.s32.totalorder %s120, 0
      %s123 = sadd.s32 %s122, 1
      %s124 = scalar_select %p121, %s122, %s123
      %p127 = pneg %p121
      %p128 = scmp.eq.s32.totalorder %s9, 15
      %p129 = por %p127, %p128
      %p130 = scmp.ne.s32.totalorder %s122, %s125
      %p131 = scmp.eq.s32.totalorder %s9, 0
      %p132 = por %p130, %p131
      %p133 = scmp.ne.s32.totalorder %s122, %s125
      %p134 = scmp.eq.s32.totalorder %s14, 15
      %p135 = por %p133, %p134
      %p136 = scmp.ne.s32.totalorder %s125, %s126
      %p137 = scmp.eq.s32.totalorder %s14, 0
      %p138 = por %p136, %p137
      %p139 = scmp.ne.s32.totalorder %s125, %s126
      %p140 = scmp.eq.s32.totalorder %s15, 15
      %p141 = por %p139, %p140
      %p143 = scmp.ne.s32.totalorder %s126, %s142
      %p144 = scmp.eq.s32.totalorder %s15, 0
      %p145 = por %p143, %p144
      %p146 = scmp.le.s32.totalorder 1, %s9
      %p147 = scmp.lt.s32.totalorder %s9, 17
      %p148 = pnand %p146, %p147
      %p149 = pneg %p148
      // Predicated region
      $region9: #{vae_forward.25} parent=5 // pred_check
        _
      $region10: #{vae_forward.25} parent=5 // pred_check_branch
        %151 = sbr.rel (%p148) target = $region12
      $region11: #{vae_forward.25} parent=5 // pred_region
        %s152 = ssub.s32 %s9, 1
      $region12: #{vae_forward.25} parent=5 // pred_fallthru
        _
      %p153 = scmp.lt.s32.totalorder %s9, 16
      // Predicated region
      $region13: #{vae_forward.25} parent=5 // pred_check
        %p154 = pneg %p153
      $region14: #{vae_forward.25} parent=5 // pred_check_branch
        %156 = sbr.rel (%p154) target = $region16
      $region15: #{vae_forward.25} parent=5 // pred_region
        // Predicated region
        $region17: #{vae_forward.25} parent=15 // pred_check
          %p157 = pneg %p50
        $region18: #{vae_forward.25} parent=15 // pred_check_branch
          %159 = sbr.rel (%p157) target = $region20
        $region19: #{vae_forward.25} parent=15 // pred_region
          %s160 = smul.u32 4, %s18
          %p161 = scmp.lt.s32.totalorder %s16, 0
          %s162 = scalar_select %p161, %s16, 0
          %p163 = scmp.lt.s32.totalorder %s160, 31
          %s164 = scalar_select %p163, %s160, 31
          %s165 = smul.addr %s162, 32
          %s166 = sadd.s32 %s164, %s165
          %s167 = smul.addr %s166, 4
          %s168 = scalar_lea.vmem %s0, %s167
          %s169 = smul.u32 4, %s18
        $region20: #{vae_forward.25} parent=15 // pred_fallthru
          _
        // Predicated region
        $region21: #{vae_forward.25} parent=15 // pred_check
          %p170 = pneg %p78
        $region22: #{vae_forward.25} parent=15 // pred_check_branch
          %172 = sbr.rel (%p170) target = $region24
        $region23: #{vae_forward.25} parent=15 // pred_region
          %s173 = sand.u32 %s68, 1
          %s174 = sand.u32 %s68, 1
          %s175 = smul.addr %s174, 512
          %s176 = scalar_lea.vmem [#allocation3], %s175
          %s177 = smul.u32 64, %s18
          %s178 = smul.u32 2, %s17
          %s179 = smul.addr %s177, 4
          %s180 = sadd.s32 %s178, %s179
          %s181 = smul.addr %s180, 4
          %s182 = scalar_lea.vmem %s1, %s181
          // Predicated region
          $region25: #{vae_forward.25} parent=23 // pred_check
            _
          $region26: #{vae_forward.25} parent=23 // pred_check_branch
            %184 = sbr.rel (0) target = $region28
          $region27: #{vae_forward.25} parent=23 // pred_region
            // Predicated region
            $region29: #{vae_forward.25} parent=27 // pred_check
              _
            $region30: #{vae_forward.25} parent=27 // pred_check_branch
              %186 = sbr.rel (0) target = $region32
            $region31: #{vae_forward.25} parent=27 // pred_region
              // Predicated region
              $region44: #{vae_forward.25} parent=31 // pred_check
                _
              $region45: #{vae_forward.25} parent=31 // pred_check_branch
                %327 = sbr.rel (0) target = $region47
              $region46: #{vae_forward.25} parent=31 // pred_region
                loop: start=0, step=1, limit=1
                $region48: #{vae_forward.25} parent=46 // loop_pre_header
                  _
                $region49: #{vae_forward.25} parent=46 // loop_header
                  %s329 = sphi 0, %s333
                  %p330 = scmp.ge.s32.totalorder %s329, 1
                  %s334 = sphi %s182, %s182
                  %s335 = sphi %s176, %s176
                $region50: #{vae_forward.25} parent=46 // loop_header_branch
                  %332 = sbr.rel (%p330) target = $region54
                $region51: #{vae_forward.25} parent=46 // loop_body
                  %v336 = vld [vmem:[%s334] sm:$0xff]
                  %337 = vst [vmem:[%s335] sm:$0xff] %v336
                  %v338 = vld [vmem:[%s334 + $0x10] sm:$0xff]
                  %339 = vst [vmem:[%s335 + $0x8] sm:$0xff] %v338
                  %v340 = vld [vmem:[%s334 + $0x20] sm:$0xff]
                  %341 = vst [vmem:[%s335 + $0x10] sm:$0xff] %v340
                  %v342 = vld [vmem:[%s334 + $0x30] sm:$0xff]
                  %343 = vst [vmem:[%s335 + $0x18] sm:$0xff] %v342
                  %v344 = vld [vmem:[%s334 + $0x40] sm:$0xff]
                  %345 = vst [vmem:[%s335 + $0x20] sm:$0xff] %v344
                  %v346 = vld [vmem:[%s334 + $0x50] sm:$0xff]
                  %347 = vst [vmem:[%s335 + $0x28] sm:$0xff] %v346
                  %v348 = vld [vmem:[%s334 + $0x60] sm:$0xff]
                  %349 = vst [vmem:[%s335 + $0x30] sm:$0xff] %v348
                  %v350 = vld [vmem:[%s334 + $0x70] sm:$0xff]
                  %351 = vst [vmem:[%s335 + $0x38] sm:$0xff] %v350
                  %v352 = vld [vmem:[%s334 + $0x80] sm:$0xff]
                  %353 = vst [vmem:[%s335 + $0x40] sm:$0xff] %v352
                  %v354 = vld [vmem:[%s334 + $0x90] sm:$0xff]
                  %355 = vst [vmem:[%s335 + $0x48] sm:$0xff] %v354
                  %v356 = vld [vmem:[%s334 + $0xa0] sm:$0xff]
                  %357 = vst [vmem:[%s335 + $0x50] sm:$0xff] %v356
                  %v358 = vld [vmem:[%s334 + $0xb0] sm:$0xff]
                  %359 = vst [vmem:[%s335 + $0x58] sm:$0xff] %v358
                  %v360 = vld [vmem:[%s334 + $0xc0] sm:$0xff]
                  %361 = vst [vmem:[%s335 + $0x60] sm:$0xff] %v360
                  %v362 = vld [vmem:[%s334 + $0xd0] sm:$0xff]
                  %363 = vst [vmem:[%s335 + $0x68] sm:$0xff] %v362
                  %v364 = vld [vmem:[%s334 + $0xe0] sm:$0xff]
                  %365 = vst [vmem:[%s335 + $0x70] sm:$0xff] %v364
                  %v366 = vld [vmem:[%s334 + $0xf0] sm:$0xff]
                  %367 = vst [vmem:[%s335 + $0x78] sm:$0xff] %v366
                  %v368 = vld [vmem:[%s334 + $0x100] sm:$0xff]
                  %369 = vst [vmem:[%s335 + $0x80] sm:$0xff] %v368
                  %v370 = vld [vmem:[%s334 + $0x110] sm:$0xff]
                  %371 = vst [vmem:[%s335 + $0x88] sm:$0xff] %v370
                  %v372 = vld [vmem:[%s334 + $0x120] sm:$0xff]
                  %373 = vst [vmem:[%s335 + $0x90] sm:$0xff] %v372
                  %v374 = vld [vmem:[%s334 + $0x130] sm:$0xff]
                  %375 = vst [vmem:[%s335 + $0x98] sm:$0xff] %v374
                  %v376 = vld [vmem:[%s334 + $0x140] sm:$0xff]
                  %377 = vst [vmem:[%s335 + $0xa0] sm:$0xff] %v376
                  %v378 = vld [vmem:[%s334 + $0x150] sm:$0xff]
                  %379 = vst [vmem:[%s335 + $0xa8] sm:$0xff] %v378
                  %v380 = vld [vmem:[%s334 + $0x160] sm:$0xff]
                  %381 = vst [vmem:[%s335 + $0xb0] sm:$0xff] %v380
                  %v382 = vld [vmem:[%s334 + $0x170] sm:$0xff]
                  %383 = vst [vmem:[%s335 + $0xb8] sm:$0xff] %v382
                  %v384 = vld [vmem:[%s334 + $0x180] sm:$0xff]
                  %385 = vst [vmem:[%s335 + $0xc0] sm:$0xff] %v384
                  %v386 = vld [vmem:[%s334 + $0x190] sm:$0xff]
                  %387 = vst [vmem:[%s335 + $0xc8] sm:$0xff] %v386
                  %v388 = vld [vmem:[%s334 + $0x1a0] sm:$0xff]
                  %389 = vst [vmem:[%s335 + $0xd0] sm:$0xff] %v388
                  %v390 = vld [vmem:[%s334 + $0x1b0] sm:$0xff]
                  %391 = vst [vmem:[%s335 + $0xd8] sm:$0xff] %v390
                  %v392 = vld [vmem:[%s334 + $0x1c0] sm:$0xff]
                  %393 = vst [vmem:[%s335 + $0xe0] sm:$0xff] %v392
                  %v394 = vld [vmem:[%s334 + $0x1d0] sm:$0xff]
                  %395 = vst [vmem:[%s335 + $0xe8] sm:$0xff] %v394
                  %v396 = vld [vmem:[%s334 + $0x1e0] sm:$0xff]
                  %397 = vst [vmem:[%s335 + $0xf0] sm:$0xff] %v396
                  %v398 = vld [vmem:[%s334 + $0x1f0] sm:$0xff]
                  %399 = vst [vmem:[%s335 + $0xf8] sm:$0xff] %v398
                  %v400 = vld [vmem:[%s334 + $0x200] sm:$0xff]
                  %401 = vst [vmem:[%s335 + $0x100] sm:$0xff] %v400
                  %v402 = vld [vmem:[%s334 + $0x210] sm:$0xff]
                  %403 = vst [vmem:[%s335 + $0x108] sm:$0xff] %v402
                  %v404 = vld [vmem:[%s334 + $0x220] sm:$0xff]
                  %405 = vst [vmem:[%s335 + $0x110] sm:$0xff] %v404
                  %v406 = vld [vmem:[%s334 + $0x230] sm:$0xff]
                  %407 = vst [vmem:[%s335 + $0x118] sm:$0xff] %v406
                  %v408 = vld [vmem:[%s334 + $0x240] sm:$0xff]
                  %409 = vst [vmem:[%s335 + $0x120] sm:$0xff] %v408
                  %v410 = vld [vmem:[%s334 + $0x250] sm:$0xff]
                  %411 = vst [vmem:[%s335 + $0x128] sm:$0xff] %v410
                  %v412 = vld [vmem:[%s334 + $0x260] sm:$0xff]
                  %413 = vst [vmem:[%s335 + $0x130] sm:$0xff] %v412
                  %v414 = vld [vmem:[%s334 + $0x270] sm:$0xff]
                  %415 = vst [vmem:[%s335 + $0x138] sm:$0xff] %v414
                  %v416 = vld [vmem:[%s334 + $0x280] sm:$0xff]
                  %417 = vst [vmem:[%s335 + $0x140] sm:$0xff] %v416
                  %v418 = vld [vmem:[%s334 + $0x290] sm:$0xff]
                  %419 = vst [vmem:[%s335 + $0x148] sm:$0xff] %v418
                  %v420 = vld [vmem:[%s334 + $0x2a0] sm:$0xff]
                  %421 = vst [vmem:[%s335 + $0x150] sm:$0xff] %v420
                  %v422 = vld [vmem:[%s334 + $0x2b0] sm:$0xff]
                  %423 = vst [vmem:[%s335 + $0x158] sm:$0xff] %v422
                  %v424 = vld [vmem:[%s334 + $0x2c0] sm:$0xff]
                  %425 = vst [vmem:[%s335 + $0x160] sm:$0xff] %v424
                  %v426 = vld [vmem:[%s334 + $0x2d0] sm:$0xff]
                  %427 = vst [vmem:[%s335 + $0x168] sm:$0xff] %v426
                  %v428 = vld [vmem:[%s334 + $0x2e0] sm:$0xff]
                  %429 = vst [vmem:[%s335 + $0x170] sm:$0xff] %v428
                  %v430 = vld [vmem:[%s334 + $0x2f0] sm:$0xff]
                  %431 = vst [vmem:[%s335 + $0x178] sm:$0xff] %v430
                  %v432 = vld [vmem:[%s334 + $0x300] sm:$0xff]
                  %433 = vst [vmem:[%s335 + $0x180] sm:$0xff] %v432
                  %v434 = vld [vmem:[%s334 + $0x310] sm:$0xff]
                  %435 = vst [vmem:[%s335 + $0x188] sm:$0xff] %v434
                  %v436 = vld [vmem:[%s334 + $0x320] sm:$0xff]
                  %437 = vst [vmem:[%s335 + $0x190] sm:$0xff] %v436
                  %v438 = vld [vmem:[%s334 + $0x330] sm:$0xff]
                  %439 = vst [vmem:[%s335 + $0x198] sm:$0xff] %v438
                  %v440 = vld [vmem:[%s334 + $0x340] sm:$0xff]
                  %441 = vst [vmem:[%s335 + $0x1a0] sm:$0xff] %v440
                  %v442 = vld [vmem:[%s334 + $0x350] sm:$0xff]
                  %443 = vst [vmem:[%s335 + $0x1a8] sm:$0xff] %v442
                  %v444 = vld [vmem:[%s334 + $0x360] sm:$0xff]
                  %445 = vst [vmem:[%s335 + $0x1b0] sm:$0xff] %v444
                  %v446 = vld [vmem:[%s334 + $0x370] sm:$0xff]
                  %447 = vst [vmem:[%s335 + $0x1b8] sm:$0xff] %v446
                  %v448 = vld [vmem:[%s334 + $0x380] sm:$0xff]
                  %449 = vst [vmem:[%s335 + $0x1c0] sm:$0xff] %v448
                  %v450 = vld [vmem:[%s334 + $0x390] sm:$0xff]
                  %451 = vst [vmem:[%s335 + $0x1c8] sm:$0xff] %v450
                  %v452 = vld [vmem:[%s334 + $0x3a0] sm:$0xff]
                  %453 = vst [vmem:[%s335 + $0x1d0] sm:$0xff] %v452
                  %v454 = vld [vmem:[%s334 + $0x3b0] sm:$0xff]
                  %455 = vst [vmem:[%s335 + $0x1d8] sm:$0xff] %v454
                  %v456 = vld [vmem:[%s334 + $0x3c0] sm:$0xff]
                  %457 = vst [vmem:[%s335 + $0x1e0] sm:$0xff] %v456
                  %v458 = vld [vmem:[%s334 + $0x3d0] sm:$0xff]
                  %459 = vst [vmem:[%s335 + $0x1e8] sm:$0xff] %v458
                  %v460 = vld [vmem:[%s334 + $0x3e0] sm:$0xff]
                  %461 = vst [vmem:[%s335 + $0x1f0] sm:$0xff] %v460
                  %v462 = vld [vmem:[%s334 + $0x3f0] sm:$0xff]
                  %463 = vst [vmem:[%s335 + $0x1f8] sm:$0xff] %v462
                $region52: #{vae_forward.25} parent=46 // loop_footer
                  %s333 = sadd.s32 1, %s329
                $region53: #{vae_forward.25} parent=46 // loop_footer_branch
                  %328 = sbr.rel target = $region49
                $region54: #{vae_forward.25} parent=46 // loop_exit
                  _
              $region47: #{vae_forward.25} parent=31 // pred_fallthru
                _
              // Predicated region
              $region55: #{vae_forward.25} parent=31 // pred_check
                _
              $region56: #{vae_forward.25} parent=31 // pred_check_branch
                %465 = sbr.rel target = $region58
              $region57: #{vae_forward.25} parent=31 // pred_region
                _
              $region58: #{vae_forward.25} parent=31 // pred_fallthru
                _
            $region32: #{vae_forward.25} parent=27 // pred_fallthru
              _
            // Predicated region
            $region33: #{vae_forward.25} parent=27 // pred_check
              _
            $region34: #{vae_forward.25} parent=27 // pred_check_branch
              %188 = sbr.rel target = $region36
            $region35: #{vae_forward.25} parent=27 // pred_region
              loop: start=0, step=1, limit=1
              $region37: #{vae_forward.25} parent=35 // loop_pre_header
                _
              $region38: #{vae_forward.25} parent=35 // loop_header
                %s191 = sphi 0, %s195
                %p192 = scmp.ge.s32.totalorder %s191, 1
                %s196 = sphi %s182, %s182
                %s197 = sphi %s176, %s176
              $region39: #{vae_forward.25} parent=35 // loop_header_branch
                %194 = sbr.rel (%p192) target = $region43
              $region40: #{vae_forward.25} parent=35 // loop_body
                %v198 = vld [vmem:[%s196] sm:$0xff]
                %199 = vst [vmem:[%s197] sm:$0xff] %v198
                %v200 = vld [vmem:[%s196 + $0x10] sm:$0xff]
                %201 = vst [vmem:[%s197 + $0x8] sm:$0xff] %v200
                %v202 = vld [vmem:[%s196 + $0x20] sm:$0xff]
                %203 = vst [vmem:[%s197 + $0x10] sm:$0xff] %v202
                %v204 = vld [vmem:[%s196 + $0x30] sm:$0xff]
                %205 = vst [vmem:[%s197 + $0x18] sm:$0xff] %v204
                %v206 = vld [vmem:[%s196 + $0x40] sm:$0xff]
                %207 = vst [vmem:[%s197 + $0x20] sm:$0xff] %v206
                %v208 = vld [vmem:[%s196 + $0x50] sm:$0xff]
                %209 = vst [vmem:[%s197 + $0x28] sm:$0xff] %v208
                %v210 = vld [vmem:[%s196 + $0x60] sm:$0xff]
                %211 = vst [vmem:[%s197 + $0x30] sm:$0xff] %v210
                %v212 = vld [vmem:[%s196 + $0x70] sm:$0xff]
                %213 = vst [vmem:[%s197 + $0x38] sm:$0xff] %v212
                %v214 = vld [vmem:[%s196 + $0x80] sm:$0xff]
                %215 = vst [vmem:[%s197 + $0x40] sm:$0xff] %v214
                %v216 = vld [vmem:[%s196 + $0x90] sm:$0xff]
                %217 = vst [vmem:[%s197 + $0x48] sm:$0xff] %v216
                %v218 = vld [vmem:[%s196 + $0xa0] sm:$0xff]
                %219 = vst [vmem:[%s197 + $0x50] sm:$0xff] %v218
                %v220 = vld [vmem:[%s196 + $0xb0] sm:$0xff]
                %221 = vst [vmem:[%s197 + $0x58] sm:$0xff] %v220
                %v222 = vld [vmem:[%s196 + $0xc0] sm:$0xff]
                %223 = vst [vmem:[%s197 + $0x60] sm:$0xff] %v222
                %v224 = vld [vmem:[%s196 + $0xd0] sm:$0xff]
                %225 = vst [vmem:[%s197 + $0x68] sm:$0xff] %v224
                %v226 = vld [vmem:[%s196 + $0xe0] sm:$0xff]
                %227 = vst [vmem:[%s197 + $0x70] sm:$0xff] %v226
                %v228 = vld [vmem:[%s196 + $0xf0] sm:$0xff]
                %229 = vst [vmem:[%s197 + $0x78] sm:$0xff] %v228
                %v230 = vld [vmem:[%s196 + $0x100] sm:$0xff]
                %231 = vst [vmem:[%s197 + $0x80] sm:$0xff] %v230
                %v232 = vld [vmem:[%s196 + $0x110] sm:$0xff]
                %233 = vst [vmem:[%s197 + $0x88] sm:$0xff] %v232
                %v234 = vld [vmem:[%s196 + $0x120] sm:$0xff]
                %235 = vst [vmem:[%s197 + $0x90] sm:$0xff] %v234
                %v236 = vld [vmem:[%s196 + $0x130] sm:$0xff]
                %237 = vst [vmem:[%s197 + $0x98] sm:$0xff] %v236
                %v238 = vld [vmem:[%s196 + $0x140] sm:$0xff]
                %239 = vst [vmem:[%s197 + $0xa0] sm:$0xff] %v238
                %v240 = vld [vmem:[%s196 + $0x150] sm:$0xff]
                %241 = vst [vmem:[%s197 + $0xa8] sm:$0xff] %v240
                %v242 = vld [vmem:[%s196 + $0x160] sm:$0xff]
                %243 = vst [vmem:[%s197 + $0xb0] sm:$0xff] %v242
                %v244 = vld [vmem:[%s196 + $0x170] sm:$0xff]
                %245 = vst [vmem:[%s197 + $0xb8] sm:$0xff] %v244
                %v246 = vld [vmem:[%s196 + $0x180] sm:$0xff]
                %247 = vst [vmem:[%s197 + $0xc0] sm:$0xff] %v246
                %v248 = vld [vmem:[%s196 + $0x190] sm:$0xff]
                %249 = vst [vmem:[%s197 + $0xc8] sm:$0xff] %v248
                %v250 = vld [vmem:[%s196 + $0x1a0] sm:$0xff]
                %251 = vst [vmem:[%s197 + $0xd0] sm:$0xff] %v250
                %v252 = vld [vmem:[%s196 + $0x1b0] sm:$0xff]
                %253 = vst [vmem:[%s197 + $0xd8] sm:$0xff] %v252
                %v254 = vld [vmem:[%s196 + $0x1c0] sm:$0xff]
                %255 = vst [vmem:[%s197 + $0xe0] sm:$0xff] %v254
                %v256 = vld [vmem:[%s196 + $0x1d0] sm:$0xff]
                %257 = vst [vmem:[%s197 + $0xe8] sm:$0xff] %v256
                %v258 = vld [vmem:[%s196 + $0x1e0] sm:$0xff]
                %259 = vst [vmem:[%s197 + $0xf0] sm:$0xff] %v258
                %v260 = vld [vmem:[%s196 + $0x1f0] sm:$0xff]
                %261 = vst [vmem:[%s197 + $0xf8] sm:$0xff] %v260
                %v262 = vld [vmem:[%s196 + $0x200] sm:$0xff]
                %263 = vst [vmem:[%s197 + $0x100] sm:$0xff] %v262
                %v264 = vld [vmem:[%s196 + $0x210] sm:$0xff]
                %265 = vst [vmem:[%s197 + $0x108] sm:$0xff] %v264
                %v266 = vld [vmem:[%s196 + $0x220] sm:$0xff]
                %267 = vst [vmem:[%s197 + $0x110] sm:$0xff] %v266
                %v268 = vld [vmem:[%s196 + $0x230] sm:$0xff]
                %269 = vst [vmem:[%s197 + $0x118] sm:$0xff] %v268
                %v270 = vld [vmem:[%s196 + $0x240] sm:$0xff]
                %271 = vst [vmem:[%s197 + $0x120] sm:$0xff] %v270
                %v272 = vld [vmem:[%s196 + $0x250] sm:$0xff]
                %273 = vst [vmem:[%s197 + $0x128] sm:$0xff] %v272
                %v274 = vld [vmem:[%s196 + $0x260] sm:$0xff]
                %275 = vst [vmem:[%s197 + $0x130] sm:$0xff] %v274
                %v276 = vld [vmem:[%s196 + $0x270] sm:$0xff]
                %277 = vst [vmem:[%s197 + $0x138] sm:$0xff] %v276
                %v278 = vld [vmem:[%s196 + $0x280] sm:$0xff]
                %279 = vst [vmem:[%s197 + $0x140] sm:$0xff] %v278
                %v280 = vld [vmem:[%s196 + $0x290] sm:$0xff]
                %281 = vst [vmem:[%s197 + $0x148] sm:$0xff] %v280
                %v282 = vld [vmem:[%s196 + $0x2a0] sm:$0xff]
                %283 = vst [vmem:[%s197 + $0x150] sm:$0xff] %v282
                %v284 = vld [vmem:[%s196 + $0x2b0] sm:$0xff]
                %285 = vst [vmem:[%s197 + $0x158] sm:$0xff] %v284
                %v286 = vld [vmem:[%s196 + $0x2c0] sm:$0xff]
                %287 = vst [vmem:[%s197 + $0x160] sm:$0xff] %v286
                %v288 = vld [vmem:[%s196 + $0x2d0] sm:$0xff]
                %289 = vst [vmem:[%s197 + $0x168] sm:$0xff] %v288
                %v290 = vld [vmem:[%s196 + $0x2e0] sm:$0xff]
                %291 = vst [vmem:[%s197 + $0x170] sm:$0xff] %v290
                %v292 = vld [vmem:[%s196 + $0x2f0] sm:$0xff]
                %293 = vst [vmem:[%s197 + $0x178] sm:$0xff] %v292
                %v294 = vld [vmem:[%s196 + $0x300] sm:$0xff]
                %295 = vst [vmem:[%s197 + $0x180] sm:$0xff] %v294
                %v296 = vld [vmem:[%s196 + $0x310] sm:$0xff]
                %297 = vst [vmem:[%s197 + $0x188] sm:$0xff] %v296
                %v298 = vld [vmem:[%s196 + $0x320] sm:$0xff]
                %299 = vst [vmem:[%s197 + $0x190] sm:$0xff] %v298
                %v300 = vld [vmem:[%s196 + $0x330] sm:$0xff]
                %301 = vst [vmem:[%s197 + $0x198] sm:$0xff] %v300
                %v302 = vld [vmem:[%s196 + $0x340] sm:$0xff]
                %303 = vst [vmem:[%s197 + $0x1a0] sm:$0xff] %v302
                %v304 = vld [vmem:[%s196 + $0x350] sm:$0xff]
                %305 = vst [vmem:[%s197 + $0x1a8] sm:$0xff] %v304
                %v306 = vld [vmem:[%s196 + $0x360] sm:$0xff]
                %307 = vst [vmem:[%s197 + $0x1b0] sm:$0xff] %v306
                %v308 = vld [vmem:[%s196 + $0x370] sm:$0xff]
                %309 = vst [vmem:[%s197 + $0x1b8] sm:$0xff] %v308
                %v310 = vld [vmem:[%s196 + $0x380] sm:$0xff]
                %311 = vst [vmem:[%s197 + $0x1c0] sm:$0xff] %v310
                %v312 = vld [vmem:[%s196 + $0x390] sm:$0xff]
                %313 = vst [vmem:[%s197 + $0x1c8] sm:$0xff] %v312
                %v314 = vld [vmem:[%s196 + $0x3a0] sm:$0xff]
                %315 = vst [vmem:[%s197 + $0x1d0] sm:$0xff] %v314
                %v316 = vld [vmem:[%s196 + $0x3b0] sm:$0xff]
                %317 = vst [vmem:[%s197 + $0x1d8] sm:$0xff] %v316
                %v318 = vld [vmem:[%s196 + $0x3c0] sm:$0xff]
                %319 = vst [vmem:[%s197 + $0x1e0] sm:$0xff] %v318
                %v320 = vld [vmem:[%s196 + $0x3d0] sm:$0xff]
                %321 = vst [vmem:[%s197 + $0x1e8] sm:$0xff] %v320
                %v322 = vld [vmem:[%s196 + $0x3e0] sm:$0xff]
                %323 = vst [vmem:[%s197 + $0x1f0] sm:$0xff] %v322
                %v324 = vld [vmem:[%s196 + $0x3f0] sm:$0xff]
                %325 = vst [vmem:[%s197 + $0x1f8] sm:$0xff] %v324
              $region41: #{vae_forward.25} parent=35 // loop_footer
                %s195 = sadd.s32 1, %s191
              $region42: #{vae_forward.25} parent=35 // loop_footer_branch
                %190 = sbr.rel target = $region38
              $region43: #{vae_forward.25} parent=35 // loop_exit
                _
            $region36: #{vae_forward.25} parent=27 // pred_fallthru
              _
          $region28: #{vae_forward.25} parent=23 // pred_fallthru
            _
          %466 = vnop
        $region24: #{vae_forward.25} parent=15 // pred_fallthru
          _
        // Predicated region
        $region59: #{vae_forward.25} parent=15 // pred_check
          %p467 = pneg %p104
        $region60: #{vae_forward.25} parent=15 // pred_check_branch
          %469 = sbr.rel (%p467) target = $region62
        $region61: #{vae_forward.25} parent=15 // pred_region
          %s470 = smul.u32 2, %s17
          %p471 = scmp.lt.s32.totalorder %s470, 3
          %s472 = scalar_select %p471, %s470, 3
          %s473 = scalar_lea.vmem %s2, %s472
          %s474 = smul.u32 2, %s17
        $region62: #{vae_forward.25} parent=15 // pred_fallthru
          _
      $region16: #{vae_forward.25} parent=5 // pred_fallthru
        _
      %p475 = scmp.le.s32.totalorder 1, %s9
      %p476 = scmp.lt.s32.totalorder %s9, 17
      %p477 = pnand %p475, %p476
      %p478 = pneg %p477
      // Predicated region
      $region63: #{vae_forward.25} parent=5 // pred_check
        _
      $region64: #{vae_forward.25} parent=5 // pred_check_branch
        %480 = sbr.rel (%p477) target = $region66
      $region65: #{vae_forward.25} parent=5 // pred_region
        %s481 = ssub.s32 %s9, 1
        %s482 = sand.u32 %s71, 1
        %s483 = sand.u32 %s71, 1
        %s484 = smul.addr %s483, 512
        %s485 = scalar_lea.vmem [#allocation3], %s484
        // Predicated region
        $region67: #{vae_forward.25} parent=65 // pred_check
          %p486 = pneg %p84
        $region68: #{vae_forward.25} parent=65 // pred_check_branch
          %488 = sbr.rel (%p486) target = $region70
        $region69: #{vae_forward.25} parent=65 // pred_region
          _
        $region70: #{vae_forward.25} parent=65 // pred_fallthru
          _
        %s489 = smul.u32 4, %s21
        %p490 = scmp.lt.s32.totalorder %s19, 0
        %s491 = scalar_select %p490, %s19, 0
        %p492 = scmp.lt.s32.totalorder %s489, 31
        %s493 = scalar_select %p492, %s489, 31
        %s494 = smul.addr %s491, 32
        %s495 = sadd.s32 %s493, %s494
        %s496 = smul.addr %s495, 4
        %s497 = scalar_lea.vmem %s0, %s496
        %p498 = pneg %p56
        %p499 = pneg %p53
        %s500 = sand.u32 %s71, 1
        %s501 = sand.u32 %s71, 1
        %s502 = smul.addr %s501, 512
        %s503 = scalar_lea.vmem [#allocation3], %s502
        %p504 = pneg %p84
        %p505 = pneg %p81
        %s506 = smul.u32 2, %s20
        %p507 = scmp.lt.s32.totalorder %s506, 3
        %s508 = scalar_select %p507, %s506, 3
        %s509 = scalar_lea.vmem %s2, %s508
        %p510 = pneg %p110
        %p511 = pneg %p107
        %p512 = pneg %p138
        %p513 = pneg %p135
        %s514 = smul.u32 2, %s20
        %p515 = scmp.lt.s32.totalorder %s19, 0
        %s516 = scalar_select %p515, %s19, 0
        %p517 = scmp.lt.s32.totalorder %s514, 3
        %s518 = scalar_select %p517, %s514, 3
        %s519 = smul.addr %s516, 4
        %s520 = sadd.s32 %s518, %s519
        %s521 = smul.addr %s520, 4
        %s522 = scalar_lea.vmem %s3, %s521
        %s523 = smul.u32 4, %s21
        %p524 = scmp.lt.s32.totalorder %s19, 0
        %s525 = scalar_select %p524, %s19, 0
        %p526 = scmp.lt.s32.totalorder %s523, 31
        %s527 = scalar_select %p526, %s523, 31
        %s528 = smul.addr %s525, 32
        %s529 = sadd.s32 %s527, %s528
        %s530 = smul.addr %s529, 4
        %s531 = scalar_lea.vmem %s0, %s530
        %s532 = smul.u32 4, %s21
        %s533 = smul.u32 64, %s21
        %s534 = smul.u32 2, %s20
        %s535 = smul.u32 2, %s20
        %p536 = scmp.lt.s32.totalorder %s535, 3
        %s537 = scalar_select %p536, %s535, 3
        %s538 = scalar_lea.vmem %s2, %s537
        %s539 = smul.u32 2, %s20
        %s540 = smul.u32 2, %s20
        %p541 = scmp.lt.s32.totalorder %s19, 0
        %s542 = scalar_select %p541, %s19, 0
        %p543 = scmp.lt.s32.totalorder %s540, 3
        %s544 = scalar_select %p543, %s540, 3
        %s545 = smul.addr %s542, 4
        %s546 = sadd.s32 %s544, %s545
        %s547 = smul.addr %s546, 4
        %s548 = scalar_lea.vmem %s3, %s547
        %s549 = smul.u32 2, %s20
        %p550 = scmp.eq.s32.totalorder %s21, 0
        // Predicated region
        $region71: #{vae_forward.25} parent=65 // pred_check
          %p551 = pneg %p550
        $region72: #{vae_forward.25} parent=65 // pred_check_branch
          %553 = sbr.rel (%p551) target = $region74
        $region73: #{vae_forward.25} parent=65 // pred_region
          %554 = vst [vmem:[#allocation2] sm:$0xff] 0.0
          %555 = vst [vmem:[#allocation2 + $0x8] sm:$0xff] 0.0
        $region74: #{vae_forward.25} parent=65 // pred_fallthru
          _
        %v556 = vld [vmem:[#allocation2] sm:$0xff]
        %v557 = vld [vmem:[#allocation2 + $0x8] sm:$0xff]
        %v558 = vld [vmem:[%s531] sm:$0xff]
        %v559 = vld [vmem:[%s531 + $0x8] sm:$0xff]
        %v560 = vld [vmem:[%s485] sm:$0xff]
        %v561 = vld [vmem:[%s485 + $0x8] sm:$0xff]
        %v562 = vld [vmem:[%s485 + $0x10] sm:$0xff]
        %v563 = vld [vmem:[%s485 + $0x18] sm:$0xff]
        %v564 = vld [vmem:[%s485 + $0x20] sm:$0xff]
        %v565 = vld [vmem:[%s485 + $0x28] sm:$0xff]
        %v566 = vld [vmem:[%s485 + $0x30] sm:$0xff]
        %v567 = vld [vmem:[%s485 + $0x38] sm:$0xff]
        %v568 = vld [vmem:[%s485 + $0x40] sm:$0xff]
        %v569 = vld [vmem:[%s485 + $0x48] sm:$0xff]
        %v570 = vld [vmem:[%s485 + $0x50] sm:$0xff]
        %v571 = vld [vmem:[%s485 + $0x58] sm:$0xff]
        %v572 = vld [vmem:[%s485 + $0x60] sm:$0xff]
        %v573 = vld [vmem:[%s485 + $0x68] sm:$0xff]
        %v574 = vld [vmem:[%s485 + $0x70] sm:$0xff]
        %v575 = vld [vmem:[%s485 + $0x78] sm:$0xff]
        %v576 = vld [vmem:[%s485 + $0x80] sm:$0xff]
        %v577 = vld [vmem:[%s485 + $0x88] sm:$0xff]
        %v578 = vld [vmem:[%s485 + $0x90] sm:$0xff]
        %v579 = vld [vmem:[%s485 + $0x98] sm:$0xff]
        %v580 = vld [vmem:[%s485 + $0xa0] sm:$0xff]
        %v581 = vld [vmem:[%s485 + $0xa8] sm:$0xff]
        %v582 = vld [vmem:[%s485 + $0xb0] sm:$0xff]
        %v583 = vld [vmem:[%s485 + $0xb8] sm:$0xff]
        %v584 = vld [vmem:[%s485 + $0xc0] sm:$0xff]
        %v585 = vld [vmem:[%s485 + $0xc8] sm:$0xff]
        %v586 = vld [vmem:[%s485 + $0xd0] sm:$0xff]
        %v587 = vld [vmem:[%s485 + $0xd8] sm:$0xff]
        %v588 = vld [vmem:[%s485 + $0xe0] sm:$0xff]
        %v589 = vld [vmem:[%s485 + $0xe8] sm:$0xff]
        %v590 = vld [vmem:[%s485 + $0xf0] sm:$0xff]
        %v591 = vld [vmem:[%s485 + $0xf8] sm:$0xff]
        %v592 = vld [vmem:[%s485 + $0x100] sm:$0xff]
        %v593 = vld [vmem:[%s485 + $0x108] sm:$0xff]
        %v594 = vld [vmem:[%s485 + $0x110] sm:$0xff]
        %v595 = vld [vmem:[%s485 + $0x118] sm:$0xff]
        %v596 = vld [vmem:[%s485 + $0x120] sm:$0xff]
        %v597 = vld [vmem:[%s485 + $0x128] sm:$0xff]
        %v598 = vld [vmem:[%s485 + $0x130] sm:$0xff]
        %v599 = vld [vmem:[%s485 + $0x138] sm:$0xff]
        %v600 = vld [vmem:[%s485 + $0x140] sm:$0xff]
        %v601 = vld [vmem:[%s485 + $0x148] sm:$0xff]
        %v602 = vld [vmem:[%s485 + $0x150] sm:$0xff]
        %v603 = vld [vmem:[%s485 + $0x158] sm:$0xff]
        %v604 = vld [vmem:[%s485 + $0x160] sm:$0xff]
        %v605 = vld [vmem:[%s485 + $0x168] sm:$0xff]
        %v606 = vld [vmem:[%s485 + $0x170] sm:$0xff]
        %v607 = vld [vmem:[%s485 + $0x178] sm:$0xff]
        %v608 = vld [vmem:[%s485 + $0x180] sm:$0xff]
        %v609 = vld [vmem:[%s485 + $0x188] sm:$0xff]
        %v610 = vld [vmem:[%s485 + $0x190] sm:$0xff]
        %v611 = vld [vmem:[%s485 + $0x198] sm:$0xff]
        %v612 = vld [vmem:[%s485 + $0x1a0] sm:$0xff]
        %v613 = vld [vmem:[%s485 + $0x1a8] sm:$0xff]
        %v614 = vld [vmem:[%s485 + $0x1b0] sm:$0xff]
        %v615 = vld [vmem:[%s485 + $0x1b8] sm:$0xff]
        %v616 = vld [vmem:[%s485 + $0x1c0] sm:$0xff]
        %v617 = vld [vmem:[%s485 + $0x1c8] sm:$0xff]
        %v618 = vld [vmem:[%s485 + $0x1d0] sm:$0xff]
        %v619 = vld [vmem:[%s485 + $0x1d8] sm:$0xff]
        %v620 = vld [vmem:[%s485 + $0x1e0] sm:$0xff]
        %v621 = vld [vmem:[%s485 + $0x1e8] sm:$0xff]
        %v622 = vld [vmem:[%s485 + $0x1f0] sm:$0xff]
        %v623 = vld [vmem:[%s485 + $0x1f8] sm:$0xff]
        %v626 = vunpack.c.l.b16 %v558
        %v627 = vunpack.c.h.b16 %v558
        %v628 = vunpack.c.l.b16 %v559
        %v629 = vunpack.c.h.b16 %v559
        %v630 = vpack.c.b16 %v626, %v626
        %v631 = vpack.c.b16 %v627, %v627
        %v632 = vpack.c.b16 %v628, %v628
        %v633 = vpack.c.b16 %v629, %v629
        %v702 = vunpack.c.l.b16 %v560
        %v703 = vunpack.c.h.b16 %v560
        %v704 = vunpack.c.l.b16 %v561
        %v705 = vunpack.c.h.b16 %v561
        %v706 = vunpack.c.l.b16 %v562
        %v707 = vunpack.c.h.b16 %v562
        %v708 = vunpack.c.l.b16 %v563
        %v709 = vunpack.c.h.b16 %v563
        %v710 = vunpack.c.l.b16 %v564
        %v711 = vunpack.c.h.b16 %v564
        %v712 = vunpack.c.l.b16 %v565
        %v713 = vunpack.c.h.b16 %v565
        %v714 = vunpack.c.l.b16 %v566
        %v715 = vunpack.c.h.b16 %v566
        %v716 = vunpack.c.l.b16 %v567
        %v717 = vunpack.c.h.b16 %v567
        %v718 = vunpack.c.l.b16 %v568
        %v719 = vunpack.c.h.b16 %v568
        %v720 = vunpack.c.l.b16 %v569
        %v721 = vunpack.c.h.b16 %v569
        %v722 = vunpack.c.l.b16 %v570
        %v723 = vunpack.c.h.b16 %v570
        %v724 = vunpack.c.l.b16 %v571
        %v725 = vunpack.c.h.b16 %v571
        %v726 = vunpack.c.l.b16 %v572
        %v727 = vunpack.c.h.b16 %v572
        %v728 = vunpack.c.l.b16 %v573
        %v729 = vunpack.c.h.b16 %v573
        %v730 = vunpack.c.l.b16 %v574
        %v731 = vunpack.c.h.b16 %v574
        %v732 = vunpack.c.l.b16 %v575
        %v733 = vunpack.c.h.b16 %v575
        %v734 = vunpack.c.l.b16 %v576
        %v735 = vunpack.c.h.b16 %v576
        %v736 = vunpack.c.l.b16 %v577
        %v737 = vunpack.c.h.b16 %v577
        %v738 = vunpack.c.l.b16 %v578
        %v739 = vunpack.c.h.b16 %v578
        %v740 = vunpack.c.l.b16 %v579
        %v741 = vunpack.c.h.b16 %v579
        %v742 = vunpack.c.l.b16 %v580
        %v743 = vunpack.c.h.b16 %v580
        %v744 = vunpack.c.l.b16 %v581
        %v745 = vunpack.c.h.b16 %v581
        %v746 = vunpack.c.l.b16 %v582
        %v747 = vunpack.c.h.b16 %v582
        %v748 = vunpack.c.l.b16 %v583
        %v749 = vunpack.c.h.b16 %v583
        %v750 = vunpack.c.l.b16 %v584
        %v751 = vunpack.c.h.b16 %v584
        %v752 = vunpack.c.l.b16 %v585
        %v753 = vunpack.c.h.b16 %v585
        %v754 = vunpack.c.l.b16 %v586
        %v755 = vunpack.c.h.b16 %v586
        %v756 = vunpack.c.l.b16 %v587
        %v757 = vunpack.c.h.b16 %v587
        %v758 = vunpack.c.l.b16 %v588
        %v759 = vunpack.c.h.b16 %v588
        %v760 = vunpack.c.l.b16 %v589
        %v761 = vunpack.c.h.b16 %v589
        %v762 = vunpack.c.l.b16 %v590
        %v763 = vunpack.c.h.b16 %v590
        %v764 = vunpack.c.l.b16 %v591
        %v765 = vunpack.c.h.b16 %v591
        %v766 = vunpack.c.l.b16 %v592
        %v767 = vunpack.c.h.b16 %v592
        %v768 = vunpack.c.l.b16 %v593
        %v769 = vunpack.c.h.b16 %v593
        %v770 = vunpack.c.l.b16 %v594
        %v771 = vunpack.c.h.b16 %v594
        %v772 = vunpack.c.l.b16 %v595
        %v773 = vunpack.c.h.b16 %v595
        %v774 = vunpack.c.l.b16 %v596
        %v775 = vunpack.c.h.b16 %v596
        %v776 = vunpack.c.l.b16 %v597
        %v777 = vunpack.c.h.b16 %v597
        %v778 = vunpack.c.l.b16 %v598
        %v779 = vunpack.c.h.b16 %v598
        %v780 = vunpack.c.l.b16 %v599
        %v781 = vunpack.c.h.b16 %v599
        %v782 = vunpack.c.l.b16 %v600
        %v783 = vunpack.c.h.b16 %v600
        %v784 = vunpack.c.l.b16 %v601
        %v785 = vunpack.c.h.b16 %v601
        %v786 = vunpack.c.l.b16 %v602
        %v787 = vunpack.c.h.b16 %v602
        %v788 = vunpack.c.l.b16 %v603
        %v789 = vunpack.c.h.b16 %v603
        %v790 = vunpack.c.l.b16 %v604
        %v791 = vunpack.c.h.b16 %v604
        %v792 = vunpack.c.l.b16 %v605
        %v793 = vunpack.c.h.b16 %v605
        %v794 = vunpack.c.l.b16 %v606
        %v795 = vunpack.c.h.b16 %v606
        %v796 = vunpack.c.l.b16 %v607
        %v797 = vunpack.c.h.b16 %v607
        %v798 = vunpack.c.l.b16 %v608
        %v799 = vunpack.c.h.b16 %v608
        %v800 = vunpack.c.l.b16 %v609
        %v801 = vunpack.c.h.b16 %v609
        %v802 = vunpack.c.l.b16 %v610
        %v803 = vunpack.c.h.b16 %v610
        %v804 = vunpack.c.l.b16 %v611
        %v805 = vunpack.c.h.b16 %v611
        %v806 = vunpack.c.l.b16 %v612
        %v807 = vunpack.c.h.b16 %v612
        %v808 = vunpack.c.l.b16 %v613
        %v809 = vunpack.c.h.b16 %v613
        %v810 = vunpack.c.l.b16 %v614
        %v811 = vunpack.c.h.b16 %v614
        %v812 = vunpack.c.l.b16 %v615
        %v813 = vunpack.c.h.b16 %v615
        %v814 = vunpack.c.l.b16 %v616
        %v815 = vunpack.c.h.b16 %v616
        %v816 = vunpack.c.l.b16 %v617
        %v817 = vunpack.c.h.b16 %v617
        %v818 = vunpack.c.l.b16 %v618
        %v819 = vunpack.c.h.b16 %v618
        %v820 = vunpack.c.l.b16 %v619
        %v821 = vunpack.c.h.b16 %v619
        %v822 = vunpack.c.l.b16 %v620
        %v823 = vunpack.c.h.b16 %v620
        %v824 = vunpack.c.l.b16 %v621
        %v825 = vunpack.c.h.b16 %v621
        %v826 = vunpack.c.l.b16 %v622
        %v827 = vunpack.c.h.b16 %v622
        %v828 = vunpack.c.l.b16 %v623
        %v829 = vunpack.c.h.b16 %v623
        %v830 = vpack.c.b16 %v704, %v702
        %v831 = vpack.c.b16 %v705, %v703
        %v832 = vpack.c.b16 %v708, %v706
        %v833 = vpack.c.b16 %v709, %v707
        %v834 = vpack.c.b16 %v712, %v710
        %v835 = vpack.c.b16 %v713, %v711
        %v836 = vpack.c.b16 %v716, %v714
        %v837 = vpack.c.b16 %v717, %v715
        %v838 = vpack.c.b16 %v720, %v718
        %v839 = vpack.c.b16 %v721, %v719
        %v840 = vpack.c.b16 %v724, %v722
        %v841 = vpack.c.b16 %v725, %v723
        %v842 = vpack.c.b16 %v728, %v726
        %v843 = vpack.c.b16 %v729, %v727
        %v844 = vpack.c.b16 %v732, %v730
        %v845 = vpack.c.b16 %v733, %v731
        %v846 = vpack.c.b16 %v736, %v734
        %v847 = vpack.c.b16 %v737, %v735
        %v848 = vpack.c.b16 %v740, %v738
        %v849 = vpack.c.b16 %v741, %v739
        %v850 = vpack.c.b16 %v744, %v742
        %v851 = vpack.c.b16 %v745, %v743
        %v852 = vpack.c.b16 %v748, %v746
        %v853 = vpack.c.b16 %v749, %v747
        %v854 = vpack.c.b16 %v752, %v750
        %v855 = vpack.c.b16 %v753, %v751
        %v856 = vpack.c.b16 %v756, %v754
        %v857 = vpack.c.b16 %v757, %v755
        %v858 = vpack.c.b16 %v760, %v758
        %v859 = vpack.c.b16 %v761, %v759
        %v860 = vpack.c.b16 %v764, %v762
        %v861 = vpack.c.b16 %v765, %v763
        %v862 = vpack.c.b16 %v768, %v766
        %v863 = vpack.c.b16 %v769, %v767
        %v864 = vpack.c.b16 %v772, %v770
        %v865 = vpack.c.b16 %v773, %v771
        %v866 = vpack.c.b16 %v776, %v774
        %v867 = vpack.c.b16 %v777, %v775
        %v868 = vpack.c.b16 %v780, %v778
        %v869 = vpack.c.b16 %v781, %v779
        %v870 = vpack.c.b16 %v784, %v782
        %v871 = vpack.c.b16 %v785, %v783
        %v872 = vpack.c.b16 %v788, %v786
        %v873 = vpack.c.b16 %v789, %v787
        %v874 = vpack.c.b16 %v792, %v790
        %v875 = vpack.c.b16 %v793, %v791
        %v876 = vpack.c.b16 %v796, %v794
        %v877 = vpack.c.b16 %v797, %v795
        %v878 = vpack.c.b16 %v800, %v798
        %v879 = vpack.c.b16 %v801, %v799
        %v880 = vpack.c.b16 %v804, %v802
        %v881 = vpack.c.b16 %v805, %v803
        %v882 = vpack.c.b16 %v808, %v806
        %v883 = vpack.c.b16 %v809, %v807
        %v884 = vpack.c.b16 %v812, %v810
        %v885 = vpack.c.b16 %v813, %v811
        %v886 = vpack.c.b16 %v816, %v814
        %v887 = vpack.c.b16 %v817, %v815
        %v888 = vpack.c.b16 %v820, %v818
        %v889 = vpack.c.b16 %v821, %v819
        %v890 = vpack.c.b16 %v824, %v822
        %v891 = vpack.c.b16 %v825, %v823
        %v892 = vpack.c.b16 %v828, %v826
        %v893 = vpack.c.b16 %v829, %v827
        %958 = vmatprep.subr.bf16.mxu0 %v831
        %959 = vmatpush1.bf16.msra.mxu0 %v830
        %960 = vmatprep.subr.bf16.mxu0 %v833
        %961 = vmatpush1.bf16.msra.mxu0 %v832
        %962 = vmatprep.subr.bf16.mxu0 %v835
        %963 = vmatpush1.bf16.msra.mxu0 %v834
        %964 = vmatprep.subr.bf16.mxu0 %v837
        %965 = vmatpush1.bf16.msra.mxu0 %v836
        %966 = vmatprep.subr.bf16.mxu0 %v839
        %967 = vmatpush1.bf16.msra.mxu0 %v838
        %968 = vmatprep.subr.bf16.mxu0 %v841
        %969 = vmatpush1.bf16.msra.mxu0 %v840
        %970 = vmatprep.subr.bf16.mxu0 %v843
        %971 = vmatpush1.bf16.msra.mxu0 %v842
        %972 = vmatprep.subr.bf16.mxu0 %v845
        %973 = vmatpush1.bf16.msra.mxu0 %v844
        %974 = vmatprep.subr.bf16.mxu0 %v847
        %975 = vmatpush1.bf16.msra.mxu0 %v846
        %976 = vmatprep.subr.bf16.mxu0 %v849
        %977 = vmatpush1.bf16.msra.mxu0 %v848
        %978 = vmatprep.subr.bf16.mxu0 %v851
        %979 = vmatpush1.bf16.msra.mxu0 %v850
        %980 = vmatprep.subr.bf16.mxu0 %v853
        %981 = vmatpush1.bf16.msra.mxu0 %v852
        %982 = vmatprep.subr.bf16.mxu0 %v855
        %983 = vmatpush1.bf16.msra.mxu0 %v854
        %984 = vmatprep.subr.bf16.mxu0 %v857
        %985 = vmatpush1.bf16.msra.mxu0 %v856
        %986 = vmatprep.subr.bf16.mxu0 %v859
        %987 = vmatpush1.bf16.msra.mxu0 %v858
        %988 = vmatprep.subr.bf16.mxu0 %v861
        %989 = vmatpush1.bf16.msra.mxu0 %v860
        %990 = vmatprep.mubr.bf16.mxu0 %v631
        %991 = vmatmul.mubr.bf16.gmra.mrb[0].mxu0 %v630
        %v992 = vpop.f32.mrb[0].mxu0
        %v993 = vadd.f32 0.0, %v992
        %v994 = vpop.f32.mrb[0].mxu0
        %v995 = vadd.f32 0.0, %v994
        %v996 = vpop.f32.mrb[0].mxu0
        %v997 = vpop.f32.mrb[0].mxu0
        %998 = vdwg.mxu0
        %999 = vmatprep.subr.bf16.mxu0 %v863
        %1000 = vmatpush1.bf16.msra.mxu0 %v862
        %1001 = vmatprep.subr.bf16.mxu0 %v865
        %1002 = vmatpush1.bf16.msra.mxu0 %v864
        %1003 = vmatprep.subr.bf16.mxu0 %v867
        %1004 = vmatpush1.bf16.msra.mxu0 %v866
        %1005 = vmatprep.subr.bf16.mxu0 %v869
        %1006 = vmatpush1.bf16.msra.mxu0 %v868
        %1007 = vmatprep.subr.bf16.mxu0 %v871
        %1008 = vmatpush1.bf16.msra.mxu0 %v870
        %1009 = vmatprep.subr.bf16.mxu0 %v873
        %1010 = vmatpush1.bf16.msra.mxu0 %v872
        %1011 = vmatprep.subr.bf16.mxu0 %v875
        %1012 = vmatpush1.bf16.msra.mxu0 %v874
        %1013 = vmatprep.subr.bf16.mxu0 %v877
        %1014 = vmatpush1.bf16.msra.mxu0 %v876
        %1015 = vmatprep.subr.bf16.mxu0 %v879
        %1016 = vmatpush1.bf16.msra.mxu0 %v878
        %1017 = vmatprep.subr.bf16.mxu0 %v881
        %1018 = vmatpush1.bf16.msra.mxu0 %v880
        %1019 = vmatprep.subr.bf16.mxu0 %v883
        %1020 = vmatpush1.bf16.msra.mxu0 %v882
        %1021 = vmatprep.subr.bf16.mxu0 %v885
        %1022 = vmatpush1.bf16.msra.mxu0 %v884
        %1023 = vmatprep.subr.bf16.mxu0 %v887
        %1024 = vmatpush1.bf16.msra.mxu0 %v886
        %1025 = vmatprep.subr.bf16.mxu0 %v889
        %1026 = vmatpush1.bf16.msra.mxu0 %v888
        %1027 = vmatprep.subr.bf16.mxu0 %v891
        %1028 = vmatpush1.bf16.msra.mxu0 %v890
        %1029 = vmatprep.subr.bf16.mxu0 %v893
        %1030 = vmatpush1.bf16.msra.mxu0 %v892
        %1031 = vmatprep.mubr.bf16.mxu0 %v633
        %1032 = vmatmul.mubr.bf16.gmra.mrb[0].mxu0 %v632
        %v1033 = vpop.f32.mrb[0].mxu0
        %v1034 = vadd.f32 %v993, %v1033
        %v1035 = vpop.f32.mrb[0].mxu0
        %v1036 = vadd.f32 %v995, %v1035
        %v1037 = vpop.f32.mrb[0].mxu0
        %v1038 = vpop.f32.mrb[0].mxu0
        %1039 = vdwg.mxu0
        %v1040 = vadd.f32 %v556, %v1034
        %v1041 = vadd.f32 %v557, %v1036
        %1042 = vst [vmem:[#allocation2] sm:$0xff] %v1040
        %1043 = vst [vmem:[#allocation2 + $0x8] sm:$0xff] %v1041
        %p1044 = scmp.eq.s32.totalorder %s21, 7
        // Predicated region
        $region75: #{vae_forward.25} parent=65 // pred_check
          %p1045 = pneg %p1044
        $region76: #{vae_forward.25} parent=65 // pred_check_branch
          %1047 = sbr.rel (%p1045) target = $region78
        $region77: #{vae_forward.25} parent=65 // pred_region
          %v1048 = vld [vmem:[#allocation2] sm:$0xff]
          %v1049 = vld [vmem:[#allocation2 + $0x8] sm:$0xff]
          %v1050 = vld [vmem:[%s538] sm:$0x3]
          %v1052 = vlaneseq
          %v1053 = vshrl.u32 %v1052, 7
          %v1054 = vsub.s32 0, %v1053
          %v1055 = vrot.slane %v1050, %v1054
          %v1056 = vlaneseq
          %v1057 = vshrl.u32 %v1056, 7
          %v1058 = vsub.s32 1, %v1057
          %v1059 = vrot.slane %v1050, %v1058
          %v1062 = vadd.f32 %v1048, %v1055
          %v1063 = vadd.f32 %v1049, %v1059
          %v1064 = vmax.f32 %v1062, 0.0
          %v1065 = vmax.f32 %v1063, 0.0
          %v1066 = vpack.c.bf16 %v1064, %v1064
          %v1067 = vpack.c.bf16 %v1065, %v1065
          %v1070 = vunpack.c.l.b16 %v1066
          %v1071 = vunpack.c.l.b16 %v1067
          %v1072 = vpack.c.b16 %v1071, %v1070
          %1074 = vst [vmem:[%s548] sm:$0xff] %v1072
        $region78: #{vae_forward.25} parent=65 // pred_fallthru
          _
        %s1075 = smul.u32 2, %s20
        %p1076 = scmp.lt.s32.totalorder %s19, 0
        %s1077 = scalar_select %p1076, %s19, 0
        %p1078 = scmp.lt.s32.totalorder %s1075, 3
        %s1079 = scalar_select %p1078, %s1075, 3
        %s1080 = smul.addr %s1077, 4
        %s1081 = sadd.s32 %s1079, %s1080
        %s1082 = smul.addr %s1081, 4
        %s1083 = scalar_lea.vmem %s3, %s1082
        // Predicated region
        $region79: #{vae_forward.25} parent=65 // pred_check
          %p1084 = pneg %p135
        $region80: #{vae_forward.25} parent=65 // pred_check_branch
          %1086 = sbr.rel (%p1084) target = $region82
        $region81: #{vae_forward.25} parent=65 // pred_region
          %s1087 = smul.u32 2, %s20
        $region82: #{vae_forward.25} parent=65 // pred_fallthru
          _
      $region66: #{vae_forward.25} parent=5 // pred_fallthru
        _
      %p1088 = scmp.le.s32.totalorder 2, %s9
      // Predicated region
      $region83: #{vae_forward.25} parent=5 // pred_check
        %p1089 = pneg %p1088
      $region84: #{vae_forward.25} parent=5 // pred_check_branch
        %1091 = sbr.rel (%p1089) target = $region86
      $region85: #{vae_forward.25} parent=5 // pred_region
        %s1092 = ssub.s32 %s9, 2
        // Predicated region
        $region87: #{vae_forward.25} parent=85 // pred_check
          %p1093 = pneg %p141
        $region88: #{vae_forward.25} parent=85 // pred_check_branch
          %1095 = sbr.rel (%p1093) target = $region90
        $region89: #{vae_forward.25} parent=85 // pred_region
          %s1096 = smul.u32 2, %s23
          %p1097 = scmp.lt.s32.totalorder %s22, 0
          %s1098 = scalar_select %p1097, %s22, 0
          %p1099 = scmp.lt.s32.totalorder %s1096, 3
          %s1100 = scalar_select %p1099, %s1096, 3
          %s1101 = smul.addr %s1098, 4
          %s1102 = sadd.s32 %s1100, %s1101
          %s1103 = smul.addr %s1102, 4
          %s1104 = scalar_lea.vmem %s3, %s1103
        $region90: #{vae_forward.25} parent=85 // pred_fallthru
          _
      $region86: #{vae_forward.25} parent=5 // pred_fallthru
        _
    $region6: #{vae_forward.25} parent=1 // loop_footer
      %s13 = sadd.s32 1, %s9
    $region7: #{vae_forward.25} parent=1 // loop_footer_branch
      %8 = sbr.rel target = $region3
    $region8: #{vae_forward.25} parent=1 // loop_exit
      _

// kernel: vae_forward.26
$region0: #{vae_forward.26}
  #allocation0 [shape = 'u32[]', space=smem, size = 0x4, offset = 0x4, fixed_abs, tag = 'smem constant byte address 0x4 - core index']
  #allocation1 [shape = 'u32[144,128]{1,0:T(1,128)}', space=vmem, size = 0x12000, scoped, tag = 'internal scratch']
  #allocation2 [shape = 'f32[8,256]{1,0:T(8,128)}', space=vmem, size = 0x2000, scoped, tag = 'scratch operand']
  %s0 = inlined_call_operand.vmem [shape: bf16[8,2048], index: 0, kind: input, shape index: {}]
  %s1 = inlined_call_operand.vmem [shape: bf16[2048,256], index: 1, kind: input, shape index: {}]
  %s2 = inlined_call_operand.vmem [shape: f32[1,256], index: 2, kind: input, shape index: {}]
  %s3 = inlined_call_operand.vmem [shape: f32[8,128], index: 3, kind: input, shape index: {}]
  %s4 = inlined_call_operand.hbm [shape: f32[8,128], index: 4, kind: output, shape index: {0}]
  %s5 = inlined_call_operand.hbm [shape: f32[8,128], index: 5, kind: output, shape index: {1}]
  %s6 = inlined_call_operand.vmem [shape: f32[8,128], index: 6, kind: output, shape index: {2}]
  %7 = xla_tuple %s4, %s5, %s6
  %s8 = sld [smem:[#allocation0]]
  $region73: #{vae_forward.26} parent=0
    _
  %s10 = ssub.s32 1, %s8
  %s11 = scalar_select 0, %s10, %s8
  $region1: #{vae_forward.26} parent=0
    #allocation3 [shape = 'u8[4096]{0}', space=vmem, size = 0x1000, scoped, tag = 'output window, operand 0, single buffered']
    #allocation4 [shape = 's32[2]{0}', space=sflag, size = 0x8, scoped, tag = 'scoped memory for vae_forward.26']
    #allocation5 [shape = 'u8[4096]{0}', space=vmem, size = 0x1000, scoped, tag = 'output window, operand 1, single buffered']
    #allocation6 [shape = 's32[1]{0}', space=sflag, size = 0x4, scoped, tag = 'scoped memory for vae_forward.26']
    %12 = vsyncpa [#allocation4], 0
    %13 = vsyncpa [#allocation6], 0
    loop: start=0, step=1, limit=6
    $region2: #{vae_forward.26} parent=1 // loop_pre_header
      _
    $region3: #{vae_forward.26} parent=1 // loop_header
      %s15 = sphi 0, %s19
      %p16 = scmp.ge.s32.totalorder %s15, 6
      %s25 = sphi 0, %s27
      %s28 = sphi 0, %s25
      %s29 = sphi 0, %s28
      %s45 = sphi 0, %s29
      %s51 = sphi 0, %s53
      %s54 = sphi 0, %s51
      %s55 = sphi 0, %s54
      %s71 = sphi 0, %s55
      %s75 = sphi 0, %s75
      %s77 = sphi 0, %s75
      %s78 = sphi 0, %s77
      %s92 = sphi 0, %s78
      %s96 = sphi 0, %s96
      %s98 = sphi 0, %s96
      %s99 = sphi 0, %s98
      %s113 = sphi 0, %s99
      %s117 = sphi 0, %s117
      %s119 = sphi 0, %s117
      %s120 = sphi 0, %s119
      %s134 = sphi 0, %s120
      %s138 = sphi 0, %s138
      %s140 = sphi 0, %s138
      %s141 = sphi 0, %s140
      %s155 = sphi 0, %s141
      %s159 = sphi 0, %s159
      %s161 = sphi 0, %s159
      %s162 = sphi 0, %s161
      %s176 = sphi 0, %s162
    $region4: #{vae_forward.26} parent=1 // loop_header_branch
      %18 = sbr.rel (%p16) target = $region8
    $region5: #{vae_forward.26} parent=1 // loop_body
      %s20 = ssub.s32 %s15, 1
      %s21 = ssub.s32 %s15, 2
      %s22 = sadd.s32 %s15, 1
      %s23 = ssub.s32 %s15, %s22
      %p24 = scmp.eq.s32.totalorder %s23, 0
      %s26 = sadd.s32 %s25, 1
      %s27 = scalar_select %p24, %s25, %s26
      %p30 = pneg %p24
      %p31 = scmp.eq.s32.totalorder %s15, 3
      %p32 = por %p30, %p31
      %p33 = scmp.ne.s32.totalorder %s25, %s28
      %p34 = scmp.eq.s32.totalorder %s15, 0
      %p35 = por %p33, %p34
      %p36 = scmp.ne.s32.totalorder %s25, %s28
      %p37 = scmp.eq.s32.totalorder %s20, 3
      %p38 = por %p36, %p37
      %p39 = scmp.ne.s32.totalorder %s28, %s29
      %p40 = scmp.eq.s32.totalorder %s20, 0
      %p41 = por %p39, %p40
      %p42 = scmp.ne.s32.totalorder %s28, %s29
      %p43 = scmp.eq.s32.totalorder %s21, 3
      %p44 = por %p42, %p43
      %p46 = scmp.ne.s32.totalorder %s29, %s45
      %p47 = scmp.eq.s32.totalorder %s21, 0
      %p48 = por %p46, %p47
      %s49 = ssub.s32 %s15, %s22
      %p50 = scmp.eq.s32.totalorder %s49, 0
      %s52 = sadd.s32 %s51, 1
      %s53 = scalar_select %p50, %s51, %s52
      %p56 = pneg %p50
      %p57 = scmp.eq.s32.totalorder %s15, 3
      %p58 = por %p56, %p57
      %p59 = scmp.ne.s32.totalorder %s51, %s54
      %p60 = scmp.eq.s32.totalorder %s15, 0
      %p61 = por %p59, %p60
      %p62 = scmp.ne.s32.totalorder %s51, %s54
      %p63 = scmp.eq.s32.totalorder %s20, 3
      %p64 = por %p62, %p63
      %p65 = scmp.ne.s32.totalorder %s54, %s55
      %p66 = scmp.eq.s32.totalorder %s20, 0
      %p67 = por %p65, %p66
      %p68 = scmp.ne.s32.totalorder %s54, %s55
      %p69 = scmp.eq.s32.totalorder %s21, 3
      %p70 = por %p68, %p69
      %p72 = scmp.ne.s32.totalorder %s55, %s71
      %p73 = scmp.eq.s32.totalorder %s21, 0
      %p74 = por %p72, %p73
      %s76 = sadd.s32 %s75, 1
      %p79 = scmp.eq.s32.totalorder %s15, 3
      %p80 = scmp.ne.s32.totalorder %s75, %s77
      %p81 = scmp.eq.s32.totalorder %s15, 0
      %p82 = por %p80, %p81
      %p83 = scmp.ne.s32.totalorder %s75, %s77
      %p84 = scmp.eq.s32.totalorder %s20, 3
      %p85 = por %p83, %p84
      %p86 = scmp.ne.s32.totalorder %s77, %s78
      %p87 = scmp.eq.s32.totalorder %s20, 0
      %p88 = por %p86, %p87
      %p89 = scmp.ne.s32.totalorder %s77, %s78
      %p90 = scmp.eq.s32.totalorder %s21, 3
      %p91 = por %p89, %p90
      %p93 = scmp.ne.s32.totalorder %s78, %s92
      %p94 = scmp.eq.s32.totalorder %s21, 0
      %p95 = por %p93, %p94
      %s97 = sadd.s32 %s96, 1
      %p100 = scmp.eq.s32.totalorder %s15, 3
      %p101 = scmp.ne.s32.totalorder %s96, %s98
      %p102 = scmp.eq.s32.totalorder %s15, 0
      %p103 = por %p101, %p102
      %p104 = scmp.ne.s32.totalorder %s96, %s98
      %p105 = scmp.eq.s32.totalorder %s20, 3
      %p106 = por %p104, %p105
      %p107 = scmp.ne.s32.totalorder %s98, %s99
      %p108 = scmp.eq.s32.totalorder %s20, 0
      %p109 = por %p107, %p108
      %p110 = scmp.ne.s32.totalorder %s98, %s99
      %p111 = scmp.eq.s32.totalorder %s21, 3
      %p112 = por %p110, %p111
      %p114 = scmp.ne.s32.totalorder %s99, %s113
      %p115 = scmp.eq.s32.totalorder %s21, 0
      %p116 = por %p114, %p115
      %s118 = sadd.s32 %s117, 1
      %p121 = scmp.eq.s32.totalorder %s15, 3
      %p122 = scmp.ne.s32.totalorder %s117, %s119
      %p123 = scmp.eq.s32.totalorder %s15, 0
      %p124 = por %p122, %p123
      %p125 = scmp.ne.s32.totalorder %s117, %s119
      %p126 = scmp.eq.s32.totalorder %s20, 3
      %p127 = por %p125, %p126
      %p128 = scmp.ne.s32.totalorder %s119, %s120
      %p129 = scmp.eq.s32.totalorder %s20, 0
      %p130 = por %p128, %p129
      %p131 = scmp.ne.s32.totalorder %s119, %s120
      %p132 = scmp.eq.s32.totalorder %s21, 3
      %p133 = por %p131, %p132
      %p135 = scmp.ne.s32.totalorder %s120, %s134
      %p136 = scmp.eq.s32.totalorder %s21, 0
      %p137 = por %p135, %p136
      %s139 = sadd.s32 %s138, 1
      %p142 = scmp.eq.s32.totalorder %s15, 3
      %p143 = scmp.ne.s32.totalorder %s138, %s140
      %p144 = scmp.eq.s32.totalorder %s15, 0
      %p145 = por %p143, %p144
      %p146 = scmp.ne.s32.totalorder %s138, %s140
      %p147 = scmp.eq.s32.totalorder %s20, 3
      %p148 = por %p146, %p147
      %p149 = scmp.ne.s32.totalorder %s140, %s141
      %p150 = scmp.eq.s32.totalorder %s20, 0
      %p151 = por %p149, %p150
      %p152 = scmp.ne.s32.totalorder %s140, %s141
      %p153 = scmp.eq.s32.totalorder %s21, 3
      %p154 = por %p152, %p153
      %p156 = scmp.ne.s32.totalorder %s141, %s155
      %p157 = scmp.eq.s32.totalorder %s21, 0
      %p158 = por %p156, %p157
      %s160 = sadd.s32 %s159, 1
      %p163 = scmp.eq.s32.totalorder %s15, 3
      %p164 = scmp.ne.s32.totalorder %s159, %s161
      %p165 = scmp.eq.s32.totalorder %s15, 0
      %p166 = por %p164, %p165
      %p167 = scmp.ne.s32.totalorder %s159, %s161
      %p168 = scmp.eq.s32.totalorder %s20, 3
      %p169 = por %p167, %p168
      %p170 = scmp.ne.s32.totalorder %s161, %s162
      %p171 = scmp.eq.s32.totalorder %s20, 0
      %p172 = por %p170, %p171
      %p173 = scmp.ne.s32.totalorder %s161, %s162
      %p174 = scmp.eq.s32.totalorder %s21, 3
      %p175 = por %p173, %p174
      %p177 = scmp.ne.s32.totalorder %s162, %s176
      %p178 = scmp.eq.s32.totalorder %s21, 0
      %p179 = por %p177, %p178
      %p180 = scmp.le.s32.totalorder 1, %s15
      %p181 = scmp.lt.s32.totalorder %s15, 5
      %p182 = pnand %p180, %p181
      %p183 = pneg %p182
      // Predicated region
      $region9: #{vae_forward.26} parent=5 // pred_check
        _
      $region10: #{vae_forward.26} parent=5 // pred_check_branch
        %185 = sbr.rel (%p182) target = $region12
      $region11: #{vae_forward.26} parent=5 // pred_region
        %s186 = ssub.s32 %s15, 1
        // Predicated region
        $region13: #{vae_forward.26} parent=11 // pred_check
          %p187 = pneg %p88
        $region14: #{vae_forward.26} parent=11 // pred_check_branch
          %189 = sbr.rel (%p187) target = $region16
        $region15: #{vae_forward.26} parent=11 // pred_region
          _
        $region16: #{vae_forward.26} parent=11 // pred_fallthru
          _
        // Predicated region
        $region17: #{vae_forward.26} parent=11 // pred_check
          %p190 = pneg %p109
        $region18: #{vae_forward.26} parent=11 // pred_check_branch
          %192 = sbr.rel (%p190) target = $region20
        $region19: #{vae_forward.26} parent=11 // pred_region
          _
        $region20: #{vae_forward.26} parent=11 // pred_fallthru
          _
      $region12: #{vae_forward.26} parent=5 // pred_fallthru
        _
      %p193 = scmp.lt.s32.totalorder %s15, 4
      // Predicated region
      $region21: #{vae_forward.26} parent=5 // pred_check
        %p194 = pneg %p193
      $region22: #{vae_forward.26} parent=5 // pred_check_branch
        %196 = sbr.rel (%p194) target = $region24
      $region23: #{vae_forward.26} parent=5 // pred_region
        // Predicated region
        $region25: #{vae_forward.26} parent=23 // pred_check
          %p197 = pneg %p35
        $region26: #{vae_forward.26} parent=23 // pred_check_branch
          %199 = sbr.rel (%p197) target = $region28
        $region27: #{vae_forward.26} parent=23 // pred_region
          %s200 = smul.u32 4, %s15
          %p201 = scmp.lt.s32.totalorder %s200, 15
          %s202 = scalar_select %p201, %s200, 15
          %s203 = smul.addr %s202, 4
          %s204 = scalar_lea.vmem %s0, %s203
          %s205 = smul.u32 4, %s15
        $region28: #{vae_forward.26} parent=23 // pred_fallthru
          _
        // Predicated region
        $region29: #{vae_forward.26} parent=23 // pred_check
          %p206 = pneg %p61
        $region30: #{vae_forward.26} parent=23 // pred_check_branch
          %208 = sbr.rel (%p206) target = $region32
        $region31: #{vae_forward.26} parent=23 // pred_region
          %s209 = smul.u32 64, %s15
          %p210 = scmp.lt.s32.totalorder %s209, 255
          %s211 = scalar_select %p210, %s209, 255
          %s212 = smul.addr %s211, 2
          %s213 = smul.addr %s212, 4
          %s214 = scalar_lea.vmem %s1, %s213
          %s215 = smul.u32 64, %s15
        $region32: #{vae_forward.26} parent=23 // pred_fallthru
          _
      $region24: #{vae_forward.26} parent=5 // pred_fallthru
        _
      %p216 = scmp.le.s32.totalorder 1, %s15
      %p217 = scmp.lt.s32.totalorder %s15, 5
      %p218 = pnand %p216, %p217
      %p219 = pneg %p218
      // Predicated region
      $region33: #{vae_forward.26} parent=5 // pred_check
        _
      $region34: #{vae_forward.26} parent=5 // pred_check_branch
        %221 = sbr.rel (%p218) target = $region36
      $region35: #{vae_forward.26} parent=5 // pred_region
        %s222 = ssub.s32 %s15, 1
        %s223 = smul.u32 4, %s20
        %p224 = scmp.lt.s32.totalorder %s223, 15
        %s225 = scalar_select %p224, %s223, 15
        %s226 = smul.addr %s225, 4
        %s227 = scalar_lea.vmem %s0, %s226
        %p228 = pneg %p41
        %p229 = pneg %p38
        %s230 = smul.u32 64, %s20
        %p231 = scmp.lt.s32.totalorder %s230, 255
        %s232 = scalar_select %p231, %s230, 255
        %s233 = smul.addr %s232, 2
        %s234 = smul.addr %s233, 4
        %s235 = scalar_lea.vmem %s1, %s234
        %p236 = pneg %p67
        %p237 = pneg %p64
        %p238 = pneg %p88
        %p239 = pneg %p85
        %p240 = pneg %p109
        %p241 = pneg %p106
        %p242 = pneg %p130
        %p243 = pneg %p127
        %p244 = pneg %p151
        %p245 = pneg %p148
        %p246 = pneg %p172
        %p247 = pneg %p169
        %s248 = smul.u32 4, %s20
        %p249 = scmp.lt.s32.totalorder %s248, 15
        %s250 = scalar_select %p249, %s248, 15
        %s251 = smul.addr %s250, 4
        %s252 = scalar_lea.vmem %s0, %s251
        %s253 = smul.u32 4, %s20
        %s254 = smul.u32 64, %s20
        %p255 = scmp.lt.s32.totalorder %s254, 255
        %s256 = scalar_select %p255, %s254, 255
        %s257 = smul.addr %s256, 2
        %s258 = smul.addr %s257, 4
        %s259 = scalar_lea.vmem %s1, %s258
        %s260 = smul.u32 64, %s20
        %p261 = scmp.eq.s32.totalorder %s20, 0
        // Predicated region
        $region37: #{vae_forward.26} parent=35 // pred_check
          %p262 = pneg %p261
        $region38: #{vae_forward.26} parent=35 // pred_check_branch
          %264 = sbr.rel (%p262) target = $region40
        $region39: #{vae_forward.26} parent=35 // pred_region
          %265 = vst [vmem:[#allocation2] sm:$0xff] 0.0
          %266 = vst [vmem:[#allocation2 + $0x8] sm:$0xff] 0.0
        $region40: #{vae_forward.26} parent=35 // pred_fallthru
          _
        %v267 = vld [vmem:[#allocation2] sm:$0xff]
        %v268 = vld [vmem:[#allocation2 + $0x8] sm:$0xff]
        %v269 = vld [vmem:[%s252] sm:$0xff]
        %v270 = vld [vmem:[%s252 + $0x8] sm:$0xff]
        %v271 = vld [vmem:[%s259] sm:$0xff]
        %v272 = vld [vmem:[%s259 + $0x8] sm:$0xff]
        %v273 = vld [vmem:[%s259 + $0x10] sm:$0xff]
        %v274 = vld [vmem:[%s259 + $0x18] sm:$0xff]
        %v275 = vld [vmem:[%s259 + $0x20] sm:$0xff]
        %v276 = vld [vmem:[%s259 + $0x28] sm:$0xff]
        %v277 = vld [vmem:[%s259 + $0x30] sm:$0xff]
        %v278 = vld [vmem:[%s259 + $0x38] sm:$0xff]
        %v279 = vld [vmem:[%s259 + $0x40] sm:$0xff]
        %v280 = vld [vmem:[%s259 + $0x48] sm:$0xff]
        %v281 = vld [vmem:[%s259 + $0x50] sm:$0xff]
        %v282 = vld [vmem:[%s259 + $0x58] sm:$0xff]
        %v283 = vld [vmem:[%s259 + $0x60] sm:$0xff]
        %v284 = vld [vmem:[%s259 + $0x68] sm:$0xff]
        %v285 = vld [vmem:[%s259 + $0x70] sm:$0xff]
        %v286 = vld [vmem:[%s259 + $0x78] sm:$0xff]
        %v287 = vld [vmem:[%s259 + $0x80] sm:$0xff]
        %v288 = vld [vmem:[%s259 + $0x88] sm:$0xff]
        %v289 = vld [vmem:[%s259 + $0x90] sm:$0xff]
        %v290 = vld [vmem:[%s259 + $0x98] sm:$0xff]
        %v291 = vld [vmem:[%s259 + $0xa0] sm:$0xff]
        %v292 = vld [vmem:[%s259 + $0xa8] sm:$0xff]
        %v293 = vld [vmem:[%s259 + $0xb0] sm:$0xff]
        %v294 = vld [vmem:[%s259 + $0xb8] sm:$0xff]
        %v295 = vld [vmem:[%s259 + $0xc0] sm:$0xff]
        %v296 = vld [vmem:[%s259 + $0xc8] sm:$0xff]
        %v297 = vld [vmem:[%s259 + $0xd0] sm:$0xff]
        %v298 = vld [vmem:[%s259 + $0xd8] sm:$0xff]
        %v299 = vld [vmem:[%s259 + $0xe0] sm:$0xff]
        %v300 = vld [vmem:[%s259 + $0xe8] sm:$0xff]
        %v301 = vld [vmem:[%s259 + $0xf0] sm:$0xff]
        %v302 = vld [vmem:[%s259 + $0xf8] sm:$0xff]
        %v303 = vld [vmem:[%s259 + $0x100] sm:$0xff]
        %v304 = vld [vmem:[%s259 + $0x108] sm:$0xff]
        %v305 = vld [vmem:[%s259 + $0x110] sm:$0xff]
        %v306 = vld [vmem:[%s259 + $0x118] sm:$0xff]
        %v307 = vld [vmem:[%s259 + $0x120] sm:$0xff]
        %v308 = vld [vmem:[%s259 + $0x128] sm:$0xff]
        %v309 = vld [vmem:[%s259 + $0x130] sm:$0xff]
        %v310 = vld [vmem:[%s259 + $0x138] sm:$0xff]
        %v311 = vld [vmem:[%s259 + $0x140] sm:$0xff]
        %v312 = vld [vmem:[%s259 + $0x148] sm:$0xff]
        %v313 = vld [vmem:[%s259 + $0x150] sm:$0xff]
        %v314 = vld [vmem:[%s259 + $0x158] sm:$0xff]
        %v315 = vld [vmem:[%s259 + $0x160] sm:$0xff]
        %v316 = vld [vmem:[%s259 + $0x168] sm:$0xff]
        %v317 = vld [vmem:[%s259 + $0x170] sm:$0xff]
        %v318 = vld [vmem:[%s259 + $0x178] sm:$0xff]
        %v319 = vld [vmem:[%s259 + $0x180] sm:$0xff]
        %v320 = vld [vmem:[%s259 + $0x188] sm:$0xff]
        %v321 = vld [vmem:[%s259 + $0x190] sm:$0xff]
        %v322 = vld [vmem:[%s259 + $0x198] sm:$0xff]
        %v323 = vld [vmem:[%s259 + $0x1a0] sm:$0xff]
        %v324 = vld [vmem:[%s259 + $0x1a8] sm:$0xff]
        %v325 = vld [vmem:[%s259 + $0x1b0] sm:$0xff]
        %v326 = vld [vmem:[%s259 + $0x1b8] sm:$0xff]
        %v327 = vld [vmem:[%s259 + $0x1c0] sm:$0xff]
        %v328 = vld [vmem:[%s259 + $0x1c8] sm:$0xff]
        %v329 = vld [vmem:[%s259 + $0x1d0] sm:$0xff]
        %v330 = vld [vmem:[%s259 + $0x1d8] sm:$0xff]
        %v331 = vld [vmem:[%s259 + $0x1e0] sm:$0xff]
        %v332 = vld [vmem:[%s259 + $0x1e8] sm:$0xff]
        %v333 = vld [vmem:[%s259 + $0x1f0] sm:$0xff]
        %v334 = vld [vmem:[%s259 + $0x1f8] sm:$0xff]
        %v337 = vunpack.c.l.b16 %v269
        %v338 = vunpack.c.h.b16 %v269
        %v339 = vunpack.c.l.b16 %v270
        %v340 = vunpack.c.h.b16 %v270
        %v341 = vpack.c.b16 %v337, %v337
        %v342 = vpack.c.b16 %v338, %v338
        %v343 = vpack.c.b16 %v339, %v339
        %v344 = vpack.c.b16 %v340, %v340
        %v413 = vunpack.c.l.b16 %v271
        %v414 = vunpack.c.h.b16 %v271
        %v415 = vunpack.c.l.b16 %v272
        %v416 = vunpack.c.h.b16 %v272
        %v417 = vunpack.c.l.b16 %v273
        %v418 = vunpack.c.h.b16 %v273
        %v419 = vunpack.c.l.b16 %v274
        %v420 = vunpack.c.h.b16 %v274
        %v421 = vunpack.c.l.b16 %v275
        %v422 = vunpack.c.h.b16 %v275
        %v423 = vunpack.c.l.b16 %v276
        %v424 = vunpack.c.h.b16 %v276
        %v425 = vunpack.c.l.b16 %v277
        %v426 = vunpack.c.h.b16 %v277
        %v427 = vunpack.c.l.b16 %v278
        %v428 = vunpack.c.h.b16 %v278
        %v429 = vunpack.c.l.b16 %v279
        %v430 = vunpack.c.h.b16 %v279
        %v431 = vunpack.c.l.b16 %v280
        %v432 = vunpack.c.h.b16 %v280
        %v433 = vunpack.c.l.b16 %v281
        %v434 = vunpack.c.h.b16 %v281
        %v435 = vunpack.c.l.b16 %v282
        %v436 = vunpack.c.h.b16 %v282
        %v437 = vunpack.c.l.b16 %v283
        %v438 = vunpack.c.h.b16 %v283
        %v439 = vunpack.c.l.b16 %v284
        %v440 = vunpack.c.h.b16 %v284
        %v441 = vunpack.c.l.b16 %v285
        %v442 = vunpack.c.h.b16 %v285
        %v443 = vunpack.c.l.b16 %v286
        %v444 = vunpack.c.h.b16 %v286
        %v445 = vunpack.c.l.b16 %v287
        %v446 = vunpack.c.h.b16 %v287
        %v447 = vunpack.c.l.b16 %v288
        %v448 = vunpack.c.h.b16 %v288
        %v449 = vunpack.c.l.b16 %v289
        %v450 = vunpack.c.h.b16 %v289
        %v451 = vunpack.c.l.b16 %v290
        %v452 = vunpack.c.h.b16 %v290
        %v453 = vunpack.c.l.b16 %v291
        %v454 = vunpack.c.h.b16 %v291
        %v455 = vunpack.c.l.b16 %v292
        %v456 = vunpack.c.h.b16 %v292
        %v457 = vunpack.c.l.b16 %v293
        %v458 = vunpack.c.h.b16 %v293
        %v459 = vunpack.c.l.b16 %v294
        %v460 = vunpack.c.h.b16 %v294
        %v461 = vunpack.c.l.b16 %v295
        %v462 = vunpack.c.h.b16 %v295
        %v463 = vunpack.c.l.b16 %v296
        %v464 = vunpack.c.h.b16 %v296
        %v465 = vunpack.c.l.b16 %v297
        %v466 = vunpack.c.h.b16 %v297
        %v467 = vunpack.c.l.b16 %v298
        %v468 = vunpack.c.h.b16 %v298
        %v469 = vunpack.c.l.b16 %v299
        %v470 = vunpack.c.h.b16 %v299
        %v471 = vunpack.c.l.b16 %v300
        %v472 = vunpack.c.h.b16 %v300
        %v473 = vunpack.c.l.b16 %v301
        %v474 = vunpack.c.h.b16 %v301
        %v475 = vunpack.c.l.b16 %v302
        %v476 = vunpack.c.h.b16 %v302
        %v477 = vunpack.c.l.b16 %v303
        %v478 = vunpack.c.h.b16 %v303
        %v479 = vunpack.c.l.b16 %v304
        %v480 = vunpack.c.h.b16 %v304
        %v481 = vunpack.c.l.b16 %v305
        %v482 = vunpack.c.h.b16 %v305
        %v483 = vunpack.c.l.b16 %v306
        %v484 = vunpack.c.h.b16 %v306
        %v485 = vunpack.c.l.b16 %v307
        %v486 = vunpack.c.h.b16 %v307
        %v487 = vunpack.c.l.b16 %v308
        %v488 = vunpack.c.h.b16 %v308
        %v489 = vunpack.c.l.b16 %v309
        %v490 = vunpack.c.h.b16 %v309
        %v491 = vunpack.c.l.b16 %v310
        %v492 = vunpack.c.h.b16 %v310
        %v493 = vunpack.c.l.b16 %v311
        %v494 = vunpack.c.h.b16 %v311
        %v495 = vunpack.c.l.b16 %v312
        %v496 = vunpack.c.h.b16 %v312
        %v497 = vunpack.c.l.b16 %v313
        %v498 = vunpack.c.h.b16 %v313
        %v499 = vunpack.c.l.b16 %v314
        %v500 = vunpack.c.h.b16 %v314
        %v501 = vunpack.c.l.b16 %v315
        %v502 = vunpack.c.h.b16 %v315
        %v503 = vunpack.c.l.b16 %v316
        %v504 = vunpack.c.h.b16 %v316
        %v505 = vunpack.c.l.b16 %v317
        %v506 = vunpack.c.h.b16 %v317
        %v507 = vunpack.c.l.b16 %v318
        %v508 = vunpack.c.h.b16 %v318
        %v509 = vunpack.c.l.b16 %v319
        %v510 = vunpack.c.h.b16 %v319
        %v511 = vunpack.c.l.b16 %v320
        %v512 = vunpack.c.h.b16 %v320
        %v513 = vunpack.c.l.b16 %v321
        %v514 = vunpack.c.h.b16 %v321
        %v515 = vunpack.c.l.b16 %v322
        %v516 = vunpack.c.h.b16 %v322
        %v517 = vunpack.c.l.b16 %v323
        %v518 = vunpack.c.h.b16 %v323
        %v519 = vunpack.c.l.b16 %v324
        %v520 = vunpack.c.h.b16 %v324
        %v521 = vunpack.c.l.b16 %v325
        %v522 = vunpack.c.h.b16 %v325
        %v523 = vunpack.c.l.b16 %v326
        %v524 = vunpack.c.h.b16 %v326
        %v525 = vunpack.c.l.b16 %v327
        %v526 = vunpack.c.h.b16 %v327
        %v527 = vunpack.c.l.b16 %v328
        %v528 = vunpack.c.h.b16 %v328
        %v529 = vunpack.c.l.b16 %v329
        %v530 = vunpack.c.h.b16 %v329
        %v531 = vunpack.c.l.b16 %v330
        %v532 = vunpack.c.h.b16 %v330
        %v533 = vunpack.c.l.b16 %v331
        %v534 = vunpack.c.h.b16 %v331
        %v535 = vunpack.c.l.b16 %v332
        %v536 = vunpack.c.h.b16 %v332
        %v537 = vunpack.c.l.b16 %v333
        %v538 = vunpack.c.h.b16 %v333
        %v539 = vunpack.c.l.b16 %v334
        %v540 = vunpack.c.h.b16 %v334
        %v541 = vpack.c.b16 %v415, %v413
        %v542 = vpack.c.b16 %v416, %v414
        %v543 = vpack.c.b16 %v419, %v417
        %v544 = vpack.c.b16 %v420, %v418
        %v545 = vpack.c.b16 %v423, %v421
        %v546 = vpack.c.b16 %v424, %v422
        %v547 = vpack.c.b16 %v427, %v425
        %v548 = vpack.c.b16 %v428, %v426
        %v549 = vpack.c.b16 %v431, %v429
        %v550 = vpack.c.b16 %v432, %v430
        %v551 = vpack.c.b16 %v435, %v433
        %v552 = vpack.c.b16 %v436, %v434
        %v553 = vpack.c.b16 %v439, %v437
        %v554 = vpack.c.b16 %v440, %v438
        %v555 = vpack.c.b16 %v443, %v441
        %v556 = vpack.c.b16 %v444, %v442
        %v557 = vpack.c.b16 %v447, %v445
        %v558 = vpack.c.b16 %v448, %v446
        %v559 = vpack.c.b16 %v451, %v449
        %v560 = vpack.c.b16 %v452, %v450
        %v561 = vpack.c.b16 %v455, %v453
        %v562 = vpack.c.b16 %v456, %v454
        %v563 = vpack.c.b16 %v459, %v457
        %v564 = vpack.c.b16 %v460, %v458
        %v565 = vpack.c.b16 %v463, %v461
        %v566 = vpack.c.b16 %v464, %v462
        %v567 = vpack.c.b16 %v467, %v465
        %v568 = vpack.c.b16 %v468, %v466
        %v569 = vpack.c.b16 %v471, %v469
        %v570 = vpack.c.b16 %v472, %v470
        %v571 = vpack.c.b16 %v475, %v473
        %v572 = vpack.c.b16 %v476, %v474
        %v573 = vpack.c.b16 %v479, %v477
        %v574 = vpack.c.b16 %v480, %v478
        %v575 = vpack.c.b16 %v483, %v481
        %v576 = vpack.c.b16 %v484, %v482
        %v577 = vpack.c.b16 %v487, %v485
        %v578 = vpack.c.b16 %v488, %v486
        %v579 = vpack.c.b16 %v491, %v489
        %v580 = vpack.c.b16 %v492, %v490
        %v581 = vpack.c.b16 %v495, %v493
        %v582 = vpack.c.b16 %v496, %v494
        %v583 = vpack.c.b16 %v499, %v497
        %v584 = vpack.c.b16 %v500, %v498
        %v585 = vpack.c.b16 %v503, %v501
        %v586 = vpack.c.b16 %v504, %v502
        %v587 = vpack.c.b16 %v507, %v505
        %v588 = vpack.c.b16 %v508, %v506
        %v589 = vpack.c.b16 %v511, %v509
        %v590 = vpack.c.b16 %v512, %v510
        %v591 = vpack.c.b16 %v515, %v513
        %v592 = vpack.c.b16 %v516, %v514
        %v593 = vpack.c.b16 %v519, %v517
        %v594 = vpack.c.b16 %v520, %v518
        %v595 = vpack.c.b16 %v523, %v521
        %v596 = vpack.c.b16 %v524, %v522
        %v597 = vpack.c.b16 %v527, %v525
        %v598 = vpack.c.b16 %v528, %v526
        %v599 = vpack.c.b16 %v531, %v529
        %v600 = vpack.c.b16 %v532, %v530
        %v601 = vpack.c.b16 %v535, %v533
        %v602 = vpack.c.b16 %v536, %v534
        %v603 = vpack.c.b16 %v539, %v537
        %v604 = vpack.c.b16 %v540, %v538
        %669 = vmatprep.subr.bf16.mxu0 %v542
        %670 = vmatpush1.bf16.msra.mxu0 %v541
        %671 = vmatprep.subr.bf16.mxu0 %v544
        %672 = vmatpush1.bf16.msra.mxu0 %v543
        %673 = vmatprep.subr.bf16.mxu0 %v546
        %674 = vmatpush1.bf16.msra.mxu0 %v545
        %675 = vmatprep.subr.bf16.mxu0 %v548
        %676 = vmatpush1.bf16.msra.mxu0 %v547
        %677 = vmatprep.subr.bf16.mxu0 %v550
        %678 = vmatpush1.bf16.msra.mxu0 %v549
        %679 = vmatprep.subr.bf16.mxu0 %v552
        %680 = vmatpush1.bf16.msra.mxu0 %v551
        %681 = vmatprep.subr.bf16.mxu0 %v554
        %682 = vmatpush1.bf16.msra.mxu0 %v553
        %683 = vmatprep.subr.bf16.mxu0 %v556
        %684 = vmatpush1.bf16.msra.mxu0 %v555
        %685 = vmatprep.subr.bf16.mxu0 %v558
        %686 = vmatpush1.bf16.msra.mxu0 %v557
        %687 = vmatprep.subr.bf16.mxu0 %v560
        %688 = vmatpush1.bf16.msra.mxu0 %v559
        %689 = vmatprep.subr.bf16.mxu0 %v562
        %690 = vmatpush1.bf16.msra.mxu0 %v561
        %691 = vmatprep.subr.bf16.mxu0 %v564
        %692 = vmatpush1.bf16.msra.mxu0 %v563
        %693 = vmatprep.subr.bf16.mxu0 %v566
        %694 = vmatpush1.bf16.msra.mxu0 %v565
        %695 = vmatprep.subr.bf16.mxu0 %v568
        %696 = vmatpush1.bf16.msra.mxu0 %v567
        %697 = vmatprep.subr.bf16.mxu0 %v570
        %698 = vmatpush1.bf16.msra.mxu0 %v569
        %699 = vmatprep.subr.bf16.mxu0 %v572
        %700 = vmatpush1.bf16.msra.mxu0 %v571
        %701 = vmatprep.mubr.bf16.mxu0 %v342
        %702 = vmatmul.mubr.bf16.gmra.mrb[0].mxu0 %v341
        %v703 = vpop.f32.mrb[0].mxu0
        %v704 = vadd.f32 0.0, %v703
        %v705 = vpop.f32.mrb[0].mxu0
        %v706 = vadd.f32 0.0, %v705
        %v707 = vpop.f32.mrb[0].mxu0
        %v708 = vpop.f32.mrb[0].mxu0
        %709 = vdwg.mxu0
        %710 = vmatprep.subr.bf16.mxu0 %v574
        %711 = vmatpush1.bf16.msra.mxu0 %v573
        %712 = vmatprep.subr.bf16.mxu0 %v576
        %713 = vmatpush1.bf16.msra.mxu0 %v575
        %714 = vmatprep.subr.bf16.mxu0 %v578
        %715 = vmatpush1.bf16.msra.mxu0 %v577
        %716 = vmatprep.subr.bf16.mxu0 %v580
        %717 = vmatpush1.bf16.msra.mxu0 %v579
        %718 = vmatprep.subr.bf16.mxu0 %v582
        %719 = vmatpush1.bf16.msra.mxu0 %v581
        %720 = vmatprep.subr.bf16.mxu0 %v584
        %721 = vmatpush1.bf16.msra.mxu0 %v583
        %722 = vmatprep.subr.bf16.mxu0 %v586
        %723 = vmatpush1.bf16.msra.mxu0 %v585
        %724 = vmatprep.subr.bf16.mxu0 %v588
        %725 = vmatpush1.bf16.msra.mxu0 %v587
        %726 = vmatprep.subr.bf16.mxu0 %v590
        %727 = vmatpush1.bf16.msra.mxu0 %v589
        %728 = vmatprep.subr.bf16.mxu0 %v592
        %729 = vmatpush1.bf16.msra.mxu0 %v591
        %730 = vmatprep.subr.bf16.mxu0 %v594
        %731 = vmatpush1.bf16.msra.mxu0 %v593
        %732 = vmatprep.subr.bf16.mxu0 %v596
        %733 = vmatpush1.bf16.msra.mxu0 %v595
        %734 = vmatprep.subr.bf16.mxu0 %v598
        %735 = vmatpush1.bf16.msra.mxu0 %v597
        %736 = vmatprep.subr.bf16.mxu0 %v600
        %737 = vmatpush1.bf16.msra.mxu0 %v599
        %738 = vmatprep.subr.bf16.mxu0 %v602
        %739 = vmatpush1.bf16.msra.mxu0 %v601
        %740 = vmatprep.subr.bf16.mxu0 %v604
        %741 = vmatpush1.bf16.msra.mxu0 %v603
        %742 = vmatprep.mubr.bf16.mxu0 %v344
        %743 = vmatmul.mubr.bf16.gmra.mrb[0].mxu0 %v343
        %v744 = vpop.f32.mrb[0].mxu0
        %v745 = vadd.f32 %v704, %v744
        %v746 = vpop.f32.mrb[0].mxu0
        %v747 = vadd.f32 %v706, %v746
        %v748 = vpop.f32.mrb[0].mxu0
        %v749 = vpop.f32.mrb[0].mxu0
        %750 = vdwg.mxu0
        %v751 = vadd.f32 %v267, %v745
        %v752 = vadd.f32 %v268, %v747
        %753 = vst [vmem:[#allocation2] sm:$0xff] %v751
        %754 = vst [vmem:[#allocation2 + $0x8] sm:$0xff] %v752
        %p755 = scmp.eq.s32.totalorder %s20, 3
        // Predicated region
        $region41: #{vae_forward.26} parent=35 // pred_check
          %p756 = pneg %p755
        $region42: #{vae_forward.26} parent=35 // pred_check_branch
          %758 = sbr.rel (%p756) target = $region44
        $region43: #{vae_forward.26} parent=35 // pred_region
          %v759 = vld [vmem:[#allocation2] sm:$0xff]
          %v760 = vld [vmem:[#allocation2 + $0x8] sm:$0xff]
          %v761 = vld [vmem:[%s2] sm:$0x3]
          %v763 = vlaneseq
          %v764 = vshrl.u32 %v763, 7
          %v765 = vsub.s32 0, %v764
          %v766 = vrot.slane %v761, %v765
          %v767 = vlaneseq
          %v768 = vshrl.u32 %v767, 7
          %v769 = vsub.s32 1, %v768
          %v770 = vrot.slane %v761, %v769
          %v773 = vadd.f32 %v759, %v766
          %v774 = vadd.f32 %v760, %v770
          %v775 = vld [vmem:[%s3] sm:$0xff]
          %v776 = vmul.f32 %v774, 0.5
          %v777 = vmul.f32 %v776, 1.442695
          %v778 = vpow.pop %v777
          %v779 = vmul.f32 %v775, %v778
          %v780 = vadd.f32 %v773, %v779
          %781 = vst [vmem:[#allocation3] sm:$0xff] %v773
          %782 = vst [vmem:[#allocation5] sm:$0xff] %v774
          %783 = vst [vmem:[%s6] sm:$0xff] %v780
        $region44: #{vae_forward.26} parent=35 // pred_fallthru
          _
        // Predicated region
        $region45: #{vae_forward.26} parent=35 // pred_check
          %p784 = pneg %p127
        $region46: #{vae_forward.26} parent=35 // pred_check_branch
          %786 = sbr.rel (%p784) target = $region48
        $region47: #{vae_forward.26} parent=35 // pred_region
          %s788 = ssub.s32 128, 128
          %789 = vsyncadd [#allocation4], %s788
          %s791 = sshll.u32 [#allocation3], 4
          %s792 = int_to_ptr.vmem [resolvable:$true] %s791
          %794 = dma.vmem_to_hbm [thread:$0]  %s792, 128, %s4, [#allocation4]
        $region48: #{vae_forward.26} parent=35 // pred_fallthru
          _
        // Predicated region
        $region49: #{vae_forward.26} parent=35 // pred_check
          %p795 = pneg %p148
        $region50: #{vae_forward.26} parent=35 // pred_check_branch
          %797 = sbr.rel (%p795) target = $region52
        $region51: #{vae_forward.26} parent=35 // pred_region
          %s799 = ssub.s32 128, 128
          %800 = vsyncadd [#allocation6], %s799
          %s802 = sshll.u32 [#allocation5], 4
          %s803 = int_to_ptr.vmem [resolvable:$true] %s802
          %805 = dma.vmem_to_hbm [thread:$0]  %s803, 128, %s5, [#allocation6]
        $region52: #{vae_forward.26} parent=35 // pred_fallthru
          _
        // Predicated region
        $region53: #{vae_forward.26} parent=35 // pred_check
          %p806 = pneg %p169
        $region54: #{vae_forward.26} parent=35 // pred_check_branch
          %808 = sbr.rel (%p806) target = $region56
        $region55: #{vae_forward.26} parent=35 // pred_region
          _
        $region56: #{vae_forward.26} parent=35 // pred_fallthru
          _
        // Predicated region
        $region57: #{vae_forward.26} parent=35 // pred_check
          %p809 = pneg %p127
        $region58: #{vae_forward.26} parent=35 // pred_check_branch
          %811 = sbr.rel (%p809) target = $region60
        $region59: #{vae_forward.26} parent=35 // pred_region
          %812 = dma.done [#allocation4], 128
        $region60: #{vae_forward.26} parent=35 // pred_fallthru
          _
        // Predicated region
        $region61: #{vae_forward.26} parent=35 // pred_check
          %p813 = pneg %p148
        $region62: #{vae_forward.26} parent=35 // pred_check_branch
          %815 = sbr.rel (%p813) target = $region64
        $region63: #{vae_forward.26} parent=35 // pred_region
          %816 = dma.done [#allocation6], 128
        $region64: #{vae_forward.26} parent=35 // pred_fallthru
          _
        // Predicated region
        $region65: #{vae_forward.26} parent=35 // pred_check
          %p817 = pneg %p169
        $region66: #{vae_forward.26} parent=35 // pred_check_branch
          %819 = sbr.rel (%p817) target = $region68
        $region67: #{vae_forward.26} parent=35 // pred_region
          _
        $region68: #{vae_forward.26} parent=35 // pred_fallthru
          _
      $region36: #{vae_forward.26} parent=5 // pred_fallthru
        _
      %p820 = scmp.le.s32.totalorder 2, %s15
      // Predicated region
      $region69: #{vae_forward.26} parent=5 // pred_check
        %p821 = pneg %p820
      $region70: #{vae_forward.26} parent=5 // pred_check_branch
        %823 = sbr.rel (%p821) target = $region72
      $region71: #{vae_forward.26} parent=5 // pred_region
        %s824 = ssub.s32 %s15, 2
      $region72: #{vae_forward.26} parent=5 // pred_fallthru
        _
    $region6: #{vae_forward.26} parent=1 // loop_footer
      %s19 = sadd.s32 1, %s15
    $region7: #{vae_forward.26} parent=1 // loop_footer_branch
      %14 = sbr.rel target = $region3
    $region8: #{vae_forward.26} parent=1 // loop_exit
      _
    %825 = vsyncpa [#allocation4], 1
    %s826 = scalar_lea.sflag [#allocation4], 1
    %827 = vsyncpa %s826, 1
    %828 = vsyncpa [#allocation6], 1

// kernel: vae_forward.27
$region0: #{vae_forward.27}
  #allocation0 [shape = 'u32[]', space=smem, size = 0x4, offset = 0x4, fixed_abs, tag = 'smem constant byte address 0x4 - core index']
  #allocation1 [shape = 'u32[144,128]{1,0:T(1,128)}', space=vmem, size = 0x12000, scoped, tag = 'internal scratch']
  #allocation2 [shape = 'f32[8,256]{1,0:T(8,128)}', space=vmem, size = 0x2000, scoped, tag = 'scratch operand']
  %s0 = inlined_call_operand.vmem [shape: bf16[8,128], index: 0, kind: input, shape index: {}]
  %s1 = inlined_call_operand.vmem [shape: bf16[128,2048], index: 1, kind: input, shape index: {}]
  %s2 = inlined_call_operand.vmem [shape: f32[1,2048], index: 2, kind: input, shape index: {}]
  %s3 = inlined_call_operand.vmem [shape: bf16[8,2048], index: 3, kind: output, shape index: {}]
  %s4 = sld [smem:[#allocation0]]
  $region91: #{vae_forward.27} parent=0
    _
  %s6 = ssub.s32 1, %s4
  %s7 = scalar_select 0, %s6, %s4
  $region1: #{vae_forward.27} parent=0
    #allocation3 [shape = 'u8[131072]{0}', space=vmem, size = 0x20000, scoped, tag = 'input window, operand 1']
    loop: start=0, step=1, limit=10
    $region2: #{vae_forward.27} parent=1 // loop_pre_header
      _
    $region3: #{vae_forward.27} parent=1 // loop_header
      %s9 = sphi 0, %s13
      %p10 = scmp.ge.s32.totalorder %s9, 10
      %s16 = sphi 0, %s35
      %s17 = sphi 0, %s31
      %s18 = sphi 0, %s27
      %s19 = sphi 0, %s16
      %s20 = sphi 0, %s17
      %s21 = sphi 0, %s18
      %s22 = sphi 0, %s19
      %s23 = sphi 0, %s20
      %s24 = sphi 0, %s21
      %s40 = sphi 0, %s42
      %s43 = sphi 0, %s40
      %s44 = sphi 0, %s43
      %s60 = sphi 0, %s44
      %s68 = sphi 0, %s70
      %s71 = sphi 0, %s68
      %s72 = sphi 0, %s71
      %s88 = sphi 0, %s72
      %s94 = sphi 0, %s96
      %s97 = sphi 0, %s94
      %s98 = sphi 0, %s97
      %s114 = sphi 0, %s98
      %s122 = sphi 0, %s124
      %s125 = sphi 0, %s122
      %s126 = sphi 0, %s125
      %s142 = sphi 0, %s126
    $region4: #{vae_forward.27} parent=1 // loop_header_branch
      %12 = sbr.rel (%p10) target = $region8
    $region5: #{vae_forward.27} parent=1 // loop_body
      %s14 = ssub.s32 %s9, 1
      %s15 = ssub.s32 %s9, 2
      %s25 = sadd.s32 1, %s18
      %p26 = scmp.ge.s32.totalorder %s25, 1
      %s27 = scalar_select %p26, 0, %s25
      %s28 = sadd.s32 1, %s17
      %s29 = scalar_select %p26, %s28, %s17
      %p30 = scmp.ge.s32.totalorder %s29, 8
      %s31 = scalar_select %p30, 0, %s29
      %s32 = sadd.s32 1, %s16
      %s33 = scalar_select %p30, %s32, %s16
      %p34 = scmp.ge.s32.totalorder %s33, 1
      %s35 = scalar_select %p34, 0, %s33
      %s36 = ssub.s32 %s16, %s35
      %s37 = ssub.s32 %s18, %s27
      %s38 = sor.u32 %s36, %s37
      %p39 = scmp.eq.s32.totalorder %s38, 0
      %s41 = sadd.s32 %s40, 1
      %s42 = scalar_select %p39, %s40, %s41
      %p45 = pneg %p39
      %p46 = scmp.eq.s32.totalorder %s9, 7
      %p47 = por %p45, %p46
      %p48 = scmp.ne.s32.totalorder %s40, %s43
      %p49 = scmp.eq.s32.totalorder %s9, 0
      %p50 = por %p48, %p49
      %p51 = scmp.ne.s32.totalorder %s40, %s43
      %p52 = scmp.eq.s32.totalorder %s14, 7
      %p53 = por %p51, %p52
      %p54 = scmp.ne.s32.totalorder %s43, %s44
      %p55 = scmp.eq.s32.totalorder %s14, 0
      %p56 = por %p54, %p55
      %p57 = scmp.ne.s32.totalorder %s43, %s44
      %p58 = scmp.eq.s32.totalorder %s15, 7
      %p59 = por %p57, %p58
      %p61 = scmp.ne.s32.totalorder %s44, %s60
      %p62 = scmp.eq.s32.totalorder %s15, 0
      %p63 = por %p61, %p62
      %s64 = ssub.s32 %s18, %s27
      %s65 = ssub.s32 %s17, %s31
      %s66 = sor.u32 %s64, %s65
      %p67 = scmp.eq.s32.totalorder %s66, 0
      %s69 = sadd.s32 %s68, 1
      %s70 = scalar_select %p67, %s68, %s69
      %p73 = pneg %p67
      %p74 = scmp.eq.s32.totalorder %s9, 7
      %p75 = por %p73, %p74
      %p76 = scmp.ne.s32.totalorder %s68, %s71
      %p77 = scmp.eq.s32.totalorder %s9, 0
      %p78 = por %p76, %p77
      %p79 = scmp.ne.s32.totalorder %s68, %s71
      %p80 = scmp.eq.s32.totalorder %s14, 7
      %p81 = por %p79, %p80
      %p82 = scmp.ne.s32.totalorder %s71, %s72
      %p83 = scmp.eq.s32.totalorder %s14, 0
      %p84 = por %p82, %p83
      %p85 = scmp.ne.s32.totalorder %s71, %s72
      %p86 = scmp.eq.s32.totalorder %s15, 7
      %p87 = por %p85, %p86
      %p89 = scmp.ne.s32.totalorder %s72, %s88
      %p90 = scmp.eq.s32.totalorder %s15, 0
      %p91 = por %p89, %p90
      %s92 = ssub.s32 %s17, %s31
      %p93 = scmp.eq.s32.totalorder %s92, 0
      %s95 = sadd.s32 %s94, 1
      %s96 = scalar_select %p93, %s94, %s95
      %p99 = pneg %p93
      %p100 = scmp.eq.s32.totalorder %s9, 7
      %p101 = por %p99, %p100
      %p102 = scmp.ne.s32.totalorder %s94, %s97
      %p103 = scmp.eq.s32.totalorder %s9, 0
      %p104 = por %p102, %p103
      %p105 = scmp.ne.s32.totalorder %s94, %s97
      %p106 = scmp.eq.s32.totalorder %s14, 7
      %p107 = por %p105, %p106
      %p108 = scmp.ne.s32.totalorder %s97, %s98
      %p109 = scmp.eq.s32.totalorder %s14, 0
      %p110 = por %p108, %p109
      %p111 = scmp.ne.s32.totalorder %s97, %s98
      %p112 = scmp.eq.s32.totalorder %s15, 7
      %p113 = por %p111, %p112
      %p115 = scmp.ne.s32.totalorder %s98, %s114
      %p116 = scmp.eq.s32.totalorder %s15, 0
      %p117 = por %p115, %p116
      %s118 = ssub.s32 %s16, %s35
      %s119 = ssub.s32 %s17, %s31
      %s120 = sor.u32 %s118, %s119
      %p121 = scmp.eq.s32.totalorder %s120, 0
      %s123 = sadd.s32 %s122, 1
      %s124 = scalar_select %p121, %s122, %s123
      %p127 = pneg %p121
      %p128 = scmp.eq.s32.totalorder %s9, 7
      %p129 = por %p127, %p128
      %p130 = scmp.ne.s32.totalorder %s122, %s125
      %p131 = scmp.eq.s32.totalorder %s9, 0
      %p132 = por %p130, %p131
      %p133 = scmp.ne.s32.totalorder %s122, %s125
      %p134 = scmp.eq.s32.totalorder %s14, 7
      %p135 = por %p133, %p134
      %p136 = scmp.ne.s32.totalorder %s125, %s126
      %p137 = scmp.eq.s32.totalorder %s14, 0
      %p138 = por %p136, %p137
      %p139 = scmp.ne.s32.totalorder %s125, %s126
      %p140 = scmp.eq.s32.totalorder %s15, 7
      %p141 = por %p139, %p140
      %p143 = scmp.ne.s32.totalorder %s126, %s142
      %p144 = scmp.eq.s32.totalorder %s15, 0
      %p145 = por %p143, %p144
      %p146 = scmp.le.s32.totalorder 1, %s9
      %p147 = scmp.lt.s32.totalorder %s9, 9
      %p148 = pnand %p146, %p147
      %p149 = pneg %p148
      // Predicated region
      $region9: #{vae_forward.27} parent=5 // pred_check
        _
      $region10: #{vae_forward.27} parent=5 // pred_check_branch
        %151 = sbr.rel (%p148) target = $region12
      $region11: #{vae_forward.27} parent=5 // pred_region
        %s152 = ssub.s32 %s9, 1
        // Predicated region
        $region13: #{vae_forward.27} parent=11 // pred_check
          %p153 = pneg %p56
        $region14: #{vae_forward.27} parent=11 // pred_check_branch
          %155 = sbr.rel (%p153) target = $region16
        $region15: #{vae_forward.27} parent=11 // pred_region
          %p156 = scmp.lt.s32.totalorder %s19, 0
          %s157 = scalar_select %p156, %s19, 0
          %p158 = scmp.lt.s32.totalorder %s21, 0
          %s159 = scalar_select %p158, %s21, 0
          %s160 = sadd.s32 %s159, %s157
          %s161 = smul.addr %s160, 4
          %s162 = scalar_lea.vmem %s0, %s161
        $region16: #{vae_forward.27} parent=11 // pred_fallthru
          _
      $region12: #{vae_forward.27} parent=5 // pred_fallthru
        _
      %p163 = scmp.lt.s32.totalorder %s9, 8
      // Predicated region
      $region17: #{vae_forward.27} parent=5 // pred_check
        %p164 = pneg %p163
      $region18: #{vae_forward.27} parent=5 // pred_check_branch
        %166 = sbr.rel (%p164) target = $region20
      $region19: #{vae_forward.27} parent=5 // pred_region
        // Predicated region
        $region21: #{vae_forward.27} parent=19 // pred_check
          %p167 = pneg %p78
        $region22: #{vae_forward.27} parent=19 // pred_check_branch
          %169 = sbr.rel (%p167) target = $region24
        $region23: #{vae_forward.27} parent=19 // pred_region
          %s170 = sand.u32 %s68, 1
          %s171 = sand.u32 %s68, 1
          %s172 = smul.addr %s171, 128
          %s173 = scalar_lea.vmem [#allocation3], %s172
          %s174 = smul.u32 16, %s18
          %s175 = smul.u32 2, %s17
          %s176 = smul.addr %s174, 16
          %s177 = sadd.s32 %s175, %s176
          %s178 = smul.addr %s177, 4
          %s179 = scalar_lea.vmem %s1, %s178
          // Predicated region
          $region25: #{vae_forward.27} parent=23 // pred_check
            _
          $region26: #{vae_forward.27} parent=23 // pred_check_branch
            %181 = sbr.rel (0) target = $region28
          $region27: #{vae_forward.27} parent=23 // pred_region
            // Predicated region
            $region29: #{vae_forward.27} parent=27 // pred_check
              _
            $region30: #{vae_forward.27} parent=27 // pred_check_branch
              %183 = sbr.rel (0) target = $region32
            $region31: #{vae_forward.27} parent=27 // pred_region
              // Predicated region
              $region44: #{vae_forward.27} parent=31 // pred_check
                _
              $region45: #{vae_forward.27} parent=31 // pred_check_branch
                %228 = sbr.rel (0) target = $region47
              $region46: #{vae_forward.27} parent=31 // pred_region
                loop: start=0, step=1, limit=1
                $region48: #{vae_forward.27} parent=46 // loop_pre_header
                  _
                $region49: #{vae_forward.27} parent=46 // loop_header
                  %s230 = sphi 0, %s234
                  %p231 = scmp.ge.s32.totalorder %s230, 1
                  %s235 = sphi %s179, %s179
                  %s236 = sphi %s173, %s173
                $region50: #{vae_forward.27} parent=46 // loop_header_branch
                  %233 = sbr.rel (%p231) target = $region54
                $region51: #{vae_forward.27} parent=46 // loop_body
                  %v237 = vld [vmem:[%s235] sm:$0xff]
                  %238 = vst [vmem:[%s236] sm:$0xff] %v237
                  %v239 = vld [vmem:[%s235 + $0x40] sm:$0xff]
                  %240 = vst [vmem:[%s236 + $0x8] sm:$0xff] %v239
                  %v241 = vld [vmem:[%s235 + $0x80] sm:$0xff]
                  %242 = vst [vmem:[%s236 + $0x10] sm:$0xff] %v241
                  %v243 = vld [vmem:[%s235 + $0xc0] sm:$0xff]
                  %244 = vst [vmem:[%s236 + $0x18] sm:$0xff] %v243
                  %v245 = vld [vmem:[%s235 + $0x100] sm:$0xff]
                  %246 = vst [vmem:[%s236 + $0x20] sm:$0xff] %v245
                  %v247 = vld [vmem:[%s235 + $0x140] sm:$0xff]
                  %248 = vst [vmem:[%s236 + $0x28] sm:$0xff] %v247
                  %v249 = vld [vmem:[%s235 + $0x180] sm:$0xff]
                  %250 = vst [vmem:[%s236 + $0x30] sm:$0xff] %v249
                  %v251 = vld [vmem:[%s235 + $0x1c0] sm:$0xff]
                  %252 = vst [vmem:[%s236 + $0x38] sm:$0xff] %v251
                  %v253 = vld [vmem:[%s235 + $0x200] sm:$0xff]
                  %254 = vst [vmem:[%s236 + $0x40] sm:$0xff] %v253
                  %v255 = vld [vmem:[%s235 + $0x240] sm:$0xff]
                  %256 = vst [vmem:[%s236 + $0x48] sm:$0xff] %v255
                  %v257 = vld [vmem:[%s235 + $0x280] sm:$0xff]
                  %258 = vst [vmem:[%s236 + $0x50] sm:$0xff] %v257
                  %v259 = vld [vmem:[%s235 + $0x2c0] sm:$0xff]
                  %260 = vst [vmem:[%s236 + $0x58] sm:$0xff] %v259
                  %v261 = vld [vmem:[%s235 + $0x300] sm:$0xff]
                  %262 = vst [vmem:[%s236 + $0x60] sm:$0xff] %v261
                  %v263 = vld [vmem:[%s235 + $0x340] sm:$0xff]
                  %264 = vst [vmem:[%s236 + $0x68] sm:$0xff] %v263
                  %v265 = vld [vmem:[%s235 + $0x380] sm:$0xff]
                  %266 = vst [vmem:[%s236 + $0x70] sm:$0xff] %v265
                  %v267 = vld [vmem:[%s235 + $0x3c0] sm:$0xff]
                  %268 = vst [vmem:[%s236 + $0x78] sm:$0xff] %v267
                $region52: #{vae_forward.27} parent=46 // loop_footer
                  %s234 = sadd.s32 1, %s230
                $region53: #{vae_forward.27} parent=46 // loop_footer_branch
                  %229 = sbr.rel target = $region49
                $region54: #{vae_forward.27} parent=46 // loop_exit
                  _
              $region47: #{vae_forward.27} parent=31 // pred_fallthru
                _
              // Predicated region
              $region55: #{vae_forward.27} parent=31 // pred_check
                _
              $region56: #{vae_forward.27} parent=31 // pred_check_branch
                %270 = sbr.rel target = $region58
              $region57: #{vae_forward.27} parent=31 // pred_region
                _
              $region58: #{vae_forward.27} parent=31 // pred_fallthru
                _
            $region32: #{vae_forward.27} parent=27 // pred_fallthru
              _
            // Predicated region
            $region33: #{vae_forward.27} parent=27 // pred_check
              _
            $region34: #{vae_forward.27} parent=27 // pred_check_branch
              %185 = sbr.rel target = $region36
            $region35: #{vae_forward.27} parent=27 // pred_region
              loop: start=0, step=1, limit=1
              $region37: #{vae_forward.27} parent=35 // loop_pre_header
                _
              $region38: #{vae_forward.27} parent=35 // loop_header
                %s188 = sphi 0, %s192
                %p189 = scmp.ge.s32.totalorder %s188, 1
                %s193 = sphi %s179, %s179
                %s194 = sphi %s173, %s173
              $region39: #{vae_forward.27} parent=35 // loop_header_branch
                %191 = sbr.rel (%p189) target = $region43
              $region40: #{vae_forward.27} parent=35 // loop_body
                %v195 = vld [vmem:[%s193] sm:$0xff]
                %196 = vst [vmem:[%s194] sm:$0xff] %v195
                %v197 = vld [vmem:[%s193 + $0x40] sm:$0xff]
                %198 = vst [vmem:[%s194 + $0x8] sm:$0xff] %v197
                %v199 = vld [vmem:[%s193 + $0x80] sm:$0xff]
                %200 = vst [vmem:[%s194 + $0x10] sm:$0xff] %v199
                %v201 = vld [vmem:[%s193 + $0xc0] sm:$0xff]
                %202 = vst [vmem:[%s194 + $0x18] sm:$0xff] %v201
                %v203 = vld [vmem:[%s193 + $0x100] sm:$0xff]
                %204 = vst [vmem:[%s194 + $0x20] sm:$0xff] %v203
                %v205 = vld [vmem:[%s193 + $0x140] sm:$0xff]
                %206 = vst [vmem:[%s194 + $0x28] sm:$0xff] %v205
                %v207 = vld [vmem:[%s193 + $0x180] sm:$0xff]
                %208 = vst [vmem:[%s194 + $0x30] sm:$0xff] %v207
                %v209 = vld [vmem:[%s193 + $0x1c0] sm:$0xff]
                %210 = vst [vmem:[%s194 + $0x38] sm:$0xff] %v209
                %v211 = vld [vmem:[%s193 + $0x200] sm:$0xff]
                %212 = vst [vmem:[%s194 + $0x40] sm:$0xff] %v211
                %v213 = vld [vmem:[%s193 + $0x240] sm:$0xff]
                %214 = vst [vmem:[%s194 + $0x48] sm:$0xff] %v213
                %v215 = vld [vmem:[%s193 + $0x280] sm:$0xff]
                %216 = vst [vmem:[%s194 + $0x50] sm:$0xff] %v215
                %v217 = vld [vmem:[%s193 + $0x2c0] sm:$0xff]
                %218 = vst [vmem:[%s194 + $0x58] sm:$0xff] %v217
                %v219 = vld [vmem:[%s193 + $0x300] sm:$0xff]
                %220 = vst [vmem:[%s194 + $0x60] sm:$0xff] %v219
                %v221 = vld [vmem:[%s193 + $0x340] sm:$0xff]
                %222 = vst [vmem:[%s194 + $0x68] sm:$0xff] %v221
                %v223 = vld [vmem:[%s193 + $0x380] sm:$0xff]
                %224 = vst [vmem:[%s194 + $0x70] sm:$0xff] %v223
                %v225 = vld [vmem:[%s193 + $0x3c0] sm:$0xff]
                %226 = vst [vmem:[%s194 + $0x78] sm:$0xff] %v225
              $region41: #{vae_forward.27} parent=35 // loop_footer
                %s192 = sadd.s32 1, %s188
              $region42: #{vae_forward.27} parent=35 // loop_footer_branch
                %187 = sbr.rel target = $region38
              $region43: #{vae_forward.27} parent=35 // loop_exit
                _
            $region36: #{vae_forward.27} parent=27 // pred_fallthru
              _
          $region28: #{vae_forward.27} parent=23 // pred_fallthru
            _
          %271 = vnop
        $region24: #{vae_forward.27} parent=19 // pred_fallthru
          _
        // Predicated region
        $region59: #{vae_forward.27} parent=19 // pred_check
          %p272 = pneg %p104
        $region60: #{vae_forward.27} parent=19 // pred_check_branch
          %274 = sbr.rel (%p272) target = $region62
        $region61: #{vae_forward.27} parent=19 // pred_region
          %s275 = smul.u32 2, %s17
          %p276 = scmp.lt.s32.totalorder %s275, 15
          %s277 = scalar_select %p276, %s275, 15
          %s278 = scalar_lea.vmem %s2, %s277
          %s279 = smul.u32 2, %s17
        $region62: #{vae_forward.27} parent=19 // pred_fallthru
          _
      $region20: #{vae_forward.27} parent=5 // pred_fallthru
        _
      %p280 = scmp.le.s32.totalorder 1, %s9
      %p281 = scmp.lt.s32.totalorder %s9, 9
      %p282 = pnand %p280, %p281
      %p283 = pneg %p282
      // Predicated region
      $region63: #{vae_forward.27} parent=5 // pred_check
        _
      $region64: #{vae_forward.27} parent=5 // pred_check_branch
        %285 = sbr.rel (%p282) target = $region66
      $region65: #{vae_forward.27} parent=5 // pred_region
        %s286 = ssub.s32 %s9, 1
        %s287 = sand.u32 %s71, 1
        %s288 = sand.u32 %s71, 1
        %s289 = smul.addr %s288, 128
        %s290 = scalar_lea.vmem [#allocation3], %s289
        // Predicated region
        $region67: #{vae_forward.27} parent=65 // pred_check
          %p291 = pneg %p84
        $region68: #{vae_forward.27} parent=65 // pred_check_branch
          %293 = sbr.rel (%p291) target = $region70
        $region69: #{vae_forward.27} parent=65 // pred_region
          _
        $region70: #{vae_forward.27} parent=65 // pred_fallthru
          _
        %p294 = scmp.lt.s32.totalorder %s19, 0
        %s295 = scalar_select %p294, %s19, 0
        %p296 = scmp.lt.s32.totalorder %s21, 0
        %s297 = scalar_select %p296, %s21, 0
        %s298 = sadd.s32 %s297, %s295
        %s299 = smul.addr %s298, 4
        %s300 = scalar_lea.vmem %s0, %s299
        %p301 = pneg %p56
        %p302 = pneg %p53
        %s303 = sand.u32 %s71, 1
        %s304 = sand.u32 %s71, 1
        %s305 = smul.addr %s304, 128
        %s306 = scalar_lea.vmem [#allocation3], %s305
        %p307 = pneg %p84
        %p308 = pneg %p81
        %s309 = smul.u32 2, %s20
        %p310 = scmp.lt.s32.totalorder %s309, 15
        %s311 = scalar_select %p310, %s309, 15
        %s312 = scalar_lea.vmem %s2, %s311
        %p313 = pneg %p110
        %p314 = pneg %p107
        %p315 = pneg %p138
        %p316 = pneg %p135
        %s317 = smul.u32 2, %s20
        %p318 = scmp.lt.s32.totalorder %s19, 0
        %s319 = scalar_select %p318, %s19, 0
        %p320 = scmp.lt.s32.totalorder %s317, 15
        %s321 = scalar_select %p320, %s317, 15
        %s322 = smul.addr %s319, 16
        %s323 = sadd.s32 %s321, %s322
        %s324 = smul.addr %s323, 4
        %s325 = scalar_lea.vmem %s3, %s324
        %p326 = scmp.lt.s32.totalorder %s19, 0
        %s327 = scalar_select %p326, %s19, 0
        %p328 = scmp.lt.s32.totalorder %s21, 0
        %s329 = scalar_select %p328, %s21, 0
        %s330 = sadd.s32 %s329, %s327
        %s331 = smul.addr %s330, 4
        %s332 = scalar_lea.vmem %s0, %s331
        %s333 = smul.u32 16, %s21
        %s334 = smul.u32 2, %s20
        %s335 = smul.u32 2, %s20
        %p336 = scmp.lt.s32.totalorder %s335, 15
        %s337 = scalar_select %p336, %s335, 15
        %s338 = scalar_lea.vmem %s2, %s337
        %s339 = smul.u32 2, %s20
        %s340 = smul.u32 2, %s20
        %p341 = scmp.lt.s32.totalorder %s19, 0
        %s342 = scalar_select %p341, %s19, 0
        %p343 = scmp.lt.s32.totalorder %s340, 15
        %s344 = scalar_select %p343, %s340, 15
        %s345 = smul.addr %s342, 16
        %s346 = sadd.s32 %s344, %s345
        %s347 = smul.addr %s346, 4
        %s348 = scalar_lea.vmem %s3, %s347
        %s349 = smul.u32 2, %s20
        %p351 = scmp.eq.s32.totalorder %s21, 0
        // Predicated region
        $region71: #{vae_forward.27} parent=65 // pred_check
          %p352 = pneg %p351
        $region72: #{vae_forward.27} parent=65 // pred_check_branch
          %354 = sbr.rel (%p352) target = $region74
        $region73: #{vae_forward.27} parent=65 // pred_region
          %355 = vst [vmem:[#allocation2] sm:$0xff] 0.0
          %356 = vst [vmem:[#allocation2 + $0x8] sm:$0xff] 0.0
        $region74: #{vae_forward.27} parent=65 // pred_fallthru
          _
        %v357 = vld [vmem:[#allocation2] sm:$0xff]
        %v358 = vld [vmem:[#allocation2 + $0x8] sm:$0xff]
        %v359 = vld [vmem:[%s332] sm:$0xf]
        %v360 = vld [vmem:[%s290] sm:$0xff]
        %v361 = vld [vmem:[%s290 + $0x8] sm:$0xff]
        %v362 = vld [vmem:[%s290 + $0x10] sm:$0xff]
        %v363 = vld [vmem:[%s290 + $0x18] sm:$0xff]
        %v364 = vld [vmem:[%s290 + $0x20] sm:$0xff]
        %v365 = vld [vmem:[%s290 + $0x28] sm:$0xff]
        %v366 = vld [vmem:[%s290 + $0x30] sm:$0xff]
        %v367 = vld [vmem:[%s290 + $0x38] sm:$0xff]
        %v368 = vld [vmem:[%s290 + $0x40] sm:$0xff]
        %v369 = vld [vmem:[%s290 + $0x48] sm:$0xff]
        %v370 = vld [vmem:[%s290 + $0x50] sm:$0xff]
        %v371 = vld [vmem:[%s290 + $0x58] sm:$0xff]
        %v372 = vld [vmem:[%s290 + $0x60] sm:$0xff]
        %v373 = vld [vmem:[%s290 + $0x68] sm:$0xff]
        %v374 = vld [vmem:[%s290 + $0x70] sm:$0xff]
        %v375 = vld [vmem:[%s290 + $0x78] sm:$0xff]
        %v392 = vunpack.c.l.b16 %v360
        %v393 = vunpack.c.h.b16 %v360
        %v394 = vunpack.c.l.b16 %v361
        %v395 = vunpack.c.h.b16 %v361
        %v396 = vunpack.c.l.b16 %v362
        %v397 = vunpack.c.h.b16 %v362
        %v398 = vunpack.c.l.b16 %v363
        %v399 = vunpack.c.h.b16 %v363
        %v400 = vunpack.c.l.b16 %v364
        %v401 = vunpack.c.h.b16 %v364
        %v402 = vunpack.c.l.b16 %v365
        %v403 = vunpack.c.h.b16 %v365
        %v404 = vunpack.c.l.b16 %v366
        %v405 = vunpack.c.h.b16 %v366
        %v406 = vunpack.c.l.b16 %v367
        %v407 = vunpack.c.h.b16 %v367
        %v408 = vunpack.c.l.b16 %v368
        %v409 = vunpack.c.h.b16 %v368
        %v410 = vunpack.c.l.b16 %v369
        %v411 = vunpack.c.h.b16 %v369
        %v412 = vunpack.c.l.b16 %v370
        %v413 = vunpack.c.h.b16 %v370
        %v414 = vunpack.c.l.b16 %v371
        %v415 = vunpack.c.h.b16 %v371
        %v416 = vunpack.c.l.b16 %v372
        %v417 = vunpack.c.h.b16 %v372
        %v418 = vunpack.c.l.b16 %v373
        %v419 = vunpack.c.h.b16 %v373
        %v420 = vunpack.c.l.b16 %v374
        %v421 = vunpack.c.h.b16 %v374
        %v422 = vunpack.c.l.b16 %v375
        %v423 = vunpack.c.h.b16 %v375
        %v424 = vpack.c.b16 %v394, %v392
        %v425 = vpack.c.b16 %v395, %v393
        %v426 = vpack.c.b16 %v398, %v396
        %v427 = vpack.c.b16 %v399, %v397
        %v428 = vpack.c.b16 %v402, %v400
        %v429 = vpack.c.b16 %v403, %v401
        %v430 = vpack.c.b16 %v406, %v404
        %v431 = vpack.c.b16 %v407, %v405
        %v432 = vpack.c.b16 %v410, %v408
        %v433 = vpack.c.b16 %v411, %v409
        %v434 = vpack.c.b16 %v414, %v412
        %v435 = vpack.c.b16 %v415, %v413
        %v436 = vpack.c.b16 %v418, %v416
        %v437 = vpack.c.b16 %v419, %v417
        %v438 = vpack.c.b16 %v422, %v420
        %v439 = vpack.c.b16 %v423, %v421
        %456 = vmatprep.subr.bf16.mxu0 %v425
        %457 = vmatpush1.bf16.msra.mxu0 %v424
        %458 = vmatprep.subr.bf16.mxu0 %v427
        %459 = vmatpush1.bf16.msra.mxu0 %v426
        %460 = vmatprep.subr.bf16.mxu0 %v429
        %461 = vmatpush1.bf16.msra.mxu0 %v428
        %462 = vmatprep.subr.bf16.mxu0 %v431
        %463 = vmatpush1.bf16.msra.mxu0 %v430
        %464 = vmatprep.subr.bf16.mxu0 %v433
        %465 = vmatpush1.bf16.msra.mxu0 %v432
        %466 = vmatprep.subr.bf16.mxu0 %v435
        %467 = vmatpush1.bf16.msra.mxu0 %v434
        %468 = vmatprep.subr.bf16.mxu0 %v437
        %469 = vmatpush1.bf16.msra.mxu0 %v436
        %470 = vmatprep.subr.bf16.mxu0 %v439
        %471 = vmatpush1.bf16.msra.mxu0 %v438
        %472 = vmatprep.subr.bf16.mxu0 0
        %473 = vmatpush1.bf16.msra.mxu0 0
        %474 = vmatprep.subr.bf16.mxu0 0
        %475 = vmatpush1.bf16.msra.mxu0 0
        %476 = vmatprep.subr.bf16.mxu0 0
        %477 = vmatpush1.bf16.msra.mxu0 0
        %478 = vmatprep.subr.bf16.mxu0 0
        %479 = vmatpush1.bf16.msra.mxu0 0
        %480 = vmatprep.subr.bf16.mxu0 0
        %481 = vmatpush1.bf16.msra.mxu0 0
        %482 = vmatprep.subr.bf16.mxu0 0
        %483 = vmatpush1.bf16.msra.mxu0 0
        %484 = vmatprep.subr.bf16.mxu0 0
        %485 = vmatpush1.bf16.msra.mxu0 0
        %486 = vmatprep.subr.bf16.mxu0 0
        %487 = vmatpush1.bf16.msra.mxu0 0
        %488 = vmatprep.mubr.bf16.mxu0 0
        %489 = vmatmul.mubr.bf16.gmra.mrb[0].mxu0 %v359
        %v490 = vpop.f32.mrb[0].mxu0
        %v491 = vadd.f32 0.0, %v490
        %v492 = vpop.f32.mrb[0].mxu0
        %v493 = vadd.f32 0.0, %v492
        %v494 = vpop.f32.mrb[0].mxu0
        %v495 = vpop.f32.mrb[0].mxu0
        %496 = vdwg.mxu0
        %v497 = vadd.f32 %v357, %v491
        %v498 = vadd.f32 %v358, %v493
        %499 = vst [vmem:[#allocation2] sm:$0xff] %v497
        %500 = vst [vmem:[#allocation2 + $0x8] sm:$0xff] %v498
        // Predicated region
        $region75: #{vae_forward.27} parent=65 // pred_check
          %p501 = pneg %p351
        $region76: #{vae_forward.27} parent=65 // pred_check_branch
          %503 = sbr.rel (%p501) target = $region78
        $region77: #{vae_forward.27} parent=65 // pred_region
          %v504 = vld [vmem:[#allocation2] sm:$0xff]
          %v505 = vld [vmem:[#allocation2 + $0x8] sm:$0xff]
          %v506 = vld [vmem:[%s338] sm:$0x3]
          %v508 = vlaneseq
          %v509 = vshrl.u32 %v508, 7
          %v510 = vsub.s32 0, %v509
          %v511 = vrot.slane %v506, %v510
          %v512 = vlaneseq
          %v513 = vshrl.u32 %v512, 7
          %v514 = vsub.s32 1, %v513
          %v515 = vrot.slane %v506, %v514
          %v518 = vadd.f32 %v504, %v511
          %v519 = vadd.f32 %v505, %v515
          %v520 = vpack.c.bf16 %v518, %v518
          %v521 = vpack.c.bf16 %v519, %v519
          %v524 = vunpack.c.l.b16 %v520
          %v525 = vunpack.c.l.b16 %v521
          %v526 = vpack.c.b16 %v525, %v524
          %528 = vst [vmem:[%s348] sm:$0xff] %v526
        $region78: #{vae_forward.27} parent=65 // pred_fallthru
          _
        %s529 = smul.u32 2, %s20
        %p530 = scmp.lt.s32.totalorder %s19, 0
        %s531 = scalar_select %p530, %s19, 0
        %p532 = scmp.lt.s32.totalorder %s529, 15
        %s533 = scalar_select %p532, %s529, 15
        %s534 = smul.addr %s531, 16
        %s535 = sadd.s32 %s533, %s534
        %s536 = smul.addr %s535, 4
        %s537 = scalar_lea.vmem %s3, %s536
        // Predicated region
        $region79: #{vae_forward.27} parent=65 // pred_check
          %p538 = pneg %p135
        $region80: #{vae_forward.27} parent=65 // pred_check_branch
          %540 = sbr.rel (%p538) target = $region82
        $region81: #{vae_forward.27} parent=65 // pred_region
          %s541 = smul.u32 2, %s20
        $region82: #{vae_forward.27} parent=65 // pred_fallthru
          _
      $region66: #{vae_forward.27} parent=5 // pred_fallthru
        _
      %p542 = scmp.le.s32.totalorder 2, %s9
      // Predicated region
      $region83: #{vae_forward.27} parent=5 // pred_check
        %p543 = pneg %p542
      $region84: #{vae_forward.27} parent=5 // pred_check_branch
        %545 = sbr.rel (%p543) target = $region86
      $region85: #{vae_forward.27} parent=5 // pred_region
        %s546 = ssub.s32 %s9, 2
        // Predicated region
        $region87: #{vae_forward.27} parent=85 // pred_check
          %p547 = pneg %p141
        $region88: #{vae_forward.27} parent=85 // pred_check_branch
          %549 = sbr.rel (%p547) target = $region90
        $region89: #{vae_forward.27} parent=85 // pred_region
          %s550 = smul.u32 2, %s23
          %p551 = scmp.lt.s32.totalorder %s22, 0
          %s552 = scalar_select %p551, %s22, 0
          %p553 = scmp.lt.s32.totalorder %s550, 15
          %s554 = scalar_select %p553, %s550, 15
          %s555 = smul.addr %s552, 16
          %s556 = sadd.s32 %s554, %s555
          %s557 = smul.addr %s556, 4
          %s558 = scalar_lea.vmem %s3, %s557
        $region90: #{vae_forward.27} parent=85 // pred_fallthru
          _
      $region86: #{vae_forward.27} parent=5 // pred_fallthru
        _
    $region6: #{vae_forward.27} parent=1 // loop_footer
      %s13 = sadd.s32 1, %s9
    $region7: #{vae_forward.27} parent=1 // loop_footer_branch
      %8 = sbr.rel target = $region3
    $region8: #{vae_forward.27} parent=1 // loop_exit
      _

// kernel: vae_forward.28
$region0: #{vae_forward.28}
  #allocation0 [shape = 'u32[]', space=smem, size = 0x4, offset = 0x4, fixed_abs, tag = 'smem constant byte address 0x4 - core index']
  #allocation1 [shape = 'u32[144,128]{1,0:T(1,128)}', space=vmem, size = 0x12000, scoped, tag = 'internal scratch']
  #allocation2 [shape = 'f32[8,256]{1,0:T(8,128)}', space=vmem, size = 0x2000, scoped, tag = 'scratch operand']
  %s0 = inlined_call_operand.vmem [shape: bf16[8,2048], index: 0, kind: input, shape index: {}]
  %s1 = inlined_call_operand.vmem [shape: bf16[2048,256], index: 1, kind: input, shape index: {}]
  %s2 = inlined_call_operand.vmem [shape: f32[1,256], index: 2, kind: input, shape index: {}]
  %s3 = inlined_call_operand.vmem [shape: bf16[8,256], index: 3, kind: output, shape index: {}]
  %s4 = sld [smem:[#allocation0]]
  $region53: #{vae_forward.28} parent=0
    _
  %s6 = ssub.s32 1, %s4
  %s7 = scalar_select 0, %s6, %s4
  loop: start=0, step=1, limit=6
  $region2: #{vae_forward.28} parent=0 // loop_pre_header
    _
  $region3: #{vae_forward.28} parent=0 // loop_header
    %s9 = sphi 0, %s13
    %p10 = scmp.ge.s32.totalorder %s9, 6
    %s16 = sphi 0, %s35
    %s17 = sphi 0, %s31
    %s18 = sphi 0, %s27
    %s19 = sphi 0, %s16
    %s20 = sphi 0, %s17
    %s21 = sphi 0, %s18
    %s22 = sphi 0, %s19
    %s23 = sphi 0, %s20
    %s24 = sphi 0, %s21
    %s40 = sphi 0, %s42
    %s43 = sphi 0, %s40
    %s44 = sphi 0, %s43
    %s60 = sphi 0, %s44
    %s68 = sphi 0, %s70
    %s71 = sphi 0, %s68
    %s72 = sphi 0, %s71
    %s88 = sphi 0, %s72
    %s94 = sphi 0, %s96
    %s97 = sphi 0, %s94
    %s98 = sphi 0, %s97
    %s114 = sphi 0, %s98
    %s122 = sphi 0, %s124
    %s125 = sphi 0, %s122
    %s126 = sphi 0, %s125
    %s142 = sphi 0, %s126
  $region4: #{vae_forward.28} parent=0 // loop_header_branch
    %12 = sbr.rel (%p10) target = $region8
  $region5: #{vae_forward.28} parent=0 // loop_body
    %s14 = ssub.s32 %s9, 1
    %s15 = ssub.s32 %s9, 2
    %s25 = sadd.s32 1, %s18
    %p26 = scmp.ge.s32.totalorder %s25, 4
    %s27 = scalar_select %p26, 0, %s25
    %s28 = sadd.s32 1, %s17
    %s29 = scalar_select %p26, %s28, %s17
    %p30 = scmp.ge.s32.totalorder %s29, 1
    %s31 = scalar_select %p30, 0, %s29
    %s32 = sadd.s32 1, %s16
    %s33 = scalar_select %p30, %s32, %s16
    %p34 = scmp.ge.s32.totalorder %s33, 1
    %s35 = scalar_select %p34, 0, %s33
    %s36 = ssub.s32 %s16, %s35
    %s37 = ssub.s32 %s18, %s27
    %s38 = sor.u32 %s36, %s37
    %p39 = scmp.eq.s32.totalorder %s38, 0
    %s41 = sadd.s32 %s40, 1
    %s42 = scalar_select %p39, %s40, %s41
    %p45 = pneg %p39
    %p46 = scmp.eq.s32.totalorder %s9, 3
    %p47 = por %p45, %p46
    %p48 = scmp.ne.s32.totalorder %s40, %s43
    %p49 = scmp.eq.s32.totalorder %s9, 0
    %p50 = por %p48, %p49
    %p51 = scmp.ne.s32.totalorder %s40, %s43
    %p52 = scmp.eq.s32.totalorder %s14, 3
    %p53 = por %p51, %p52
    %p54 = scmp.ne.s32.totalorder %s43, %s44
    %p55 = scmp.eq.s32.totalorder %s14, 0
    %p56 = por %p54, %p55
    %p57 = scmp.ne.s32.totalorder %s43, %s44
    %p58 = scmp.eq.s32.totalorder %s15, 3
    %p59 = por %p57, %p58
    %p61 = scmp.ne.s32.totalorder %s44, %s60
    %p62 = scmp.eq.s32.totalorder %s15, 0
    %p63 = por %p61, %p62
    %s64 = ssub.s32 %s18, %s27
    %s65 = ssub.s32 %s17, %s31
    %s66 = sor.u32 %s64, %s65
    %p67 = scmp.eq.s32.totalorder %s66, 0
    %s69 = sadd.s32 %s68, 1
    %s70 = scalar_select %p67, %s68, %s69
    %p73 = pneg %p67
    %p74 = scmp.eq.s32.totalorder %s9, 3
    %p75 = por %p73, %p74
    %p76 = scmp.ne.s32.totalorder %s68, %s71
    %p77 = scmp.eq.s32.totalorder %s9, 0
    %p78 = por %p76, %p77
    %p79 = scmp.ne.s32.totalorder %s68, %s71
    %p80 = scmp.eq.s32.totalorder %s14, 3
    %p81 = por %p79, %p80
    %p82 = scmp.ne.s32.totalorder %s71, %s72
    %p83 = scmp.eq.s32.totalorder %s14, 0
    %p84 = por %p82, %p83
    %p85 = scmp.ne.s32.totalorder %s71, %s72
    %p86 = scmp.eq.s32.totalorder %s15, 3
    %p87 = por %p85, %p86
    %p89 = scmp.ne.s32.totalorder %s72, %s88
    %p90 = scmp.eq.s32.totalorder %s15, 0
    %p91 = por %p89, %p90
    %s92 = ssub.s32 %s17, %s31
    %p93 = scmp.eq.s32.totalorder %s92, 0
    %s95 = sadd.s32 %s94, 1
    %s96 = scalar_select %p93, %s94, %s95
    %p99 = pneg %p93
    %p100 = scmp.eq.s32.totalorder %s9, 3
    %p101 = por %p99, %p100
    %p102 = scmp.ne.s32.totalorder %s94, %s97
    %p103 = scmp.eq.s32.totalorder %s9, 0
    %p104 = por %p102, %p103
    %p105 = scmp.ne.s32.totalorder %s94, %s97
    %p106 = scmp.eq.s32.totalorder %s14, 3
    %p107 = por %p105, %p106
    %p108 = scmp.ne.s32.totalorder %s97, %s98
    %p109 = scmp.eq.s32.totalorder %s14, 0
    %p110 = por %p108, %p109
    %p111 = scmp.ne.s32.totalorder %s97, %s98
    %p112 = scmp.eq.s32.totalorder %s15, 3
    %p113 = por %p111, %p112
    %p115 = scmp.ne.s32.totalorder %s98, %s114
    %p116 = scmp.eq.s32.totalorder %s15, 0
    %p117 = por %p115, %p116
    %s118 = ssub.s32 %s16, %s35
    %s119 = ssub.s32 %s17, %s31
    %s120 = sor.u32 %s118, %s119
    %p121 = scmp.eq.s32.totalorder %s120, 0
    %s123 = sadd.s32 %s122, 1
    %s124 = scalar_select %p121, %s122, %s123
    %p127 = pneg %p121
    %p128 = scmp.eq.s32.totalorder %s9, 3
    %p129 = por %p127, %p128
    %p130 = scmp.ne.s32.totalorder %s122, %s125
    %p131 = scmp.eq.s32.totalorder %s9, 0
    %p132 = por %p130, %p131
    %p133 = scmp.ne.s32.totalorder %s122, %s125
    %p134 = scmp.eq.s32.totalorder %s14, 3
    %p135 = por %p133, %p134
    %p136 = scmp.ne.s32.totalorder %s125, %s126
    %p137 = scmp.eq.s32.totalorder %s14, 0
    %p138 = por %p136, %p137
    %p139 = scmp.ne.s32.totalorder %s125, %s126
    %p140 = scmp.eq.s32.totalorder %s15, 3
    %p141 = por %p139, %p140
    %p143 = scmp.ne.s32.totalorder %s126, %s142
    %p144 = scmp.eq.s32.totalorder %s15, 0
    %p145 = por %p143, %p144
    %p146 = scmp.le.s32.totalorder 1, %s9
    %p147 = scmp.lt.s32.totalorder %s9, 5
    %p148 = pnand %p146, %p147
    %p149 = pneg %p148
    // Predicated region
    $region9: #{vae_forward.28} parent=5 // pred_check
      _
    $region10: #{vae_forward.28} parent=5 // pred_check_branch
      %151 = sbr.rel (%p148) target = $region12
    $region11: #{vae_forward.28} parent=5 // pred_region
      %s152 = ssub.s32 %s9, 1
      // Predicated region
      $region13: #{vae_forward.28} parent=11 // pred_check
        %p153 = pneg %p110
      $region14: #{vae_forward.28} parent=11 // pred_check_branch
        %155 = sbr.rel (%p153) target = $region16
      $region15: #{vae_forward.28} parent=11 // pred_region
        %s156 = smul.u32 2, %s20
        %p157 = scmp.lt.s32.totalorder %s156, 1
        %s158 = scalar_select %p157, %s156, 1
        %s159 = scalar_lea.vmem %s2, %s158
        %s160 = smul.u32 2, %s20
      $region16: #{vae_forward.28} parent=11 // pred_fallthru
        _
    $region12: #{vae_forward.28} parent=5 // pred_fallthru
      _
    %p161 = scmp.lt.s32.totalorder %s9, 4
    // Predicated region
    $region17: #{vae_forward.28} parent=5 // pred_check
      %p162 = pneg %p161
    $region18: #{vae_forward.28} parent=5 // pred_check_branch
      %164 = sbr.rel (%p162) target = $region20
    $region19: #{vae_forward.28} parent=5 // pred_region
      // Predicated region
      $region21: #{vae_forward.28} parent=19 // pred_check
        %p165 = pneg %p50
      $region22: #{vae_forward.28} parent=19 // pred_check_branch
        %167 = sbr.rel (%p165) target = $region24
      $region23: #{vae_forward.28} parent=19 // pred_region
        %s168 = smul.u32 4, %s18
        %p169 = scmp.lt.s32.totalorder %s16, 0
        %s170 = scalar_select %p169, %s16, 0
        %p171 = scmp.lt.s32.totalorder %s168, 15
        %s172 = scalar_select %p171, %s168, 15
        %s173 = smul.addr %s170, 16
        %s174 = sadd.s32 %s172, %s173
        %s175 = smul.addr %s174, 4
        %s176 = scalar_lea.vmem %s0, %s175
        %s177 = smul.u32 4, %s18
      $region24: #{vae_forward.28} parent=19 // pred_fallthru
        _
      // Predicated region
      $region25: #{vae_forward.28} parent=19 // pred_check
        %p178 = pneg %p78
      $region26: #{vae_forward.28} parent=19 // pred_check_branch
        %180 = sbr.rel (%p178) target = $region28
      $region27: #{vae_forward.28} parent=19 // pred_region
        %s181 = smul.u32 64, %s18
        %s182 = smul.u32 2, %s17
        %p183 = scmp.lt.s32.totalorder %s181, 255
        %s184 = scalar_select %p183, %s181, 255
        %p185 = scmp.lt.s32.totalorder %s182, 1
        %s186 = scalar_select %p185, %s182, 1
        %s187 = smul.addr %s184, 2
        %s188 = sadd.s32 %s186, %s187
        %s189 = smul.addr %s188, 4
        %s190 = scalar_lea.vmem %s1, %s189
        %s191 = smul.u32 64, %s18
        %s192 = smul.u32 2, %s17
      $region28: #{vae_forward.28} parent=19 // pred_fallthru
        _
    $region20: #{vae_forward.28} parent=5 // pred_fallthru
      _
    %p193 = scmp.le.s32.totalorder 1, %s9
    %p194 = scmp.lt.s32.totalorder %s9, 5
    %p195 = pnand %p193, %p194
    %p196 = pneg %p195
    // Predicated region
    $region29: #{vae_forward.28} parent=5 // pred_check
      _
    $region30: #{vae_forward.28} parent=5 // pred_check_branch
      %198 = sbr.rel (%p195) target = $region32
    $region31: #{vae_forward.28} parent=5 // pred_region
      %s199 = ssub.s32 %s9, 1
      %s200 = smul.u32 4, %s21
      %p201 = scmp.lt.s32.totalorder %s19, 0
      %s202 = scalar_select %p201, %s19, 0
      %p203 = scmp.lt.s32.totalorder %s200, 15
      %s204 = scalar_select %p203, %s200, 15
      %s205 = smul.addr %s202, 16
      %s206 = sadd.s32 %s204, %s205
      %s207 = smul.addr %s206, 4
      %s208 = scalar_lea.vmem %s0, %s207
      %p209 = pneg %p56
      %p210 = pneg %p53
      %s211 = smul.u32 64, %s21
      %s212 = smul.u32 2, %s20
      %p213 = scmp.lt.s32.totalorder %s211, 255
      %s214 = scalar_select %p213, %s211, 255
      %p215 = scmp.lt.s32.totalorder %s212, 1
      %s216 = scalar_select %p215, %s212, 1
      %s217 = smul.addr %s214, 2
      %s218 = sadd.s32 %s216, %s217
      %s219 = smul.addr %s218, 4
      %s220 = scalar_lea.vmem %s1, %s219
      %p221 = pneg %p84
      %p222 = pneg %p81
      %s223 = smul.u32 2, %s20
      %p224 = scmp.lt.s32.totalorder %s223, 1
      %s225 = scalar_select %p224, %s223, 1
      %s226 = scalar_lea.vmem %s2, %s225
      %p227 = pneg %p110
      %p228 = pneg %p107
      %p229 = pneg %p138
      %p230 = pneg %p135
      %s231 = smul.u32 2, %s20
      %p232 = scmp.lt.s32.totalorder %s19, 0
      %s233 = scalar_select %p232, %s19, 0
      %p234 = scmp.lt.s32.totalorder %s231, 1
      %s235 = scalar_select %p234, %s231, 1
      %s236 = smul.addr %s233, 2
      %s237 = sadd.s32 %s235, %s236
      %s238 = smul.addr %s237, 4
      %s239 = scalar_lea.vmem %s3, %s238
      %s240 = smul.u32 4, %s21
      %p241 = scmp.lt.s32.totalorder %s19, 0
      %s242 = scalar_select %p241, %s19, 0
      %p243 = scmp.lt.s32.totalorder %s240, 15
      %s244 = scalar_select %p243, %s240, 15
      %s245 = smul.addr %s242, 16
      %s246 = sadd.s32 %s244, %s245
      %s247 = smul.addr %s246, 4
      %s248 = scalar_lea.vmem %s0, %s247
      %s249 = smul.u32 4, %s21
      %s250 = smul.u32 64, %s21
      %s251 = smul.u32 2, %s20
      %p252 = scmp.lt.s32.totalorder %s250, 255
      %s253 = scalar_select %p252, %s250, 255
      %p254 = scmp.lt.s32.totalorder %s251, 1
      %s255 = scalar_select %p254, %s251, 1
      %s256 = smul.addr %s253, 2
      %s257 = sadd.s32 %s255, %s256
      %s258 = smul.addr %s257, 4
      %s259 = scalar_lea.vmem %s1, %s258
      %s260 = smul.u32 64, %s21
      %s261 = smul.u32 2, %s20
      %s262 = smul.u32 2, %s20
      %p263 = scmp.lt.s32.totalorder %s262, 1
      %s264 = scalar_select %p263, %s262, 1
      %s265 = scalar_lea.vmem %s2, %s264
      %s266 = smul.u32 2, %s20
      %s267 = smul.u32 2, %s20
      %p268 = scmp.lt.s32.totalorder %s19, 0
      %s269 = scalar_select %p268, %s19, 0
      %p270 = scmp.lt.s32.totalorder %s267, 1
      %s271 = scalar_select %p270, %s267, 1
      %s272 = smul.addr %s269, 2
      %s273 = sadd.s32 %s271, %s272
      %s274 = smul.addr %s273, 4
      %s275 = scalar_lea.vmem %s3, %s274
      %s276 = smul.u32 2, %s20
      %p277 = scmp.eq.s32.totalorder %s21, 0
      // Predicated region
      $region33: #{vae_forward.28} parent=31 // pred_check
        %p278 = pneg %p277
      $region34: #{vae_forward.28} parent=31 // pred_check_branch
        %280 = sbr.rel (%p278) target = $region36
      $region35: #{vae_forward.28} parent=31 // pred_region
        %281 = vst [vmem:[#allocation2] sm:$0xff] 0.0
        %282 = vst [vmem:[#allocation2 + $0x8] sm:$0xff] 0.0
      $region36: #{vae_forward.28} parent=31 // pred_fallthru
        _
      %v283 = vld [vmem:[#allocation2] sm:$0xff]
      %v284 = vld [vmem:[#allocation2 + $0x8] sm:$0xff]
      %v285 = vld [vmem:[%s248] sm:$0xff]
      %v286 = vld [vmem:[%s248 + $0x8] sm:$0xff]
      %v287 = vld [vmem:[%s259] sm:$0xff]
      %v288 = vld [vmem:[%s259 + $0x8] sm:$0xff]
      %v289 = vld [vmem:[%s259 + $0x10] sm:$0xff]
      %v290 = vld [vmem:[%s259 + $0x18] sm:$0xff]
      %v291 = vld [vmem:[%s259 + $0x20] sm:$0xff]
      %v292 = vld [vmem:[%s259 + $0x28] sm:$0xff]
      %v293 = vld [vmem:[%s259 + $0x30] sm:$0xff]
      %v294 = vld [vmem:[%s259 + $0x38] sm:$0xff]
      %v295 = vld [vmem:[%s259 + $0x40] sm:$0xff]
      %v296 = vld [vmem:[%s259 + $0x48] sm:$0xff]
      %v297 = vld [vmem:[%s259 + $0x50] sm:$0xff]
      %v298 = vld [vmem:[%s259 + $0x58] sm:$0xff]
      %v299 = vld [vmem:[%s259 + $0x60] sm:$0xff]
      %v300 = vld [vmem:[%s259 + $0x68] sm:$0xff]
      %v301 = vld [vmem:[%s259 + $0x70] sm:$0xff]
      %v302 = vld [vmem:[%s259 + $0x78] sm:$0xff]
      %v303 = vld [vmem:[%s259 + $0x80] sm:$0xff]
      %v304 = vld [vmem:[%s259 + $0x88] sm:$0xff]
      %v305 = vld [vmem:[%s259 + $0x90] sm:$0xff]
      %v306 = vld [vmem:[%s259 + $0x98] sm:$0xff]
      %v307 = vld [vmem:[%s259 + $0xa0] sm:$0xff]
      %v308 = vld [vmem:[%s259 + $0xa8] sm:$0xff]
      %v309 = vld [vmem:[%s259 + $0xb0] sm:$0xff]
      %v310 = vld [vmem:[%s259 + $0xb8] sm:$0xff]
      %v311 = vld [vmem:[%s259 + $0xc0] sm:$0xff]
      %v312 = vld [vmem:[%s259 + $0xc8] sm:$0xff]
      %v313 = vld [vmem:[%s259 + $0xd0] sm:$0xff]
      %v314 = vld [vmem:[%s259 + $0xd8] sm:$0xff]
      %v315 = vld [vmem:[%s259 + $0xe0] sm:$0xff]
      %v316 = vld [vmem:[%s259 + $0xe8] sm:$0xff]
      %v317 = vld [vmem:[%s259 + $0xf0] sm:$0xff]
      %v318 = vld [vmem:[%s259 + $0xf8] sm:$0xff]
      %v319 = vld [vmem:[%s259 + $0x100] sm:$0xff]
      %v320 = vld [vmem:[%s259 + $0x108] sm:$0xff]
      %v321 = vld [vmem:[%s259 + $0x110] sm:$0xff]
      %v322 = vld [vmem:[%s259 + $0x118] sm:$0xff]
      %v323 = vld [vmem:[%s259 + $0x120] sm:$0xff]
      %v324 = vld [vmem:[%s259 + $0x128] sm:$0xff]
      %v325 = vld [vmem:[%s259 + $0x130] sm:$0xff]
      %v326 = vld [vmem:[%s259 + $0x138] sm:$0xff]
      %v327 = vld [vmem:[%s259 + $0x140] sm:$0xff]
      %v328 = vld [vmem:[%s259 + $0x148] sm:$0xff]
      %v329 = vld [vmem:[%s259 + $0x150] sm:$0xff]
      %v330 = vld [vmem:[%s259 + $0x158] sm:$0xff]
      %v331 = vld [vmem:[%s259 + $0x160] sm:$0xff]
      %v332 = vld [vmem:[%s259 + $0x168] sm:$0xff]
      %v333 = vld [vmem:[%s259 + $0x170] sm:$0xff]
      %v334 = vld [vmem:[%s259 + $0x178] sm:$0xff]
      %v335 = vld [vmem:[%s259 + $0x180] sm:$0xff]
      %v336 = vld [vmem:[%s259 + $0x188] sm:$0xff]
      %v337 = vld [vmem:[%s259 + $0x190] sm:$0xff]
      %v338 = vld [vmem:[%s259 + $0x198] sm:$0xff]
      %v339 = vld [vmem:[%s259 + $0x1a0] sm:$0xff]
      %v340 = vld [vmem:[%s259 + $0x1a8] sm:$0xff]
      %v341 = vld [vmem:[%s259 + $0x1b0] sm:$0xff]
      %v342 = vld [vmem:[%s259 + $0x1b8] sm:$0xff]
      %v343 = vld [vmem:[%s259 + $0x1c0] sm:$0xff]
      %v344 = vld [vmem:[%s259 + $0x1c8] sm:$0xff]
      %v345 = vld [vmem:[%s259 + $0x1d0] sm:$0xff]
      %v346 = vld [vmem:[%s259 + $0x1d8] sm:$0xff]
      %v347 = vld [vmem:[%s259 + $0x1e0] sm:$0xff]
      %v348 = vld [vmem:[%s259 + $0x1e8] sm:$0xff]
      %v349 = vld [vmem:[%s259 + $0x1f0] sm:$0xff]
      %v350 = vld [vmem:[%s259 + $0x1f8] sm:$0xff]
      %v353 = vunpack.c.l.b16 %v285
      %v354 = vunpack.c.h.b16 %v285
      %v355 = vunpack.c.l.b16 %v286
      %v356 = vunpack.c.h.b16 %v286
      %v357 = vpack.c.b16 %v353, %v353
      %v358 = vpack.c.b16 %v354, %v354
      %v359 = vpack.c.b16 %v355, %v355
      %v360 = vpack.c.b16 %v356, %v356
      %v429 = vunpack.c.l.b16 %v287
      %v430 = vunpack.c.h.b16 %v287
      %v431 = vunpack.c.l.b16 %v288
      %v432 = vunpack.c.h.b16 %v288
      %v433 = vunpack.c.l.b16 %v289
      %v434 = vunpack.c.h.b16 %v289
      %v435 = vunpack.c.l.b16 %v290
      %v436 = vunpack.c.h.b16 %v290
      %v437 = vunpack.c.l.b16 %v291
      %v438 = vunpack.c.h.b16 %v291
      %v439 = vunpack.c.l.b16 %v292
      %v440 = vunpack.c.h.b16 %v292
      %v441 = vunpack.c.l.b16 %v293
      %v442 = vunpack.c.h.b16 %v293
      %v443 = vunpack.c.l.b16 %v294
      %v444 = vunpack.c.h.b16 %v294
      %v445 = vunpack.c.l.b16 %v295
      %v446 = vunpack.c.h.b16 %v295
      %v447 = vunpack.c.l.b16 %v296
      %v448 = vunpack.c.h.b16 %v296
      %v449 = vunpack.c.l.b16 %v297
      %v450 = vunpack.c.h.b16 %v297
      %v451 = vunpack.c.l.b16 %v298
      %v452 = vunpack.c.h.b16 %v298
      %v453 = vunpack.c.l.b16 %v299
      %v454 = vunpack.c.h.b16 %v299
      %v455 = vunpack.c.l.b16 %v300
      %v456 = vunpack.c.h.b16 %v300
      %v457 = vunpack.c.l.b16 %v301
      %v458 = vunpack.c.h.b16 %v301
      %v459 = vunpack.c.l.b16 %v302
      %v460 = vunpack.c.h.b16 %v302
      %v461 = vunpack.c.l.b16 %v303
      %v462 = vunpack.c.h.b16 %v303
      %v463 = vunpack.c.l.b16 %v304
      %v464 = vunpack.c.h.b16 %v304
      %v465 = vunpack.c.l.b16 %v305
      %v466 = vunpack.c.h.b16 %v305
      %v467 = vunpack.c.l.b16 %v306
      %v468 = vunpack.c.h.b16 %v306
      %v469 = vunpack.c.l.b16 %v307
      %v470 = vunpack.c.h.b16 %v307
      %v471 = vunpack.c.l.b16 %v308
      %v472 = vunpack.c.h.b16 %v308
      %v473 = vunpack.c.l.b16 %v309
      %v474 = vunpack.c.h.b16 %v309
      %v475 = vunpack.c.l.b16 %v310
      %v476 = vunpack.c.h.b16 %v310
      %v477 = vunpack.c.l.b16 %v311
      %v478 = vunpack.c.h.b16 %v311
      %v479 = vunpack.c.l.b16 %v312
      %v480 = vunpack.c.h.b16 %v312
      %v481 = vunpack.c.l.b16 %v313
      %v482 = vunpack.c.h.b16 %v313
      %v483 = vunpack.c.l.b16 %v314
      %v484 = vunpack.c.h.b16 %v314
      %v485 = vunpack.c.l.b16 %v315
      %v486 = vunpack.c.h.b16 %v315
      %v487 = vunpack.c.l.b16 %v316
      %v488 = vunpack.c.h.b16 %v316
      %v489 = vunpack.c.l.b16 %v317
      %v490 = vunpack.c.h.b16 %v317
      %v491 = vunpack.c.l.b16 %v318
      %v492 = vunpack.c.h.b16 %v318
      %v493 = vunpack.c.l.b16 %v319
      %v494 = vunpack.c.h.b16 %v319
      %v495 = vunpack.c.l.b16 %v320
      %v496 = vunpack.c.h.b16 %v320
      %v497 = vunpack.c.l.b16 %v321
      %v498 = vunpack.c.h.b16 %v321
      %v499 = vunpack.c.l.b16 %v322
      %v500 = vunpack.c.h.b16 %v322
      %v501 = vunpack.c.l.b16 %v323
      %v502 = vunpack.c.h.b16 %v323
      %v503 = vunpack.c.l.b16 %v324
      %v504 = vunpack.c.h.b16 %v324
      %v505 = vunpack.c.l.b16 %v325
      %v506 = vunpack.c.h.b16 %v325
      %v507 = vunpack.c.l.b16 %v326
      %v508 = vunpack.c.h.b16 %v326
      %v509 = vunpack.c.l.b16 %v327
      %v510 = vunpack.c.h.b16 %v327
      %v511 = vunpack.c.l.b16 %v328
      %v512 = vunpack.c.h.b16 %v328
      %v513 = vunpack.c.l.b16 %v329
      %v514 = vunpack.c.h.b16 %v329
      %v515 = vunpack.c.l.b16 %v330
      %v516 = vunpack.c.h.b16 %v330
      %v517 = vunpack.c.l.b16 %v331
      %v518 = vunpack.c.h.b16 %v331
      %v519 = vunpack.c.l.b16 %v332
      %v520 = vunpack.c.h.b16 %v332
      %v521 = vunpack.c.l.b16 %v333
      %v522 = vunpack.c.h.b16 %v333
      %v523 = vunpack.c.l.b16 %v334
      %v524 = vunpack.c.h.b16 %v334
      %v525 = vunpack.c.l.b16 %v335
      %v526 = vunpack.c.h.b16 %v335
      %v527 = vunpack.c.l.b16 %v336
      %v528 = vunpack.c.h.b16 %v336
      %v529 = vunpack.c.l.b16 %v337
      %v530 = vunpack.c.h.b16 %v337
      %v531 = vunpack.c.l.b16 %v338
      %v532 = vunpack.c.h.b16 %v338
      %v533 = vunpack.c.l.b16 %v339
      %v534 = vunpack.c.h.b16 %v339
      %v535 = vunpack.c.l.b16 %v340
      %v536 = vunpack.c.h.b16 %v340
      %v537 = vunpack.c.l.b16 %v341
      %v538 = vunpack.c.h.b16 %v341
      %v539 = vunpack.c.l.b16 %v342
      %v540 = vunpack.c.h.b16 %v342
      %v541 = vunpack.c.l.b16 %v343
      %v542 = vunpack.c.h.b16 %v343
      %v543 = vunpack.c.l.b16 %v344
      %v544 = vunpack.c.h.b16 %v344
      %v545 = vunpack.c.l.b16 %v345
      %v546 = vunpack.c.h.b16 %v345
      %v547 = vunpack.c.l.b16 %v346
      %v548 = vunpack.c.h.b16 %v346
      %v549 = vunpack.c.l.b16 %v347
      %v550 = vunpack.c.h.b16 %v347
      %v551 = vunpack.c.l.b16 %v348
      %v552 = vunpack.c.h.b16 %v348
      %v553 = vunpack.c.l.b16 %v349
      %v554 = vunpack.c.h.b16 %v349
      %v555 = vunpack.c.l.b16 %v350
      %v556 = vunpack.c.h.b16 %v350
      %v557 = vpack.c.b16 %v431, %v429
      %v558 = vpack.c.b16 %v432, %v430
      %v559 = vpack.c.b16 %v435, %v433
      %v560 = vpack.c.b16 %v436, %v434
      %v561 = vpack.c.b16 %v439, %v437
      %v562 = vpack.c.b16 %v440, %v438
      %v563 = vpack.c.b16 %v443, %v441
      %v564 = vpack.c.b16 %v444, %v442
      %v565 = vpack.c.b16 %v447, %v445
      %v566 = vpack.c.b16 %v448, %v446
      %v567 = vpack.c.b16 %v451, %v449
      %v568 = vpack.c.b16 %v452, %v450
      %v569 = vpack.c.b16 %v455, %v453
      %v570 = vpack.c.b16 %v456, %v454
      %v571 = vpack.c.b16 %v459, %v457
      %v572 = vpack.c.b16 %v460, %v458
      %v573 = vpack.c.b16 %v463, %v461
      %v574 = vpack.c.b16 %v464, %v462
      %v575 = vpack.c.b16 %v467, %v465
      %v576 = vpack.c.b16 %v468, %v466
      %v577 = vpack.c.b16 %v471, %v469
      %v578 = vpack.c.b16 %v472, %v470
      %v579 = vpack.c.b16 %v475, %v473
      %v580 = vpack.c.b16 %v476, %v474
      %v581 = vpack.c.b16 %v479, %v477
      %v582 = vpack.c.b16 %v480, %v478
      %v583 = vpack.c.b16 %v483, %v481
      %v584 = vpack.c.b16 %v484, %v482
      %v585 = vpack.c.b16 %v487, %v485
      %v586 = vpack.c.b16 %v488, %v486
      %v587 = vpack.c.b16 %v491, %v489
      %v588 = vpack.c.b16 %v492, %v490
      %v589 = vpack.c.b16 %v495, %v493
      %v590 = vpack.c.b16 %v496, %v494
      %v591 = vpack.c.b16 %v499, %v497
      %v592 = vpack.c.b16 %v500, %v498
      %v593 = vpack.c.b16 %v503, %v501
      %v594 = vpack.c.b16 %v504, %v502
      %v595 = vpack.c.b16 %v507, %v505
      %v596 = vpack.c.b16 %v508, %v506
      %v597 = vpack.c.b16 %v511, %v509
      %v598 = vpack.c.b16 %v512, %v510
      %v599 = vpack.c.b16 %v515, %v513
      %v600 = vpack.c.b16 %v516, %v514
      %v601 = vpack.c.b16 %v519, %v517
      %v602 = vpack.c.b16 %v520, %v518
      %v603 = vpack.c.b16 %v523, %v521
      %v604 = vpack.c.b16 %v524, %v522
      %v605 = vpack.c.b16 %v527, %v525
      %v606 = vpack.c.b16 %v528, %v526
      %v607 = vpack.c.b16 %v531, %v529
      %v608 = vpack.c.b16 %v532, %v530
      %v609 = vpack.c.b16 %v535, %v533
      %v610 = vpack.c.b16 %v536, %v534
      %v611 = vpack.c.b16 %v539, %v537
      %v612 = vpack.c.b16 %v540, %v538
      %v613 = vpack.c.b16 %v543, %v541
      %v614 = vpack.c.b16 %v544, %v542
      %v615 = vpack.c.b16 %v547, %v545
      %v616 = vpack.c.b16 %v548, %v546
      %v617 = vpack.c.b16 %v551, %v549
      %v618 = vpack.c.b16 %v552, %v550
      %v619 = vpack.c.b16 %v555, %v553
      %v620 = vpack.c.b16 %v556, %v554
      %685 = vmatprep.subr.bf16.mxu0 %v558
      %686 = vmatpush1.bf16.msra.mxu0 %v557
      %687 = vmatprep.subr.bf16.mxu0 %v560
      %688 = vmatpush1.bf16.msra.mxu0 %v559
      %689 = vmatprep.subr.bf16.mxu0 %v562
      %690 = vmatpush1.bf16.msra.mxu0 %v561
      %691 = vmatprep.subr.bf16.mxu0 %v564
      %692 = vmatpush1.bf16.msra.mxu0 %v563
      %693 = vmatprep.subr.bf16.mxu0 %v566
      %694 = vmatpush1.bf16.msra.mxu0 %v565
      %695 = vmatprep.subr.bf16.mxu0 %v568
      %696 = vmatpush1.bf16.msra.mxu0 %v567
      %697 = vmatprep.subr.bf16.mxu0 %v570
      %698 = vmatpush1.bf16.msra.mxu0 %v569
      %699 = vmatprep.subr.bf16.mxu0 %v572
      %700 = vmatpush1.bf16.msra.mxu0 %v571
      %701 = vmatprep.subr.bf16.mxu0 %v574
      %702 = vmatpush1.bf16.msra.mxu0 %v573
      %703 = vmatprep.subr.bf16.mxu0 %v576
      %704 = vmatpush1.bf16.msra.mxu0 %v575
      %705 = vmatprep.subr.bf16.mxu0 %v578
      %706 = vmatpush1.bf16.msra.mxu0 %v577
      %707 = vmatprep.subr.bf16.mxu0 %v580
      %708 = vmatpush1.bf16.msra.mxu0 %v579
      %709 = vmatprep.subr.bf16.mxu0 %v582
      %710 = vmatpush1.bf16.msra.mxu0 %v581
      %711 = vmatprep.subr.bf16.mxu0 %v584
      %712 = vmatpush1.bf16.msra.mxu0 %v583
      %713 = vmatprep.subr.bf16.mxu0 %v586
      %714 = vmatpush1.bf16.msra.mxu0 %v585
      %715 = vmatprep.subr.bf16.mxu0 %v588
      %716 = vmatpush1.bf16.msra.mxu0 %v587
      %717 = vmatprep.mubr.bf16.mxu0 %v358
      %718 = vmatmul.mubr.bf16.gmra.mrb[0].mxu0 %v357
      %v719 = vpop.f32.mrb[0].mxu0
      %v720 = vadd.f32 0.0, %v719
      %v721 = vpop.f32.mrb[0].mxu0
      %v722 = vadd.f32 0.0, %v721
      %v723 = vpop.f32.mrb[0].mxu0
      %v724 = vpop.f32.mrb[0].mxu0
      %725 = vdwg.mxu0
      %726 = vmatprep.subr.bf16.mxu0 %v590
      %727 = vmatpush1.bf16.msra.mxu0 %v589
      %728 = vmatprep.subr.bf16.mxu0 %v592
      %729 = vmatpush1.bf16.msra.mxu0 %v591
      %730 = vmatprep.subr.bf16.mxu0 %v594
      %731 = vmatpush1.bf16.msra.mxu0 %v593
      %732 = vmatprep.subr.bf16.mxu0 %v596
      %733 = vmatpush1.bf16.msra.mxu0 %v595
      %734 = vmatprep.subr.bf16.mxu0 %v598
      %735 = vmatpush1.bf16.msra.mxu0 %v597
      %736 = vmatprep.subr.bf16.mxu0 %v600
      %737 = vmatpush1.bf16.msra.mxu0 %v599
      %738 = vmatprep.subr.bf16.mxu0 %v602
      %739 = vmatpush1.bf16.msra.mxu0 %v601
      %740 = vmatprep.subr.bf16.mxu0 %v604
      %741 = vmatpush1.bf16.msra.mxu0 %v603
      %742 = vmatprep.subr.bf16.mxu0 %v606
      %743 = vmatpush1.bf16.msra.mxu0 %v605
      %744 = vmatprep.subr.bf16.mxu0 %v608
      %745 = vmatpush1.bf16.msra.mxu0 %v607
      %746 = vmatprep.subr.bf16.mxu0 %v610
      %747 = vmatpush1.bf16.msra.mxu0 %v609
      %748 = vmatprep.subr.bf16.mxu0 %v612
      %749 = vmatpush1.bf16.msra.mxu0 %v611
      %750 = vmatprep.subr.bf16.mxu0 %v614
      %751 = vmatpush1.bf16.msra.mxu0 %v613
      %752 = vmatprep.subr.bf16.mxu0 %v616
      %753 = vmatpush1.bf16.msra.mxu0 %v615
      %754 = vmatprep.subr.bf16.mxu0 %v618
      %755 = vmatpush1.bf16.msra.mxu0 %v617
      %756 = vmatprep.subr.bf16.mxu0 %v620
      %757 = vmatpush1.bf16.msra.mxu0 %v619
      %758 = vmatprep.mubr.bf16.mxu0 %v360
      %759 = vmatmul.mubr.bf16.gmra.mrb[0].mxu0 %v359
      %v760 = vpop.f32.mrb[0].mxu0
      %v761 = vadd.f32 %v720, %v760
      %v762 = vpop.f32.mrb[0].mxu0
      %v763 = vadd.f32 %v722, %v762
      %v764 = vpop.f32.mrb[0].mxu0
      %v765 = vpop.f32.mrb[0].mxu0
      %766 = vdwg.mxu0
      %v767 = vadd.f32 %v283, %v761
      %v768 = vadd.f32 %v284, %v763
      %769 = vst [vmem:[#allocation2] sm:$0xff] %v767
      %770 = vst [vmem:[#allocation2 + $0x8] sm:$0xff] %v768
      %p771 = scmp.eq.s32.totalorder %s21, 3
      // Predicated region
      $region37: #{vae_forward.28} parent=31 // pred_check
        %p772 = pneg %p771
      $region38: #{vae_forward.28} parent=31 // pred_check_branch
        %774 = sbr.rel (%p772) target = $region40
      $region39: #{vae_forward.28} parent=31 // pred_region
        %v775 = vld [vmem:[#allocation2] sm:$0xff]
        %v776 = vld [vmem:[#allocation2 + $0x8] sm:$0xff]
        %v777 = vld [vmem:[%s265] sm:$0x3]
        %v779 = vlaneseq
        %v780 = vshrl.u32 %v779, 7
        %v781 = vsub.s32 0, %v780
        %v782 = vrot.slane %v777, %v781
        %v783 = vlaneseq
        %v784 = vshrl.u32 %v783, 7
        %v785 = vsub.s32 1, %v784
        %v786 = vrot.slane %v777, %v785
        %v789 = vadd.f32 %v775, %v782
        %v790 = vadd.f32 %v776, %v786
        %v791 = vmax.f32 %v789, 0.0
        %v792 = vmax.f32 %v790, 0.0
        %v793 = vpack.c.bf16 %v791, %v791
        %v794 = vpack.c.bf16 %v792, %v792
        %v797 = vunpack.c.l.b16 %v793
        %v798 = vunpack.c.l.b16 %v794
        %v799 = vpack.c.b16 %v798, %v797
        %801 = vst [vmem:[%s275] sm:$0xff] %v799
      $region40: #{vae_forward.28} parent=31 // pred_fallthru
        _
      %s802 = smul.u32 2, %s20
      %p803 = scmp.lt.s32.totalorder %s19, 0
      %s804 = scalar_select %p803, %s19, 0
      %p805 = scmp.lt.s32.totalorder %s802, 1
      %s806 = scalar_select %p805, %s802, 1
      %s807 = smul.addr %s804, 2
      %s808 = sadd.s32 %s806, %s807
      %s809 = smul.addr %s808, 4
      %s810 = scalar_lea.vmem %s3, %s809
      // Predicated region
      $region41: #{vae_forward.28} parent=31 // pred_check
        %p811 = pneg %p135
      $region42: #{vae_forward.28} parent=31 // pred_check_branch
        %813 = sbr.rel (%p811) target = $region44
      $region43: #{vae_forward.28} parent=31 // pred_region
        %s814 = smul.u32 2, %s20
      $region44: #{vae_forward.28} parent=31 // pred_fallthru
        _
      // Predicated region
      $region45: #{vae_forward.28} parent=31 // pred_check
        %p815 = pneg %p135
      $region46: #{vae_forward.28} parent=31 // pred_check_branch
        %817 = sbr.rel (%p815) target = $region48
      $region47: #{vae_forward.28} parent=31 // pred_region
        %s818 = smul.u32 2, %s20
        %p819 = scmp.lt.s32.totalorder %s19, 0
        %s820 = scalar_select %p819, %s19, 0
        %p821 = scmp.lt.s32.totalorder %s818, 1
        %s822 = scalar_select %p821, %s818, 1
        %s823 = smul.addr %s820, 2
        %s824 = sadd.s32 %s822, %s823
        %s825 = smul.addr %s824, 4
        %s826 = scalar_lea.vmem %s3, %s825
      $region48: #{vae_forward.28} parent=31 // pred_fallthru
        _
    $region32: #{vae_forward.28} parent=5 // pred_fallthru
      _
    %p827 = scmp.le.s32.totalorder 2, %s9
    // Predicated region
    $region49: #{vae_forward.28} parent=5 // pred_check
      %p828 = pneg %p827
    $region50: #{vae_forward.28} parent=5 // pred_check_branch
      %830 = sbr.rel (%p828) target = $region52
    $region51: #{vae_forward.28} parent=5 // pred_region
      %s831 = ssub.s32 %s9, 2
    $region52: #{vae_forward.28} parent=5 // pred_fallthru
      _
  $region6: #{vae_forward.28} parent=0 // loop_footer
    %s13 = sadd.s32 1, %s9
  $region7: #{vae_forward.28} parent=0 // loop_footer_branch
    %8 = sbr.rel target = $region3
  $region8: #{vae_forward.28} parent=0 // loop_exit
    _

// kernel: vae_forward.32
$region0: #{vae_forward.32}
  #allocation0 [shape = 'u32[]', space=smem, size = 0x4, offset = 0x4, fixed_abs, tag = 'smem constant byte address 0x4 - core index']
  #allocation1 [shape = 'u32[144,128]{1,0:T(1,128)}', space=vmem, size = 0x12000, scoped, tag = 'internal scratch']
  #allocation2 [shape = 'f32[32,128]{1,0:T(8,128)}', space=vmem, size = 0x4000, scoped, tag = 'scratch operand']
  %s0 = inlined_call_operand.vmem [shape: bf16[32,1024], index: 0, kind: input, shape index: {}]
  %s1 = inlined_call_operand.vmem [shape: bf16[1024,128], index: 1, kind: input, shape index: {}]
  %s2 = inlined_call_operand.vmem [shape: f32[1,128], index: 2, kind: input, shape index: {}]
  %s3 = inlined_call_operand.vmem [shape: bf16[32,128], index: 3, kind: output, shape index: {}]
  %s4 = sld [smem:[#allocation0]]
  $region76: #{vae_forward.32} parent=0
    _
  %s6 = ssub.s32 1, %s4
  %s7 = scalar_select 0, %s6, %s4
  $region1: #{vae_forward.32} parent=0
    #allocation3 [shape = 'u8[65536]{0}', space=vmem, size = 0x10000, scoped, tag = 'input window, operand 0']
    loop: start=0, step=1, limit=4
    $region2: #{vae_forward.32} parent=1 // loop_pre_header
      _
    $region3: #{vae_forward.32} parent=1 // loop_header
      %s9 = sphi 0, %s13
      %p10 = scmp.ge.s32.totalorder %s9, 4
      %s16 = sphi 0, %s35
      %s17 = sphi 0, %s31
      %s18 = sphi 0, %s27
      %s19 = sphi 0, %s16
      %s20 = sphi 0, %s17
      %s21 = sphi 0, %s18
      %s22 = sphi 0, %s19
      %s23 = sphi 0, %s20
      %s24 = sphi 0, %s21
      %s40 = sphi 0, %s42
      %s43 = sphi 0, %s40
      %s44 = sphi 0, %s43
      %s60 = sphi 0, %s44
      %s68 = sphi 0, %s70
      %s71 = sphi 0, %s68
      %s72 = sphi 0, %s71
      %s88 = sphi 0, %s72
      %s94 = sphi 0, %s96
      %s97 = sphi 0, %s94
      %s98 = sphi 0, %s97
      %s114 = sphi 0, %s98
      %s122 = sphi 0, %s124
      %s125 = sphi 0, %s122
      %s126 = sphi 0, %s125
      %s142 = sphi 0, %s126
    $region4: #{vae_forward.32} parent=1 // loop_header_branch
      %12 = sbr.rel (%p10) target = $region8
    $region5: #{vae_forward.32} parent=1 // loop_body
      %s14 = ssub.s32 %s9, 1
      %s15 = ssub.s32 %s9, 2
      %s25 = sadd.s32 1, %s18
      %p26 = scmp.ge.s32.totalorder %s25, 2
      %s27 = scalar_select %p26, 0, %s25
      %s28 = sadd.s32 1, %s17
      %s29 = scalar_select %p26, %s28, %s17
      %p30 = scmp.ge.s32.totalorder %s29, 1
      %s31 = scalar_select %p30, 0, %s29
      %s32 = sadd.s32 1, %s16
      %s33 = scalar_select %p30, %s32, %s16
      %p34 = scmp.ge.s32.totalorder %s33, 1
      %s35 = scalar_select %p34, 0, %s33
      %s36 = ssub.s32 %s16, %s35
      %s37 = ssub.s32 %s18, %s27
      %s38 = sor.u32 %s36, %s37
      %p39 = scmp.eq.s32.totalorder %s38, 0
      %s41 = sadd.s32 %s40, 1
      %s42 = scalar_select %p39, %s40, %s41
      %p45 = pneg %p39
      %p46 = scmp.eq.s32.totalorder %s9, 1
      %p47 = por %p45, %p46
      %p48 = scmp.ne.s32.totalorder %s40, %s43
      %p49 = scmp.eq.s32.totalorder %s9, 0
      %p50 = por %p48, %p49
      %p51 = scmp.ne.s32.totalorder %s40, %s43
      %p52 = scmp.eq.s32.totalorder %s14, 1
      %p53 = por %p51, %p52
      %p54 = scmp.ne.s32.totalorder %s43, %s44
      %p55 = scmp.eq.s32.totalorder %s14, 0
      %p56 = por %p54, %p55
      %p57 = scmp.ne.s32.totalorder %s43, %s44
      %p58 = scmp.eq.s32.totalorder %s15, 1
      %p59 = por %p57, %p58
      %p61 = scmp.ne.s32.totalorder %s44, %s60
      %p62 = scmp.eq.s32.totalorder %s15, 0
      %p63 = por %p61, %p62
      %s64 = ssub.s32 %s18, %s27
      %s65 = ssub.s32 %s17, %s31
      %s66 = sor.u32 %s64, %s65
      %p67 = scmp.eq.s32.totalorder %s66, 0
      %s69 = sadd.s32 %s68, 1
      %s70 = scalar_select %p67, %s68, %s69
      %p73 = pneg %p67
      %p74 = scmp.eq.s32.totalorder %s9, 1
      %p75 = por %p73, %p74
      %p76 = scmp.ne.s32.totalorder %s68, %s71
      %p77 = scmp.eq.s32.totalorder %s9, 0
      %p78 = por %p76, %p77
      %p79 = scmp.ne.s32.totalorder %s68, %s71
      %p80 = scmp.eq.s32.totalorder %s14, 1
      %p81 = por %p79, %p80
      %p82 = scmp.ne.s32.totalorder %s71, %s72
      %p83 = scmp.eq.s32.totalorder %s14, 0
      %p84 = por %p82, %p83
      %p85 = scmp.ne.s32.totalorder %s71, %s72
      %p86 = scmp.eq.s32.totalorder %s15, 1
      %p87 = por %p85, %p86
      %p89 = scmp.ne.s32.totalorder %s72, %s88
      %p90 = scmp.eq.s32.totalorder %s15, 0
      %p91 = por %p89, %p90
      %s92 = ssub.s32 %s17, %s31
      %p93 = scmp.eq.s32.totalorder %s92, 0
      %s95 = sadd.s32 %s94, 1
      %s96 = scalar_select %p93, %s94, %s95
      %p99 = pneg %p93
      %p100 = scmp.eq.s32.totalorder %s9, 1
      %p101 = por %p99, %p100
      %p102 = scmp.ne.s32.totalorder %s94, %s97
      %p103 = scmp.eq.s32.totalorder %s9, 0
      %p104 = por %p102, %p103
      %p105 = scmp.ne.s32.totalorder %s94, %s97
      %p106 = scmp.eq.s32.totalorder %s14, 1
      %p107 = por %p105, %p106
      %p108 = scmp.ne.s32.totalorder %s97, %s98
      %p109 = scmp.eq.s32.totalorder %s14, 0
      %p110 = por %p108, %p109
      %p111 = scmp.ne.s32.totalorder %s97, %s98
      %p112 = scmp.eq.s32.totalorder %s15, 1
      %p113 = por %p111, %p112
      %p115 = scmp.ne.s32.totalorder %s98, %s114
      %p116 = scmp.eq.s32.totalorder %s15, 0
      %p117 = por %p115, %p116
      %s118 = ssub.s32 %s16, %s35
      %s119 = ssub.s32 %s17, %s31
      %s120 = sor.u32 %s118, %s119
      %p121 = scmp.eq.s32.totalorder %s120, 0
      %s123 = sadd.s32 %s122, 1
      %s124 = scalar_select %p121, %s122, %s123
      %p127 = pneg %p121
      %p128 = scmp.eq.s32.totalorder %s9, 1
      %p129 = por %p127, %p128
      %p130 = scmp.ne.s32.totalorder %s122, %s125
      %p131 = scmp.eq.s32.totalorder %s9, 0
      %p132 = por %p130, %p131
      %p133 = scmp.ne.s32.totalorder %s122, %s125
      %p134 = scmp.eq.s32.totalorder %s14, 1
      %p135 = por %p133, %p134
      %p136 = scmp.ne.s32.totalorder %s125, %s126
      %p137 = scmp.eq.s32.totalorder %s14, 0
      %p138 = por %p136, %p137
      %p139 = scmp.ne.s32.totalorder %s125, %s126
      %p140 = scmp.eq.s32.totalorder %s15, 1
      %p141 = por %p139, %p140
      %p143 = scmp.ne.s32.totalorder %s126, %s142
      %p144 = scmp.eq.s32.totalorder %s15, 0
      %p145 = por %p143, %p144
      %p146 = scmp.le.s32.totalorder 1, %s9
      %p147 = scmp.lt.s32.totalorder %s9, 3
      %p148 = pnand %p146, %p147
      %p149 = pneg %p148
      // Predicated region
      $region9: #{vae_forward.32} parent=5 // pred_check
        _
      $region10: #{vae_forward.32} parent=5 // pred_check_branch
        %151 = sbr.rel (%p148) target = $region12
      $region11: #{vae_forward.32} parent=5 // pred_region
        %s152 = ssub.s32 %s9, 1
        // Predicated region
        $region13: #{vae_forward.32} parent=11 // pred_check
          %p153 = pneg %p110
        $region14: #{vae_forward.32} parent=11 // pred_check_branch
          %155 = sbr.rel (%p153) target = $region16
        $region15: #{vae_forward.32} parent=11 // pred_region
          %p156 = scmp.lt.s32.totalorder %s20, 0
          %s157 = scalar_select %p156, %s20, 0
          %s158 = scalar_lea.vmem %s2, %s157
        $region16: #{vae_forward.32} parent=11 // pred_fallthru
          _
      $region12: #{vae_forward.32} parent=5 // pred_fallthru
        _
      %p159 = scmp.lt.s32.totalorder %s9, 2
      // Predicated region
      $region17: #{vae_forward.32} parent=5 // pred_check
        %p160 = pneg %p159
      $region18: #{vae_forward.32} parent=5 // pred_check_branch
        %162 = sbr.rel (%p160) target = $region20
      $region19: #{vae_forward.32} parent=5 // pred_region
        // Predicated region
        $region21: #{vae_forward.32} parent=19 // pred_check
          %p163 = pneg %p50
        $region22: #{vae_forward.32} parent=19 // pred_check_branch
          %165 = sbr.rel (%p163) target = $region24
        $region23: #{vae_forward.32} parent=19 // pred_region
          %s166 = sand.u32 %s40, 1
          %s167 = sand.u32 %s40, 1
          %s168 = smul.addr %s167, 64
          %s169 = scalar_lea.vmem [#allocation3], %s168
          %s170 = smul.u32 4, %s16
          %s171 = smul.u32 4, %s18
          %s172 = smul.addr %s170, 8
          %s173 = sadd.s32 %s171, %s172
          %s174 = smul.addr %s173, 4
          %s175 = scalar_lea.vmem %s0, %s174
          // Predicated region
          $region25: #{vae_forward.32} parent=23 // pred_check
            _
          $region26: #{vae_forward.32} parent=23 // pred_check_branch
            %177 = sbr.rel (0) target = $region28
          $region27: #{vae_forward.32} parent=23 // pred_region
            // Predicated region
            $region29: #{vae_forward.32} parent=27 // pred_check
              _
            $region30: #{vae_forward.32} parent=27 // pred_check_branch
              %179 = sbr.rel (0) target = $region32
            $region31: #{vae_forward.32} parent=27 // pred_region
              loop: start=0, step=1, limit=1
              $region33: #{vae_forward.32} parent=31 // loop_pre_header
                _
              $region34: #{vae_forward.32} parent=31 // loop_header
                %s181 = sphi 0, %s185
                %p182 = scmp.ge.s32.totalorder %s181, 1
                %s186 = sphi %s175, %s175
                %s187 = sphi %s169, %s169
              $region35: #{vae_forward.32} parent=31 // loop_header_branch
                %184 = sbr.rel (%p182) target = $region39
              $region36: #{vae_forward.32} parent=31 // loop_body
                %v188 = vld [vmem:[%s186] sm:$0xff]
                %189 = vst [vmem:[%s187] sm:$0xff] %v188
                %v190 = vld [vmem:[%s186 + $0x8] sm:$0xff]
                %191 = vst [vmem:[%s187 + $0x8] sm:$0xff] %v190
                %v192 = vld [vmem:[%s186 + $0x20] sm:$0xff]
                %193 = vst [vmem:[%s187 + $0x10] sm:$0xff] %v192
                %v194 = vld [vmem:[%s186 + $0x28] sm:$0xff]
                %195 = vst [vmem:[%s187 + $0x18] sm:$0xff] %v194
                %v196 = vld [vmem:[%s186 + $0x40] sm:$0xff]
                %197 = vst [vmem:[%s187 + $0x20] sm:$0xff] %v196
                %v198 = vld [vmem:[%s186 + $0x48] sm:$0xff]
                %199 = vst [vmem:[%s187 + $0x28] sm:$0xff] %v198
                %v200 = vld [vmem:[%s186 + $0x60] sm:$0xff]
                %201 = vst [vmem:[%s187 + $0x30] sm:$0xff] %v200
                %v202 = vld [vmem:[%s186 + $0x68] sm:$0xff]
                %203 = vst [vmem:[%s187 + $0x38] sm:$0xff] %v202
              $region37: #{vae_forward.32} parent=31 // loop_footer
                %s185 = sadd.s32 1, %s181
              $region38: #{vae_forward.32} parent=31 // loop_footer_branch
                %180 = sbr.rel target = $region34
              $region39: #{vae_forward.32} parent=31 // loop_exit
                _
            $region32: #{vae_forward.32} parent=27 // pred_fallthru
              _
            // Predicated region
            $region40: #{vae_forward.32} parent=27 // pred_check
              _
            $region41: #{vae_forward.32} parent=27 // pred_check_branch
              %205 = sbr.rel target = $region43
            $region42: #{vae_forward.32} parent=27 // pred_region
              _
            $region43: #{vae_forward.32} parent=27 // pred_fallthru
              _
          $region28: #{vae_forward.32} parent=23 // pred_fallthru
            _
          %206 = vnop
        $region24: #{vae_forward.32} parent=19 // pred_fallthru
          _
        // Predicated region
        $region44: #{vae_forward.32} parent=19 // pred_check
          %p207 = pneg %p78
        $region45: #{vae_forward.32} parent=19 // pred_check_branch
          %209 = sbr.rel (%p207) target = $region47
        $region46: #{vae_forward.32} parent=19 // pred_region
          %s210 = smul.u32 64, %s18
          %p211 = scmp.lt.s32.totalorder %s210, 127
          %s212 = scalar_select %p211, %s210, 127
          %p213 = scmp.lt.s32.totalorder %s17, 0
          %s214 = scalar_select %p213, %s17, 0
          %s215 = sadd.s32 %s214, %s212
          %s216 = smul.addr %s215, 4
          %s217 = scalar_lea.vmem %s1, %s216
          %s218 = smul.u32 64, %s18
        $region47: #{vae_forward.32} parent=19 // pred_fallthru
          _
      $region20: #{vae_forward.32} parent=5 // pred_fallthru
        _
      %p219 = scmp.le.s32.totalorder 1, %s9
      %p220 = scmp.lt.s32.totalorder %s9, 3
      %p221 = pnand %p219, %p220
      %p222 = pneg %p221
      // Predicated region
      $region48: #{vae_forward.32} parent=5 // pred_check
        _
      $region49: #{vae_forward.32} parent=5 // pred_check_branch
        %224 = sbr.rel (%p221) target = $region51
      $region50: #{vae_forward.32} parent=5 // pred_region
        %s225 = ssub.s32 %s9, 1
        %s226 = sand.u32 %s43, 1
        %s227 = sand.u32 %s43, 1
        %s228 = smul.addr %s227, 64
        %s229 = scalar_lea.vmem [#allocation3], %s228
        // Predicated region
        $region52: #{vae_forward.32} parent=50 // pred_check
          %p230 = pneg %p56
        $region53: #{vae_forward.32} parent=50 // pred_check_branch
          %232 = sbr.rel (%p230) target = $region55
        $region54: #{vae_forward.32} parent=50 // pred_region
          _
        $region55: #{vae_forward.32} parent=50 // pred_fallthru
          _
        %s233 = sand.u32 %s43, 1
        %s234 = sand.u32 %s43, 1
        %s235 = smul.addr %s234, 64
        %s236 = scalar_lea.vmem [#allocation3], %s235
        %p237 = pneg %p56
        %p238 = pneg %p53
        %s239 = smul.u32 64, %s21
        %p240 = scmp.lt.s32.totalorder %s239, 127
        %s241 = scalar_select %p240, %s239, 127
        %p242 = scmp.lt.s32.totalorder %s20, 0
        %s243 = scalar_select %p242, %s20, 0
        %s244 = sadd.s32 %s243, %s241
        %s245 = smul.addr %s244, 4
        %s246 = scalar_lea.vmem %s1, %s245
        %p247 = pneg %p84
        %p248 = pneg %p81
        %p249 = scmp.lt.s32.totalorder %s20, 0
        %s250 = scalar_select %p249, %s20, 0
        %s251 = scalar_lea.vmem %s2, %s250
        %p252 = pneg %p110
        %p253 = pneg %p107
        %p254 = pneg %p138
        %p255 = pneg %p135
        %s256 = smul.u32 4, %s19
        %p257 = scmp.lt.s32.totalorder %s256, 3
        %s258 = scalar_select %p257, %s256, 3
        %p259 = scmp.lt.s32.totalorder %s20, 0
        %s260 = scalar_select %p259, %s20, 0
        %s261 = sadd.s32 %s260, %s258
        %s262 = smul.addr %s261, 4
        %s263 = scalar_lea.vmem %s3, %s262
        %s264 = smul.u32 4, %s19
        %s265 = smul.u32 4, %s21
        %s266 = smul.u32 64, %s21
        %p267 = scmp.lt.s32.totalorder %s266, 127
        %s268 = scalar_select %p267, %s266, 127
        %p269 = scmp.lt.s32.totalorder %s20, 0
        %s270 = scalar_select %p269, %s20, 0
        %s271 = sadd.s32 %s270, %s268
        %s272 = smul.addr %s271, 4
        %s273 = scalar_lea.vmem %s1, %s272
        %s274 = smul.u32 64, %s21
        %p275 = scmp.lt.s32.totalorder %s20, 0
        %s276 = scalar_select %p275, %s20, 0
        %s277 = scalar_lea.vmem %s2, %s276
        %s278 = smul.u32 4, %s19
        %p279 = scmp.lt.s32.totalorder %s278, 3
        %s280 = scalar_select %p279, %s278, 3
        %p281 = scmp.lt.s32.totalorder %s20, 0
        %s282 = scalar_select %p281, %s20, 0
        %s283 = sadd.s32 %s282, %s280
        %s284 = smul.addr %s283, 4
        %s285 = scalar_lea.vmem %s3, %s284
        %s286 = smul.u32 4, %s19
        %p288 = scmp.eq.s32.totalorder %s21, 0
        // Predicated region
        $region56: #{vae_forward.32} parent=50 // pred_check
          %p289 = pneg %p288
        $region57: #{vae_forward.32} parent=50 // pred_check_branch
          %291 = sbr.rel (%p289) target = $region59
        $region58: #{vae_forward.32} parent=50 // pred_region
          %292 = vst [vmem:[#allocation2] sm:$0xff] 0.0
          %293 = vst [vmem:[#allocation2 + $0x8] sm:$0xff] 0.0
          %294 = vst [vmem:[#allocation2 + $0x10] sm:$0xff] 0.0
          %295 = vst [vmem:[#allocation2 + $0x18] sm:$0xff] 0.0
        $region59: #{vae_forward.32} parent=50 // pred_fallthru
          _
        %v296 = vld [vmem:[#allocation2] sm:$0xff]
        %v297 = vld [vmem:[#allocation2 + $0x8] sm:$0xff]
        %v298 = vld [vmem:[#allocation2 + $0x10] sm:$0xff]
        %v299 = vld [vmem:[#allocation2 + $0x18] sm:$0xff]
        %v300 = vld [vmem:[%s229] sm:$0xff]
        %v301 = vld [vmem:[%s229 + $0x8] sm:$0xff]
        %v302 = vld [vmem:[%s229 + $0x10] sm:$0xff]
        %v303 = vld [vmem:[%s229 + $0x18] sm:$0xff]
        %v304 = vld [vmem:[%s229 + $0x20] sm:$0xff]
        %v305 = vld [vmem:[%s229 + $0x28] sm:$0xff]
        %v306 = vld [vmem:[%s229 + $0x30] sm:$0xff]
        %v307 = vld [vmem:[%s229 + $0x38] sm:$0xff]
        %v308 = vld [vmem:[%s273] sm:$0xf]
        %v309 = vld [vmem:[%s273 + $0x4] sm:$0xf]
        %v310 = vld [vmem:[%s273 + $0x8] sm:$0xf]
        %v311 = vld [vmem:[%s273 + $0xc] sm:$0xf]
        %v312 = vld [vmem:[%s273 + $0x10] sm:$0xf]
        %v313 = vld [vmem:[%s273 + $0x14] sm:$0xf]
        %v314 = vld [vmem:[%s273 + $0x18] sm:$0xf]
        %v315 = vld [vmem:[%s273 + $0x1c] sm:$0xf]
        %v316 = vld [vmem:[%s273 + $0x20] sm:$0xf]
        %v317 = vld [vmem:[%s273 + $0x24] sm:$0xf]
        %v318 = vld [vmem:[%s273 + $0x28] sm:$0xf]
        %v319 = vld [vmem:[%s273 + $0x2c] sm:$0xf]
        %v320 = vld [vmem:[%s273 + $0x30] sm:$0xf]
        %v321 = vld [vmem:[%s273 + $0x34] sm:$0xf]
        %v322 = vld [vmem:[%s273 + $0x38] sm:$0xf]
        %v323 = vld [vmem:[%s273 + $0x3c] sm:$0xf]
        %v324 = vld [vmem:[%s273 + $0x40] sm:$0xf]
        %v325 = vld [vmem:[%s273 + $0x44] sm:$0xf]
        %v326 = vld [vmem:[%s273 + $0x48] sm:$0xf]
        %v327 = vld [vmem:[%s273 + $0x4c] sm:$0xf]
        %v328 = vld [vmem:[%s273 + $0x50] sm:$0xf]
        %v329 = vld [vmem:[%s273 + $0x54] sm:$0xf]
        %v330 = vld [vmem:[%s273 + $0x58] sm:$0xf]
        %v331 = vld [vmem:[%s273 + $0x5c] sm:$0xf]
        %v332 = vld [vmem:[%s273 + $0x60] sm:$0xf]
        %v333 = vld [vmem:[%s273 + $0x64] sm:$0xf]
        %v334 = vld [vmem:[%s273 + $0x68] sm:$0xf]
        %v335 = vld [vmem:[%s273 + $0x6c] sm:$0xf]
        %v336 = vld [vmem:[%s273 + $0x70] sm:$0xf]
        %v337 = vld [vmem:[%s273 + $0x74] sm:$0xf]
        %v338 = vld [vmem:[%s273 + $0x78] sm:$0xf]
        %v339 = vld [vmem:[%s273 + $0x7c] sm:$0xf]
        %v340 = vld [vmem:[%s273 + $0x80] sm:$0xf]
        %v341 = vld [vmem:[%s273 + $0x84] sm:$0xf]
        %v342 = vld [vmem:[%s273 + $0x88] sm:$0xf]
        %v343 = vld [vmem:[%s273 + $0x8c] sm:$0xf]
        %v344 = vld [vmem:[%s273 + $0x90] sm:$0xf]
        %v345 = vld [vmem:[%s273 + $0x94] sm:$0xf]
        %v346 = vld [vmem:[%s273 + $0x98] sm:$0xf]
        %v347 = vld [vmem:[%s273 + $0x9c] sm:$0xf]
        %v348 = vld [vmem:[%s273 + $0xa0] sm:$0xf]
        %v349 = vld [vmem:[%s273 + $0xa4] sm:$0xf]
        %v350 = vld [vmem:[%s273 + $0xa8] sm:$0xf]
        %v351 = vld [vmem:[%s273 + $0xac] sm:$0xf]
        %v352 = vld [vmem:[%s273 + $0xb0] sm:$0xf]
        %v353 = vld [vmem:[%s273 + $0xb4] sm:$0xf]
        %v354 = vld [vmem:[%s273 + $0xb8] sm:$0xf]
        %v355 = vld [vmem:[%s273 + $0xbc] sm:$0xf]
        %v356 = vld [vmem:[%s273 + $0xc0] sm:$0xf]
        %v357 = vld [vmem:[%s273 + $0xc4] sm:$0xf]
        %v358 = vld [vmem:[%s273 + $0xc8] sm:$0xf]
        %v359 = vld [vmem:[%s273 + $0xcc] sm:$0xf]
        %v360 = vld [vmem:[%s273 + $0xd0] sm:$0xf]
        %v361 = vld [vmem:[%s273 + $0xd4] sm:$0xf]
        %v362 = vld [vmem:[%s273 + $0xd8] sm:$0xf]
        %v363 = vld [vmem:[%s273 + $0xdc] sm:$0xf]
        %v364 = vld [vmem:[%s273 + $0xe0] sm:$0xf]
        %v365 = vld [vmem:[%s273 + $0xe4] sm:$0xf]
        %v366 = vld [vmem:[%s273 + $0xe8] sm:$0xf]
        %v367 = vld [vmem:[%s273 + $0xec] sm:$0xf]
        %v368 = vld [vmem:[%s273 + $0xf0] sm:$0xf]
        %v369 = vld [vmem:[%s273 + $0xf4] sm:$0xf]
        %v370 = vld [vmem:[%s273 + $0xf8] sm:$0xf]
        %v371 = vld [vmem:[%s273 + $0xfc] sm:$0xf]
        %v380 = vunpack.c.l.b16 %v300
        %v381 = vunpack.c.h.b16 %v300
        %v382 = vunpack.c.l.b16 %v301
        %v383 = vunpack.c.h.b16 %v301
        %v384 = vunpack.c.l.b16 %v302
        %v385 = vunpack.c.h.b16 %v302
        %v386 = vunpack.c.l.b16 %v303
        %v387 = vunpack.c.h.b16 %v303
        %v388 = vunpack.c.l.b16 %v304
        %v389 = vunpack.c.h.b16 %v304
        %v390 = vunpack.c.l.b16 %v305
        %v391 = vunpack.c.h.b16 %v305
        %v392 = vunpack.c.l.b16 %v306
        %v393 = vunpack.c.h.b16 %v306
        %v394 = vunpack.c.l.b16 %v307
        %v395 = vunpack.c.h.b16 %v307
        %v396 = vpack.c.b16 %v384, %v380
        %v397 = vpack.c.b16 %v385, %v381
        %v398 = vpack.c.b16 %v386, %v382
        %v399 = vpack.c.b16 %v387, %v383
        %v400 = vpack.c.b16 %v392, %v388
        %v401 = vpack.c.b16 %v393, %v389
        %v402 = vpack.c.b16 %v394, %v390
        %v403 = vpack.c.b16 %v395, %v391
        %v476 = vunpack.c.l.b16 %v308
        %v477 = vunpack.c.l.b16 %v309
        %v478 = vunpack.c.l.b16 %v310
        %v479 = vunpack.c.l.b16 %v311
        %v480 = vunpack.c.l.b16 %v312
        %v481 = vunpack.c.l.b16 %v313
        %v482 = vunpack.c.l.b16 %v314
        %v483 = vunpack.c.l.b16 %v315
        %v484 = vunpack.c.l.b16 %v316
        %v485 = vunpack.c.l.b16 %v317
        %v486 = vunpack.c.l.b16 %v318
        %v487 = vunpack.c.l.b16 %v319
        %v488 = vunpack.c.l.b16 %v320
        %v489 = vunpack.c.l.b16 %v321
        %v490 = vunpack.c.l.b16 %v322
        %v491 = vunpack.c.l.b16 %v323
        %v492 = vunpack.c.l.b16 %v324
        %v493 = vunpack.c.l.b16 %v325
        %v494 = vunpack.c.l.b16 %v326
        %v495 = vunpack.c.l.b16 %v327
        %v496 = vunpack.c.l.b16 %v328
        %v497 = vunpack.c.l.b16 %v329
        %v498 = vunpack.c.l.b16 %v330
        %v499 = vunpack.c.l.b16 %v331
        %v500 = vunpack.c.l.b16 %v332
        %v501 = vunpack.c.l.b16 %v333
        %v502 = vunpack.c.l.b16 %v334
        %v503 = vunpack.c.l.b16 %v335
        %v504 = vunpack.c.l.b16 %v336
        %v505 = vunpack.c.l.b16 %v337
        %v506 = vunpack.c.l.b16 %v338
        %v507 = vunpack.c.l.b16 %v339
        %v508 = vunpack.c.l.b16 %v340
        %v509 = vunpack.c.l.b16 %v341
        %v510 = vunpack.c.l.b16 %v342
        %v511 = vunpack.c.l.b16 %v343
        %v512 = vunpack.c.l.b16 %v344
        %v513 = vunpack.c.l.b16 %v345
        %v514 = vunpack.c.l.b16 %v346
        %v515 = vunpack.c.l.b16 %v347
        %v516 = vunpack.c.l.b16 %v348
        %v517 = vunpack.c.l.b16 %v349
        %v518 = vunpack.c.l.b16 %v350
        %v519 = vunpack.c.l.b16 %v351
        %v520 = vunpack.c.l.b16 %v352
        %v521 = vunpack.c.l.b16 %v353
        %v522 = vunpack.c.l.b16 %v354
        %v523 = vunpack.c.l.b16 %v355
        %v524 = vunpack.c.l.b16 %v356
        %v525 = vunpack.c.l.b16 %v357
        %v526 = vunpack.c.l.b16 %v358
        %v527 = vunpack.c.l.b16 %v359
        %v528 = vunpack.c.l.b16 %v360
        %v529 = vunpack.c.l.b16 %v361
        %v530 = vunpack.c.l.b16 %v362
        %v531 = vunpack.c.l.b16 %v363
        %v532 = vunpack.c.l.b16 %v364
        %v533 = vunpack.c.l.b16 %v365
        %v534 = vunpack.c.l.b16 %v366
        %v535 = vunpack.c.l.b16 %v367
        %v536 = vunpack.c.l.b16 %v368
        %v537 = vunpack.c.l.b16 %v369
        %v538 = vunpack.c.l.b16 %v370
        %v539 = vunpack.c.l.b16 %v371
        %v540 = vpack.c.b16 %v477, %v476
        %v541 = vpack.c.b16 %v479, %v478
        %v542 = vpack.c.b16 %v481, %v480
        %v543 = vpack.c.b16 %v483, %v482
        %v544 = vpack.c.b16 %v485, %v484
        %v545 = vpack.c.b16 %v487, %v486
        %v546 = vpack.c.b16 %v489, %v488
        %v547 = vpack.c.b16 %v491, %v490
        %v548 = vpack.c.b16 %v493, %v492
        %v549 = vpack.c.b16 %v495, %v494
        %v550 = vpack.c.b16 %v497, %v496
        %v551 = vpack.c.b16 %v499, %v498
        %v552 = vpack.c.b16 %v501, %v500
        %v553 = vpack.c.b16 %v503, %v502
        %v554 = vpack.c.b16 %v505, %v504
        %v555 = vpack.c.b16 %v507, %v506
        %v556 = vpack.c.b16 %v509, %v508
        %v557 = vpack.c.b16 %v511, %v510
        %v558 = vpack.c.b16 %v513, %v512
        %v559 = vpack.c.b16 %v515, %v514
        %v560 = vpack.c.b16 %v517, %v516
        %v561 = vpack.c.b16 %v519, %v518
        %v562 = vpack.c.b16 %v521, %v520
        %v563 = vpack.c.b16 %v523, %v522
        %v564 = vpack.c.b16 %v525, %v524
        %v565 = vpack.c.b16 %v527, %v526
        %v566 = vpack.c.b16 %v529, %v528
        %v567 = vpack.c.b16 %v531, %v530
        %v568 = vpack.c.b16 %v533, %v532
        %v569 = vpack.c.b16 %v535, %v534
        %v570 = vpack.c.b16 %v537, %v536
        %v571 = vpack.c.b16 %v539, %v538
        %604 = vmatprep.subr.bf16.mxu0 0
        %605 = vmatpush1.bf16.msra.mxu0 %v540
        %606 = vmatprep.subr.bf16.mxu0 0
        %607 = vmatpush1.bf16.msra.mxu0 %v541
        %608 = vmatprep.subr.bf16.mxu0 0
        %609 = vmatpush1.bf16.msra.mxu0 %v542
        %610 = vmatprep.subr.bf16.mxu0 0
        %611 = vmatpush1.bf16.msra.mxu0 %v543
        %612 = vmatprep.subr.bf16.mxu0 0
        %613 = vmatpush1.bf16.msra.mxu0 %v544
        %614 = vmatprep.subr.bf16.mxu0 0
        %615 = vmatpush1.bf16.msra.mxu0 %v545
        %616 = vmatprep.subr.bf16.mxu0 0
        %617 = vmatpush1.bf16.msra.mxu0 %v546
        %618 = vmatprep.subr.bf16.mxu0 0
        %619 = vmatpush1.bf16.msra.mxu0 %v547
        %620 = vmatprep.subr.bf16.mxu0 0
        %621 = vmatpush1.bf16.msra.mxu0 %v548
        %622 = vmatprep.subr.bf16.mxu0 0
        %623 = vmatpush1.bf16.msra.mxu0 %v549
        %624 = vmatprep.subr.bf16.mxu0 0
        %625 = vmatpush1.bf16.msra.mxu0 %v550
        %626 = vmatprep.subr.bf16.mxu0 0
        %627 = vmatpush1.bf16.msra.mxu0 %v551
        %628 = vmatprep.subr.bf16.mxu0 0
        %629 = vmatpush1.bf16.msra.mxu0 %v552
        %630 = vmatprep.subr.bf16.mxu0 0
        %631 = vmatpush1.bf16.msra.mxu0 %v553
        %632 = vmatprep.subr.bf16.mxu0 0
        %633 = vmatpush1.bf16.msra.mxu0 %v554
        %634 = vmatprep.subr.bf16.mxu0 0
        %635 = vmatpush1.bf16.msra.mxu0 %v555
        %636 = vmatprep.mubr.bf16.mxu0 %v397
        %637 = vmatmul.mubr.bf16.gmra.mrb[0].mxu0 %v396
        %v638 = vpop.f32.mrb[0].mxu0
        %v639 = vadd.f32 0.0, %v638
        %v640 = vpop.f32.mrb[0].mxu0
        %v641 = vpop.f32.mrb[0].mxu0
        %v642 = vadd.f32 0.0, %v641
        %v643 = vpop.f32.mrb[0].mxu0
        %644 = vmatprep.mubr.bf16.mxu0 %v401
        %645 = vmatmul.mubr.bf16.gmra.mrb[0].mxu0 %v400
        %v646 = vpop.f32.mrb[0].mxu0
        %v647 = vadd.f32 0.0, %v646
        %v648 = vpop.f32.mrb[0].mxu0
        %v649 = vpop.f32.mrb[0].mxu0
        %v650 = vadd.f32 0.0, %v649
        %v651 = vpop.f32.mrb[0].mxu0
        %652 = vdwg.mxu0
        %653 = vmatprep.subr.bf16.mxu0 0
        %654 = vmatpush1.bf16.msra.mxu0 %v556
        %655 = vmatprep.subr.bf16.mxu0 0
        %656 = vmatpush1.bf16.msra.mxu0 %v557
        %657 = vmatprep.subr.bf16.mxu0 0
        %658 = vmatpush1.bf16.msra.mxu0 %v558
        %659 = vmatprep.subr.bf16.mxu0 0
        %660 = vmatpush1.bf16.msra.mxu0 %v559
        %661 = vmatprep.subr.bf16.mxu0 0
        %662 = vmatpush1.bf16.msra.mxu0 %v560
        %663 = vmatprep.subr.bf16.mxu0 0
        %664 = vmatpush1.bf16.msra.mxu0 %v561
        %665 = vmatprep.subr.bf16.mxu0 0
        %666 = vmatpush1.bf16.msra.mxu0 %v562
        %667 = vmatprep.subr.bf16.mxu0 0
        %668 = vmatpush1.bf16.msra.mxu0 %v563
        %669 = vmatprep.subr.bf16.mxu0 0
        %670 = vmatpush1.bf16.msra.mxu0 %v564
        %671 = vmatprep.subr.bf16.mxu0 0
        %672 = vmatpush1.bf16.msra.mxu0 %v565
        %673 = vmatprep.subr.bf16.mxu0 0
        %674 = vmatpush1.bf16.msra.mxu0 %v566
        %675 = vmatprep.subr.bf16.mxu0 0
        %676 = vmatpush1.bf16.msra.mxu0 %v567
        %677 = vmatprep.subr.bf16.mxu0 0
        %678 = vmatpush1.bf16.msra.mxu0 %v568
        %679 = vmatprep.subr.bf16.mxu0 0
        %680 = vmatpush1.bf16.msra.mxu0 %v569
        %681 = vmatprep.subr.bf16.mxu0 0
        %682 = vmatpush1.bf16.msra.mxu0 %v570
        %683 = vmatprep.subr.bf16.mxu0 0
        %684 = vmatpush1.bf16.msra.mxu0 %v571
        %685 = vmatprep.mubr.bf16.mxu0 %v399
        %686 = vmatmul.mubr.bf16.gmra.mrb[0].mxu0 %v398
        %v687 = vpop.f32.mrb[0].mxu0
        %v688 = vadd.f32 %v639, %v687
        %v689 = vpop.f32.mrb[0].mxu0
        %v690 = vpop.f32.mrb[0].mxu0
        %v691 = vadd.f32 %v642, %v690
        %v692 = vpop.f32.mrb[0].mxu0
        %693 = vmatprep.mubr.bf16.mxu0 %v403
        %694 = vmatmul.mubr.bf16.gmra.mrb[0].mxu0 %v402
        %v695 = vpop.f32.mrb[0].mxu0
        %v696 = vadd.f32 %v647, %v695
        %v697 = vpop.f32.mrb[0].mxu0
        %v698 = vpop.f32.mrb[0].mxu0
        %v699 = vadd.f32 %v650, %v698
        %v700 = vpop.f32.mrb[0].mxu0
        %701 = vdwg.mxu0
        %v702 = vadd.f32 %v296, %v688
        %v703 = vadd.f32 %v297, %v691
        %v704 = vadd.f32 %v298, %v696
        %v705 = vadd.f32 %v299, %v699
        %706 = vst [vmem:[#allocation2] sm:$0xff] %v702
        %707 = vst [vmem:[#allocation2 + $0x8] sm:$0xff] %v703
        %708 = vst [vmem:[#allocation2 + $0x10] sm:$0xff] %v704
        %709 = vst [vmem:[#allocation2 + $0x18] sm:$0xff] %v705
        %p710 = scmp.eq.s32.totalorder %s21, 1
        // Predicated region
        $region60: #{vae_forward.32} parent=50 // pred_check
          %p711 = pneg %p710
        $region61: #{vae_forward.32} parent=50 // pred_check_branch
          %713 = sbr.rel (%p711) target = $region63
        $region62: #{vae_forward.32} parent=50 // pred_region
          %v714 = vld [vmem:[#allocation2] sm:$0xff]
          %v715 = vld [vmem:[#allocation2 + $0x8] sm:$0xff]
          %v716 = vld [vmem:[#allocation2 + $0x10] sm:$0xff]
          %v717 = vld [vmem:[#allocation2 + $0x18] sm:$0xff]
          %v718 = vld [vmem:[%s277] sm:$0x1]
          %v720 = vlaneseq
          %v721 = vshrl.u32 %v720, 7
          %v722 = vsub.s32 0, %v721
          %v723 = vrot.slane %v718, %v722
          %v725 = vadd.f32 %v714, %v723
          %v726 = vadd.f32 %v715, %v723
          %v727 = vadd.f32 %v716, %v723
          %v728 = vadd.f32 %v717, %v723
          %v729 = vmax.f32 %v725, 0.0
          %v730 = vmax.f32 %v726, 0.0
          %v731 = vmax.f32 %v727, 0.0
          %v732 = vmax.f32 %v728, 0.0
          %v733 = vpack.c.bf16 %v730, %v729
          %v734 = vpack.c.bf16 %v732, %v731
          %v737 = vunpack.c.l.b16 %v733
          %v738 = vunpack.c.h.b16 %v733
          %v739 = vunpack.c.l.b16 %v734
          %v740 = vunpack.c.h.b16 %v734
          %v741 = vpack.c.b16 %v737, %v737
          %v742 = vpack.c.b16 %v738, %v738
          %v743 = vpack.c.b16 %v739, %v739
          %v744 = vpack.c.b16 %v740, %v740
          %749 = vst [vmem:[%s285] sm:$0xf] %v741
          %750 = vst [vmem:[%s285 + $0x4] sm:$0xf] %v742
          %751 = vst [vmem:[%s285 + $0x8] sm:$0xf] %v743
          %752 = vst [vmem:[%s285 + $0xc] sm:$0xf] %v744
        $region63: #{vae_forward.32} parent=50 // pred_fallthru
          _
        %s753 = smul.u32 4, %s19
        %p754 = scmp.lt.s32.totalorder %s753, 3
        %s755 = scalar_select %p754, %s753, 3
        %p756 = scmp.lt.s32.totalorder %s20, 0
        %s757 = scalar_select %p756, %s20, 0
        %s758 = sadd.s32 %s757, %s755
        %s759 = smul.addr %s758, 4
        %s760 = scalar_lea.vmem %s3, %s759
        // Predicated region
        $region64: #{vae_forward.32} parent=50 // pred_check
          %p761 = pneg %p135
        $region65: #{vae_forward.32} parent=50 // pred_check_branch
          %763 = sbr.rel (%p761) target = $region67
        $region66: #{vae_forward.32} parent=50 // pred_region
          %s764 = smul.u32 4, %s19
        $region67: #{vae_forward.32} parent=50 // pred_fallthru
          _
        // Predicated region
        $region68: #{vae_forward.32} parent=50 // pred_check
          %p765 = pneg %p135
        $region69: #{vae_forward.32} parent=50 // pred_check_branch
          %767 = sbr.rel (%p765) target = $region71
        $region70: #{vae_forward.32} parent=50 // pred_region
          %s768 = smul.u32 4, %s19
          %p769 = scmp.lt.s32.totalorder %s768, 3
          %s770 = scalar_select %p769, %s768, 3
          %p771 = scmp.lt.s32.totalorder %s20, 0
          %s772 = scalar_select %p771, %s20, 0
          %s773 = sadd.s32 %s772, %s770
          %s774 = smul.addr %s773, 4
          %s775 = scalar_lea.vmem %s3, %s774
        $region71: #{vae_forward.32} parent=50 // pred_fallthru
          _
      $region51: #{vae_forward.32} parent=5 // pred_fallthru
        _
      %p776 = scmp.le.s32.totalorder 2, %s9
      // Predicated region
      $region72: #{vae_forward.32} parent=5 // pred_check
        %p777 = pneg %p776
      $region73: #{vae_forward.32} parent=5 // pred_check_branch
        %779 = sbr.rel (%p777) target = $region75
      $region74: #{vae_forward.32} parent=5 // pred_region
        %s780 = ssub.s32 %s9, 2
      $region75: #{vae_forward.32} parent=5 // pred_fallthru
        _
    $region6: #{vae_forward.32} parent=1 // loop_footer
      %s13 = sadd.s32 1, %s9
    $region7: #{vae_forward.32} parent=1 // loop_footer_branch
      %8 = sbr.rel target = $region3
    $region8: #{vae_forward.32} parent=1 // loop_exit
      _

// kernel: vae_forward.36
$region0: #{vae_forward.36}
  #allocation0 [shape = 'u32[]', space=smem, size = 0x4, offset = 0x4, fixed_abs, tag = 'smem constant byte address 0x4 - core index']
  #allocation1 [shape = 'u32[144,128]{1,0:T(1,128)}', space=vmem, size = 0x12000, scoped, tag = 'internal scratch']
  #allocation2 [shape = 'f32[128,128]{1,0:T(8,128)}', space=vmem, size = 0x10000, scoped, tag = 'scratch operand']
  %s0 = inlined_call_operand.vmem [shape: bf16[128,512], index: 0, kind: input, shape index: {}]
  %s1 = inlined_call_operand.vmem [shape: bf16[512,128], index: 1, kind: input, shape index: {}]
  %s2 = inlined_call_operand.vmem [shape: f32[1,128], index: 2, kind: input, shape index: {}]
  %s3 = inlined_call_operand.vmem [shape: bf16[128,128], index: 3, kind: output, shape index: {}]
  %s4 = sld [smem:[#allocation0]]
  $region30: #{vae_forward.36} parent=0
    _
  %s6 = ssub.s32 1, %s4
  %s7 = scalar_select 0, %s6, %s4
  // Predicated region
  $region2: #{vae_forward.36} parent=0 // pred_check
    _
  $region3: #{vae_forward.36} parent=0 // pred_check_branch
    %9 = sbr.rel (0) target = $region5
  $region4: #{vae_forward.36} parent=0 // pred_region
    _
  $region5: #{vae_forward.36} parent=0 // pred_fallthru
    _
  // Predicated region
  $region6: #{vae_forward.36} parent=0 // pred_check
    _
  $region7: #{vae_forward.36} parent=0 // pred_check_branch
    %11 = sbr.rel (0) target = $region9
  $region8: #{vae_forward.36} parent=0 // pred_region
    _
  $region9: #{vae_forward.36} parent=0 // pred_fallthru
    _
  // Predicated region
  $region10: #{vae_forward.36} parent=0 // pred_check
    _
  $region11: #{vae_forward.36} parent=0 // pred_check_branch
    %13 = sbr.rel (0) target = $region13
  $region12: #{vae_forward.36} parent=0 // pred_region
    _
  $region13: #{vae_forward.36} parent=0 // pred_fallthru
    _
  %p15 = scmp.eq.s32.totalorder 0, 0
  // Predicated region
  $region14: #{vae_forward.36} parent=0 // pred_check
    %p16 = pneg %p15
  $region15: #{vae_forward.36} parent=0 // pred_check_branch
    %18 = sbr.rel (%p16) target = $region17
  $region16: #{vae_forward.36} parent=0 // pred_region
    %19 = vst [vmem:[#allocation2] sm:$0xff] 0.0
    %20 = vst [vmem:[#allocation2 + $0x8] sm:$0xff] 0.0
    %21 = vst [vmem:[#allocation2 + $0x10] sm:$0xff] 0.0
    %22 = vst [vmem:[#allocation2 + $0x18] sm:$0xff] 0.0
    %23 = vst [vmem:[#allocation2 + $0x20] sm:$0xff] 0.0
    %24 = vst [vmem:[#allocation2 + $0x28] sm:$0xff] 0.0
    %25 = vst [vmem:[#allocation2 + $0x30] sm:$0xff] 0.0
    %26 = vst [vmem:[#allocation2 + $0x38] sm:$0xff] 0.0
    %27 = vst [vmem:[#allocation2 + $0x40] sm:$0xff] 0.0
    %28 = vst [vmem:[#allocation2 + $0x48] sm:$0xff] 0.0
    %29 = vst [vmem:[#allocation2 + $0x50] sm:$0xff] 0.0
    %30 = vst [vmem:[#allocation2 + $0x58] sm:$0xff] 0.0
    %31 = vst [vmem:[#allocation2 + $0x60] sm:$0xff] 0.0
    %32 = vst [vmem:[#allocation2 + $0x68] sm:$0xff] 0.0
    %33 = vst [vmem:[#allocation2 + $0x70] sm:$0xff] 0.0
    %34 = vst [vmem:[#allocation2 + $0x78] sm:$0xff] 0.0
  $region17: #{vae_forward.36} parent=0 // pred_fallthru
    _
  %v35 = vld [vmem:[#allocation2] sm:$0xff]
  %v36 = vld [vmem:[#allocation2 + $0x8] sm:$0xff]
  %v37 = vld [vmem:[#allocation2 + $0x10] sm:$0xff]
  %v38 = vld [vmem:[#allocation2 + $0x18] sm:$0xff]
  %v39 = vld [vmem:[#allocation2 + $0x20] sm:$0xff]
  %v40 = vld [vmem:[#allocation2 + $0x28] sm:$0xff]
  %v41 = vld [vmem:[#allocation2 + $0x30] sm:$0xff]
  %v42 = vld [vmem:[#allocation2 + $0x38] sm:$0xff]
  %v43 = vld [vmem:[#allocation2 + $0x40] sm:$0xff]
  %v44 = vld [vmem:[#allocation2 + $0x48] sm:$0xff]
  %v45 = vld [vmem:[#allocation2 + $0x50] sm:$0xff]
  %v46 = vld [vmem:[#allocation2 + $0x58] sm:$0xff]
  %v47 = vld [vmem:[#allocation2 + $0x60] sm:$0xff]
  %v48 = vld [vmem:[#allocation2 + $0x68] sm:$0xff]
  %v49 = vld [vmem:[#allocation2 + $0x70] sm:$0xff]
  %v50 = vld [vmem:[#allocation2 + $0x78] sm:$0xff]
  %v51 = vld [vmem:[%s0] sm:$0xff]
  %v52 = vld [vmem:[%s0 + $0x8] sm:$0xff]
  %v53 = vld [vmem:[%s0 + $0x10] sm:$0xff]
  %v54 = vld [vmem:[%s0 + $0x18] sm:$0xff]
  %v55 = vld [vmem:[%s0 + $0x20] sm:$0xff]
  %v56 = vld [vmem:[%s0 + $0x28] sm:$0xff]
  %v57 = vld [vmem:[%s0 + $0x30] sm:$0xff]
  %v58 = vld [vmem:[%s0 + $0x38] sm:$0xff]
  %v59 = vld [vmem:[%s0 + $0x40] sm:$0xff]
  %v60 = vld [vmem:[%s0 + $0x48] sm:$0xff]
  %v61 = vld [vmem:[%s0 + $0x50] sm:$0xff]
  %v62 = vld [vmem:[%s0 + $0x58] sm:$0xff]
  %v63 = vld [vmem:[%s0 + $0x60] sm:$0xff]
  %v64 = vld [vmem:[%s0 + $0x68] sm:$0xff]
  %v65 = vld [vmem:[%s0 + $0x70] sm:$0xff]
  %v66 = vld [vmem:[%s0 + $0x78] sm:$0xff]
  %v67 = vld [vmem:[%s0 + $0x80] sm:$0xff]
  %v68 = vld [vmem:[%s0 + $0x88] sm:$0xff]
  %v69 = vld [vmem:[%s0 + $0x90] sm:$0xff]
  %v70 = vld [vmem:[%s0 + $0x98] sm:$0xff]
  %v71 = vld [vmem:[%s0 + $0xa0] sm:$0xff]
  %v72 = vld [vmem:[%s0 + $0xa8] sm:$0xff]
  %v73 = vld [vmem:[%s0 + $0xb0] sm:$0xff]
  %v74 = vld [vmem:[%s0 + $0xb8] sm:$0xff]
  %v75 = vld [vmem:[%s0 + $0xc0] sm:$0xff]
  %v76 = vld [vmem:[%s0 + $0xc8] sm:$0xff]
  %v77 = vld [vmem:[%s0 + $0xd0] sm:$0xff]
  %v78 = vld [vmem:[%s0 + $0xd8] sm:$0xff]
  %v79 = vld [vmem:[%s0 + $0xe0] sm:$0xff]
  %v80 = vld [vmem:[%s0 + $0xe8] sm:$0xff]
  %v81 = vld [vmem:[%s0 + $0xf0] sm:$0xff]
  %v82 = vld [vmem:[%s0 + $0xf8] sm:$0xff]
  %v83 = vld [vmem:[%s1] sm:$0xf]
  %v84 = vld [vmem:[%s1 + $0x4] sm:$0xf]
  %v85 = vld [vmem:[%s1 + $0x8] sm:$0xf]
  %v86 = vld [vmem:[%s1 + $0xc] sm:$0xf]
  %v87 = vld [vmem:[%s1 + $0x10] sm:$0xf]
  %v88 = vld [vmem:[%s1 + $0x14] sm:$0xf]
  %v89 = vld [vmem:[%s1 + $0x18] sm:$0xf]
  %v90 = vld [vmem:[%s1 + $0x1c] sm:$0xf]
  %v91 = vld [vmem:[%s1 + $0x20] sm:$0xf]
  %v92 = vld [vmem:[%s1 + $0x24] sm:$0xf]
  %v93 = vld [vmem:[%s1 + $0x28] sm:$0xf]
  %v94 = vld [vmem:[%s1 + $0x2c] sm:$0xf]
  %v95 = vld [vmem:[%s1 + $0x30] sm:$0xf]
  %v96 = vld [vmem:[%s1 + $0x34] sm:$0xf]
  %v97 = vld [vmem:[%s1 + $0x38] sm:$0xf]
  %v98 = vld [vmem:[%s1 + $0x3c] sm:$0xf]
  %v99 = vld [vmem:[%s1 + $0x40] sm:$0xf]
  %v100 = vld [vmem:[%s1 + $0x44] sm:$0xf]
  %v101 = vld [vmem:[%s1 + $0x48] sm:$0xf]
  %v102 = vld [vmem:[%s1 + $0x4c] sm:$0xf]
  %v103 = vld [vmem:[%s1 + $0x50] sm:$0xf]
  %v104 = vld [vmem:[%s1 + $0x54] sm:$0xf]
  %v105 = vld [vmem:[%s1 + $0x58] sm:$0xf]
  %v106 = vld [vmem:[%s1 + $0x5c] sm:$0xf]
  %v107 = vld [vmem:[%s1 + $0x60] sm:$0xf]
  %v108 = vld [vmem:[%s1 + $0x64] sm:$0xf]
  %v109 = vld [vmem:[%s1 + $0x68] sm:$0xf]
  %v110 = vld [vmem:[%s1 + $0x6c] sm:$0xf]
  %v111 = vld [vmem:[%s1 + $0x70] sm:$0xf]
  %v112 = vld [vmem:[%s1 + $0x74] sm:$0xf]
  %v113 = vld [vmem:[%s1 + $0x78] sm:$0xf]
  %v114 = vld [vmem:[%s1 + $0x7c] sm:$0xf]
  %v115 = vld [vmem:[%s1 + $0x80] sm:$0xf]
  %v116 = vld [vmem:[%s1 + $0x84] sm:$0xf]
  %v117 = vld [vmem:[%s1 + $0x88] sm:$0xf]
  %v118 = vld [vmem:[%s1 + $0x8c] sm:$0xf]
  %v119 = vld [vmem:[%s1 + $0x90] sm:$0xf]
  %v120 = vld [vmem:[%s1 + $0x94] sm:$0xf]
  %v121 = vld [vmem:[%s1 + $0x98] sm:$0xf]
  %v122 = vld [vmem:[%s1 + $0x9c] sm:$0xf]
  %v123 = vld [vmem:[%s1 + $0xa0] sm:$0xf]
  %v124 = vld [vmem:[%s1 + $0xa4] sm:$0xf]
  %v125 = vld [vmem:[%s1 + $0xa8] sm:$0xf]
  %v126 = vld [vmem:[%s1 + $0xac] sm:$0xf]
  %v127 = vld [vmem:[%s1 + $0xb0] sm:$0xf]
  %v128 = vld [vmem:[%s1 + $0xb4] sm:$0xf]
  %v129 = vld [vmem:[%s1 + $0xb8] sm:$0xf]
  %v130 = vld [vmem:[%s1 + $0xbc] sm:$0xf]
  %v131 = vld [vmem:[%s1 + $0xc0] sm:$0xf]
  %v132 = vld [vmem:[%s1 + $0xc4] sm:$0xf]
  %v133 = vld [vmem:[%s1 + $0xc8] sm:$0xf]
  %v134 = vld [vmem:[%s1 + $0xcc] sm:$0xf]
  %v135 = vld [vmem:[%s1 + $0xd0] sm:$0xf]
  %v136 = vld [vmem:[%s1 + $0xd4] sm:$0xf]
  %v137 = vld [vmem:[%s1 + $0xd8] sm:$0xf]
  %v138 = vld [vmem:[%s1 + $0xdc] sm:$0xf]
  %v139 = vld [vmem:[%s1 + $0xe0] sm:$0xf]
  %v140 = vld [vmem:[%s1 + $0xe4] sm:$0xf]
  %v141 = vld [vmem:[%s1 + $0xe8] sm:$0xf]
  %v142 = vld [vmem:[%s1 + $0xec] sm:$0xf]
  %v143 = vld [vmem:[%s1 + $0xf0] sm:$0xf]
  %v144 = vld [vmem:[%s1 + $0xf4] sm:$0xf]
  %v145 = vld [vmem:[%s1 + $0xf8] sm:$0xf]
  %v146 = vld [vmem:[%s1 + $0xfc] sm:$0xf]
  %v179 = vunpack.c.l.b16 %v51
  %v180 = vunpack.c.h.b16 %v51
  %v181 = vunpack.c.l.b16 %v52
  %v182 = vunpack.c.h.b16 %v52
  %v183 = vunpack.c.l.b16 %v53
  %v184 = vunpack.c.h.b16 %v53
  %v185 = vunpack.c.l.b16 %v54
  %v186 = vunpack.c.h.b16 %v54
  %v187 = vunpack.c.l.b16 %v55
  %v188 = vunpack.c.h.b16 %v55
  %v189 = vunpack.c.l.b16 %v56
  %v190 = vunpack.c.h.b16 %v56
  %v191 = vunpack.c.l.b16 %v57
  %v192 = vunpack.c.h.b16 %v57
  %v193 = vunpack.c.l.b16 %v58
  %v194 = vunpack.c.h.b16 %v58
  %v195 = vunpack.c.l.b16 %v59
  %v196 = vunpack.c.h.b16 %v59
  %v197 = vunpack.c.l.b16 %v60
  %v198 = vunpack.c.h.b16 %v60
  %v199 = vunpack.c.l.b16 %v61
  %v200 = vunpack.c.h.b16 %v61
  %v201 = vunpack.c.l.b16 %v62
  %v202 = vunpack.c.h.b16 %v62
  %v203 = vunpack.c.l.b16 %v63
  %v204 = vunpack.c.h.b16 %v63
  %v205 = vunpack.c.l.b16 %v64
  %v206 = vunpack.c.h.b16 %v64
  %v207 = vunpack.c.l.b16 %v65
  %v208 = vunpack.c.h.b16 %v65
  %v209 = vunpack.c.l.b16 %v66
  %v210 = vunpack.c.h.b16 %v66
  %v211 = vunpack.c.l.b16 %v67
  %v212 = vunpack.c.h.b16 %v67
  %v213 = vunpack.c.l.b16 %v68
  %v214 = vunpack.c.h.b16 %v68
  %v215 = vunpack.c.l.b16 %v69
  %v216 = vunpack.c.h.b16 %v69
  %v217 = vunpack.c.l.b16 %v70
  %v218 = vunpack.c.h.b16 %v70
  %v219 = vunpack.c.l.b16 %v71
  %v220 = vunpack.c.h.b16 %v71
  %v221 = vunpack.c.l.b16 %v72
  %v222 = vunpack.c.h.b16 %v72
  %v223 = vunpack.c.l.b16 %v73
  %v224 = vunpack.c.h.b16 %v73
  %v225 = vunpack.c.l.b16 %v74
  %v226 = vunpack.c.h.b16 %v74
  %v227 = vunpack.c.l.b16 %v75
  %v228 = vunpack.c.h.b16 %v75
  %v229 = vunpack.c.l.b16 %v76
  %v230 = vunpack.c.h.b16 %v76
  %v231 = vunpack.c.l.b16 %v77
  %v232 = vunpack.c.h.b16 %v77
  %v233 = vunpack.c.l.b16 %v78
  %v234 = vunpack.c.h.b16 %v78
  %v235 = vunpack.c.l.b16 %v79
  %v236 = vunpack.c.h.b16 %v79
  %v237 = vunpack.c.l.b16 %v80
  %v238 = vunpack.c.h.b16 %v80
  %v239 = vunpack.c.l.b16 %v81
  %v240 = vunpack.c.h.b16 %v81
  %v241 = vunpack.c.l.b16 %v82
  %v242 = vunpack.c.h.b16 %v82
  %v243 = vpack.c.b16 %v183, %v179
  %v244 = vpack.c.b16 %v184, %v180
  %v245 = vpack.c.b16 %v185, %v181
  %v246 = vpack.c.b16 %v186, %v182
  %v247 = vpack.c.b16 %v191, %v187
  %v248 = vpack.c.b16 %v192, %v188
  %v249 = vpack.c.b16 %v193, %v189
  %v250 = vpack.c.b16 %v194, %v190
  %v251 = vpack.c.b16 %v199, %v195
  %v252 = vpack.c.b16 %v200, %v196
  %v253 = vpack.c.b16 %v201, %v197
  %v254 = vpack.c.b16 %v202, %v198
  %v255 = vpack.c.b16 %v207, %v203
  %v256 = vpack.c.b16 %v208, %v204
  %v257 = vpack.c.b16 %v209, %v205
  %v258 = vpack.c.b16 %v210, %v206
  %v259 = vpack.c.b16 %v215, %v211
  %v260 = vpack.c.b16 %v216, %v212
  %v261 = vpack.c.b16 %v217, %v213
  %v262 = vpack.c.b16 %v218, %v214
  %v263 = vpack.c.b16 %v223, %v219
  %v264 = vpack.c.b16 %v224, %v220
  %v265 = vpack.c.b16 %v225, %v221
  %v266 = vpack.c.b16 %v226, %v222
  %v267 = vpack.c.b16 %v231, %v227
  %v268 = vpack.c.b16 %v232, %v228
  %v269 = vpack.c.b16 %v233, %v229
  %v270 = vpack.c.b16 %v234, %v230
  %v271 = vpack.c.b16 %v239, %v235
  %v272 = vpack.c.b16 %v240, %v236
  %v273 = vpack.c.b16 %v241, %v237
  %v274 = vpack.c.b16 %v242, %v238
  %v371 = vunpack.c.l.b16 %v83
  %v372 = vunpack.c.l.b16 %v84
  %v373 = vunpack.c.l.b16 %v85
  %v374 = vunpack.c.l.b16 %v86
  %v375 = vunpack.c.l.b16 %v87
  %v376 = vunpack.c.l.b16 %v88
  %v377 = vunpack.c.l.b16 %v89
  %v378 = vunpack.c.l.b16 %v90
  %v379 = vunpack.c.l.b16 %v91
  %v380 = vunpack.c.l.b16 %v92
  %v381 = vunpack.c.l.b16 %v93
  %v382 = vunpack.c.l.b16 %v94
  %v383 = vunpack.c.l.b16 %v95
  %v384 = vunpack.c.l.b16 %v96
  %v385 = vunpack.c.l.b16 %v97
  %v386 = vunpack.c.l.b16 %v98
  %v387 = vunpack.c.l.b16 %v99
  %v388 = vunpack.c.l.b16 %v100
  %v389 = vunpack.c.l.b16 %v101
  %v390 = vunpack.c.l.b16 %v102
  %v391 = vunpack.c.l.b16 %v103
  %v392 = vunpack.c.l.b16 %v104
  %v393 = vunpack.c.l.b16 %v105
  %v394 = vunpack.c.l.b16 %v106
  %v395 = vunpack.c.l.b16 %v107
  %v396 = vunpack.c.l.b16 %v108
  %v397 = vunpack.c.l.b16 %v109
  %v398 = vunpack.c.l.b16 %v110
  %v399 = vunpack.c.l.b16 %v111
  %v400 = vunpack.c.l.b16 %v112
  %v401 = vunpack.c.l.b16 %v113
  %v402 = vunpack.c.l.b16 %v114
  %v403 = vunpack.c.l.b16 %v115
  %v404 = vunpack.c.l.b16 %v116
  %v405 = vunpack.c.l.b16 %v117
  %v406 = vunpack.c.l.b16 %v118
  %v407 = vunpack.c.l.b16 %v119
  %v408 = vunpack.c.l.b16 %v120
  %v409 = vunpack.c.l.b16 %v121
  %v410 = vunpack.c.l.b16 %v122
  %v411 = vunpack.c.l.b16 %v123
  %v412 = vunpack.c.l.b16 %v124
  %v413 = vunpack.c.l.b16 %v125
  %v414 = vunpack.c.l.b16 %v126
  %v415 = vunpack.c.l.b16 %v127
  %v416 = vunpack.c.l.b16 %v128
  %v417 = vunpack.c.l.b16 %v129
  %v418 = vunpack.c.l.b16 %v130
  %v419 = vunpack.c.l.b16 %v131
  %v420 = vunpack.c.l.b16 %v132
  %v421 = vunpack.c.l.b16 %v133
  %v422 = vunpack.c.l.b16 %v134
  %v423 = vunpack.c.l.b16 %v135
  %v424 = vunpack.c.l.b16 %v136
  %v425 = vunpack.c.l.b16 %v137
  %v426 = vunpack.c.l.b16 %v138
  %v427 = vunpack.c.l.b16 %v139
  %v428 = vunpack.c.l.b16 %v140
  %v429 = vunpack.c.l.b16 %v141
  %v430 = vunpack.c.l.b16 %v142
  %v431 = vunpack.c.l.b16 %v143
  %v432 = vunpack.c.l.b16 %v144
  %v433 = vunpack.c.l.b16 %v145
  %v434 = vunpack.c.l.b16 %v146
  %v435 = vpack.c.b16 %v372, %v371
  %v436 = vpack.c.b16 %v374, %v373
  %v437 = vpack.c.b16 %v376, %v375
  %v438 = vpack.c.b16 %v378, %v377
  %v439 = vpack.c.b16 %v380, %v379
  %v440 = vpack.c.b16 %v382, %v381
  %v441 = vpack.c.b16 %v384, %v383
  %v442 = vpack.c.b16 %v386, %v385
  %v443 = vpack.c.b16 %v388, %v387
  %v444 = vpack.c.b16 %v390, %v389
  %v445 = vpack.c.b16 %v392, %v391
  %v446 = vpack.c.b16 %v394, %v393
  %v447 = vpack.c.b16 %v396, %v395
  %v448 = vpack.c.b16 %v398, %v397
  %v449 = vpack.c.b16 %v400, %v399
  %v450 = vpack.c.b16 %v402, %v401
  %v451 = vpack.c.b16 %v404, %v403
  %v452 = vpack.c.b16 %v406, %v405
  %v453 = vpack.c.b16 %v408, %v407
  %v454 = vpack.c.b16 %v410, %v409
  %v455 = vpack.c.b16 %v412, %v411
  %v456 = vpack.c.b16 %v414, %v413
  %v457 = vpack.c.b16 %v416, %v415
  %v458 = vpack.c.b16 %v418, %v417
  %v459 = vpack.c.b16 %v420, %v419
  %v460 = vpack.c.b16 %v422, %v421
  %v461 = vpack.c.b16 %v424, %v423
  %v462 = vpack.c.b16 %v426, %v425
  %v463 = vpack.c.b16 %v428, %v427
  %v464 = vpack.c.b16 %v430, %v429
  %v465 = vpack.c.b16 %v432, %v431
  %v466 = vpack.c.b16 %v434, %v433
  %499 = vmatprep.subr.bf16.mxu0 0
  %500 = vmatpush1.bf16.msra.mxu0 %v435
  %501 = vmatprep.subr.bf16.mxu0 0
  %502 = vmatpush1.bf16.msra.mxu0 %v436
  %503 = vmatprep.subr.bf16.mxu0 0
  %504 = vmatpush1.bf16.msra.mxu0 %v437
  %505 = vmatprep.subr.bf16.mxu0 0
  %506 = vmatpush1.bf16.msra.mxu0 %v438
  %507 = vmatprep.subr.bf16.mxu0 0
  %508 = vmatpush1.bf16.msra.mxu0 %v439
  %509 = vmatprep.subr.bf16.mxu0 0
  %510 = vmatpush1.bf16.msra.mxu0 %v440
  %511 = vmatprep.subr.bf16.mxu0 0
  %512 = vmatpush1.bf16.msra.mxu0 %v441
  %513 = vmatprep.subr.bf16.mxu0 0
  %514 = vmatpush1.bf16.msra.mxu0 %v442
  %515 = vmatprep.subr.bf16.mxu0 0
  %516 = vmatpush1.bf16.msra.mxu0 %v443
  %517 = vmatprep.subr.bf16.mxu0 0
  %518 = vmatpush1.bf16.msra.mxu0 %v444
  %519 = vmatprep.subr.bf16.mxu0 0
  %520 = vmatpush1.bf16.msra.mxu0 %v445
  %521 = vmatprep.subr.bf16.mxu0 0
  %522 = vmatpush1.bf16.msra.mxu0 %v446
  %523 = vmatprep.subr.bf16.mxu0 0
  %524 = vmatpush1.bf16.msra.mxu0 %v447
  %525 = vmatprep.subr.bf16.mxu0 0
  %526 = vmatpush1.bf16.msra.mxu0 %v448
  %527 = vmatprep.subr.bf16.mxu0 0
  %528 = vmatpush1.bf16.msra.mxu0 %v449
  %529 = vmatprep.subr.bf16.mxu0 0
  %530 = vmatpush1.bf16.msra.mxu0 %v450
  %531 = vmatprep.mubr.bf16.mxu0 %v244
  %532 = vmatmul.mubr.bf16.gmra.mrb[0].mxu0 %v243
  %v533 = vpop.f32.mrb[0].mxu0
  %v534 = vadd.f32 0.0, %v533
  %v535 = vpop.f32.mrb[0].mxu0
  %v536 = vpop.f32.mrb[0].mxu0
  %v537 = vadd.f32 0.0, %v536
  %v538 = vpop.f32.mrb[0].mxu0
  %539 = vmatprep.mubr.bf16.mxu0 %v248
  %540 = vmatmul.mubr.bf16.gmra.mrb[0].mxu0 %v247
  %v541 = vpop.f32.mrb[0].mxu0
  %v542 = vadd.f32 0.0, %v541
  %v543 = vpop.f32.mrb[0].mxu0
  %v544 = vpop.f32.mrb[0].mxu0
  %v545 = vadd.f32 0.0, %v544
  %v546 = vpop.f32.mrb[0].mxu0
  %547 = vmatprep.mubr.bf16.mxu0 %v252
  %548 = vmatmul.mubr.bf16.gmra.mrb[0].mxu0 %v251
  %v549 = vpop.f32.mrb[0].mxu0
  %v550 = vadd.f32 0.0, %v549
  %v551 = vpop.f32.mrb[0].mxu0
  %v552 = vpop.f32.mrb[0].mxu0
  %v553 = vadd.f32 0.0, %v552
  %v554 = vpop.f32.mrb[0].mxu0
  %555 = vmatprep.mubr.bf16.mxu0 %v256
  %556 = vmatmul.mubr.bf16.gmra.mrb[0].mxu0 %v255
  %v557 = vpop.f32.mrb[0].mxu0
  %v558 = vadd.f32 0.0, %v557
  %v559 = vpop.f32.mrb[0].mxu0
  %v560 = vpop.f32.mrb[0].mxu0
  %v561 = vadd.f32 0.0, %v560
  %v562 = vpop.f32.mrb[0].mxu0
  %563 = vmatprep.mubr.bf16.mxu0 %v260
  %564 = vmatmul.mubr.bf16.gmra.mrb[0].mxu0 %v259
  %v565 = vpop.f32.mrb[0].mxu0
  %v566 = vadd.f32 0.0, %v565
  %v567 = vpop.f32.mrb[0].mxu0
  %v568 = vpop.f32.mrb[0].mxu0
  %v569 = vadd.f32 0.0, %v568
  %v570 = vpop.f32.mrb[0].mxu0
  %571 = vmatprep.mubr.bf16.mxu0 %v264
  %572 = vmatmul.mubr.bf16.gmra.mrb[0].mxu0 %v263
  %v573 = vpop.f32.mrb[0].mxu0
  %v574 = vadd.f32 0.0, %v573
  %v575 = vpop.f32.mrb[0].mxu0
  %v576 = vpop.f32.mrb[0].mxu0
  %v577 = vadd.f32 0.0, %v576
  %v578 = vpop.f32.mrb[0].mxu0
  %579 = vmatprep.mubr.bf16.mxu0 %v268
  %580 = vmatmul.mubr.bf16.gmra.mrb[0].mxu0 %v267
  %v581 = vpop.f32.mrb[0].mxu0
  %v582 = vadd.f32 0.0, %v581
  %v583 = vpop.f32.mrb[0].mxu0
  %v584 = vpop.f32.mrb[0].mxu0
  %v585 = vadd.f32 0.0, %v584
  %v586 = vpop.f32.mrb[0].mxu0
  %587 = vmatprep.mubr.bf16.mxu0 %v272
  %588 = vmatmul.mubr.bf16.gmra.mrb[0].mxu0 %v271
  %v589 = vpop.f32.mrb[0].mxu0
  %v590 = vadd.f32 0.0, %v589
  %v591 = vpop.f32.mrb[0].mxu0
  %v592 = vpop.f32.mrb[0].mxu0
  %v593 = vadd.f32 0.0, %v592
  %v594 = vpop.f32.mrb[0].mxu0
  %595 = vdwg.mxu0
  %596 = vmatprep.subr.bf16.mxu0 0
  %597 = vmatpush1.bf16.msra.mxu0 %v451
  %598 = vmatprep.subr.bf16.mxu0 0
  %599 = vmatpush1.bf16.msra.mxu0 %v452
  %600 = vmatprep.subr.bf16.mxu0 0
  %601 = vmatpush1.bf16.msra.mxu0 %v453
  %602 = vmatprep.subr.bf16.mxu0 0
  %603 = vmatpush1.bf16.msra.mxu0 %v454
  %604 = vmatprep.subr.bf16.mxu0 0
  %605 = vmatpush1.bf16.msra.mxu0 %v455
  %606 = vmatprep.subr.bf16.mxu0 0
  %607 = vmatpush1.bf16.msra.mxu0 %v456
  %608 = vmatprep.subr.bf16.mxu0 0
  %609 = vmatpush1.bf16.msra.mxu0 %v457
  %610 = vmatprep.subr.bf16.mxu0 0
  %611 = vmatpush1.bf16.msra.mxu0 %v458
  %612 = vmatprep.subr.bf16.mxu0 0
  %613 = vmatpush1.bf16.msra.mxu0 %v459
  %614 = vmatprep.subr.bf16.mxu0 0
  %615 = vmatpush1.bf16.msra.mxu0 %v460
  %616 = vmatprep.subr.bf16.mxu0 0
  %617 = vmatpush1.bf16.msra.mxu0 %v461
  %618 = vmatprep.subr.bf16.mxu0 0
  %619 = vmatpush1.bf16.msra.mxu0 %v462
  %620 = vmatprep.subr.bf16.mxu0 0
  %621 = vmatpush1.bf16.msra.mxu0 %v463
  %622 = vmatprep.subr.bf16.mxu0 0
  %623 = vmatpush1.bf16.msra.mxu0 %v464
  %624 = vmatprep.subr.bf16.mxu0 0
  %625 = vmatpush1.bf16.msra.mxu0 %v465
  %626 = vmatprep.subr.bf16.mxu0 0
  %627 = vmatpush1.bf16.msra.mxu0 %v466
  %628 = vmatprep.mubr.bf16.mxu0 %v246
  %629 = vmatmul.mubr.bf16.gmra.mrb[0].mxu0 %v245
  %v630 = vpop.f32.mrb[0].mxu0
  %v631 = vadd.f32 %v534, %v630
  %v632 = vpop.f32.mrb[0].mxu0
  %v633 = vpop.f32.mrb[0].mxu0
  %v634 = vadd.f32 %v537, %v633
  %v635 = vpop.f32.mrb[0].mxu0
  %636 = vmatprep.mubr.bf16.mxu0 %v250
  %637 = vmatmul.mubr.bf16.gmra.mrb[0].mxu0 %v249
  %v638 = vpop.f32.mrb[0].mxu0
  %v639 = vadd.f32 %v542, %v638
  %v640 = vpop.f32.mrb[0].mxu0
  %v641 = vpop.f32.mrb[0].mxu0
  %v642 = vadd.f32 %v545, %v641
  %v643 = vpop.f32.mrb[0].mxu0
  %644 = vmatprep.mubr.bf16.mxu0 %v254
  %645 = vmatmul.mubr.bf16.gmra.mrb[0].mxu0 %v253
  %v646 = vpop.f32.mrb[0].mxu0
  %v647 = vadd.f32 %v550, %v646
  %v648 = vpop.f32.mrb[0].mxu0
  %v649 = vpop.f32.mrb[0].mxu0
  %v650 = vadd.f32 %v553, %v649
  %v651 = vpop.f32.mrb[0].mxu0
  %652 = vmatprep.mubr.bf16.mxu0 %v258
  %653 = vmatmul.mubr.bf16.gmra.mrb[0].mxu0 %v257
  %v654 = vpop.f32.mrb[0].mxu0
  %v655 = vadd.f32 %v558, %v654
  %v656 = vpop.f32.mrb[0].mxu0
  %v657 = vpop.f32.mrb[0].mxu0
  %v658 = vadd.f32 %v561, %v657
  %v659 = vpop.f32.mrb[0].mxu0
  %660 = vmatprep.mubr.bf16.mxu0 %v262
  %661 = vmatmul.mubr.bf16.gmra.mrb[0].mxu0 %v261
  %v662 = vpop.f32.mrb[0].mxu0
  %v663 = vadd.f32 %v566, %v662
  %v664 = vpop.f32.mrb[0].mxu0
  %v665 = vpop.f32.mrb[0].mxu0
  %v666 = vadd.f32 %v569, %v665
  %v667 = vpop.f32.mrb[0].mxu0
  %668 = vmatprep.mubr.bf16.mxu0 %v266
  %669 = vmatmul.mubr.bf16.gmra.mrb[0].mxu0 %v265
  %v670 = vpop.f32.mrb[0].mxu0
  %v671 = vadd.f32 %v574, %v670
  %v672 = vpop.f32.mrb[0].mxu0
  %v673 = vpop.f32.mrb[0].mxu0
  %v674 = vadd.f32 %v577, %v673
  %v675 = vpop.f32.mrb[0].mxu0
  %676 = vmatprep.mubr.bf16.mxu0 %v270
  %677 = vmatmul.mubr.bf16.gmra.mrb[0].mxu0 %v269
  %v678 = vpop.f32.mrb[0].mxu0
  %v679 = vadd.f32 %v582, %v678
  %v680 = vpop.f32.mrb[0].mxu0
  %v681 = vpop.f32.mrb[0].mxu0
  %v682 = vadd.f32 %v585, %v681
  %v683 = vpop.f32.mrb[0].mxu0
  %684 = vmatprep.mubr.bf16.mxu0 %v274
  %685 = vmatmul.mubr.bf16.gmra.mrb[0].mxu0 %v273
  %v686 = vpop.f32.mrb[0].mxu0
  %v687 = vadd.f32 %v590, %v686
  %v688 = vpop.f32.mrb[0].mxu0
  %v689 = vpop.f32.mrb[0].mxu0
  %v690 = vadd.f32 %v593, %v689
  %v691 = vpop.f32.mrb[0].mxu0
  %692 = vdwg.mxu0
  %v693 = vadd.f32 %v35, %v631
  %v694 = vadd.f32 %v36, %v634
  %v695 = vadd.f32 %v37, %v639
  %v696 = vadd.f32 %v38, %v642
  %v697 = vadd.f32 %v39, %v647
  %v698 = vadd.f32 %v40, %v650
  %v699 = vadd.f32 %v41, %v655
  %v700 = vadd.f32 %v42, %v658
  %v701 = vadd.f32 %v43, %v663
  %v702 = vadd.f32 %v44, %v666
  %v703 = vadd.f32 %v45, %v671
  %v704 = vadd.f32 %v46, %v674
  %v705 = vadd.f32 %v47, %v679
  %v706 = vadd.f32 %v48, %v682
  %v707 = vadd.f32 %v49, %v687
  %v708 = vadd.f32 %v50, %v690
  %709 = vst [vmem:[#allocation2] sm:$0xff] %v693
  %710 = vst [vmem:[#allocation2 + $0x8] sm:$0xff] %v694
  %711 = vst [vmem:[#allocation2 + $0x10] sm:$0xff] %v695
  %712 = vst [vmem:[#allocation2 + $0x18] sm:$0xff] %v696
  %713 = vst [vmem:[#allocation2 + $0x20] sm:$0xff] %v697
  %714 = vst [vmem:[#allocation2 + $0x28] sm:$0xff] %v698
  %715 = vst [vmem:[#allocation2 + $0x30] sm:$0xff] %v699
  %716 = vst [vmem:[#allocation2 + $0x38] sm:$0xff] %v700
  %717 = vst [vmem:[#allocation2 + $0x40] sm:$0xff] %v701
  %718 = vst [vmem:[#allocation2 + $0x48] sm:$0xff] %v702
  %719 = vst [vmem:[#allocation2 + $0x50] sm:$0xff] %v703
  %720 = vst [vmem:[#allocation2 + $0x58] sm:$0xff] %v704
  %721 = vst [vmem:[#allocation2 + $0x60] sm:$0xff] %v705
  %722 = vst [vmem:[#allocation2 + $0x68] sm:$0xff] %v706
  %723 = vst [vmem:[#allocation2 + $0x70] sm:$0xff] %v707
  %724 = vst [vmem:[#allocation2 + $0x78] sm:$0xff] %v708
  // Predicated region
  $region18: #{vae_forward.36} parent=0 // pred_check
    %p725 = pneg %p15
  $region19: #{vae_forward.36} parent=0 // pred_check_branch
    %727 = sbr.rel (%p725) target = $region21
  $region20: #{vae_forward.36} parent=0 // pred_region
    %v728 = vld [vmem:[#allocation2] sm:$0xff]
    %v729 = vld [vmem:[#allocation2 + $0x8] sm:$0xff]
    %v730 = vld [vmem:[#allocation2 + $0x10] sm:$0xff]
    %v731 = vld [vmem:[#allocation2 + $0x18] sm:$0xff]
    %v732 = vld [vmem:[#allocation2 + $0x20] sm:$0xff]
    %v733 = vld [vmem:[#allocation2 + $0x28] sm:$0xff]
    %v734 = vld [vmem:[#allocation2 + $0x30] sm:$0xff]
    %v735 = vld [vmem:[#allocation2 + $0x38] sm:$0xff]
    %v736 = vld [vmem:[#allocation2 + $0x40] sm:$0xff]
    %v737 = vld [vmem:[#allocation2 + $0x48] sm:$0xff]
    %v738 = vld [vmem:[#allocation2 + $0x50] sm:$0xff]
    %v739 = vld [vmem:[#allocation2 + $0x58] sm:$0xff]
    %v740 = vld [vmem:[#allocation2 + $0x60] sm:$0xff]
    %v741 = vld [vmem:[#allocation2 + $0x68] sm:$0xff]
    %v742 = vld [vmem:[#allocation2 + $0x70] sm:$0xff]
    %v743 = vld [vmem:[#allocation2 + $0x78] sm:$0xff]
    %v744 = vld [vmem:[%s2] sm:$0x1]
    %v746 = vlaneseq
    %v747 = vshrl.u32 %v746, 7
    %v748 = vsub.s32 0, %v747
    %v749 = vrot.slane %v744, %v748
    %v751 = vadd.f32 %v728, %v749
    %v752 = vadd.f32 %v729, %v749
    %v753 = vadd.f32 %v730, %v749
    %v754 = vadd.f32 %v731, %v749
    %v755 = vadd.f32 %v732, %v749
    %v756 = vadd.f32 %v733, %v749
    %v757 = vadd.f32 %v734, %v749
    %v758 = vadd.f32 %v735, %v749
    %v759 = vadd.f32 %v736, %v749
    %v760 = vadd.f32 %v737, %v749
    %v761 = vadd.f32 %v738, %v749
    %v762 = vadd.f32 %v739, %v749
    %v763 = vadd.f32 %v740, %v749
    %v764 = vadd.f32 %v741, %v749
    %v765 = vadd.f32 %v742, %v749
    %v766 = vadd.f32 %v743, %v749
    %v767 = vmax.f32 %v751, 0.0
    %v768 = vmax.f32 %v752, 0.0
    %v769 = vmax.f32 %v753, 0.0
    %v770 = vmax.f32 %v754, 0.0
    %v771 = vmax.f32 %v755, 0.0
    %v772 = vmax.f32 %v756, 0.0
    %v773 = vmax.f32 %v757, 0.0
    %v774 = vmax.f32 %v758, 0.0
    %v775 = vmax.f32 %v759, 0.0
    %v776 = vmax.f32 %v760, 0.0
    %v777 = vmax.f32 %v761, 0.0
    %v778 = vmax.f32 %v762, 0.0
    %v779 = vmax.f32 %v763, 0.0
    %v780 = vmax.f32 %v764, 0.0
    %v781 = vmax.f32 %v765, 0.0
    %v782 = vmax.f32 %v766, 0.0
    %v783 = vpack.c.bf16 %v768, %v767
    %v784 = vpack.c.bf16 %v770, %v769
    %v785 = vpack.c.bf16 %v772, %v771
    %v786 = vpack.c.bf16 %v774, %v773
    %v787 = vpack.c.bf16 %v776, %v775
    %v788 = vpack.c.bf16 %v778, %v777
    %v789 = vpack.c.bf16 %v780, %v779
    %v790 = vpack.c.bf16 %v782, %v781
    %v799 = vunpack.c.l.b16 %v783
    %v800 = vunpack.c.h.b16 %v783
    %v801 = vunpack.c.l.b16 %v784
    %v802 = vunpack.c.h.b16 %v784
    %v803 = vunpack.c.l.b16 %v785
    %v804 = vunpack.c.h.b16 %v785
    %v805 = vunpack.c.l.b16 %v786
    %v806 = vunpack.c.h.b16 %v786
    %v807 = vunpack.c.l.b16 %v787
    %v808 = vunpack.c.h.b16 %v787
    %v809 = vunpack.c.l.b16 %v788
    %v810 = vunpack.c.h.b16 %v788
    %v811 = vunpack.c.l.b16 %v789
    %v812 = vunpack.c.h.b16 %v789
    %v813 = vunpack.c.l.b16 %v790
    %v814 = vunpack.c.h.b16 %v790
    %v815 = vpack.c.b16 %v799, %v799
    %v816 = vpack.c.b16 %v800, %v800
    %v817 = vpack.c.b16 %v801, %v801
    %v818 = vpack.c.b16 %v802, %v802
    %v819 = vpack.c.b16 %v803, %v803
    %v820 = vpack.c.b16 %v804, %v804
    %v821 = vpack.c.b16 %v805, %v805
    %v822 = vpack.c.b16 %v806, %v806
    %v823 = vpack.c.b16 %v807, %v807
    %v824 = vpack.c.b16 %v808, %v808
    %v825 = vpack.c.b16 %v809, %v809
    %v826 = vpack.c.b16 %v810, %v810
    %v827 = vpack.c.b16 %v811, %v811
    %v828 = vpack.c.b16 %v812, %v812
    %v829 = vpack.c.b16 %v813, %v813
    %v830 = vpack.c.b16 %v814, %v814
    %847 = vst [vmem:[%s3] sm:$0xf] %v815
    %848 = vst [vmem:[%s3 + $0x4] sm:$0xf] %v816
    %849 = vst [vmem:[%s3 + $0x8] sm:$0xf] %v817
    %850 = vst [vmem:[%s3 + $0xc] sm:$0xf] %v818
    %851 = vst [vmem:[%s3 + $0x10] sm:$0xf] %v819
    %852 = vst [vmem:[%s3 + $0x14] sm:$0xf] %v820
    %853 = vst [vmem:[%s3 + $0x18] sm:$0xf] %v821
    %854 = vst [vmem:[%s3 + $0x1c] sm:$0xf] %v822
    %855 = vst [vmem:[%s3 + $0x20] sm:$0xf] %v823
    %856 = vst [vmem:[%s3 + $0x24] sm:$0xf] %v824
    %857 = vst [vmem:[%s3 + $0x28] sm:$0xf] %v825
    %858 = vst [vmem:[%s3 + $0x2c] sm:$0xf] %v826
    %859 = vst [vmem:[%s3 + $0x30] sm:$0xf] %v827
    %860 = vst [vmem:[%s3 + $0x34] sm:$0xf] %v828
    %861 = vst [vmem:[%s3 + $0x38] sm:$0xf] %v829
    %862 = vst [vmem:[%s3 + $0x3c] sm:$0xf] %v830
  $region21: #{vae_forward.36} parent=0 // pred_fallthru
    _
  // Predicated region
  $region22: #{vae_forward.36} parent=0 // pred_check
    _
  $region23: #{vae_forward.36} parent=0 // pred_check_branch
    %864 = sbr.rel (0) target = $region25
  $region24: #{vae_forward.36} parent=0 // pred_region
    _
  $region25: #{vae_forward.36} parent=0 // pred_fallthru
    _
  // Predicated region
  $region26: #{vae_forward.36} parent=0 // pred_check
    _
  $region27: #{vae_forward.36} parent=0 // pred_check_branch
    %866 = sbr.rel (0) target = $region29
  $region28: #{vae_forward.36} parent=0 // pred_region
    _
  $region29: #{vae_forward.36} parent=0 // pred_fallthru
    _

// kernel: vae_forward.40
$region0: #{vae_forward.40}
  #allocation0 [shape = 'u32[]', space=smem, size = 0x4, offset = 0x4, fixed_abs, tag = 'smem constant byte address 0x4 - core index']
  #allocation1 [shape = 'u32[144,128]{1,0:T(1,128)}', space=vmem, size = 0x12000, scoped, tag = 'internal scratch']
  #allocation2 [shape = 'f32[256,128]{1,0:T(8,128)}', space=vmem, size = 0x20000, scoped, tag = 'scratch operand']
  %s0 = inlined_call_operand.vmem [shape: bf16[512,256], index: 0, kind: input, shape index: {}]
  %s1 = inlined_call_operand.vmem [shape: bf16[256,128], index: 1, kind: input, shape index: {}]
  %s2 = inlined_call_operand.vmem [shape: f32[1,128], index: 2, kind: input, shape index: {}]
  %s3 = inlined_call_operand.vmem [shape: f32[512,128], index: 3, kind: output, shape index: {}]
  %s4 = sld [smem:[#allocation0]]
  $region53: #{vae_forward.40} parent=0
    _
  %s6 = ssub.s32 1, %s4
  %s7 = scalar_select 0, %s6, %s4
  loop: start=0, step=1, limit=4
  $region2: #{vae_forward.40} parent=0 // loop_pre_header
    _
  $region3: #{vae_forward.40} parent=0 // loop_header
    %s9 = sphi 0, %s13
    %p10 = scmp.ge.s32.totalorder %s9, 4
    %s16 = sphi 0, %s35
    %s17 = sphi 0, %s31
    %s18 = sphi 0, %s27
    %s19 = sphi 0, %s16
    %s20 = sphi 0, %s17
    %s21 = sphi 0, %s18
    %s22 = sphi 0, %s19
    %s23 = sphi 0, %s20
    %s24 = sphi 0, %s21
    %s40 = sphi 0, %s42
    %s43 = sphi 0, %s40
    %s44 = sphi 0, %s43
    %s60 = sphi 0, %s44
    %s68 = sphi 0, %s70
    %s71 = sphi 0, %s68
    %s72 = sphi 0, %s71
    %s88 = sphi 0, %s72
    %s94 = sphi 0, %s96
    %s97 = sphi 0, %s94
    %s98 = sphi 0, %s97
    %s114 = sphi 0, %s98
    %s122 = sphi 0, %s124
    %s125 = sphi 0, %s122
    %s126 = sphi 0, %s125
    %s142 = sphi 0, %s126
  $region4: #{vae_forward.40} parent=0 // loop_header_branch
    %12 = sbr.rel (%p10) target = $region8
  $region5: #{vae_forward.40} parent=0 // loop_body
    %s14 = ssub.s32 %s9, 1
    %s15 = ssub.s32 %s9, 2
    %s25 = sadd.s32 1, %s18
    %p26 = scmp.ge.s32.totalorder %s25, 1
    %s27 = scalar_select %p26, 0, %s25
    %s28 = sadd.s32 1, %s17
    %s29 = scalar_select %p26, %s28, %s17
    %p30 = scmp.ge.s32.totalorder %s29, 1
    %s31 = scalar_select %p30, 0, %s29
    %s32 = sadd.s32 1, %s16
    %s33 = scalar_select %p30, %s32, %s16
    %p34 = scmp.ge.s32.totalorder %s33, 2
    %s35 = scalar_select %p34, 0, %s33
    %s36 = ssub.s32 %s16, %s35
    %s37 = ssub.s32 %s18, %s27
    %s38 = sor.u32 %s36, %s37
    %p39 = scmp.eq.s32.totalorder %s38, 0
    %s41 = sadd.s32 %s40, 1
    %s42 = scalar_select %p39, %s40, %s41
    %p45 = pneg %p39
    %p46 = scmp.eq.s32.totalorder %s9, 1
    %p47 = por %p45, %p46
    %p48 = scmp.ne.s32.totalorder %s40, %s43
    %p49 = scmp.eq.s32.totalorder %s9, 0
    %p50 = por %p48, %p49
    %p51 = scmp.ne.s32.totalorder %s40, %s43
    %p52 = scmp.eq.s32.totalorder %s14, 1
    %p53 = por %p51, %p52
    %p54 = scmp.ne.s32.totalorder %s43, %s44
    %p55 = scmp.eq.s32.totalorder %s14, 0
    %p56 = por %p54, %p55
    %p57 = scmp.ne.s32.totalorder %s43, %s44
    %p58 = scmp.eq.s32.totalorder %s15, 1
    %p59 = por %p57, %p58
    %p61 = scmp.ne.s32.totalorder %s44, %s60
    %p62 = scmp.eq.s32.totalorder %s15, 0
    %p63 = por %p61, %p62
    %s64 = ssub.s32 %s18, %s27
    %s65 = ssub.s32 %s17, %s31
    %s66 = sor.u32 %s64, %s65
    %p67 = scmp.eq.s32.totalorder %s66, 0
    %s69 = sadd.s32 %s68, 1
    %s70 = scalar_select %p67, %s68, %s69
    %p73 = pneg %p67
    %p74 = scmp.eq.s32.totalorder %s9, 1
    %p75 = por %p73, %p74
    %p76 = scmp.ne.s32.totalorder %s68, %s71
    %p77 = scmp.eq.s32.totalorder %s9, 0
    %p78 = por %p76, %p77
    %p79 = scmp.ne.s32.totalorder %s68, %s71
    %p80 = scmp.eq.s32.totalorder %s14, 1
    %p81 = por %p79, %p80
    %p82 = scmp.ne.s32.totalorder %s71, %s72
    %p83 = scmp.eq.s32.totalorder %s14, 0
    %p84 = por %p82, %p83
    %p85 = scmp.ne.s32.totalorder %s71, %s72
    %p86 = scmp.eq.s32.totalorder %s15, 1
    %p87 = por %p85, %p86
    %p89 = scmp.ne.s32.totalorder %s72, %s88
    %p90 = scmp.eq.s32.totalorder %s15, 0
    %p91 = por %p89, %p90
    %s92 = ssub.s32 %s17, %s31
    %p93 = scmp.eq.s32.totalorder %s92, 0
    %s95 = sadd.s32 %s94, 1
    %s96 = scalar_select %p93, %s94, %s95
    %p99 = pneg %p93
    %p100 = scmp.eq.s32.totalorder %s9, 1
    %p101 = por %p99, %p100
    %p102 = scmp.ne.s32.totalorder %s94, %s97
    %p103 = scmp.eq.s32.totalorder %s9, 0
    %p104 = por %p102, %p103
    %p105 = scmp.ne.s32.totalorder %s94, %s97
    %p106 = scmp.eq.s32.totalorder %s14, 1
    %p107 = por %p105, %p106
    %p108 = scmp.ne.s32.totalorder %s97, %s98
    %p109 = scmp.eq.s32.totalorder %s14, 0
    %p110 = por %p108, %p109
    %p111 = scmp.ne.s32.totalorder %s97, %s98
    %p112 = scmp.eq.s32.totalorder %s15, 1
    %p113 = por %p111, %p112
    %p115 = scmp.ne.s32.totalorder %s98, %s114
    %p116 = scmp.eq.s32.totalorder %s15, 0
    %p117 = por %p115, %p116
    %s118 = ssub.s32 %s16, %s35
    %s119 = ssub.s32 %s17, %s31
    %s120 = sor.u32 %s118, %s119
    %p121 = scmp.eq.s32.totalorder %s120, 0
    %s123 = sadd.s32 %s122, 1
    %s124 = scalar_select %p121, %s122, %s123
    %p127 = pneg %p121
    %p128 = scmp.eq.s32.totalorder %s9, 1
    %p129 = por %p127, %p128
    %p130 = scmp.ne.s32.totalorder %s122, %s125
    %p131 = scmp.eq.s32.totalorder %s9, 0
    %p132 = por %p130, %p131
    %p133 = scmp.ne.s32.totalorder %s122, %s125
    %p134 = scmp.eq.s32.totalorder %s14, 1
    %p135 = por %p133, %p134
    %p136 = scmp.ne.s32.totalorder %s125, %s126
    %p137 = scmp.eq.s32.totalorder %s14, 0
    %p138 = por %p136, %p137
    %p139 = scmp.ne.s32.totalorder %s125, %s126
    %p140 = scmp.eq.s32.totalorder %s15, 1
    %p141 = por %p139, %p140
    %p143 = scmp.ne.s32.totalorder %s126, %s142
    %p144 = scmp.eq.s32.totalorder %s15, 0
    %p145 = por %p143, %p144
    %p146 = scmp.le.s32.totalorder 1, %s9
    %p147 = scmp.lt.s32.totalorder %s9, 3
    %p148 = pnand %p146, %p147
    %p149 = pneg %p148
    // Predicated region
    $region9: #{vae_forward.40} parent=5 // pred_check
      _
    $region10: #{vae_forward.40} parent=5 // pred_check_branch
      %151 = sbr.rel (%p148) target = $region12
    $region11: #{vae_forward.40} parent=5 // pred_region
      %s152 = ssub.s32 %s9, 1
      // Predicated region
      $region13: #{vae_forward.40} parent=11 // pred_check
        %p153 = pneg %p84
      $region14: #{vae_forward.40} parent=11 // pred_check_branch
        %155 = sbr.rel (%p153) target = $region16
      $region15: #{vae_forward.40} parent=11 // pred_region
        %s156 = smul.u32 32, %s21
        %p157 = scmp.lt.s32.totalorder %s156, 31
        %s158 = scalar_select %p157, %s156, 31
        %p159 = scmp.lt.s32.totalorder %s20, 0
        %s160 = scalar_select %p159, %s20, 0
        %s161 = sadd.s32 %s160, %s158
        %s162 = smul.addr %s161, 4
        %s163 = scalar_lea.vmem %s1, %s162
        %s164 = smul.u32 32, %s21
      $region16: #{vae_forward.40} parent=11 // pred_fallthru
        _
      // Predicated region
      $region17: #{vae_forward.40} parent=11 // pred_check
        %p165 = pneg %p110
      $region18: #{vae_forward.40} parent=11 // pred_check_branch
        %167 = sbr.rel (%p165) target = $region20
      $region19: #{vae_forward.40} parent=11 // pred_region
        %p168 = scmp.lt.s32.totalorder %s20, 0
        %s169 = scalar_select %p168, %s20, 0
        %s170 = scalar_lea.vmem %s2, %s169
      $region20: #{vae_forward.40} parent=11 // pred_fallthru
        _
    $region12: #{vae_forward.40} parent=5 // pred_fallthru
      _
    %p171 = scmp.lt.s32.totalorder %s9, 2
    // Predicated region
    $region21: #{vae_forward.40} parent=5 // pred_check
      %p172 = pneg %p171
    $region22: #{vae_forward.40} parent=5 // pred_check_branch
      %174 = sbr.rel (%p172) target = $region24
    $region23: #{vae_forward.40} parent=5 // pred_region
      // Predicated region
      $region25: #{vae_forward.40} parent=23 // pred_check
        %p175 = pneg %p50
      $region26: #{vae_forward.40} parent=23 // pred_check_branch
        %177 = sbr.rel (%p175) target = $region28
      $region27: #{vae_forward.40} parent=23 // pred_region
        %s178 = smul.u32 32, %s16
        %s179 = smul.u32 2, %s18
        %p180 = scmp.lt.s32.totalorder %s178, 63
        %s181 = scalar_select %p180, %s178, 63
        %p182 = scmp.lt.s32.totalorder %s179, 1
        %s183 = scalar_select %p182, %s179, 1
        %s184 = smul.addr %s181, 2
        %s185 = sadd.s32 %s183, %s184
        %s186 = smul.addr %s185, 4
        %s187 = scalar_lea.vmem %s0, %s186
        %s188 = smul.u32 32, %s16
        %s189 = smul.u32 2, %s18
      $region28: #{vae_forward.40} parent=23 // pred_fallthru
        _
    $region24: #{vae_forward.40} parent=5 // pred_fallthru
      _
    %p190 = scmp.le.s32.totalorder 1, %s9
    %p191 = scmp.lt.s32.totalorder %s9, 3
    %p192 = pnand %p190, %p191
    %p193 = pneg %p192
    // Predicated region
    $region29: #{vae_forward.40} parent=5 // pred_check
      _
    $region30: #{vae_forward.40} parent=5 // pred_check_branch
      %195 = sbr.rel (%p192) target = $region32
    $region31: #{vae_forward.40} parent=5 // pred_region
      %s196 = ssub.s32 %s9, 1
      %s197 = smul.u32 32, %s19
      %s198 = smul.u32 2, %s21
      %p199 = scmp.lt.s32.totalorder %s197, 63
      %s200 = scalar_select %p199, %s197, 63
      %p201 = scmp.lt.s32.totalorder %s198, 1
      %s202 = scalar_select %p201, %s198, 1
      %s203 = smul.addr %s200, 2
      %s204 = sadd.s32 %s202, %s203
      %s205 = smul.addr %s204, 4
      %s206 = scalar_lea.vmem %s0, %s205
      %p207 = pneg %p56
      %p208 = pneg %p53
      %s209 = smul.u32 32, %s21
      %p210 = scmp.lt.s32.totalorder %s209, 31
      %s211 = scalar_select %p210, %s209, 31
      %p212 = scmp.lt.s32.totalorder %s20, 0
      %s213 = scalar_select %p212, %s20, 0
      %s214 = sadd.s32 %s213, %s211
      %s215 = smul.addr %s214, 4
      %s216 = scalar_lea.vmem %s1, %s215
      %p217 = pneg %p84
      %p218 = pneg %p81
      %p219 = scmp.lt.s32.totalorder %s20, 0
      %s220 = scalar_select %p219, %s20, 0
      %s221 = scalar_lea.vmem %s2, %s220
      %p222 = pneg %p110
      %p223 = pneg %p107
      %p224 = pneg %p138
      %p225 = pneg %p135
      %s226 = smul.u32 32, %s19
      %p227 = scmp.lt.s32.totalorder %s226, 63
      %s228 = scalar_select %p227, %s226, 63
      %p229 = scmp.lt.s32.totalorder %s20, 0
      %s230 = scalar_select %p229, %s20, 0
      %s231 = sadd.s32 %s230, %s228
      %s232 = smul.addr %s231, 8
      %s233 = scalar_lea.vmem %s3, %s232
      %s234 = smul.u32 32, %s19
      %s235 = smul.u32 2, %s21
      %p236 = scmp.lt.s32.totalorder %s234, 63
      %s237 = scalar_select %p236, %s234, 63
      %p238 = scmp.lt.s32.totalorder %s235, 1
      %s239 = scalar_select %p238, %s235, 1
      %s240 = smul.addr %s237, 2
      %s241 = sadd.s32 %s239, %s240
      %s242 = smul.addr %s241, 4
      %s243 = scalar_lea.vmem %s0, %s242
      %s244 = smul.u32 32, %s19
      %s245 = smul.u32 2, %s21
      %s246 = smul.u32 32, %s21
      %p247 = scmp.lt.s32.totalorder %s246, 31
      %s248 = scalar_select %p247, %s246, 31
      %p249 = scmp.lt.s32.totalorder %s20, 0
      %s250 = scalar_select %p249, %s20, 0
      %s251 = sadd.s32 %s250, %s248
      %s252 = smul.addr %s251, 4
      %s253 = scalar_lea.vmem %s1, %s252
      %s254 = smul.u32 32, %s21
      %p255 = scmp.lt.s32.totalorder %s20, 0
      %s256 = scalar_select %p255, %s20, 0
      %s257 = scalar_lea.vmem %s2, %s256
      %s258 = smul.u32 32, %s19
      %p259 = scmp.lt.s32.totalorder %s258, 63
      %s260 = scalar_select %p259, %s258, 63
      %p261 = scmp.lt.s32.totalorder %s20, 0
      %s262 = scalar_select %p261, %s20, 0
      %s263 = sadd.s32 %s262, %s260
      %s264 = smul.addr %s263, 8
      %s265 = scalar_lea.vmem %s3, %s264
      %s266 = smul.u32 32, %s19
      %p268 = scmp.eq.s32.totalorder %s21, 0
      // Predicated region
      $region33: #{vae_forward.40} parent=31 // pred_check
        %p269 = pneg %p268
      $region34: #{vae_forward.40} parent=31 // pred_check_branch
        %271 = sbr.rel (%p269) target = $region36
      $region35: #{vae_forward.40} parent=31 // pred_region
        %272 = vst [vmem:[#allocation2] sm:$0xff] 0.0
        %273 = vst [vmem:[#allocation2 + $0x8] sm:$0xff] 0.0
        %274 = vst [vmem:[#allocation2 + $0x10] sm:$0xff] 0.0
        %275 = vst [vmem:[#allocation2 + $0x18] sm:$0xff] 0.0
        %276 = vst [vmem:[#allocation2 + $0x20] sm:$0xff] 0.0
        %277 = vst [vmem:[#allocation2 + $0x28] sm:$0xff] 0.0
        %278 = vst [vmem:[#allocation2 + $0x30] sm:$0xff] 0.0
        %279 = vst [vmem:[#allocation2 + $0x38] sm:$0xff] 0.0
        %280 = vst [vmem:[#allocation2 + $0x40] sm:$0xff] 0.0
        %281 = vst [vmem:[#allocation2 + $0x48] sm:$0xff] 0.0
        %282 = vst [vmem:[#allocation2 + $0x50] sm:$0xff] 0.0
        %283 = vst [vmem:[#allocation2 + $0x58] sm:$0xff] 0.0
        %284 = vst [vmem:[#allocation2 + $0x60] sm:$0xff] 0.0
        %285 = vst [vmem:[#allocation2 + $0x68] sm:$0xff] 0.0
        %286 = vst [vmem:[#allocation2 + $0x70] sm:$0xff] 0.0
        %287 = vst [vmem:[#allocation2 + $0x78] sm:$0xff] 0.0
        %288 = vst [vmem:[#allocation2 + $0x80] sm:$0xff] 0.0
        %289 = vst [vmem:[#allocation2 + $0x88] sm:$0xff] 0.0
        %290 = vst [vmem:[#allocation2 + $0x90] sm:$0xff] 0.0
        %291 = vst [vmem:[#allocation2 + $0x98] sm:$0xff] 0.0
        %292 = vst [vmem:[#allocation2 + $0xa0] sm:$0xff] 0.0
        %293 = vst [vmem:[#allocation2 + $0xa8] sm:$0xff] 0.0
        %294 = vst [vmem:[#allocation2 + $0xb0] sm:$0xff] 0.0
        %295 = vst [vmem:[#allocation2 + $0xb8] sm:$0xff] 0.0
        %296 = vst [vmem:[#allocation2 + $0xc0] sm:$0xff] 0.0
        %297 = vst [vmem:[#allocation2 + $0xc8] sm:$0xff] 0.0
        %298 = vst [vmem:[#allocation2 + $0xd0] sm:$0xff] 0.0
        %299 = vst [vmem:[#allocation2 + $0xd8] sm:$0xff] 0.0
        %300 = vst [vmem:[#allocation2 + $0xe0] sm:$0xff] 0.0
        %301 = vst [vmem:[#allocation2 + $0xe8] sm:$0xff] 0.0
        %302 = vst [vmem:[#allocation2 + $0xf0] sm:$0xff] 0.0
        %303 = vst [vmem:[#allocation2 + $0xf8] sm:$0xff] 0.0
      $region36: #{vae_forward.40} parent=31 // pred_fallthru
        _
      %v304 = vld [vmem:[#allocation2] sm:$0xff]
      %v305 = vld [vmem:[#allocation2 + $0x8] sm:$0xff]
      %v306 = vld [vmem:[#allocation2 + $0x10] sm:$0xff]
      %v307 = vld [vmem:[#allocation2 + $0x18] sm:$0xff]
      %v308 = vld [vmem:[#allocation2 + $0x20] sm:$0xff]
      %v309 = vld [vmem:[#allocation2 + $0x28] sm:$0xff]
      %v310 = vld [vmem:[#allocation2 + $0x30] sm:$0xff]
      %v311 = vld [vmem:[#allocation2 + $0x38] sm:$0xff]
      %v312 = vld [vmem:[#allocation2 + $0x40] sm:$0xff]
      %v313 = vld [vmem:[#allocation2 + $0x48] sm:$0xff]
      %v314 = vld [vmem:[#allocation2 + $0x50] sm:$0xff]
      %v315 = vld [vmem:[#allocation2 + $0x58] sm:$0xff]
      %v316 = vld [vmem:[#allocation2 + $0x60] sm:$0xff]
      %v317 = vld [vmem:[#allocation2 + $0x68] sm:$0xff]
      %v318 = vld [vmem:[#allocation2 + $0x70] sm:$0xff]
      %v319 = vld [vmem:[#allocation2 + $0x78] sm:$0xff]
      %v320 = vld [vmem:[#allocation2 + $0x80] sm:$0xff]
      %v321 = vld [vmem:[#allocation2 + $0x88] sm:$0xff]
      %v322 = vld [vmem:[#allocation2 + $0x90] sm:$0xff]
      %v323 = vld [vmem:[#allocation2 + $0x98] sm:$0xff]
      %v324 = vld [vmem:[#allocation2 + $0xa0] sm:$0xff]
      %v325 = vld [vmem:[#allocation2 + $0xa8] sm:$0xff]
      %v326 = vld [vmem:[#allocation2 + $0xb0] sm:$0xff]
      %v327 = vld [vmem:[#allocation2 + $0xb8] sm:$0xff]
      %v328 = vld [vmem:[#allocation2 + $0xc0] sm:$0xff]
      %v329 = vld [vmem:[#allocation2 + $0xc8] sm:$0xff]
      %v330 = vld [vmem:[#allocation2 + $0xd0] sm:$0xff]
      %v331 = vld [vmem:[#allocation2 + $0xd8] sm:$0xff]
      %v332 = vld [vmem:[#allocation2 + $0xe0] sm:$0xff]
      %v333 = vld [vmem:[#allocation2 + $0xe8] sm:$0xff]
      %v334 = vld [vmem:[#allocation2 + $0xf0] sm:$0xff]
      %v335 = vld [vmem:[#allocation2 + $0xf8] sm:$0xff]
      %v336 = vld [vmem:[%s243] sm:$0xff]
      %v337 = vld [vmem:[%s243 + $0x8] sm:$0xff]
      %v338 = vld [vmem:[%s243 + $0x10] sm:$0xff]
      %v339 = vld [vmem:[%s243 + $0x18] sm:$0xff]
      %v340 = vld [vmem:[%s243 + $0x20] sm:$0xff]
      %v341 = vld [vmem:[%s243 + $0x28] sm:$0xff]
      %v342 = vld [vmem:[%s243 + $0x30] sm:$0xff]
      %v343 = vld [vmem:[%s243 + $0x38] sm:$0xff]
      %v344 = vld [vmem:[%s243 + $0x40] sm:$0xff]
      %v345 = vld [vmem:[%s243 + $0x48] sm:$0xff]
      %v346 = vld [vmem:[%s243 + $0x50] sm:$0xff]
      %v347 = vld [vmem:[%s243 + $0x58] sm:$0xff]
      %v348 = vld [vmem:[%s243 + $0x60] sm:$0xff]
      %v349 = vld [vmem:[%s243 + $0x68] sm:$0xff]
      %v350 = vld [vmem:[%s243 + $0x70] sm:$0xff]
      %v351 = vld [vmem:[%s243 + $0x78] sm:$0xff]
      %v352 = vld [vmem:[%s243 + $0x80] sm:$0xff]
      %v353 = vld [vmem:[%s243 + $0x88] sm:$0xff]
      %v354 = vld [vmem:[%s243 + $0x90] sm:$0xff]
      %v355 = vld [vmem:[%s243 + $0x98] sm:$0xff]
      %v356 = vld [vmem:[%s243 + $0xa0] sm:$0xff]
      %v357 = vld [vmem:[%s243 + $0xa8] sm:$0xff]
      %v358 = vld [vmem:[%s243 + $0xb0] sm:$0xff]
      %v359 = vld [vmem:[%s243 + $0xb8] sm:$0xff]
      %v360 = vld [vmem:[%s243 + $0xc0] sm:$0xff]
      %v361 = vld [vmem:[%s243 + $0xc8] sm:$0xff]
      %v362 = vld [vmem:[%s243 + $0xd0] sm:$0xff]
      %v363 = vld [vmem:[%s243 + $0xd8] sm:$0xff]
      %v364 = vld [vmem:[%s243 + $0xe0] sm:$0xff]
      %v365 = vld [vmem:[%s243 + $0xe8] sm:$0xff]
      %v366 = vld [vmem:[%s243 + $0xf0] sm:$0xff]
      %v367 = vld [vmem:[%s243 + $0xf8] sm:$0xff]
      %v368 = vld [vmem:[%s253] sm:$0xf]
      %v369 = vld [vmem:[%s253 + $0x4] sm:$0xf]
      %v370 = vld [vmem:[%s253 + $0x8] sm:$0xf]
      %v371 = vld [vmem:[%s253 + $0xc] sm:$0xf]
      %v372 = vld [vmem:[%s253 + $0x10] sm:$0xf]
      %v373 = vld [vmem:[%s253 + $0x14] sm:$0xf]
      %v374 = vld [vmem:[%s253 + $0x18] sm:$0xf]
      %v375 = vld [vmem:[%s253 + $0x1c] sm:$0xf]
      %v376 = vld [vmem:[%s253 + $0x20] sm:$0xf]
      %v377 = vld [vmem:[%s253 + $0x24] sm:$0xf]
      %v378 = vld [vmem:[%s253 + $0x28] sm:$0xf]
      %v379 = vld [vmem:[%s253 + $0x2c] sm:$0xf]
      %v380 = vld [vmem:[%s253 + $0x30] sm:$0xf]
      %v381 = vld [vmem:[%s253 + $0x34] sm:$0xf]
      %v382 = vld [vmem:[%s253 + $0x38] sm:$0xf]
      %v383 = vld [vmem:[%s253 + $0x3c] sm:$0xf]
      %v384 = vld [vmem:[%s253 + $0x40] sm:$0xf]
      %v385 = vld [vmem:[%s253 + $0x44] sm:$0xf]
      %v386 = vld [vmem:[%s253 + $0x48] sm:$0xf]
      %v387 = vld [vmem:[%s253 + $0x4c] sm:$0xf]
      %v388 = vld [vmem:[%s253 + $0x50] sm:$0xf]
      %v389 = vld [vmem:[%s253 + $0x54] sm:$0xf]
      %v390 = vld [vmem:[%s253 + $0x58] sm:$0xf]
      %v391 = vld [vmem:[%s253 + $0x5c] sm:$0xf]
      %v392 = vld [vmem:[%s253 + $0x60] sm:$0xf]
      %v393 = vld [vmem:[%s253 + $0x64] sm:$0xf]
      %v394 = vld [vmem:[%s253 + $0x68] sm:$0xf]
      %v395 = vld [vmem:[%s253 + $0x6c] sm:$0xf]
      %v396 = vld [vmem:[%s253 + $0x70] sm:$0xf]
      %v397 = vld [vmem:[%s253 + $0x74] sm:$0xf]
      %v398 = vld [vmem:[%s253 + $0x78] sm:$0xf]
      %v399 = vld [vmem:[%s253 + $0x7c] sm:$0xf]
      %v432 = vunpack.c.l.b16 %v336
      %v433 = vunpack.c.h.b16 %v336
      %v434 = vunpack.c.l.b16 %v337
      %v435 = vunpack.c.h.b16 %v337
      %v436 = vunpack.c.l.b16 %v338
      %v437 = vunpack.c.h.b16 %v338
      %v438 = vunpack.c.l.b16 %v339
      %v439 = vunpack.c.h.b16 %v339
      %v440 = vunpack.c.l.b16 %v340
      %v441 = vunpack.c.h.b16 %v340
      %v442 = vunpack.c.l.b16 %v341
      %v443 = vunpack.c.h.b16 %v341
      %v444 = vunpack.c.l.b16 %v342
      %v445 = vunpack.c.h.b16 %v342
      %v446 = vunpack.c.l.b16 %v343
      %v447 = vunpack.c.h.b16 %v343
      %v448 = vunpack.c.l.b16 %v344
      %v449 = vunpack.c.h.b16 %v344
      %v450 = vunpack.c.l.b16 %v345
      %v451 = vunpack.c.h.b16 %v345
      %v452 = vunpack.c.l.b16 %v346
      %v453 = vunpack.c.h.b16 %v346
      %v454 = vunpack.c.l.b16 %v347
      %v455 = vunpack.c.h.b16 %v347
      %v456 = vunpack.c.l.b16 %v348
      %v457 = vunpack.c.h.b16 %v348
      %v458 = vunpack.c.l.b16 %v349
      %v459 = vunpack.c.h.b16 %v349
      %v460 = vunpack.c.l.b16 %v350
      %v461 = vunpack.c.h.b16 %v350
      %v462 = vunpack.c.l.b16 %v351
      %v463 = vunpack.c.h.b16 %v351
      %v464 = vunpack.c.l.b16 %v352
      %v465 = vunpack.c.h.b16 %v352
      %v466 = vunpack.c.l.b16 %v353
      %v467 = vunpack.c.h.b16 %v353
      %v468 = vunpack.c.l.b16 %v354
      %v469 = vunpack.c.h.b16 %v354
      %v470 = vunpack.c.l.b16 %v355
      %v471 = vunpack.c.h.b16 %v355
      %v472 = vunpack.c.l.b16 %v356
      %v473 = vunpack.c.h.b16 %v356
      %v474 = vunpack.c.l.b16 %v357
      %v475 = vunpack.c.h.b16 %v357
      %v476 = vunpack.c.l.b16 %v358
      %v477 = vunpack.c.h.b16 %v358
      %v478 = vunpack.c.l.b16 %v359
      %v479 = vunpack.c.h.b16 %v359
      %v480 = vunpack.c.l.b16 %v360
      %v481 = vunpack.c.h.b16 %v360
      %v482 = vunpack.c.l.b16 %v361
      %v483 = vunpack.c.h.b16 %v361
      %v484 = vunpack.c.l.b16 %v362
      %v485 = vunpack.c.h.b16 %v362
      %v486 = vunpack.c.l.b16 %v363
      %v487 = vunpack.c.h.b16 %v363
      %v488 = vunpack.c.l.b16 %v364
      %v489 = vunpack.c.h.b16 %v364
      %v490 = vunpack.c.l.b16 %v365
      %v491 = vunpack.c.h.b16 %v365
      %v492 = vunpack.c.l.b16 %v366
      %v493 = vunpack.c.h.b16 %v366
      %v494 = vunpack.c.l.b16 %v367
      %v495 = vunpack.c.h.b16 %v367
      %v496 = vpack.c.b16 %v434, %v432
      %v497 = vpack.c.b16 %v435, %v433
      %v498 = vpack.c.b16 %v438, %v436
      %v499 = vpack.c.b16 %v439, %v437
      %v500 = vpack.c.b16 %v442, %v440
      %v501 = vpack.c.b16 %v443, %v441
      %v502 = vpack.c.b16 %v446, %v444
      %v503 = vpack.c.b16 %v447, %v445
      %v504 = vpack.c.b16 %v450, %v448
      %v505 = vpack.c.b16 %v451, %v449
      %v506 = vpack.c.b16 %v454, %v452
      %v507 = vpack.c.b16 %v455, %v453
      %v508 = vpack.c.b16 %v458, %v456
      %v509 = vpack.c.b16 %v459, %v457
      %v510 = vpack.c.b16 %v462, %v460
      %v511 = vpack.c.b16 %v463, %v461
      %v512 = vpack.c.b16 %v466, %v464
      %v513 = vpack.c.b16 %v467, %v465
      %v514 = vpack.c.b16 %v470, %v468
      %v515 = vpack.c.b16 %v471, %v469
      %v516 = vpack.c.b16 %v474, %v472
      %v517 = vpack.c.b16 %v475, %v473
      %v518 = vpack.c.b16 %v478, %v476
      %v519 = vpack.c.b16 %v479, %v477
      %v520 = vpack.c.b16 %v482, %v480
      %v521 = vpack.c.b16 %v483, %v481
      %v522 = vpack.c.b16 %v486, %v484
      %v523 = vpack.c.b16 %v487, %v485
      %v524 = vpack.c.b16 %v490, %v488
      %v525 = vpack.c.b16 %v491, %v489
      %v526 = vpack.c.b16 %v494, %v492
      %v527 = vpack.c.b16 %v495, %v493
      %v592 = vunpack.c.l.b16 %v368
      %v593 = vunpack.c.l.b16 %v369
      %v594 = vunpack.c.l.b16 %v370
      %v595 = vunpack.c.l.b16 %v371
      %v596 = vunpack.c.l.b16 %v372
      %v597 = vunpack.c.l.b16 %v373
      %v598 = vunpack.c.l.b16 %v374
      %v599 = vunpack.c.l.b16 %v375
      %v600 = vunpack.c.l.b16 %v376
      %v601 = vunpack.c.l.b16 %v377
      %v602 = vunpack.c.l.b16 %v378
      %v603 = vunpack.c.l.b16 %v379
      %v604 = vunpack.c.l.b16 %v380
      %v605 = vunpack.c.l.b16 %v381
      %v606 = vunpack.c.l.b16 %v382
      %v607 = vunpack.c.l.b16 %v383
      %v608 = vunpack.c.l.b16 %v384
      %v609 = vunpack.c.l.b16 %v385
      %v610 = vunpack.c.l.b16 %v386
      %v611 = vunpack.c.l.b16 %v387
      %v612 = vunpack.c.l.b16 %v388
      %v613 = vunpack.c.l.b16 %v389
      %v614 = vunpack.c.l.b16 %v390
      %v615 = vunpack.c.l.b16 %v391
      %v616 = vunpack.c.l.b16 %v392
      %v617 = vunpack.c.l.b16 %v393
      %v618 = vunpack.c.l.b16 %v394
      %v619 = vunpack.c.l.b16 %v395
      %v620 = vunpack.c.l.b16 %v396
      %v621 = vunpack.c.l.b16 %v397
      %v622 = vunpack.c.l.b16 %v398
      %v623 = vunpack.c.l.b16 %v399
      %v624 = vpack.c.b16 %v593, %v592
      %v625 = vpack.c.b16 %v595, %v594
      %v626 = vpack.c.b16 %v597, %v596
      %v627 = vpack.c.b16 %v599, %v598
      %v628 = vpack.c.b16 %v601, %v600
      %v629 = vpack.c.b16 %v603, %v602
      %v630 = vpack.c.b16 %v605, %v604
      %v631 = vpack.c.b16 %v607, %v606
      %v632 = vpack.c.b16 %v609, %v608
      %v633 = vpack.c.b16 %v611, %v610
      %v634 = vpack.c.b16 %v613, %v612
      %v635 = vpack.c.b16 %v615, %v614
      %v636 = vpack.c.b16 %v617, %v616
      %v637 = vpack.c.b16 %v619, %v618
      %v638 = vpack.c.b16 %v621, %v620
      %v639 = vpack.c.b16 %v623, %v622
      %656 = vmatprep.subr.bf16.mxu0 0
      %657 = vmatpush1.bf16.msra.mxu0 %v624
      %658 = vmatprep.subr.bf16.mxu0 0
      %659 = vmatpush1.bf16.msra.mxu0 %v625
      %660 = vmatprep.subr.bf16.mxu0 0
      %661 = vmatpush1.bf16.msra.mxu0 %v626
      %662 = vmatprep.subr.bf16.mxu0 0
      %663 = vmatpush1.bf16.msra.mxu0 %v627
      %664 = vmatprep.subr.bf16.mxu0 0
      %665 = vmatpush1.bf16.msra.mxu0 %v628
      %666 = vmatprep.subr.bf16.mxu0 0
      %667 = vmatpush1.bf16.msra.mxu0 %v629
      %668 = vmatprep.subr.bf16.mxu0 0
      %669 = vmatpush1.bf16.msra.mxu0 %v630
      %670 = vmatprep.subr.bf16.mxu0 0
      %671 = vmatpush1.bf16.msra.mxu0 %v631
      %672 = vmatprep.subr.bf16.mxu0 0
      %673 = vmatpush1.bf16.msra.mxu0 %v632
      %674 = vmatprep.subr.bf16.mxu0 0
      %675 = vmatpush1.bf16.msra.mxu0 %v633
      %676 = vmatprep.subr.bf16.mxu0 0
      %677 = vmatpush1.bf16.msra.mxu0 %v634
      %678 = vmatprep.subr.bf16.mxu0 0
      %679 = vmatpush1.bf16.msra.mxu0 %v635
      %680 = vmatprep.subr.bf16.mxu0 0
      %681 = vmatpush1.bf16.msra.mxu0 %v636
      %682 = vmatprep.subr.bf16.mxu0 0
      %683 = vmatpush1.bf16.msra.mxu0 %v637
      %684 = vmatprep.subr.bf16.mxu0 0
      %685 = vmatpush1.bf16.msra.mxu0 %v638
      %686 = vmatprep.subr.bf16.mxu0 0
      %687 = vmatpush1.bf16.msra.mxu0 %v639
      %688 = vmatprep.mubr.bf16.mxu0 %v497
      %689 = vmatmul.mubr.bf16.gmra.mrb[0].mxu0 %v496
      %v690 = vpop.f32.mrb[0].mxu0
      %v691 = vadd.f32 0.0, %v690
      %v692 = vpop.f32.mrb[0].mxu0
      %v693 = vpop.f32.mrb[0].mxu0
      %v694 = vadd.f32 0.0, %v693
      %v695 = vpop.f32.mrb[0].mxu0
      %696 = vmatprep.mubr.bf16.mxu0 %v499
      %697 = vmatmul.mubr.bf16.gmra.mrb[0].mxu0 %v498
      %v698 = vpop.f32.mrb[0].mxu0
      %v699 = vadd.f32 0.0, %v698
      %v700 = vpop.f32.mrb[0].mxu0
      %v701 = vpop.f32.mrb[0].mxu0
      %v702 = vadd.f32 0.0, %v701
      %v703 = vpop.f32.mrb[0].mxu0
      %704 = vmatprep.mubr.bf16.mxu0 %v501
      %705 = vmatmul.mubr.bf16.gmra.mrb[0].mxu0 %v500
      %v706 = vpop.f32.mrb[0].mxu0
      %v707 = vadd.f32 0.0, %v706
      %v708 = vpop.f32.mrb[0].mxu0
      %v709 = vpop.f32.mrb[0].mxu0
      %v710 = vadd.f32 0.0, %v709
      %v711 = vpop.f32.mrb[0].mxu0
      %712 = vmatprep.mubr.bf16.mxu0 %v503
      %713 = vmatmul.mubr.bf16.gmra.mrb[0].mxu0 %v502
      %v714 = vpop.f32.mrb[0].mxu0
      %v715 = vadd.f32 0.0, %v714
      %v716 = vpop.f32.mrb[0].mxu0
      %v717 = vpop.f32.mrb[0].mxu0
      %v718 = vadd.f32 0.0, %v717
      %v719 = vpop.f32.mrb[0].mxu0
      %720 = vmatprep.mubr.bf16.mxu0 %v505
      %721 = vmatmul.mubr.bf16.gmra.mrb[0].mxu0 %v504
      %v722 = vpop.f32.mrb[0].mxu0
      %v723 = vadd.f32 0.0, %v722
      %v724 = vpop.f32.mrb[0].mxu0
      %v725 = vpop.f32.mrb[0].mxu0
      %v726 = vadd.f32 0.0, %v725
      %v727 = vpop.f32.mrb[0].mxu0
      %728 = vmatprep.mubr.bf16.mxu0 %v507
      %729 = vmatmul.mubr.bf16.gmra.mrb[0].mxu0 %v506
      %v730 = vpop.f32.mrb[0].mxu0
      %v731 = vadd.f32 0.0, %v730
      %v732 = vpop.f32.mrb[0].mxu0
      %v733 = vpop.f32.mrb[0].mxu0
      %v734 = vadd.f32 0.0, %v733
      %v735 = vpop.f32.mrb[0].mxu0
      %736 = vmatprep.mubr.bf16.mxu0 %v509
      %737 = vmatmul.mubr.bf16.gmra.mrb[0].mxu0 %v508
      %v738 = vpop.f32.mrb[0].mxu0
      %v739 = vadd.f32 0.0, %v738
      %v740 = vpop.f32.mrb[0].mxu0
      %v741 = vpop.f32.mrb[0].mxu0
      %v742 = vadd.f32 0.0, %v741
      %v743 = vpop.f32.mrb[0].mxu0
      %744 = vmatprep.mubr.bf16.mxu0 %v511
      %745 = vmatmul.mubr.bf16.gmra.mrb[0].mxu0 %v510
      %v746 = vpop.f32.mrb[0].mxu0
      %v747 = vadd.f32 0.0, %v746
      %v748 = vpop.f32.mrb[0].mxu0
      %v749 = vpop.f32.mrb[0].mxu0
      %v750 = vadd.f32 0.0, %v749
      %v751 = vpop.f32.mrb[0].mxu0
      %752 = vmatprep.mubr.bf16.mxu0 %v513
      %753 = vmatmul.mubr.bf16.gmra.mrb[0].mxu0 %v512
      %v754 = vpop.f32.mrb[0].mxu0
      %v755 = vadd.f32 0.0, %v754
      %v756 = vpop.f32.mrb[0].mxu0
      %v757 = vpop.f32.mrb[0].mxu0
      %v758 = vadd.f32 0.0, %v757
      %v759 = vpop.f32.mrb[0].mxu0
      %760 = vmatprep.mubr.bf16.mxu0 %v515
      %761 = vmatmul.mubr.bf16.gmra.mrb[0].mxu0 %v514
      %v762 = vpop.f32.mrb[0].mxu0
      %v763 = vadd.f32 0.0, %v762
      %v764 = vpop.f32.mrb[0].mxu0
      %v765 = vpop.f32.mrb[0].mxu0
      %v766 = vadd.f32 0.0, %v765
      %v767 = vpop.f32.mrb[0].mxu0
      %768 = vmatprep.mubr.bf16.mxu0 %v517
      %769 = vmatmul.mubr.bf16.gmra.mrb[0].mxu0 %v516
      %v770 = vpop.f32.mrb[0].mxu0
      %v771 = vadd.f32 0.0, %v770
      %v772 = vpop.f32.mrb[0].mxu0
      %v773 = vpop.f32.mrb[0].mxu0
      %v774 = vadd.f32 0.0, %v773
      %v775 = vpop.f32.mrb[0].mxu0
      %776 = vmatprep.mubr.bf16.mxu0 %v519
      %777 = vmatmul.mubr.bf16.gmra.mrb[0].mxu0 %v518
      %v778 = vpop.f32.mrb[0].mxu0
      %v779 = vadd.f32 0.0, %v778
      %v780 = vpop.f32.mrb[0].mxu0
      %v781 = vpop.f32.mrb[0].mxu0
      %v782 = vadd.f32 0.0, %v781
      %v783 = vpop.f32.mrb[0].mxu0
      %784 = vmatprep.mubr.bf16.mxu0 %v521
      %785 = vmatmul.mubr.bf16.gmra.mrb[0].mxu0 %v520
      %v786 = vpop.f32.mrb[0].mxu0
      %v787 = vadd.f32 0.0, %v786
      %v788 = vpop.f32.mrb[0].mxu0
      %v789 = vpop.f32.mrb[0].mxu0
      %v790 = vadd.f32 0.0, %v789
      %v791 = vpop.f32.mrb[0].mxu0
      %792 = vmatprep.mubr.bf16.mxu0 %v523
      %793 = vmatmul.mubr.bf16.gmra.mrb[0].mxu0 %v522
      %v794 = vpop.f32.mrb[0].mxu0
      %v795 = vadd.f32 0.0, %v794
      %v796 = vpop.f32.mrb[0].mxu0
      %v797 = vpop.f32.mrb[0].mxu0
      %v798 = vadd.f32 0.0, %v797
      %v799 = vpop.f32.mrb[0].mxu0
      %800 = vmatprep.mubr.bf16.mxu0 %v525
      %801 = vmatmul.mubr.bf16.gmra.mrb[0].mxu0 %v524
      %v802 = vpop.f32.mrb[0].mxu0
      %v803 = vadd.f32 0.0, %v802
      %v804 = vpop.f32.mrb[0].mxu0
      %v805 = vpop.f32.mrb[0].mxu0
      %v806 = vadd.f32 0.0, %v805
      %v807 = vpop.f32.mrb[0].mxu0
      %808 = vmatprep.mubr.bf16.mxu0 %v527
      %809 = vmatmul.mubr.bf16.gmra.mrb[0].mxu0 %v526
      %v810 = vpop.f32.mrb[0].mxu0
      %v811 = vadd.f32 0.0, %v810
      %v812 = vpop.f32.mrb[0].mxu0
      %v813 = vpop.f32.mrb[0].mxu0
      %v814 = vadd.f32 0.0, %v813
      %v815 = vpop.f32.mrb[0].mxu0
      %816 = vdwg.mxu0
      %v817 = vadd.f32 %v304, %v691
      %v818 = vadd.f32 %v305, %v694
      %v819 = vadd.f32 %v306, %v699
      %v820 = vadd.f32 %v307, %v702
      %v821 = vadd.f32 %v308, %v707
      %v822 = vadd.f32 %v309, %v710
      %v823 = vadd.f32 %v310, %v715
      %v824 = vadd.f32 %v311, %v718
      %v825 = vadd.f32 %v312, %v723
      %v826 = vadd.f32 %v313, %v726
      %v827 = vadd.f32 %v314, %v731
      %v828 = vadd.f32 %v315, %v734
      %v829 = vadd.f32 %v316, %v739
      %v830 = vadd.f32 %v317, %v742
      %v831 = vadd.f32 %v318, %v747
      %v832 = vadd.f32 %v319, %v750
      %v833 = vadd.f32 %v320, %v755
      %v834 = vadd.f32 %v321, %v758
      %v835 = vadd.f32 %v322, %v763
      %v836 = vadd.f32 %v323, %v766
      %v837 = vadd.f32 %v324, %v771
      %v838 = vadd.f32 %v325, %v774
      %v839 = vadd.f32 %v326, %v779
      %v840 = vadd.f32 %v327, %v782
      %v841 = vadd.f32 %v328, %v787
      %v842 = vadd.f32 %v329, %v790
      %v843 = vadd.f32 %v330, %v795
      %v844 = vadd.f32 %v331, %v798
      %v845 = vadd.f32 %v332, %v803
      %v846 = vadd.f32 %v333, %v806
      %v847 = vadd.f32 %v334, %v811
      %v848 = vadd.f32 %v335, %v814
      %849 = vst [vmem:[#allocation2] sm:$0xff] %v817
      %850 = vst [vmem:[#allocation2 + $0x8] sm:$0xff] %v818
      %851 = vst [vmem:[#allocation2 + $0x10] sm:$0xff] %v819
      %852 = vst [vmem:[#allocation2 + $0x18] sm:$0xff] %v820
      %853 = vst [vmem:[#allocation2 + $0x20] sm:$0xff] %v821
      %854 = vst [vmem:[#allocation2 + $0x28] sm:$0xff] %v822
      %855 = vst [vmem:[#allocation2 + $0x30] sm:$0xff] %v823
      %856 = vst [vmem:[#allocation2 + $0x38] sm:$0xff] %v824
      %857 = vst [vmem:[#allocation2 + $0x40] sm:$0xff] %v825
      %858 = vst [vmem:[#allocation2 + $0x48] sm:$0xff] %v826
      %859 = vst [vmem:[#allocation2 + $0x50] sm:$0xff] %v827
      %860 = vst [vmem:[#allocation2 + $0x58] sm:$0xff] %v828
      %861 = vst [vmem:[#allocation2 + $0x60] sm:$0xff] %v829
      %862 = vst [vmem:[#allocation2 + $0x68] sm:$0xff] %v830
      %863 = vst [vmem:[#allocation2 + $0x70] sm:$0xff] %v831
      %864 = vst [vmem:[#allocation2 + $0x78] sm:$0xff] %v832
      %865 = vst [vmem:[#allocation2 + $0x80] sm:$0xff] %v833
      %866 = vst [vmem:[#allocation2 + $0x88] sm:$0xff] %v834
      %867 = vst [vmem:[#allocation2 + $0x90] sm:$0xff] %v835
      %868 = vst [vmem:[#allocation2 + $0x98] sm:$0xff] %v836
      %869 = vst [vmem:[#allocation2 + $0xa0] sm:$0xff] %v837
      %870 = vst [vmem:[#allocation2 + $0xa8] sm:$0xff] %v838
      %871 = vst [vmem:[#allocation2 + $0xb0] sm:$0xff] %v839
      %872 = vst [vmem:[#allocation2 + $0xb8] sm:$0xff] %v840
      %873 = vst [vmem:[#allocation2 + $0xc0] sm:$0xff] %v841
      %874 = vst [vmem:[#allocation2 + $0xc8] sm:$0xff] %v842
      %875 = vst [vmem:[#allocation2 + $0xd0] sm:$0xff] %v843
      %876 = vst [vmem:[#allocation2 + $0xd8] sm:$0xff] %v844
      %877 = vst [vmem:[#allocation2 + $0xe0] sm:$0xff] %v845
      %878 = vst [vmem:[#allocation2 + $0xe8] sm:$0xff] %v846
      %879 = vst [vmem:[#allocation2 + $0xf0] sm:$0xff] %v847
      %880 = vst [vmem:[#allocation2 + $0xf8] sm:$0xff] %v848
      // Predicated region
      $region37: #{vae_forward.40} parent=31 // pred_check
        %p881 = pneg %p268
      $region38: #{vae_forward.40} parent=31 // pred_check_branch
        %883 = sbr.rel (%p881) target = $region40
      $region39: #{vae_forward.40} parent=31 // pred_region
        %v884 = vld [vmem:[#allocation2] sm:$0xff]
        %v885 = vld [vmem:[#allocation2 + $0x8] sm:$0xff]
        %v886 = vld [vmem:[#allocation2 + $0x10] sm:$0xff]
        %v887 = vld [vmem:[#allocation2 + $0x18] sm:$0xff]
        %v888 = vld [vmem:[#allocation2 + $0x20] sm:$0xff]
        %v889 = vld [vmem:[#allocation2 + $0x28] sm:$0xff]
        %v890 = vld [vmem:[#allocation2 + $0x30] sm:$0xff]
        %v891 = vld [vmem:[#allocation2 + $0x38] sm:$0xff]
        %v892 = vld [vmem:[#allocation2 + $0x40] sm:$0xff]
        %v893 = vld [vmem:[#allocation2 + $0x48] sm:$0xff]
        %v894 = vld [vmem:[#allocation2 + $0x50] sm:$0xff]
        %v895 = vld [vmem:[#allocation2 + $0x58] sm:$0xff]
        %v896 = vld [vmem:[#allocation2 + $0x60] sm:$0xff]
        %v897 = vld [vmem:[#allocation2 + $0x68] sm:$0xff]
        %v898 = vld [vmem:[#allocation2 + $0x70] sm:$0xff]
        %v899 = vld [vmem:[#allocation2 + $0x78] sm:$0xff]
        %v900 = vld [vmem:[#allocation2 + $0x80] sm:$0xff]
        %v901 = vld [vmem:[#allocation2 + $0x88] sm:$0xff]
        %v902 = vld [vmem:[#allocation2 + $0x90] sm:$0xff]
        %v903 = vld [vmem:[#allocation2 + $0x98] sm:$0xff]
        %v904 = vld [vmem:[#allocation2 + $0xa0] sm:$0xff]
        %v905 = vld [vmem:[#allocation2 + $0xa8] sm:$0xff]
        %v906 = vld [vmem:[#allocation2 + $0xb0] sm:$0xff]
        %v907 = vld [vmem:[#allocation2 + $0xb8] sm:$0xff]
        %v908 = vld [vmem:[#allocation2 + $0xc0] sm:$0xff]
        %v909 = vld [vmem:[#allocation2 + $0xc8] sm:$0xff]
        %v910 = vld [vmem:[#allocation2 + $0xd0] sm:$0xff]
        %v911 = vld [vmem:[#allocation2 + $0xd8] sm:$0xff]
        %v912 = vld [vmem:[#allocation2 + $0xe0] sm:$0xff]
        %v913 = vld [vmem:[#allocation2 + $0xe8] sm:$0xff]
        %v914 = vld [vmem:[#allocation2 + $0xf0] sm:$0xff]
        %v915 = vld [vmem:[#allocation2 + $0xf8] sm:$0xff]
        %v916 = vld [vmem:[%s257] sm:$0x1]
        %v918 = vlaneseq
        %v919 = vshrl.u32 %v918, 7
        %v920 = vsub.s32 0, %v919
        %v921 = vrot.slane %v916, %v920
        %v923 = vadd.f32 %v884, %v921
        %v924 = vadd.f32 %v885, %v921
        %v925 = vadd.f32 %v886, %v921
        %v926 = vadd.f32 %v887, %v921
        %v927 = vadd.f32 %v888, %v921
        %v928 = vadd.f32 %v889, %v921
        %v929 = vadd.f32 %v890, %v921
        %v930 = vadd.f32 %v891, %v921
        %v931 = vadd.f32 %v892, %v921
        %v932 = vadd.f32 %v893, %v921
        %v933 = vadd.f32 %v894, %v921
        %v934 = vadd.f32 %v895, %v921
        %v935 = vadd.f32 %v896, %v921
        %v936 = vadd.f32 %v897, %v921
        %v937 = vadd.f32 %v898, %v921
        %v938 = vadd.f32 %v899, %v921
        %v939 = vadd.f32 %v900, %v921
        %v940 = vadd.f32 %v901, %v921
        %v941 = vadd.f32 %v902, %v921
        %v942 = vadd.f32 %v903, %v921
        %v943 = vadd.f32 %v904, %v921
        %v944 = vadd.f32 %v905, %v921
        %v945 = vadd.f32 %v906, %v921
        %v946 = vadd.f32 %v907, %v921
        %v947 = vadd.f32 %v908, %v921
        %v948 = vadd.f32 %v909, %v921
        %v949 = vadd.f32 %v910, %v921
        %v950 = vadd.f32 %v911, %v921
        %v951 = vadd.f32 %v912, %v921
        %v952 = vadd.f32 %v913, %v921
        %v953 = vadd.f32 %v914, %v921
        %v954 = vadd.f32 %v915, %v921
        %v955 = vxor.u32 %v923, 2147483648
        %v956 = vxor.u32 %v924, 2147483648
        %v957 = vxor.u32 %v925, 2147483648
        %v958 = vxor.u32 %v926, 2147483648
        %v959 = vxor.u32 %v927, 2147483648
        %v960 = vxor.u32 %v928, 2147483648
        %v961 = vxor.u32 %v929, 2147483648
        %v962 = vxor.u32 %v930, 2147483648
        %v963 = vxor.u32 %v931, 2147483648
        %v964 = vxor.u32 %v932, 2147483648
        %v965 = vxor.u32 %v933, 2147483648
        %v966 = vxor.u32 %v934, 2147483648
        %v967 = vxor.u32 %v935, 2147483648
        %v968 = vxor.u32 %v936, 2147483648
        %v969 = vxor.u32 %v937, 2147483648
        %v970 = vxor.u32 %v938, 2147483648
        %v971 = vxor.u32 %v939, 2147483648
        %v972 = vxor.u32 %v940, 2147483648
        %v973 = vxor.u32 %v941, 2147483648
        %v974 = vxor.u32 %v942, 2147483648
        %v975 = vxor.u32 %v943, 2147483648
        %v976 = vxor.u32 %v944, 2147483648
        %v977 = vxor.u32 %v945, 2147483648
        %v978 = vxor.u32 %v946, 2147483648
        %v979 = vxor.u32 %v947, 2147483648
        %v980 = vxor.u32 %v948, 2147483648
        %v981 = vxor.u32 %v949, 2147483648
        %v982 = vxor.u32 %v950, 2147483648
        %v983 = vxor.u32 %v951, 2147483648
        %v984 = vxor.u32 %v952, 2147483648
        %v985 = vxor.u32 %v953, 2147483648
        %v986 = vxor.u32 %v954, 2147483648
        %v987 = vmul.f32 %v955, 1.442695
        %v988 = vpow.pop %v987
        %v989 = vmul.f32 %v956, 1.442695
        %v990 = vpow.pop %v989
        %v991 = vmul.f32 %v957, 1.442695
        %v992 = vpow.pop %v991
        %v993 = vmul.f32 %v958, 1.442695
        %v994 = vpow.pop %v993
        %v995 = vmul.f32 %v959, 1.442695
        %v996 = vpow.pop %v995
        %v997 = vmul.f32 %v960, 1.442695
        %v998 = vpow.pop %v997
        %v999 = vmul.f32 %v961, 1.442695
        %v1000 = vpow.pop %v999
        %v1001 = vmul.f32 %v962, 1.442695
        %v1002 = vpow.pop %v1001
        %v1003 = vmul.f32 %v963, 1.442695
        %v1004 = vpow.pop %v1003
        %v1005 = vmul.f32 %v964, 1.442695
        %v1006 = vpow.pop %v1005
        %v1007 = vmul.f32 %v965, 1.442695
        %v1008 = vpow.pop %v1007
        %v1009 = vmul.f32 %v966, 1.442695
        %v1010 = vpow.pop %v1009
        %v1011 = vmul.f32 %v967, 1.442695
        %v1012 = vpow.pop %v1011
        %v1013 = vmul.f32 %v968, 1.442695
        %v1014 = vpow.pop %v1013
        %v1015 = vmul.f32 %v969, 1.442695
        %v1016 = vpow.pop %v1015
        %v1017 = vmul.f32 %v970, 1.442695
        %v1018 = vpow.pop %v1017
        %v1019 = vmul.f32 %v971, 1.442695
        %v1020 = vpow.pop %v1019
        %v1021 = vmul.f32 %v972, 1.442695
        %v1022 = vpow.pop %v1021
        %v1023 = vmul.f32 %v973, 1.442695
        %v1024 = vpow.pop %v1023
        %v1025 = vmul.f32 %v974, 1.442695
        %v1026 = vpow.pop %v1025
        %v1027 = vmul.f32 %v975, 1.442695
        %v1028 = vpow.pop %v1027
        %v1029 = vmul.f32 %v976, 1.442695
        %v1030 = vpow.pop %v1029
        %v1031 = vmul.f32 %v977, 1.442695
        %v1032 = vpow.pop %v1031
        %v1033 = vmul.f32 %v978, 1.442695
        %v1034 = vpow.pop %v1033
        %v1035 = vmul.f32 %v979, 1.442695
        %v1036 = vpow.pop %v1035
        %v1037 = vmul.f32 %v980, 1.442695
        %v1038 = vpow.pop %v1037
        %v1039 = vmul.f32 %v981, 1.442695
        %v1040 = vpow.pop %v1039
        %v1041 = vmul.f32 %v982, 1.442695
        %v1042 = vpow.pop %v1041
        %v1043 = vmul.f32 %v983, 1.442695
        %v1044 = vpow.pop %v1043
        %v1045 = vmul.f32 %v984, 1.442695
        %v1046 = vpow.pop %v1045
        %v1047 = vmul.f32 %v985, 1.442695
        %v1048 = vpow.pop %v1047
        %v1049 = vmul.f32 %v986, 1.442695
        %v1050 = vpow.pop %v1049
        %v1051 = vadd.f32 %v988, 1.0
        %v1052 = vadd.f32 %v990, 1.0
        %v1053 = vadd.f32 %v992, 1.0
        %v1054 = vadd.f32 %v994, 1.0
        %v1055 = vadd.f32 %v996, 1.0
        %v1056 = vadd.f32 %v998, 1.0
        %v1057 = vadd.f32 %v1000, 1.0
        %v1058 = vadd.f32 %v1002, 1.0
        %v1059 = vadd.f32 %v1004, 1.0
        %v1060 = vadd.f32 %v1006, 1.0
        %v1061 = vadd.f32 %v1008, 1.0
        %v1062 = vadd.f32 %v1010, 1.0
        %v1063 = vadd.f32 %v1012, 1.0
        %v1064 = vadd.f32 %v1014, 1.0
        %v1065 = vadd.f32 %v1016, 1.0
        %v1066 = vadd.f32 %v1018, 1.0
        %v1067 = vadd.f32 %v1020, 1.0
        %v1068 = vadd.f32 %v1022, 1.0
        %v1069 = vadd.f32 %v1024, 1.0
        %v1070 = vadd.f32 %v1026, 1.0
        %v1071 = vadd.f32 %v1028, 1.0
        %v1072 = vadd.f32 %v1030, 1.0
        %v1073 = vadd.f32 %v1032, 1.0
        %v1074 = vadd.f32 %v1034, 1.0
        %v1075 = vadd.f32 %v1036, 1.0
        %v1076 = vadd.f32 %v1038, 1.0
        %v1077 = vadd.f32 %v1040, 1.0
        %v1078 = vadd.f32 %v1042, 1.0
        %v1079 = vadd.f32 %v1044, 1.0
        %v1080 = vadd.f32 %v1046, 1.0
        %v1081 = vadd.f32 %v1048, 1.0
        %v1082 = vadd.f32 %v1050, 1.0
        %v1083 = vrcp.pop %v1051
        %v1084 = vmul.f32 1.0, %v1083
        %v1085 = vrcp.pop %v1052
        %v1086 = vmul.f32 1.0, %v1085
        %v1087 = vrcp.pop %v1053
        %v1088 = vmul.f32 1.0, %v1087
        %v1089 = vrcp.pop %v1054
        %v1090 = vmul.f32 1.0, %v1089
        %v1091 = vrcp.pop %v1055
        %v1092 = vmul.f32 1.0, %v1091
        %v1093 = vrcp.pop %v1056
        %v1094 = vmul.f32 1.0, %v1093
        %v1095 = vrcp.pop %v1057
        %v1096 = vmul.f32 1.0, %v1095
        %v1097 = vrcp.pop %v1058
        %v1098 = vmul.f32 1.0, %v1097
        %v1099 = vrcp.pop %v1059
        %v1100 = vmul.f32 1.0, %v1099
        %v1101 = vrcp.pop %v1060
        %v1102 = vmul.f32 1.0, %v1101
        %v1103 = vrcp.pop %v1061
        %v1104 = vmul.f32 1.0, %v1103
        %v1105 = vrcp.pop %v1062
        %v1106 = vmul.f32 1.0, %v1105
        %v1107 = vrcp.pop %v1063
        %v1108 = vmul.f32 1.0, %v1107
        %v1109 = vrcp.pop %v1064
        %v1110 = vmul.f32 1.0, %v1109
        %v1111 = vrcp.pop %v1065
        %v1112 = vmul.f32 1.0, %v1111
        %v1113 = vrcp.pop %v1066
        %v1114 = vmul.f32 1.0, %v1113
        %v1115 = vrcp.pop %v1067
        %v1116 = vmul.f32 1.0, %v1115
        %v1117 = vrcp.pop %v1068
        %v1118 = vmul.f32 1.0, %v1117
        %v1119 = vrcp.pop %v1069
        %v1120 = vmul.f32 1.0, %v1119
        %v1121 = vrcp.pop %v1070
        %v1122 = vmul.f32 1.0, %v1121
        %v1123 = vrcp.pop %v1071
        %v1124 = vmul.f32 1.0, %v1123
        %v1125 = vrcp.pop %v1072
        %v1126 = vmul.f32 1.0, %v1125
        %v1127 = vrcp.pop %v1073
        %v1128 = vmul.f32 1.0, %v1127
        %v1129 = vrcp.pop %v1074
        %v1130 = vmul.f32 1.0, %v1129
        %v1131 = vrcp.pop %v1075
        %v1132 = vmul.f32 1.0, %v1131
        %v1133 = vrcp.pop %v1076
        %v1134 = vmul.f32 1.0, %v1133
        %v1135 = vrcp.pop %v1077
        %v1136 = vmul.f32 1.0, %v1135
        %v1137 = vrcp.pop %v1078
        %v1138 = vmul.f32 1.0, %v1137
        %v1139 = vrcp.pop %v1079
        %v1140 = vmul.f32 1.0, %v1139
        %v1141 = vrcp.pop %v1080
        %v1142 = vmul.f32 1.0, %v1141
        %v1143 = vrcp.pop %v1081
        %v1144 = vmul.f32 1.0, %v1143
        %v1145 = vrcp.pop %v1082
        %v1146 = vmul.f32 1.0, %v1145
        %1147 = vst [vmem:[%s265] sm:$0xff] %v1084
        %1148 = vst [vmem:[%s265 + $0x8] sm:$0xff] %v1086
        %1149 = vst [vmem:[%s265 + $0x10] sm:$0xff] %v1088
        %1150 = vst [vmem:[%s265 + $0x18] sm:$0xff] %v1090
        %1151 = vst [vmem:[%s265 + $0x20] sm:$0xff] %v1092
        %1152 = vst [vmem:[%s265 + $0x28] sm:$0xff] %v1094
        %1153 = vst [vmem:[%s265 + $0x30] sm:$0xff] %v1096
        %1154 = vst [vmem:[%s265 + $0x38] sm:$0xff] %v1098
        %1155 = vst [vmem:[%s265 + $0x40] sm:$0xff] %v1100
        %1156 = vst [vmem:[%s265 + $0x48] sm:$0xff] %v1102
        %1157 = vst [vmem:[%s265 + $0x50] sm:$0xff] %v1104
        %1158 = vst [vmem:[%s265 + $0x58] sm:$0xff] %v1106
        %1159 = vst [vmem:[%s265 + $0x60] sm:$0xff] %v1108
        %1160 = vst [vmem:[%s265 + $0x68] sm:$0xff] %v1110
        %1161 = vst [vmem:[%s265 + $0x70] sm:$0xff] %v1112
        %1162 = vst [vmem:[%s265 + $0x78] sm:$0xff] %v1114
        %1163 = vst [vmem:[%s265 + $0x80] sm:$0xff] %v1116
        %1164 = vst [vmem:[%s265 + $0x88] sm:$0xff] %v1118
        %1165 = vst [vmem:[%s265 + $0x90] sm:$0xff] %v1120
        %1166 = vst [vmem:[%s265 + $0x98] sm:$0xff] %v1122
        %1167 = vst [vmem:[%s265 + $0xa0] sm:$0xff] %v1124
        %1168 = vst [vmem:[%s265 + $0xa8] sm:$0xff] %v1126
        %1169 = vst [vmem:[%s265 + $0xb0] sm:$0xff] %v1128
        %1170 = vst [vmem:[%s265 + $0xb8] sm:$0xff] %v1130
        %1171 = vst [vmem:[%s265 + $0xc0] sm:$0xff] %v1132
        %1172 = vst [vmem:[%s265 + $0xc8] sm:$0xff] %v1134
        %1173 = vst [vmem:[%s265 + $0xd0] sm:$0xff] %v1136
        %1174 = vst [vmem:[%s265 + $0xd8] sm:$0xff] %v1138
        %1175 = vst [vmem:[%s265 + $0xe0] sm:$0xff] %v1140
        %1176 = vst [vmem:[%s265 + $0xe8] sm:$0xff] %v1142
        %1177 = vst [vmem:[%s265 + $0xf0] sm:$0xff] %v1144
        %1178 = vst [vmem:[%s265 + $0xf8] sm:$0xff] %v1146
      $region40: #{vae_forward.40} parent=31 // pred_fallthru
        _
      %s1179 = smul.u32 32, %s19
      %p1180 = scmp.lt.s32.totalorder %s1179, 63
      %s1181 = scalar_select %p1180, %s1179, 63
      %p1182 = scmp.lt.s32.totalorder %s20, 0
      %s1183 = scalar_select %p1182, %s20, 0
      %s1184 = sadd.s32 %s1183, %s1181
      %s1185 = smul.addr %s1184, 8
      %s1186 = scalar_lea.vmem %s3, %s1185
      // Predicated region
      $region41: #{vae_forward.40} parent=31 // pred_check
        %p1187 = pneg %p135
      $region42: #{vae_forward.40} parent=31 // pred_check_branch
        %1189 = sbr.rel (%p1187) target = $region44
      $region43: #{vae_forward.40} parent=31 // pred_region
        %s1190 = smul.u32 32, %s19
      $region44: #{vae_forward.40} parent=31 // pred_fallthru
        _
    $region32: #{vae_forward.40} parent=5 // pred_fallthru
      _
    %p1191 = scmp.le.s32.totalorder 2, %s9
    // Predicated region
    $region45: #{vae_forward.40} parent=5 // pred_check
      %p1192 = pneg %p1191
    $region46: #{vae_forward.40} parent=5 // pred_check_branch
      %1194 = sbr.rel (%p1192) target = $region48
    $region47: #{vae_forward.40} parent=5 // pred_region
      %s1195 = ssub.s32 %s9, 2
      // Predicated region
      $region49: #{vae_forward.40} parent=47 // pred_check
        %p1196 = pneg %p141
      $region50: #{vae_forward.40} parent=47 // pred_check_branch
        %1198 = sbr.rel (%p1196) target = $region52
      $region51: #{vae_forward.40} parent=47 // pred_region
        %s1199 = smul.u32 32, %s22
        %p1200 = scmp.lt.s32.totalorder %s1199, 63
        %s1201 = scalar_select %p1200, %s1199, 63
        %p1202 = scmp.lt.s32.totalorder %s23, 0
        %s1203 = scalar_select %p1202, %s23, 0
        %s1204 = sadd.s32 %s1203, %s1201
        %s1205 = smul.addr %s1204, 8
        %s1206 = scalar_lea.vmem %s3, %s1205
      $region52: #{vae_forward.40} parent=47 // pred_fallthru
        _
    $region48: #{vae_forward.40} parent=5 // pred_fallthru
      _
  $region6: #{vae_forward.40} parent=0 // loop_footer
    %s13 = sadd.s32 1, %s9
  $region7: #{vae_forward.40} parent=0 // loop_footer_branch
    %8 = sbr.rel target = $region3
  $region8: #{vae_forward.40} parent=0 // loop_exit
    _

</llo_original>
